<compile_context>
chip_gen: v7x
topology: tpu7x:2x2x1
jax: 0.10.0
libtpu: 0.0.40
codegen_flags: <defaults>
</compile_context>

<pallas_src>
import jax
import jax.numpy as jnp
import numpy as np
from jax.experimental import pallas as pl
from jax.experimental.pallas import tpu as pltpu

# Geometry implied by the module (fc_input_size = 32*15*15 forces a 64x64 input).
_C1_OUT = 16            # conv1 out channels
_C2_OUT = 32            # conv2 out channels
_OH2 = 15               # conv2 output spatial size (64 ->31 ->15)
_GP_H = 17              # padded parity-group height (>= 16 + 1 tap offset)
_GP_W = 24              # padded parity-group width  (>= 17, multiple of 8 -> free reshapes)
_NPOS = 4 * _GP_H * _GP_W   # 1632 conv1 rows per sample (incl. zero padding)


# --------------------------- kernel 1: conv1 + conv2 --------------------------
def _conv_stack_kernel(patches_ref, w1_ref, b1_ref, w2_ref, b2_ref, o_ref):
    # patches_ref: (1, 1632, 9*Cin)  parity-grouped, zero-padded conv1 im2col patches
    # w1_ref:      (9*Cin, 16)       conv1 weight, (ki,kj,ci) x c1
    # b1_ref:      (1, 16)
    # w2_ref:      (3, 3, 16, 32)    conv2 weight, tap-major (di,dj,c1,c2)
    # b2_ref:      (1, 32)
    # o_ref:       (1, 15, 15, 32)   conv2 output (NHWC) for this sample
    patches = patches_ref[0]                                         # (1632, 9*Cin)

    # conv1 + bias + ReLU on every (padded) output position of every parity group.
    a1 = jnp.dot(patches, w1_ref[...], preferred_element_type=jnp.float32)
    a1 = jnp.maximum(a1 + b1_ref[...], 0.0)                          # (1632, 16)

    # View as (group, h', w', c1).  Layout-free reshape: trailing (24, 16) dims are
    # sublane/lane aligned identically to the flat (1632, 16) form.
    a1g = a1.reshape(4, _GP_H, _GP_W, _C1_OUT)

    # conv2: 9 taps.  Tap (di, dj) reads parity group (di%2, dj%2) at a static
    # offset, so every gather is a contiguous static slice.
    w2 = w2_ref[...]                                                 # (3,3,16,32)
    acc = jnp.zeros((16 * 16, _C2_OUT), jnp.float32)
    for di in range(3):
        for dj in range(3):
            g = (di % 2) * 2 + (dj % 2)
            rp, cq = di // 2, dj // 2
            sl = a1g[g, rp:rp + 16, cq:cq + 16, :]                   # (16,16,16)
            acc = acc + jnp.dot(sl.reshape(16 * 16, _C1_OUT), w2[di, dj],
                                preferred_element_type=jnp.float32)
    a2 = jnp.maximum(acc + b2_ref[...], 0.0)                         # (256, 32)
    # Drop the padded 16th row/col and emit NHWC (oh, ow, c2).
    o_ref[0] = a2.reshape(16, 16, _C2_OUT)[:_OH2, :_OH2, :]


def _conv_stack(patches, pp):
    B, npos, k1 = patches.shape
    return pl.pallas_call(
        _conv_stack_kernel,
        out_shape=jax.ShapeDtypeStruct((B, _OH2, _OH2, _C2_OUT), jnp.float32),
        grid=(B,),
        in_specs=[
            pl.BlockSpec((1, npos, k1), lambda b: (b, 0, 0)),
            pl.BlockSpec((k1, _C1_OUT), lambda b: (0, 0)),
            pl.BlockSpec((1, _C1_OUT), lambda b: (0, 0)),
            pl.BlockSpec((3, 3, _C1_OUT, _C2_OUT), lambda b: (0, 0, 0, 0)),
            pl.BlockSpec((1, _C2_OUT), lambda b: (0, 0)),
        ],
        out_specs=pl.BlockSpec((1, _OH2, _OH2, _C2_OUT), lambda b: (b, 0, 0, 0)),
        compiler_params=pltpu.CompilerParams(dimension_semantics=("parallel",)),
    )(patches, pp["w1m"], pp["b1r"], pp["w2t"], pp["b2r"])


# ----------------------------- kernel 2: fc1 + fc2 ----------------------------
def _fc_stack_kernel(x_ref, w1_ref, b1_ref, w2_ref, b2_ref, o_ref):
    h = jnp.dot(x_ref[...], w1_ref[...], preferred_element_type=jnp.float32)
    h = jnp.maximum(h + b1_ref[...], 0.0)
    out = jnp.dot(h, w2_ref[...], preferred_element_type=jnp.float32) + b2_ref[...]
    o_ref[...] = out.astype(o_ref.dtype)


def _fc_stack(h, pp):
    B, K = h.shape
    N1 = pp["fw1m"].shape[1]
    A = pp["fw2m"].shape[1]
    return pl.pallas_call(
        _fc_stack_kernel,
        out_shape=jax.ShapeDtypeStruct((B, A), jnp.float32),
        grid=(1,),
        in_specs=[
            pl.BlockSpec((B, K), lambda i: (0, 0)),
            pl.BlockSpec((K, N1), lambda i: (0, 0)),
            pl.BlockSpec((1, N1), lambda i: (0, 0)),
            pl.BlockSpec((N1, A), lambda i: (0, 0)),
            pl.BlockSpec((1, A), lambda i: (0, 0)),
        ],
        out_specs=pl.BlockSpec((B, A), lambda i: (0, 0)),
        compiler_params=pltpu.CompilerParams(
            dimension_semantics=("arbitrary",),
            # The 7200x256 f32 weight is double-buffered; raise the scoped-VMEM cap
            # so it fits comfortably on v5e (default ~16 MiB) while staying well
            # under v7x's 64 MiB physical VMEM.
            vmem_limit_bytes=48 * 1024 * 1024),
    )(h, pp["fw1m"], pp["fb1r"], pp["fw2m"], pp["fb2r"])


# ----------------------------- wrapper-side im2col ----------------------------
def _conv1_patches_grouped(x_nhwc):
    """im2col for conv1 (k=3, s=2, VALID), grouped by output-position parity and
    zero-padded to a (17, 24) grid per group so conv2's stride-2 gather becomes a
    set of contiguous static slices inside the kernel."""
    B, H, W, C = x_nhwc.shape
    oh = (H - 3) // 2 + 1
    ow = (W - 3) // 2 + 1
    cols = []
    for ki in range(3):
        for kj in range(3):
            cols.append(x_nhwc[:, ki:ki + 2 * oh:2, kj:kj + 2 * ow:2, :])
    p = jnp.stack(cols, axis=3).reshape(B, oh, ow, 9 * C)     # (B,31,31,9*C)
    groups = []
    for P in range(2):
        for Q in range(2):
            gp = p[:, P::2, Q::2, :]
            gp = jnp.pad(gp, ((0, 0), (0, _GP_H - gp.shape[1]),
                              (0, _GP_W - gp.shape[2]), (0, 0)))
            groups.append(gp.reshape(B, _GP_H * _GP_W, 9 * C))
    return jnp.concatenate(groups, axis=1)                    # (B, 1632, 9*C)


# --------------------------- parameter packing (once) -------------------------
def pack_params(p):
    """One-time re-layout of PyTorch-convention parameters into kernel layouts,
    so the forward pass contains no per-call weight transposes."""
    c1 = p["w1"].shape[0]
    cin = p["w1"].shape[1]
    c2 = p["w2"].shape[0]
    a = p["fw2"].shape[0]
    w1m = jnp.transpose(p["w1"], (2, 3, 1, 0)).reshape(9 * cin, c1)
    w2t = jnp.transpose(p["w2"], (2, 3, 1, 0))                        # (3,3,16,32)
    # fc1 weight re-indexed to consume the kernel's NHWC-flat conv2 output while
    # matching torch's NCHW .view() semantics exactly.
    fw1m = (p["fw1"].reshape(256, c2, _OH2, _OH2)
            .transpose(2, 3, 1, 0).reshape(c2 * _OH2 * _OH2, 256))
    fw2m = p["fw2"].T                                                  # (256, A)
    return {
        "w1m": w1m, "b1r": p["b1"].reshape(1, c1),
        "w2t": w2t, "b2r": p["b2"].reshape(1, c2),
        "fw1m": fw1m, "fb1r": p["fb1"].reshape(1, 256),
        "fw2m": fw2m, "fb2r": p["fb2"].reshape(1, a),
    }


# ------------------------------- DQNCNN forward -------------------------------
@jax.jit
def dqn_cnn_forward(x, pp):
    """x: [B, C, H, W] float32 (PyTorch NCHW convention)."""
    assert x.shape[2] == 64 and x.shape[3] == 64, "fc_input_size forces 64x64 input"
    B = x.shape[0]
    x_nhwc = jnp.transpose(x, (0, 2, 3, 1))
    patches = _conv1_patches_grouped(x_nhwc)            # (B, 1632, 9*C)
    a2 = _conv_stack(patches, pp)                       # (B, 15, 15, 32)
    h = a2.reshape(B, _C2_OUT * _OH2 * _OH2)            # free row-major bitcast
    return _fc_stack(h, pp)                             # (B, action_size)


# ------------------------ deterministic parameter init ------------------------
def init_params(key, action_size, stack_size=1, channels=3):
    in_c = stack_size * channels
    ks = jax.random.split(key, 8)

    def u(k, shape, fan_in):
        bound = 1.0 / np.sqrt(fan_in)
        return jax.random.uniform(k, shape, jnp.float32, -bound, bound)

    return {
        "w1": u(ks[0], (16, in_c, 3, 3), in_c * 9),
        "b1": u(ks[1], (16,), in_c * 9),
        "w2": u(ks[2], (32, 16, 3, 3), 16 * 9),
        "b2": u(ks[3], (32,), 16 * 9),
        "fw1": u(ks[4], (256, 32 * 15 * 15), 32 * 15 * 15),
        "fb1": u(ks[5], (256,), 32 * 15 * 15),
        "fw2": u(ks[6], (action_size, 256), 256),
        "fb2": u(ks[7], (action_size,), 256),
    }


# ------------------------------ plain-JAX reference ---------------------------
def reference_forward(x, p):
    dn = ("NCHW", "OIHW", "NCHW")
    y = jax.lax.conv_general_dilated(x, p["w1"], (2, 2), "VALID",
                                     dimension_numbers=dn) + p["b1"][None, :, None, None]
    y = jax.nn.relu(y)
    y = jax.lax.conv_general_dilated(y, p["w2"], (2, 2), "VALID",
                                     dimension_numbers=dn) + p["b2"][None, :, None, None]
    y = jax.nn.relu(y)
    y = y.reshape(y.shape[0], -1)
    y = jax.nn.relu(y @ p["fw1"].T + p["fb1"])
    return y @ p["fw2"].T + p["fb2"]


if __name__ == "__main__":
    key = jax.random.PRNGKey(0)
    pkey, xkey = jax.random.split(key)

    action_size = 6
    params = init_params(pkey, action_size)
    packed = pack_params(params)      # one-time weight re-layout (hoisted out of forward)

    # fc_input_size = 32*15*15 forces a 64x64 input: 64 -(conv3/s2)-> 31 -(conv3/s2)-> 15.
    x = jax.random.uniform(xkey, (2, 3, 64, 64), dtype=jnp.float32)

    out = jax.block_until_ready(dqn_cnn_forward(x, packed))
    ref = jax.block_until_ready(reference_forward(x, params))

    assert out.shape == (2, action_size), out.shape
    np.testing.assert_allclose(np.asarray(out), np.asarray(ref), rtol=1e-3, atol=1e-3)
    print("KERNEL_OK")
</pallas_src>

<mosaic_0001>
module attributes {stable_mosaic.version = 11 : i64} {
  func.func @_conv_stack_kernel(%arg0: i32, %arg1: memref<1x1632x27xf32, #tpu.memory_space<vmem>>, %arg2: memref<27x16xf32, #tpu.memory_space<vmem>>, %arg3: memref<1x16xf32, #tpu.memory_space<vmem>>, %arg4: memref<3x3x16x32xf32, #tpu.memory_space<vmem>>, %arg5: memref<1x32xf32, #tpu.memory_space<vmem>>, %arg6: memref<1x15x15x32xf32, #tpu.memory_space<vmem>>) attributes {dimension_semantics = [#tpu.dimension_semantics<parallel>], iteration_bounds = array<i64: 2>, scalar_prefetch = 0 : i64, scratch_operands = 0 : i64, tpu.core_type = #tpu.core_type<tc>, window_params = [{transform_indices = @transform_0, window_bounds = array<i64: 1, 1632, 27>}, {pipeline_mode = #tpu.pipeline_mode<synchronous>, transform_indices = @transform_1, window_bounds = array<i64: 27, 16>}, {pipeline_mode = #tpu.pipeline_mode<synchronous>, transform_indices = @transform_2, window_bounds = array<i64: 1, 16>}, {pipeline_mode = #tpu.pipeline_mode<synchronous>, transform_indices = @transform_3, window_bounds = array<i64: 3, 3, 16, 32>}, {pipeline_mode = #tpu.pipeline_mode<synchronous>, transform_indices = @transform_4, window_bounds = array<i64: 1, 32>}, {transform_indices = @transform_5, window_bounds = array<i64: 1, 15, 15, 32>}]} {
    %c0 = arith.constant 0 : index
    %c0_0 = arith.constant 0 : index
    %c0_1 = arith.constant 0 : index
    %0 = vector.load %arg1[%c0, %c0_0, %c0_1] : memref<1x1632x27xf32, #tpu.memory_space<vmem>>, vector<1x1632x27xf32>
    %1 = vector.shape_cast %0 : vector<1x1632x27xf32> to vector<1632x27xf32>
    %c0_2 = arith.constant 0 : index
    %c0_3 = arith.constant 0 : index
    %2 = vector.load %arg2[%c0_2, %c0_3] : memref<27x16xf32, #tpu.memory_space<vmem>>, vector<27x16xf32>
    %cst = arith.constant dense<0.000000e+00> : vector<1632x16xf32>
    %3 = tpu.matmul %1, %2, %cst {dimension_numbers = #tpu.dot_dimension_numbers<[1], [0], [0], [1], [0, 0, 1, 1], [], []>} : vector<1632x27xf32>, vector<27x16xf32>, vector<1632x16xf32> -> vector<1632x16xf32>
    %c0_4 = arith.constant 0 : index
    %c0_5 = arith.constant 0 : index
    %4 = vector.load %arg3[%c0_4, %c0_5] : memref<1x16xf32, #tpu.memory_space<vmem>>, vector<1x16xf32>
    %5 = vector.broadcast %4 : vector<1x16xf32> to vector<1632x16xf32>
    %6 = arith.addf %3, %5 : vector<1632x16xf32>
    %cst_6 = arith.constant 0.000000e+00 : f32
    %7 = vector.broadcast %cst_6 : f32 to vector<1632x16xf32>
    %8 = arith.maximumf %6, %7 : vector<1632x16xf32>
    %9 = vector.shape_cast %8 : vector<1632x16xf32> to vector<4x17x24x16xf32>
    %c0_7 = arith.constant 0 : index
    %c0_8 = arith.constant 0 : index
    %c0_9 = arith.constant 0 : index
    %c0_10 = arith.constant 0 : index
    %10 = vector.load %arg4[%c0_7, %c0_8, %c0_9, %c0_10] : memref<3x3x16x32xf32, #tpu.memory_space<vmem>>, vector<3x3x16x32xf32>
    %cst_11 = arith.constant 0.000000e+00 : f32
    %11 = vector.broadcast %cst_11 : f32 to vector<256x32xf32>
    %12 = vector.extract_strided_slice %9 {offsets = [0, 0, 0, 0], sizes = [1, 16, 16, 16], strides = [1, 1, 1, 1]} : vector<4x17x24x16xf32> to vector<1x16x16x16xf32>
    %13 = vector.shape_cast %12 : vector<1x16x16x16xf32> to vector<16x16x16xf32>
    %14 = vector.shape_cast %13 : vector<16x16x16xf32> to vector<256x16xf32>
    %15 = vector.extract_strided_slice %10 {offsets = [0, 0, 0, 0], sizes = [1, 1, 16, 32], strides = [1, 1, 1, 1]} : vector<3x3x16x32xf32> to vector<1x1x16x32xf32>
    %16 = vector.shape_cast %15 : vector<1x1x16x32xf32> to vector<16x32xf32>
    %cst_12 = arith.constant dense<0.000000e+00> : vector<256x32xf32>
    %17 = tpu.matmul %14, %16, %cst_12 {dimension_numbers = #tpu.dot_dimension_numbers<[1], [0], [0], [1], [0, 0, 1, 1], [], []>} : vector<256x16xf32>, vector<16x32xf32>, vector<256x32xf32> -> vector<256x32xf32>
    %18 = arith.addf %11, %17 : vector<256x32xf32>
    %19 = vector.extract_strided_slice %9 {offsets = [1, 0, 0, 0], sizes = [1, 16, 16, 16], strides = [1, 1, 1, 1]} : vector<4x17x24x16xf32> to vector<1x16x16x16xf32>
    %20 = vector.shape_cast %19 : vector<1x16x16x16xf32> to vector<16x16x16xf32>
    %21 = vector.shape_cast %20 : vector<16x16x16xf32> to vector<256x16xf32>
    %22 = vector.extract_strided_slice %10 {offsets = [0, 1, 0, 0], sizes = [1, 1, 16, 32], strides = [1, 1, 1, 1]} : vector<3x3x16x32xf32> to vector<1x1x16x32xf32>
    %23 = vector.shape_cast %22 : vector<1x1x16x32xf32> to vector<16x32xf32>
    %cst_13 = arith.constant dense<0.000000e+00> : vector<256x32xf32>
    %24 = tpu.matmul %21, %23, %cst_13 {dimension_numbers = #tpu.dot_dimension_numbers<[1], [0], [0], [1], [0, 0, 1, 1], [], []>} : vector<256x16xf32>, vector<16x32xf32>, vector<256x32xf32> -> vector<256x32xf32>
    %25 = arith.addf %18, %24 : vector<256x32xf32>
    %26 = vector.extract_strided_slice %9 {offsets = [0, 0, 1, 0], sizes = [1, 16, 16, 16], strides = [1, 1, 1, 1]} : vector<4x17x24x16xf32> to vector<1x16x16x16xf32>
    %27 = vector.shape_cast %26 : vector<1x16x16x16xf32> to vector<16x16x16xf32>
    %28 = vector.shape_cast %27 : vector<16x16x16xf32> to vector<256x16xf32>
    %29 = vector.extract_strided_slice %10 {offsets = [0, 2, 0, 0], sizes = [1, 1, 16, 32], strides = [1, 1, 1, 1]} : vector<3x3x16x32xf32> to vector<1x1x16x32xf32>
    %30 = vector.shape_cast %29 : vector<1x1x16x32xf32> to vector<16x32xf32>
    %cst_14 = arith.constant dense<0.000000e+00> : vector<256x32xf32>
    %31 = tpu.matmul %28, %30, %cst_14 {dimension_numbers = #tpu.dot_dimension_numbers<[1], [0], [0], [1], [0, 0, 1, 1], [], []>} : vector<256x16xf32>, vector<16x32xf32>, vector<256x32xf32> -> vector<256x32xf32>
    %32 = arith.addf %25, %31 : vector<256x32xf32>
    %33 = vector.extract_strided_slice %9 {offsets = [2, 0, 0, 0], sizes = [1, 16, 16, 16], strides = [1, 1, 1, 1]} : vector<4x17x24x16xf32> to vector<1x16x16x16xf32>
    %34 = vector.shape_cast %33 : vector<1x16x16x16xf32> to vector<16x16x16xf32>
    %35 = vector.shape_cast %34 : vector<16x16x16xf32> to vector<256x16xf32>
    %36 = vector.extract_strided_slice %10 {offsets = [1, 0, 0, 0], sizes = [1, 1, 16, 32], strides = [1, 1, 1, 1]} : vector<3x3x16x32xf32> to vector<1x1x16x32xf32>
    %37 = vector.shape_cast %36 : vector<1x1x16x32xf32> to vector<16x32xf32>
    %cst_15 = arith.constant dense<0.000000e+00> : vector<256x32xf32>
    %38 = tpu.matmul %35, %37, %cst_15 {dimension_numbers = #tpu.dot_dimension_numbers<[1], [0], [0], [1], [0, 0, 1, 1], [], []>} : vector<256x16xf32>, vector<16x32xf32>, vector<256x32xf32> -> vector<256x32xf32>
    %39 = arith.addf %32, %38 : vector<256x32xf32>
    %40 = vector.extract_strided_slice %9 {offsets = [3, 0, 0, 0], sizes = [1, 16, 16, 16], strides = [1, 1, 1, 1]} : vector<4x17x24x16xf32> to vector<1x16x16x16xf32>
    %41 = vector.shape_cast %40 : vector<1x16x16x16xf32> to vector<16x16x16xf32>
    %42 = vector.shape_cast %41 : vector<16x16x16xf32> to vector<256x16xf32>
    %43 = vector.extract_strided_slice %10 {offsets = [1, 1, 0, 0], sizes = [1, 1, 16, 32], strides = [1, 1, 1, 1]} : vector<3x3x16x32xf32> to vector<1x1x16x32xf32>
    %44 = vector.shape_cast %43 : vector<1x1x16x32xf32> to vector<16x32xf32>
    %cst_16 = arith.constant dense<0.000000e+00> : vector<256x32xf32>
    %45 = tpu.matmul %42, %44, %cst_16 {dimension_numbers = #tpu.dot_dimension_numbers<[1], [0], [0], [1], [0, 0, 1, 1], [], []>} : vector<256x16xf32>, vector<16x32xf32>, vector<256x32xf32> -> vector<256x32xf32>
    %46 = arith.addf %39, %45 : vector<256x32xf32>
    %47 = vector.extract_strided_slice %9 {offsets = [2, 0, 1, 0], sizes = [1, 16, 16, 16], strides = [1, 1, 1, 1]} : vector<4x17x24x16xf32> to vector<1x16x16x16xf32>
    %48 = vector.shape_cast %47 : vector<1x16x16x16xf32> to vector<16x16x16xf32>
    %49 = vector.shape_cast %48 : vector<16x16x16xf32> to vector<256x16xf32>
    %50 = vector.extract_strided_slice %10 {offsets = [1, 2, 0, 0], sizes = [1, 1, 16, 32], strides = [1, 1, 1, 1]} : vector<3x3x16x32xf32> to vector<1x1x16x32xf32>
    %51 = vector.shape_cast %50 : vector<1x1x16x32xf32> to vector<16x32xf32>
    %cst_17 = arith.constant dense<0.000000e+00> : vector<256x32xf32>
    %52 = tpu.matmul %49, %51, %cst_17 {dimension_numbers = #tpu.dot_dimension_numbers<[1], [0], [0], [1], [0, 0, 1, 1], [], []>} : vector<256x16xf32>, vector<16x32xf32>, vector<256x32xf32> -> vector<256x32xf32>
    %53 = arith.addf %46, %52 : vector<256x32xf32>
    %54 = vector.extract_strided_slice %9 {offsets = [0, 1, 0, 0], sizes = [1, 16, 16, 16], strides = [1, 1, 1, 1]} : vector<4x17x24x16xf32> to vector<1x16x16x16xf32>
    %55 = vector.shape_cast %54 : vector<1x16x16x16xf32> to vector<16x16x16xf32>
    %56 = vector.shape_cast %55 : vector<16x16x16xf32> to vector<256x16xf32>
    %57 = vector.extract_strided_slice %10 {offsets = [2, 0, 0, 0], sizes = [1, 1, 16, 32], strides = [1, 1, 1, 1]} : vector<3x3x16x32xf32> to vector<1x1x16x32xf32>
    %58 = vector.shape_cast %57 : vector<1x1x16x32xf32> to vector<16x32xf32>
    %cst_18 = arith.constant dense<0.000000e+00> : vector<256x32xf32>
    %59 = tpu.matmul %56, %58, %cst_18 {dimension_numbers = #tpu.dot_dimension_numbers<[1], [0], [0], [1], [0, 0, 1, 1], [], []>} : vector<256x16xf32>, vector<16x32xf32>, vector<256x32xf32> -> vector<256x32xf32>
    %60 = arith.addf %53, %59 : vector<256x32xf32>
    %61 = vector.extract_strided_slice %9 {offsets = [1, 1, 0, 0], sizes = [1, 16, 16, 16], strides = [1, 1, 1, 1]} : vector<4x17x24x16xf32> to vector<1x16x16x16xf32>
    %62 = vector.shape_cast %61 : vector<1x16x16x16xf32> to vector<16x16x16xf32>
    %63 = vector.shape_cast %62 : vector<16x16x16xf32> to vector<256x16xf32>
    %64 = vector.extract_strided_slice %10 {offsets = [2, 1, 0, 0], sizes = [1, 1, 16, 32], strides = [1, 1, 1, 1]} : vector<3x3x16x32xf32> to vector<1x1x16x32xf32>
    %65 = vector.shape_cast %64 : vector<1x1x16x32xf32> to vector<16x32xf32>
    %cst_19 = arith.constant dense<0.000000e+00> : vector<256x32xf32>
    %66 = tpu.matmul %63, %65, %cst_19 {dimension_numbers = #tpu.dot_dimension_numbers<[1], [0], [0], [1], [0, 0, 1, 1], [], []>} : vector<256x16xf32>, vector<16x32xf32>, vector<256x32xf32> -> vector<256x32xf32>
    %67 = arith.addf %60, %66 : vector<256x32xf32>
    %68 = vector.extract_strided_slice %9 {offsets = [0, 1, 1, 0], sizes = [1, 16, 16, 16], strides = [1, 1, 1, 1]} : vector<4x17x24x16xf32> to vector<1x16x16x16xf32>
    %69 = vector.shape_cast %68 : vector<1x16x16x16xf32> to vector<16x16x16xf32>
    %70 = vector.shape_cast %69 : vector<16x16x16xf32> to vector<256x16xf32>
    %71 = vector.extract_strided_slice %10 {offsets = [2, 2, 0, 0], sizes = [1, 1, 16, 32], strides = [1, 1, 1, 1]} : vector<3x3x16x32xf32> to vector<1x1x16x32xf32>
    %72 = vector.shape_cast %71 : vector<1x1x16x32xf32> to vector<16x32xf32>
    %cst_20 = arith.constant dense<0.000000e+00> : vector<256x32xf32>
    %73 = tpu.matmul %70, %72, %cst_20 {dimension_numbers = #tpu.dot_dimension_numbers<[1], [0], [0], [1], [0, 0, 1, 1], [], []>} : vector<256x16xf32>, vector<16x32xf32>, vector<256x32xf32> -> vector<256x32xf32>
    %74 = arith.addf %67, %73 : vector<256x32xf32>
    %c0_21 = arith.constant 0 : index
    %c0_22 = arith.constant 0 : index
    %75 = vector.load %arg5[%c0_21, %c0_22] : memref<1x32xf32, #tpu.memory_space<vmem>>, vector<1x32xf32>
    %76 = vector.broadcast %75 : vector<1x32xf32> to vector<256x32xf32>
    %77 = arith.addf %74, %76 : vector<256x32xf32>
    %cst_23 = arith.constant 0.000000e+00 : f32
    %78 = vector.broadcast %cst_23 : f32 to vector<256x32xf32>
    %79 = arith.maximumf %77, %78 : vector<256x32xf32>
    %80 = vector.shape_cast %79 : vector<256x32xf32> to vector<16x16x32xf32>
    %81 = vector.extract_strided_slice %80 {offsets = [0, 0, 0], sizes = [15, 15, 32], strides = [1, 1, 1]} : vector<16x16x32xf32> to vector<15x15x32xf32>
    %c0_24 = arith.constant 0 : index
    %c0_25 = arith.constant 0 : index
    %c0_26 = arith.constant 0 : index
    %c0_27 = arith.constant 0 : index
    %82 = vector.load %arg6[%c0_24, %c0_25, %c0_26, %c0_27] : memref<1x15x15x32xf32, #tpu.memory_space<vmem>>, vector<1x15x15x32xf32>
    %83 = vector.shape_cast %82 : vector<1x15x15x32xf32> to vector<15x15x32xf32>
    %84 = vector.shape_cast %81 : vector<15x15x32xf32> to vector<1x15x15x32xf32>
    tpu.vector_store %arg6[%c0_24, %c0_25, %c0_26, %c0_27], %84 {strides = array<i32>} : memref<1x15x15x32xf32, #tpu.memory_space<vmem>>, vector<1x15x15x32xf32>,
    return
  }
  func.func @transform_0(%arg0: i32) -> (i32, i32, i32) {
    %c0_i32 = arith.constant 0 : i32
    %c0_i32_0 = arith.constant 0 : i32
    %c0_i32_1 = arith.constant 0 : i32
    return %arg0, %c0_i32, %c0_i32_0 : i32, i32, i32
  }
  func.func @transform_1(%arg0: i32) -> (i32, i32) {
    %c0_i32 = arith.constant 0 : i32
    %c0_i32_0 = arith.constant 0 : i32
    %c0_i32_1 = arith.constant 0 : i32
    return %c0_i32, %c0_i32_0 : i32, i32
  }
  func.func @transform_2(%arg0: i32) -> (i32, i32) {
    %c0_i32 = arith.constant 0 : i32
    %c0_i32_0 = arith.constant 0 : i32
    %c0_i32_1 = arith.constant 0 : i32
    return %c0_i32, %c0_i32_0 : i32, i32
  }
  func.func @transform_3(%arg0: i32) -> (i32, i32, i32, i32) {
    %c0_i32 = arith.constant 0 : i32
    %c0_i32_0 = arith.constant 0 : i32
    %c0_i32_1 = arith.constant 0 : i32
    %c0_i32_2 = arith.constant 0 : i32
    %c0_i32_3 = arith.constant 0 : i32
    return %c0_i32, %c0_i32_0, %c0_i32_1, %c0_i32_2 : i32, i32, i32, i32
  }
  func.func @transform_4(%arg0: i32) -> (i32, i32) {
    %c0_i32 = arith.constant 0 : i32
    %c0_i32_0 = arith.constant 0 : i32
    %c0_i32_1 = arith.constant 0 : i32
    return %c0_i32, %c0_i32_0 : i32, i32
  }
  func.func @transform_5(%arg0: i32) -> (i32, i32, i32, i32) {
    %c0_i32 = arith.constant 0 : i32
    %c0_i32_0 = arith.constant 0 : i32
    %c0_i32_1 = arith.constant 0 : i32
    %c0_i32_2 = arith.constant 0 : i32
    return %arg0, %c0_i32, %c0_i32_0, %c0_i32_1 : i32, i32, i32, i32
  }
}

module attributes {stable_mosaic.version = 11 : i64} {
  func.func @_fc_stack_kernel(%arg0: i32, %arg1: memref<2x7200xf32, #tpu.memory_space<vmem>>, %arg2: memref<7200x256xf32, #tpu.memory_space<vmem>>, %arg3: memref<1x256xf32, #tpu.memory_space<vmem>>, %arg4: memref<256x6xf32, #tpu.memory_space<vmem>>, %arg5: memref<1x6xf32, #tpu.memory_space<vmem>>, %arg6: memref<2x6xf32, #tpu.memory_space<vmem>>) attributes {dimension_semantics = [#tpu.dimension_semantics<arbitrary>], iteration_bounds = array<i64: 1>, scalar_prefetch = 0 : i64, scratch_operands = 0 : i64, tpu.core_type = #tpu.core_type<tc>, window_params = [{pipeline_mode = #tpu.pipeline_mode<synchronous>, transform_indices = @transform_0, window_bounds = array<i64: 2, 7200>}, {pipeline_mode = #tpu.pipeline_mode<synchronous>, transform_indices = @transform_1, window_bounds = array<i64: 7200, 256>}, {pipeline_mode = #tpu.pipeline_mode<synchronous>, transform_indices = @transform_2, window_bounds = array<i64: 1, 256>}, {pipeline_mode = #tpu.pipeline_mode<synchronous>, transform_indices = @transform_3, window_bounds = array<i64: 256, 6>}, {pipeline_mode = #tpu.pipeline_mode<synchronous>, transform_indices = @transform_4, window_bounds = array<i64: 1, 6>}, {pipeline_mode = #tpu.pipeline_mode<synchronous>, transform_indices = @transform_5, window_bounds = array<i64: 2, 6>}]} {
    %c0 = arith.constant 0 : index
    %c0_0 = arith.constant 0 : index
    %0 = vector.load %arg1[%c0, %c0_0] : memref<2x7200xf32, #tpu.memory_space<vmem>>, vector<2x7200xf32>
    %c0_1 = arith.constant 0 : index
    %c0_2 = arith.constant 0 : index
    %1 = vector.load %arg2[%c0_1, %c0_2] : memref<7200x256xf32, #tpu.memory_space<vmem>>, vector<7200x256xf32>
    %cst = arith.constant dense<0.000000e+00> : vector<2x256xf32>
    %2 = tpu.matmul %0, %1, %cst {dimension_numbers = #tpu.dot_dimension_numbers<[1], [0], [0], [1], [0, 0, 1, 1], [], []>} : vector<2x7200xf32>, vector<7200x256xf32>, vector<2x256xf32> -> vector<2x256xf32>
    %c0_3 = arith.constant 0 : index
    %c0_4 = arith.constant 0 : index
    %3 = vector.load %arg3[%c0_3, %c0_4] : memref<1x256xf32, #tpu.memory_space<vmem>>, vector<1x256xf32>
    %4 = vector.broadcast %3 : vector<1x256xf32> to vector<2x256xf32>
    %5 = arith.addf %2, %4 : vector<2x256xf32>
    %cst_5 = arith.constant 0.000000e+00 : f32
    %6 = vector.broadcast %cst_5 : f32 to vector<2x256xf32>
    %7 = arith.maximumf %5, %6 : vector<2x256xf32>
    %c0_6 = arith.constant 0 : index
    %c0_7 = arith.constant 0 : index
    %8 = vector.load %arg4[%c0_6, %c0_7] : memref<256x6xf32, #tpu.memory_space<vmem>>, vector<256x6xf32>
    %cst_8 = arith.constant dense<0.000000e+00> : vector<2x6xf32>
    %9 = tpu.matmul %7, %8, %cst_8 {dimension_numbers = #tpu.dot_dimension_numbers<[1], [0], [0], [1], [0, 0, 1, 1], [], []>} : vector<2x256xf32>, vector<256x6xf32>, vector<2x6xf32> -> vector<2x6xf32>
    %c0_9 = arith.constant 0 : index
    %c0_10 = arith.constant 0 : index
    %10 = vector.load %arg5[%c0_9, %c0_10] : memref<1x6xf32, #tpu.memory_space<vmem>>, vector<1x6xf32>
    %11 = vector.broadcast %10 : vector<1x6xf32> to vector<2x6xf32>
    %12 = arith.addf %9, %11 : vector<2x6xf32>
    %c0_11 = arith.constant 0 : index
    %c0_12 = arith.constant 0 : index
    %13 = vector.load %arg6[%c0_11, %c0_12] : memref<2x6xf32, #tpu.memory_space<vmem>>, vector<2x6xf32>
    tpu.vector_store %arg6[%c0_11, %c0_12], %12 {strides = array<i32>} : memref<2x6xf32, #tpu.memory_space<vmem>>, vector<2x6xf32>,
    return
  }
  func.func @transform_0(%arg0: i32) -> (i32, i32) {
    %c0_i32 = arith.constant 0 : i32
    %c0_i32_0 = arith.constant 0 : i32
    %c0_i32_1 = arith.constant 0 : i32
    return %c0_i32, %c0_i32_0 : i32, i32
  }
  func.func @transform_1(%arg0: i32) -> (i32, i32) {
    %c0_i32 = arith.constant 0 : i32
    %c0_i32_0 = arith.constant 0 : i32
    %c0_i32_1 = arith.constant 0 : i32
    return %c0_i32, %c0_i32_0 : i32, i32
  }
  func.func @transform_2(%arg0: i32) -> (i32, i32) {
    %c0_i32 = arith.constant 0 : i32
    %c0_i32_0 = arith.constant 0 : i32
    %c0_i32_1 = arith.constant 0 : i32
    return %c0_i32, %c0_i32_0 : i32, i32
  }
  func.func @transform_3(%arg0: i32) -> (i32, i32) {
    %c0_i32 = arith.constant 0 : i32
    %c0_i32_0 = arith.constant 0 : i32
    %c0_i32_1 = arith.constant 0 : i32
    return %c0_i32, %c0_i32_0 : i32, i32
  }
  func.func @transform_4(%arg0: i32) -> (i32, i32) {
    %c0_i32 = arith.constant 0 : i32
    %c0_i32_0 = arith.constant 0 : i32
    %c0_i32_1 = arith.constant 0 : i32
    return %c0_i32, %c0_i32_0 : i32, i32
  }
  func.func @transform_5(%arg0: i32) -> (i32, i32) {
    %c0_i32 = arith.constant 0 : i32
    %c0_i32_0 = arith.constant 0 : i32
    %c0_i32_1 = arith.constant 0 : i32
    return %c0_i32, %c0_i32_0 : i32, i32
  }
}

</mosaic_0001>

<llo_original>
// kernel: dqn_cnn_forward.2
$region0: #{dqn_cnn_forward.2}
  #allocation0 [shape = 'u32[]', space=smem, size = 0x4, offset = 0x4, fixed_abs, tag = 'smem constant byte address 0x4 - core index']
  #allocation1 [shape = 'u32[144,128]{1,0:T(1,128)}', space=vmem, size = 0x12000, scoped, tag = 'internal scratch']
  %s0 = inlined_call_operand.vmem [shape: f32[2,1632,27], index: 0, kind: input, shape index: {}]
  %s1 = inlined_call_operand.vmem [shape: f32[27,16], index: 1, kind: input, shape index: {}]
  %s2 = inlined_call_operand.vmem [shape: f32[1,16], index: 2, kind: input, shape index: {}]
  %s3 = inlined_call_operand.vmem [shape: f32[3,3,16,32], index: 3, kind: input, shape index: {}]
  %s4 = inlined_call_operand.vmem [shape: f32[1,32], index: 4, kind: input, shape index: {}]
  %s5 = inlined_call_operand.vmem [shape: f32[2,15,15,32], index: 5, kind: output, shape index: {}]
  %s6 = sld [smem:[#allocation0]]
  $region53: #{dqn_cnn_forward.2} parent=0
    _
  %s8 = ssub.s32 1, %s6
  %s9 = scalar_select 0, %s8, %s6
  loop: start=0, step=1, limit=4
  $region2: #{dqn_cnn_forward.2} parent=0 // loop_pre_header
    _
  $region3: #{dqn_cnn_forward.2} parent=0 // loop_header
    %s11 = sphi 0, %s15
    %p12 = scmp.ge.s32.totalorder %s11, 4
    %s21 = sphi 0, %s23
    %s24 = sphi 0, %s21
    %s25 = sphi 0, %s24
    %s41 = sphi 0, %s25
    %s45 = sphi 0, %s45
    %s47 = sphi 0, %s45
    %s48 = sphi 0, %s47
    %s62 = sphi 0, %s48
    %s66 = sphi 0, %s66
    %s68 = sphi 0, %s66
    %s69 = sphi 0, %s68
    %s83 = sphi 0, %s69
    %s87 = sphi 0, %s87
    %s89 = sphi 0, %s87
    %s90 = sphi 0, %s89
    %s104 = sphi 0, %s90
    %s108 = sphi 0, %s108
    %s110 = sphi 0, %s108
    %s111 = sphi 0, %s110
    %s125 = sphi 0, %s111
    %s131 = sphi 0, %s133
    %s134 = sphi 0, %s131
    %s135 = sphi 0, %s134
    %s151 = sphi 0, %s135
  $region4: #{dqn_cnn_forward.2} parent=0 // loop_header_branch
    %14 = sbr.rel (%p12) target = $region8
  $region5: #{dqn_cnn_forward.2} parent=0 // loop_body
    %s16 = ssub.s32 %s11, 1
    %s17 = ssub.s32 %s11, 2
    %s18 = sadd.s32 %s11, 1
    %s19 = ssub.s32 %s11, %s18
    %p20 = scmp.eq.s32.totalorder %s19, 0
    %s22 = sadd.s32 %s21, 1
    %s23 = scalar_select %p20, %s21, %s22
    %p26 = pneg %p20
    %p27 = scmp.eq.s32.totalorder %s11, 1
    %p28 = por %p26, %p27
    %p29 = scmp.ne.s32.totalorder %s21, %s24
    %p30 = scmp.eq.s32.totalorder %s11, 0
    %p31 = por %p29, %p30
    %p32 = scmp.ne.s32.totalorder %s21, %s24
    %p33 = scmp.eq.s32.totalorder %s16, 1
    %p34 = por %p32, %p33
    %p35 = scmp.ne.s32.totalorder %s24, %s25
    %p36 = scmp.eq.s32.totalorder %s16, 0
    %p37 = por %p35, %p36
    %p38 = scmp.ne.s32.totalorder %s24, %s25
    %p39 = scmp.eq.s32.totalorder %s17, 1
    %p40 = por %p38, %p39
    %p42 = scmp.ne.s32.totalorder %s25, %s41
    %p43 = scmp.eq.s32.totalorder %s17, 0
    %p44 = por %p42, %p43
    %s46 = sadd.s32 %s45, 1
    %p49 = scmp.eq.s32.totalorder %s11, 1
    %p50 = scmp.ne.s32.totalorder %s45, %s47
    %p51 = scmp.eq.s32.totalorder %s11, 0
    %p52 = por %p50, %p51
    %p53 = scmp.ne.s32.totalorder %s45, %s47
    %p54 = scmp.eq.s32.totalorder %s16, 1
    %p55 = por %p53, %p54
    %p56 = scmp.ne.s32.totalorder %s47, %s48
    %p57 = scmp.eq.s32.totalorder %s16, 0
    %p58 = por %p56, %p57
    %p59 = scmp.ne.s32.totalorder %s47, %s48
    %p60 = scmp.eq.s32.totalorder %s17, 1
    %p61 = por %p59, %p60
    %p63 = scmp.ne.s32.totalorder %s48, %s62
    %p64 = scmp.eq.s32.totalorder %s17, 0
    %p65 = por %p63, %p64
    %s67 = sadd.s32 %s66, 1
    %p70 = scmp.eq.s32.totalorder %s11, 1
    %p71 = scmp.ne.s32.totalorder %s66, %s68
    %p72 = scmp.eq.s32.totalorder %s11, 0
    %p73 = por %p71, %p72
    %p74 = scmp.ne.s32.totalorder %s66, %s68
    %p75 = scmp.eq.s32.totalorder %s16, 1
    %p76 = por %p74, %p75
    %p77 = scmp.ne.s32.totalorder %s68, %s69
    %p78 = scmp.eq.s32.totalorder %s16, 0
    %p79 = por %p77, %p78
    %p80 = scmp.ne.s32.totalorder %s68, %s69
    %p81 = scmp.eq.s32.totalorder %s17, 1
    %p82 = por %p80, %p81
    %p84 = scmp.ne.s32.totalorder %s69, %s83
    %p85 = scmp.eq.s32.totalorder %s17, 0
    %p86 = por %p84, %p85
    %s88 = sadd.s32 %s87, 1
    %p91 = scmp.eq.s32.totalorder %s11, 1
    %p92 = scmp.ne.s32.totalorder %s87, %s89
    %p93 = scmp.eq.s32.totalorder %s11, 0
    %p94 = por %p92, %p93
    %p95 = scmp.ne.s32.totalorder %s87, %s89
    %p96 = scmp.eq.s32.totalorder %s16, 1
    %p97 = por %p95, %p96
    %p98 = scmp.ne.s32.totalorder %s89, %s90
    %p99 = scmp.eq.s32.totalorder %s16, 0
    %p100 = por %p98, %p99
    %p101 = scmp.ne.s32.totalorder %s89, %s90
    %p102 = scmp.eq.s32.totalorder %s17, 1
    %p103 = por %p101, %p102
    %p105 = scmp.ne.s32.totalorder %s90, %s104
    %p106 = scmp.eq.s32.totalorder %s17, 0
    %p107 = por %p105, %p106
    %s109 = sadd.s32 %s108, 1
    %p112 = scmp.eq.s32.totalorder %s11, 1
    %p113 = scmp.ne.s32.totalorder %s108, %s110
    %p114 = scmp.eq.s32.totalorder %s11, 0
    %p115 = por %p113, %p114
    %p116 = scmp.ne.s32.totalorder %s108, %s110
    %p117 = scmp.eq.s32.totalorder %s16, 1
    %p118 = por %p116, %p117
    %p119 = scmp.ne.s32.totalorder %s110, %s111
    %p120 = scmp.eq.s32.totalorder %s16, 0
    %p121 = por %p119, %p120
    %p122 = scmp.ne.s32.totalorder %s110, %s111
    %p123 = scmp.eq.s32.totalorder %s17, 1
    %p124 = por %p122, %p123
    %p126 = scmp.ne.s32.totalorder %s111, %s125
    %p127 = scmp.eq.s32.totalorder %s17, 0
    %p128 = por %p126, %p127
    %s129 = ssub.s32 %s11, %s18
    %p130 = scmp.eq.s32.totalorder %s129, 0
    %s132 = sadd.s32 %s131, 1
    %s133 = scalar_select %p130, %s131, %s132
    %p136 = pneg %p130
    %p137 = scmp.eq.s32.totalorder %s11, 1
    %p138 = por %p136, %p137
    %p139 = scmp.ne.s32.totalorder %s131, %s134
    %p140 = scmp.eq.s32.totalorder %s11, 0
    %p141 = por %p139, %p140
    %p142 = scmp.ne.s32.totalorder %s131, %s134
    %p143 = scmp.eq.s32.totalorder %s16, 1
    %p144 = por %p142, %p143
    %p145 = scmp.ne.s32.totalorder %s134, %s135
    %p146 = scmp.eq.s32.totalorder %s16, 0
    %p147 = por %p145, %p146
    %p148 = scmp.ne.s32.totalorder %s134, %s135
    %p149 = scmp.eq.s32.totalorder %s17, 1
    %p150 = por %p148, %p149
    %p152 = scmp.ne.s32.totalorder %s135, %s151
    %p153 = scmp.eq.s32.totalorder %s17, 0
    %p154 = por %p152, %p153
    %p155 = scmp.le.s32.totalorder 1, %s11
    %p156 = scmp.lt.s32.totalorder %s11, 3
    %p157 = pnand %p155, %p156
    %p158 = pneg %p157
    // Predicated region
    $region9: #{dqn_cnn_forward.2} parent=5 // pred_check
      _
    $region10: #{dqn_cnn_forward.2} parent=5 // pred_check_branch
      %160 = sbr.rel (%p157) target = $region12
    $region11: #{dqn_cnn_forward.2} parent=5 // pred_region
      %s161 = ssub.s32 %s11, 1
      // Predicated region
      $region13: #{dqn_cnn_forward.2} parent=11 // pred_check
        %p162 = pneg %p58
      $region14: #{dqn_cnn_forward.2} parent=11 // pred_check_branch
        %164 = sbr.rel (%p162) target = $region16
      $region15: #{dqn_cnn_forward.2} parent=11 // pred_region
        _
      $region16: #{dqn_cnn_forward.2} parent=11 // pred_fallthru
        _
      // Predicated region
      $region17: #{dqn_cnn_forward.2} parent=11 // pred_check
        %p165 = pneg %p79
      $region18: #{dqn_cnn_forward.2} parent=11 // pred_check_branch
        %167 = sbr.rel (%p165) target = $region20
      $region19: #{dqn_cnn_forward.2} parent=11 // pred_region
        _
      $region20: #{dqn_cnn_forward.2} parent=11 // pred_fallthru
        _
      // Predicated region
      $region21: #{dqn_cnn_forward.2} parent=11 // pred_check
        %p168 = pneg %p100
      $region22: #{dqn_cnn_forward.2} parent=11 // pred_check_branch
        %170 = sbr.rel (%p168) target = $region24
      $region23: #{dqn_cnn_forward.2} parent=11 // pred_region
        _
      $region24: #{dqn_cnn_forward.2} parent=11 // pred_fallthru
        _
      // Predicated region
      $region25: #{dqn_cnn_forward.2} parent=11 // pred_check
        %p171 = pneg %p121
      $region26: #{dqn_cnn_forward.2} parent=11 // pred_check_branch
        %173 = sbr.rel (%p171) target = $region28
      $region27: #{dqn_cnn_forward.2} parent=11 // pred_region
        _
      $region28: #{dqn_cnn_forward.2} parent=11 // pred_fallthru
        _
    $region12: #{dqn_cnn_forward.2} parent=5 // pred_fallthru
      _
    %p174 = scmp.lt.s32.totalorder %s11, 2
    // Predicated region
    $region29: #{dqn_cnn_forward.2} parent=5 // pred_check
      %p175 = pneg %p174
    $region30: #{dqn_cnn_forward.2} parent=5 // pred_check_branch
      %177 = sbr.rel (%p175) target = $region32
    $region31: #{dqn_cnn_forward.2} parent=5 // pred_region
      // Predicated region
      $region33: #{dqn_cnn_forward.2} parent=31 // pred_check
        %p178 = pneg %p31
      $region34: #{dqn_cnn_forward.2} parent=31 // pred_check_branch
        %180 = sbr.rel (%p178) target = $region36
      $region35: #{dqn_cnn_forward.2} parent=31 // pred_region
        %p181 = scmp.lt.s32.totalorder %s11, 1
        %s182 = scalar_select %p181, %s11, 1
        %s183 = smul.addr %s182, 204
        %s184 = smul.addr %s183, 8
        %s185 = scalar_lea.vmem %s0, %s184
      $region36: #{dqn_cnn_forward.2} parent=31 // pred_fallthru
        _
    $region32: #{dqn_cnn_forward.2} parent=5 // pred_fallthru
      _
    %p186 = scmp.le.s32.totalorder 1, %s11
    %p187 = scmp.lt.s32.totalorder %s11, 3
    %p188 = pnand %p186, %p187
    %p189 = pneg %p188
    // Predicated region
    $region37: #{dqn_cnn_forward.2} parent=5 // pred_check
      _
    $region38: #{dqn_cnn_forward.2} parent=5 // pred_check_branch
      %191 = sbr.rel (%p188) target = $region40
    $region39: #{dqn_cnn_forward.2} parent=5 // pred_region
      %s192 = ssub.s32 %s11, 1
      %p193 = scmp.lt.s32.totalorder %s16, 1
      %s194 = scalar_select %p193, %s16, 1
      %s195 = smul.addr %s194, 204
      %s196 = smul.addr %s195, 8
      %s197 = scalar_lea.vmem %s0, %s196
      %p198 = pneg %p37
      %p199 = pneg %p34
      %p200 = pneg %p58
      %p201 = pneg %p55
      %p202 = pneg %p79
      %p203 = pneg %p76
      %p204 = pneg %p100
      %p205 = pneg %p97
      %p206 = pneg %p121
      %p207 = pneg %p118
      %p208 = pneg %p147
      %p209 = pneg %p144
      %p210 = scmp.lt.s32.totalorder %s16, 1
      %s211 = scalar_select %p210, %s16, 1
      %s212 = smul.addr %s211, 30
      %s213 = smul.addr %s212, 8
      %s214 = scalar_lea.vmem %s5, %s213
      %p215 = scmp.lt.s32.totalorder %s16, 1
      %s216 = scalar_select %p215, %s16, 1
      %s217 = smul.addr %s216, 204
      %s218 = smul.addr %s217, 8
      %s219 = scalar_lea.vmem %s0, %s218
      %p220 = scmp.lt.s32.totalorder %s16, 1
      %s221 = scalar_select %p220, %s16, 1
      %s222 = smul.addr %s221, 30
      %s223 = smul.addr %s222, 8
      %s224 = scalar_lea.vmem %s5, %s223
      %v225 = vld [vmem:[%s219] sm:$0xff]
      %v226 = vld [vmem:[%s219 + $0x8] sm:$0xff]
      %v227 = vld [vmem:[%s219 + $0x10] sm:$0xff]
      %v228 = vld [vmem:[%s219 + $0x18] sm:$0xff]
      %v229 = vld [vmem:[%s219 + $0x20] sm:$0xff]
      %v230 = vld [vmem:[%s219 + $0x28] sm:$0xff]
      %v231 = vld [vmem:[%s219 + $0x30] sm:$0xff]
      %v232 = vld [vmem:[%s219 + $0x38] sm:$0xff]
      %v233 = vld [vmem:[%s219 + $0x40] sm:$0xff]
      %v234 = vld [vmem:[%s219 + $0x48] sm:$0xff]
      %v235 = vld [vmem:[%s219 + $0x50] sm:$0xff]
      %v236 = vld [vmem:[%s219 + $0x58] sm:$0xff]
      %v237 = vld [vmem:[%s219 + $0x60] sm:$0xff]
      %v238 = vld [vmem:[%s219 + $0x68] sm:$0xff]
      %v239 = vld [vmem:[%s219 + $0x70] sm:$0xff]
      %v240 = vld [vmem:[%s219 + $0x78] sm:$0xff]
      %v241 = vld [vmem:[%s219 + $0x80] sm:$0xff]
      %v242 = vld [vmem:[%s219 + $0x88] sm:$0xff]
      %v243 = vld [vmem:[%s219 + $0x90] sm:$0xff]
      %v244 = vld [vmem:[%s219 + $0x98] sm:$0xff]
      %v245 = vld [vmem:[%s219 + $0xa0] sm:$0xff]
      %v246 = vld [vmem:[%s219 + $0xa8] sm:$0xff]
      %v247 = vld [vmem:[%s219 + $0xb0] sm:$0xff]
      %v248 = vld [vmem:[%s219 + $0xb8] sm:$0xff]
      %v249 = vld [vmem:[%s219 + $0xc0] sm:$0xff]
      %v250 = vld [vmem:[%s219 + $0xc8] sm:$0xff]
      %v251 = vld [vmem:[%s219 + $0xd0] sm:$0xff]
      %v252 = vld [vmem:[%s219 + $0xd8] sm:$0xff]
      %v253 = vld [vmem:[%s219 + $0xe0] sm:$0xff]
      %v254 = vld [vmem:[%s219 + $0xe8] sm:$0xff]
      %v255 = vld [vmem:[%s219 + $0xf0] sm:$0xff]
      %v256 = vld [vmem:[%s219 + $0xf8] sm:$0xff]
      %v257 = vld [vmem:[%s219 + $0x100] sm:$0xff]
      %v258 = vld [vmem:[%s219 + $0x108] sm:$0xff]
      %v259 = vld [vmem:[%s219 + $0x110] sm:$0xff]
      %v260 = vld [vmem:[%s219 + $0x118] sm:$0xff]
      %v261 = vld [vmem:[%s219 + $0x120] sm:$0xff]
      %v262 = vld [vmem:[%s219 + $0x128] sm:$0xff]
      %v263 = vld [vmem:[%s219 + $0x130] sm:$0xff]
      %v264 = vld [vmem:[%s219 + $0x138] sm:$0xff]
      %v265 = vld [vmem:[%s219 + $0x140] sm:$0xff]
      %v266 = vld [vmem:[%s219 + $0x148] sm:$0xff]
      %v267 = vld [vmem:[%s219 + $0x150] sm:$0xff]
      %v268 = vld [vmem:[%s219 + $0x158] sm:$0xff]
      %v269 = vld [vmem:[%s219 + $0x160] sm:$0xff]
      %v270 = vld [vmem:[%s219 + $0x168] sm:$0xff]
      %v271 = vld [vmem:[%s219 + $0x170] sm:$0xff]
      %v272 = vld [vmem:[%s219 + $0x178] sm:$0xff]
      %v273 = vld [vmem:[%s219 + $0x180] sm:$0xff]
      %v274 = vld [vmem:[%s219 + $0x188] sm:$0xff]
      %v275 = vld [vmem:[%s219 + $0x190] sm:$0xff]
      %v276 = vld [vmem:[%s219 + $0x198] sm:$0xff]
      %v277 = vld [vmem:[%s219 + $0x1a0] sm:$0xff]
      %v278 = vld [vmem:[%s219 + $0x1a8] sm:$0xff]
      %v279 = vld [vmem:[%s219 + $0x1b0] sm:$0xff]
      %v280 = vld [vmem:[%s219 + $0x1b8] sm:$0xff]
      %v281 = vld [vmem:[%s219 + $0x1c0] sm:$0xff]
      %v282 = vld [vmem:[%s219 + $0x1c8] sm:$0xff]
      %v283 = vld [vmem:[%s219 + $0x1d0] sm:$0xff]
      %v284 = vld [vmem:[%s219 + $0x1d8] sm:$0xff]
      %v285 = vld [vmem:[%s219 + $0x1e0] sm:$0xff]
      %v286 = vld [vmem:[%s219 + $0x1e8] sm:$0xff]
      %v287 = vld [vmem:[%s219 + $0x1f0] sm:$0xff]
      %v288 = vld [vmem:[%s219 + $0x1f8] sm:$0xff]
      %v289 = vld [vmem:[%s219 + $0x200] sm:$0xff]
      %v290 = vld [vmem:[%s219 + $0x208] sm:$0xff]
      %v291 = vld [vmem:[%s219 + $0x210] sm:$0xff]
      %v292 = vld [vmem:[%s219 + $0x218] sm:$0xff]
      %v293 = vld [vmem:[%s219 + $0x220] sm:$0xff]
      %v294 = vld [vmem:[%s219 + $0x228] sm:$0xff]
      %v295 = vld [vmem:[%s219 + $0x230] sm:$0xff]
      %v296 = vld [vmem:[%s219 + $0x238] sm:$0xff]
      %v297 = vld [vmem:[%s219 + $0x240] sm:$0xff]
      %v298 = vld [vmem:[%s219 + $0x248] sm:$0xff]
      %v299 = vld [vmem:[%s219 + $0x250] sm:$0xff]
      %v300 = vld [vmem:[%s219 + $0x258] sm:$0xff]
      %v301 = vld [vmem:[%s219 + $0x260] sm:$0xff]
      %v302 = vld [vmem:[%s219 + $0x268] sm:$0xff]
      %v303 = vld [vmem:[%s219 + $0x270] sm:$0xff]
      %v304 = vld [vmem:[%s219 + $0x278] sm:$0xff]
      %v305 = vld [vmem:[%s219 + $0x280] sm:$0xff]
      %v306 = vld [vmem:[%s219 + $0x288] sm:$0xff]
      %v307 = vld [vmem:[%s219 + $0x290] sm:$0xff]
      %v308 = vld [vmem:[%s219 + $0x298] sm:$0xff]
      %v309 = vld [vmem:[%s219 + $0x2a0] sm:$0xff]
      %v310 = vld [vmem:[%s219 + $0x2a8] sm:$0xff]
      %v311 = vld [vmem:[%s219 + $0x2b0] sm:$0xff]
      %v312 = vld [vmem:[%s219 + $0x2b8] sm:$0xff]
      %v313 = vld [vmem:[%s219 + $0x2c0] sm:$0xff]
      %v314 = vld [vmem:[%s219 + $0x2c8] sm:$0xff]
      %v315 = vld [vmem:[%s219 + $0x2d0] sm:$0xff]
      %v316 = vld [vmem:[%s219 + $0x2d8] sm:$0xff]
      %v317 = vld [vmem:[%s219 + $0x2e0] sm:$0xff]
      %v318 = vld [vmem:[%s219 + $0x2e8] sm:$0xff]
      %v319 = vld [vmem:[%s219 + $0x2f0] sm:$0xff]
      %v320 = vld [vmem:[%s219 + $0x2f8] sm:$0xff]
      %v321 = vld [vmem:[%s219 + $0x300] sm:$0xff]
      %v322 = vld [vmem:[%s219 + $0x308] sm:$0xff]
      %v323 = vld [vmem:[%s219 + $0x310] sm:$0xff]
      %v324 = vld [vmem:[%s219 + $0x318] sm:$0xff]
      %v325 = vld [vmem:[%s219 + $0x320] sm:$0xff]
      %v326 = vld [vmem:[%s219 + $0x328] sm:$0xff]
      %v327 = vld [vmem:[%s219 + $0x330] sm:$0xff]
      %v328 = vld [vmem:[%s219 + $0x338] sm:$0xff]
      %v329 = vld [vmem:[%s219 + $0x340] sm:$0xff]
      %v330 = vld [vmem:[%s219 + $0x348] sm:$0xff]
      %v331 = vld [vmem:[%s219 + $0x350] sm:$0xff]
      %v332 = vld [vmem:[%s219 + $0x358] sm:$0xff]
      %v333 = vld [vmem:[%s219 + $0x360] sm:$0xff]
      %v334 = vld [vmem:[%s219 + $0x368] sm:$0xff]
      %v335 = vld [vmem:[%s219 + $0x370] sm:$0xff]
      %v336 = vld [vmem:[%s219 + $0x378] sm:$0xff]
      %v337 = vld [vmem:[%s219 + $0x380] sm:$0xff]
      %v338 = vld [vmem:[%s219 + $0x388] sm:$0xff]
      %v339 = vld [vmem:[%s219 + $0x390] sm:$0xff]
      %v340 = vld [vmem:[%s219 + $0x398] sm:$0xff]
      %v341 = vld [vmem:[%s219 + $0x3a0] sm:$0xff]
      %v342 = vld [vmem:[%s219 + $0x3a8] sm:$0xff]
      %v343 = vld [vmem:[%s219 + $0x3b0] sm:$0xff]
      %v344 = vld [vmem:[%s219 + $0x3b8] sm:$0xff]
      %v345 = vld [vmem:[%s219 + $0x3c0] sm:$0xff]
      %v346 = vld [vmem:[%s219 + $0x3c8] sm:$0xff]
      %v347 = vld [vmem:[%s219 + $0x3d0] sm:$0xff]
      %v348 = vld [vmem:[%s219 + $0x3d8] sm:$0xff]
      %v349 = vld [vmem:[%s219 + $0x3e0] sm:$0xff]
      %v350 = vld [vmem:[%s219 + $0x3e8] sm:$0xff]
      %v351 = vld [vmem:[%s219 + $0x3f0] sm:$0xff]
      %v352 = vld [vmem:[%s219 + $0x3f8] sm:$0xff]
      %v353 = vld [vmem:[%s219 + $0x400] sm:$0xff]
      %v354 = vld [vmem:[%s219 + $0x408] sm:$0xff]
      %v355 = vld [vmem:[%s219 + $0x410] sm:$0xff]
      %v356 = vld [vmem:[%s219 + $0x418] sm:$0xff]
      %v357 = vld [vmem:[%s219 + $0x420] sm:$0xff]
      %v358 = vld [vmem:[%s219 + $0x428] sm:$0xff]
      %v359 = vld [vmem:[%s219 + $0x430] sm:$0xff]
      %v360 = vld [vmem:[%s219 + $0x438] sm:$0xff]
      %v361 = vld [vmem:[%s219 + $0x440] sm:$0xff]
      %v362 = vld [vmem:[%s219 + $0x448] sm:$0xff]
      %v363 = vld [vmem:[%s219 + $0x450] sm:$0xff]
      %v364 = vld [vmem:[%s219 + $0x458] sm:$0xff]
      %v365 = vld [vmem:[%s219 + $0x460] sm:$0xff]
      %v366 = vld [vmem:[%s219 + $0x468] sm:$0xff]
      %v367 = vld [vmem:[%s219 + $0x470] sm:$0xff]
      %v368 = vld [vmem:[%s219 + $0x478] sm:$0xff]
      %v369 = vld [vmem:[%s219 + $0x480] sm:$0xff]
      %v370 = vld [vmem:[%s219 + $0x488] sm:$0xff]
      %v371 = vld [vmem:[%s219 + $0x490] sm:$0xff]
      %v372 = vld [vmem:[%s219 + $0x498] sm:$0xff]
      %v373 = vld [vmem:[%s219 + $0x4a0] sm:$0xff]
      %v374 = vld [vmem:[%s219 + $0x4a8] sm:$0xff]
      %v375 = vld [vmem:[%s219 + $0x4b0] sm:$0xff]
      %v376 = vld [vmem:[%s219 + $0x4b8] sm:$0xff]
      %v377 = vld [vmem:[%s219 + $0x4c0] sm:$0xff]
      %v378 = vld [vmem:[%s219 + $0x4c8] sm:$0xff]
      %v379 = vld [vmem:[%s219 + $0x4d0] sm:$0xff]
      %v380 = vld [vmem:[%s219 + $0x4d8] sm:$0xff]
      %v381 = vld [vmem:[%s219 + $0x4e0] sm:$0xff]
      %v382 = vld [vmem:[%s219 + $0x4e8] sm:$0xff]
      %v383 = vld [vmem:[%s219 + $0x4f0] sm:$0xff]
      %v384 = vld [vmem:[%s219 + $0x4f8] sm:$0xff]
      %v385 = vld [vmem:[%s219 + $0x500] sm:$0xff]
      %v386 = vld [vmem:[%s219 + $0x508] sm:$0xff]
      %v387 = vld [vmem:[%s219 + $0x510] sm:$0xff]
      %v388 = vld [vmem:[%s219 + $0x518] sm:$0xff]
      %v389 = vld [vmem:[%s219 + $0x520] sm:$0xff]
      %v390 = vld [vmem:[%s219 + $0x528] sm:$0xff]
      %v391 = vld [vmem:[%s219 + $0x530] sm:$0xff]
      %v392 = vld [vmem:[%s219 + $0x538] sm:$0xff]
      %v393 = vld [vmem:[%s219 + $0x540] sm:$0xff]
      %v394 = vld [vmem:[%s219 + $0x548] sm:$0xff]
      %v395 = vld [vmem:[%s219 + $0x550] sm:$0xff]
      %v396 = vld [vmem:[%s219 + $0x558] sm:$0xff]
      %v397 = vld [vmem:[%s219 + $0x560] sm:$0xff]
      %v398 = vld [vmem:[%s219 + $0x568] sm:$0xff]
      %v399 = vld [vmem:[%s219 + $0x570] sm:$0xff]
      %v400 = vld [vmem:[%s219 + $0x578] sm:$0xff]
      %v401 = vld [vmem:[%s219 + $0x580] sm:$0xff]
      %v402 = vld [vmem:[%s219 + $0x588] sm:$0xff]
      %v403 = vld [vmem:[%s219 + $0x590] sm:$0xff]
      %v404 = vld [vmem:[%s219 + $0x598] sm:$0xff]
      %v405 = vld [vmem:[%s219 + $0x5a0] sm:$0xff]
      %v406 = vld [vmem:[%s219 + $0x5a8] sm:$0xff]
      %v407 = vld [vmem:[%s219 + $0x5b0] sm:$0xff]
      %v408 = vld [vmem:[%s219 + $0x5b8] sm:$0xff]
      %v409 = vld [vmem:[%s219 + $0x5c0] sm:$0xff]
      %v410 = vld [vmem:[%s219 + $0x5c8] sm:$0xff]
      %v411 = vld [vmem:[%s219 + $0x5d0] sm:$0xff]
      %v412 = vld [vmem:[%s219 + $0x5d8] sm:$0xff]
      %v413 = vld [vmem:[%s219 + $0x5e0] sm:$0xff]
      %v414 = vld [vmem:[%s219 + $0x5e8] sm:$0xff]
      %v415 = vld [vmem:[%s219 + $0x5f0] sm:$0xff]
      %v416 = vld [vmem:[%s219 + $0x5f8] sm:$0xff]
      %v417 = vld [vmem:[%s219 + $0x600] sm:$0xff]
      %v418 = vld [vmem:[%s219 + $0x608] sm:$0xff]
      %v419 = vld [vmem:[%s219 + $0x610] sm:$0xff]
      %v420 = vld [vmem:[%s219 + $0x618] sm:$0xff]
      %v421 = vld [vmem:[%s219 + $0x620] sm:$0xff]
      %v422 = vld [vmem:[%s219 + $0x628] sm:$0xff]
      %v423 = vld [vmem:[%s219 + $0x630] sm:$0xff]
      %v424 = vld [vmem:[%s219 + $0x638] sm:$0xff]
      %v425 = vld [vmem:[%s219 + $0x640] sm:$0xff]
      %v426 = vld [vmem:[%s219 + $0x648] sm:$0xff]
      %v427 = vld [vmem:[%s219 + $0x650] sm:$0xff]
      %v428 = vld [vmem:[%s219 + $0x658] sm:$0xff]
      %v429 = vld [vmem:[%s1] sm:$0xff]
      %v430 = vld [vmem:[%s1 + $0x8] sm:$0xff]
      %v431 = vld [vmem:[%s1 + $0x10] sm:$0xff]
      %v432 = vld [vmem:[%s1 + $0x18] sm:$0x7]
      %v433 = vld [vmem:[%s2] sm:$0x1]
      %v435 = vlaneseq
      %v436 = vshrl.u32 %v435, 7
      %v437 = vsub.s32 0, %v436
      %v438 = vrot.slane %v433, %v437
      %vm440 = vcmask 220160
      %v442 = vsel %vm440, %v225, 0
      %v445 = vsel %vm440, %v226, 0
      %v448 = vsel %vm440, %v227, 0
      %v451 = vsel %vm440, %v228, 0
      %v454 = vsel %vm440, %v229, 0
      %v457 = vsel %vm440, %v230, 0
      %v460 = vsel %vm440, %v231, 0
      %v463 = vsel %vm440, %v232, 0
      %v466 = vsel %vm440, %v233, 0
      %v469 = vsel %vm440, %v234, 0
      %v472 = vsel %vm440, %v235, 0
      %v475 = vsel %vm440, %v236, 0
      %v478 = vsel %vm440, %v237, 0
      %v481 = vsel %vm440, %v238, 0
      %v484 = vsel %vm440, %v239, 0
      %v487 = vsel %vm440, %v240, 0
      %v490 = vsel %vm440, %v241, 0
      %v493 = vsel %vm440, %v242, 0
      %v496 = vsel %vm440, %v243, 0
      %v499 = vsel %vm440, %v244, 0
      %v502 = vsel %vm440, %v245, 0
      %v505 = vsel %vm440, %v246, 0
      %v508 = vsel %vm440, %v247, 0
      %v511 = vsel %vm440, %v248, 0
      %v514 = vsel %vm440, %v249, 0
      %v517 = vsel %vm440, %v250, 0
      %v520 = vsel %vm440, %v251, 0
      %v523 = vsel %vm440, %v252, 0
      %v526 = vsel %vm440, %v253, 0
      %v529 = vsel %vm440, %v254, 0
      %v532 = vsel %vm440, %v255, 0
      %v535 = vsel %vm440, %v256, 0
      %v538 = vsel %vm440, %v257, 0
      %v541 = vsel %vm440, %v258, 0
      %v544 = vsel %vm440, %v259, 0
      %v547 = vsel %vm440, %v260, 0
      %v550 = vsel %vm440, %v261, 0
      %v553 = vsel %vm440, %v262, 0
      %v556 = vsel %vm440, %v263, 0
      %v559 = vsel %vm440, %v264, 0
      %v562 = vsel %vm440, %v265, 0
      %v565 = vsel %vm440, %v266, 0
      %v568 = vsel %vm440, %v267, 0
      %v571 = vsel %vm440, %v268, 0
      %v574 = vsel %vm440, %v269, 0
      %v577 = vsel %vm440, %v270, 0
      %v580 = vsel %vm440, %v271, 0
      %v583 = vsel %vm440, %v272, 0
      %v586 = vsel %vm440, %v273, 0
      %v589 = vsel %vm440, %v274, 0
      %v592 = vsel %vm440, %v275, 0
      %v595 = vsel %vm440, %v276, 0
      %v598 = vsel %vm440, %v277, 0
      %v601 = vsel %vm440, %v278, 0
      %v604 = vsel %vm440, %v279, 0
      %v607 = vsel %vm440, %v280, 0
      %v610 = vsel %vm440, %v281, 0
      %v613 = vsel %vm440, %v282, 0
      %v616 = vsel %vm440, %v283, 0
      %v619 = vsel %vm440, %v284, 0
      %v622 = vsel %vm440, %v285, 0
      %v625 = vsel %vm440, %v286, 0
      %v628 = vsel %vm440, %v287, 0
      %v631 = vsel %vm440, %v288, 0
      %v634 = vsel %vm440, %v289, 0
      %v637 = vsel %vm440, %v290, 0
      %v640 = vsel %vm440, %v291, 0
      %v643 = vsel %vm440, %v292, 0
      %v646 = vsel %vm440, %v293, 0
      %v649 = vsel %vm440, %v294, 0
      %v652 = vsel %vm440, %v295, 0
      %v655 = vsel %vm440, %v296, 0
      %v658 = vsel %vm440, %v297, 0
      %v661 = vsel %vm440, %v298, 0
      %v664 = vsel %vm440, %v299, 0
      %v667 = vsel %vm440, %v300, 0
      %v670 = vsel %vm440, %v301, 0
      %v673 = vsel %vm440, %v302, 0
      %v676 = vsel %vm440, %v303, 0
      %v679 = vsel %vm440, %v304, 0
      %v682 = vsel %vm440, %v305, 0
      %v685 = vsel %vm440, %v306, 0
      %v688 = vsel %vm440, %v307, 0
      %v691 = vsel %vm440, %v308, 0
      %v694 = vsel %vm440, %v309, 0
      %v697 = vsel %vm440, %v310, 0
      %v700 = vsel %vm440, %v311, 0
      %v703 = vsel %vm440, %v312, 0
      %v706 = vsel %vm440, %v313, 0
      %v709 = vsel %vm440, %v314, 0
      %v712 = vsel %vm440, %v315, 0
      %v715 = vsel %vm440, %v316, 0
      %v718 = vsel %vm440, %v317, 0
      %v721 = vsel %vm440, %v318, 0
      %v724 = vsel %vm440, %v319, 0
      %v727 = vsel %vm440, %v320, 0
      %v730 = vsel %vm440, %v321, 0
      %v733 = vsel %vm440, %v322, 0
      %v736 = vsel %vm440, %v323, 0
      %v739 = vsel %vm440, %v324, 0
      %v742 = vsel %vm440, %v325, 0
      %v745 = vsel %vm440, %v326, 0
      %v748 = vsel %vm440, %v327, 0
      %v751 = vsel %vm440, %v328, 0
      %v754 = vsel %vm440, %v329, 0
      %v757 = vsel %vm440, %v330, 0
      %v760 = vsel %vm440, %v331, 0
      %v763 = vsel %vm440, %v332, 0
      %v766 = vsel %vm440, %v333, 0
      %v769 = vsel %vm440, %v334, 0
      %v772 = vsel %vm440, %v335, 0
      %v775 = vsel %vm440, %v336, 0
      %v778 = vsel %vm440, %v337, 0
      %v781 = vsel %vm440, %v338, 0
      %v784 = vsel %vm440, %v339, 0
      %v787 = vsel %vm440, %v340, 0
      %v790 = vsel %vm440, %v341, 0
      %v793 = vsel %vm440, %v342, 0
      %v796 = vsel %vm440, %v343, 0
      %v799 = vsel %vm440, %v344, 0
      %v802 = vsel %vm440, %v345, 0
      %v805 = vsel %vm440, %v346, 0
      %v808 = vsel %vm440, %v347, 0
      %v811 = vsel %vm440, %v348, 0
      %v814 = vsel %vm440, %v349, 0
      %v817 = vsel %vm440, %v350, 0
      %v820 = vsel %vm440, %v351, 0
      %v823 = vsel %vm440, %v352, 0
      %v826 = vsel %vm440, %v353, 0
      %v829 = vsel %vm440, %v354, 0
      %v832 = vsel %vm440, %v355, 0
      %v835 = vsel %vm440, %v356, 0
      %v838 = vsel %vm440, %v357, 0
      %v841 = vsel %vm440, %v358, 0
      %v844 = vsel %vm440, %v359, 0
      %v847 = vsel %vm440, %v360, 0
      %v850 = vsel %vm440, %v361, 0
      %v853 = vsel %vm440, %v362, 0
      %v856 = vsel %vm440, %v363, 0
      %v859 = vsel %vm440, %v364, 0
      %v862 = vsel %vm440, %v365, 0
      %v865 = vsel %vm440, %v366, 0
      %v868 = vsel %vm440, %v367, 0
      %v871 = vsel %vm440, %v368, 0
      %v874 = vsel %vm440, %v369, 0
      %v877 = vsel %vm440, %v370, 0
      %v880 = vsel %vm440, %v371, 0
      %v883 = vsel %vm440, %v372, 0
      %v886 = vsel %vm440, %v373, 0
      %v889 = vsel %vm440, %v374, 0
      %v892 = vsel %vm440, %v375, 0
      %v895 = vsel %vm440, %v376, 0
      %v898 = vsel %vm440, %v377, 0
      %v901 = vsel %vm440, %v378, 0
      %v904 = vsel %vm440, %v379, 0
      %v907 = vsel %vm440, %v380, 0
      %v910 = vsel %vm440, %v381, 0
      %v913 = vsel %vm440, %v382, 0
      %v916 = vsel %vm440, %v383, 0
      %v919 = vsel %vm440, %v384, 0
      %v922 = vsel %vm440, %v385, 0
      %v925 = vsel %vm440, %v386, 0
      %v928 = vsel %vm440, %v387, 0
      %v931 = vsel %vm440, %v388, 0
      %v934 = vsel %vm440, %v389, 0
      %v937 = vsel %vm440, %v390, 0
      %v940 = vsel %vm440, %v391, 0
      %v943 = vsel %vm440, %v392, 0
      %v946 = vsel %vm440, %v393, 0
      %v949 = vsel %vm440, %v394, 0
      %v952 = vsel %vm440, %v395, 0
      %v955 = vsel %vm440, %v396, 0
      %v958 = vsel %vm440, %v397, 0
      %v961 = vsel %vm440, %v398, 0
      %v964 = vsel %vm440, %v399, 0
      %v967 = vsel %vm440, %v400, 0
      %v970 = vsel %vm440, %v401, 0
      %v973 = vsel %vm440, %v402, 0
      %v976 = vsel %vm440, %v403, 0
      %v979 = vsel %vm440, %v404, 0
      %v982 = vsel %vm440, %v405, 0
      %v985 = vsel %vm440, %v406, 0
      %v988 = vsel %vm440, %v407, 0
      %v991 = vsel %vm440, %v408, 0
      %v994 = vsel %vm440, %v409, 0
      %v997 = vsel %vm440, %v410, 0
      %v1000 = vsel %vm440, %v411, 0
      %v1003 = vsel %vm440, %v412, 0
      %v1006 = vsel %vm440, %v413, 0
      %v1009 = vsel %vm440, %v414, 0
      %v1012 = vsel %vm440, %v415, 0
      %v1015 = vsel %vm440, %v416, 0
      %v1018 = vsel %vm440, %v417, 0
      %v1021 = vsel %vm440, %v418, 0
      %v1024 = vsel %vm440, %v419, 0
      %v1027 = vsel %vm440, %v420, 0
      %v1030 = vsel %vm440, %v421, 0
      %v1033 = vsel %vm440, %v422, 0
      %v1036 = vsel %vm440, %v423, 0
      %v1039 = vsel %vm440, %v424, 0
      %v1042 = vsel %vm440, %v425, 0
      %v1045 = vsel %vm440, %v426, 0
      %v1048 = vsel %vm440, %v427, 0
      %v1051 = vsel %vm440, %v428, 0
      %vm1053 = vcmask 1042432
      %v1055 = vsel %vm1053, %v432, 0
      %1057 = vmatprep.subr.mxu0 0.0
      %1058 = vmatpush1.msra.mxu0 %v429
      %1059 = vmatprep.subr.mxu0 0.0
      %1060 = vmatpush1.msra.mxu0 %v430
      %1061 = vmatprep.subr.mxu0 0.0
      %1062 = vmatpush1.msra.mxu0 %v431
      %1063 = vmatprep.subr.mxu0 0.0
      %1064 = vmatpush1.msra.mxu0 %v1055
      %1065 = vmatprep.subr.mxu0 0.0
      %1066 = vmatpush1.msra.mxu0 0.0
      %1067 = vmatprep.subr.mxu0 0.0
      %1068 = vmatpush1.msra.mxu0 0.0
      %1069 = vmatprep.subr.mxu0 0.0
      %1070 = vmatpush1.msra.mxu0 0.0
      %1071 = vmatprep.subr.mxu0 0.0
      %1072 = vmatpush1.msra.mxu0 0.0
      %1073 = vmatprep.subr.mxu0 0.0
      %1074 = vmatpush1.msra.mxu0 0.0
      %1075 = vmatprep.subr.mxu0 0.0
      %1076 = vmatpush1.msra.mxu0 0.0
      %1077 = vmatprep.subr.mxu0 0.0
      %1078 = vmatpush1.msra.mxu0 0.0
      %1079 = vmatprep.subr.mxu0 0.0
      %1080 = vmatpush1.msra.mxu0 0.0
      %1081 = vmatprep.subr.mxu0 0.0
      %1082 = vmatpush1.msra.mxu0 0.0
      %1083 = vmatprep.subr.mxu0 0.0
      %1084 = vmatpush1.msra.mxu0 0.0
      %1085 = vmatprep.subr.mxu0 0.0
      %1086 = vmatpush1.msra.mxu0 0.0
      %1087 = vmatprep.subr.mxu0 0.0
      %1088 = vmatpush1.msra.mxu0 0.0
      %1089 = vmatprep.subr.mxu0 0.0
      %1090 = vmatpush1.msra.mxu0 0.0
      %1091 = vmatprep.subr.mxu0 0.0
      %1092 = vmatpush1.msra.mxu0 0.0
      %1093 = vmatprep.subr.mxu0 0.0
      %1094 = vmatpush1.msra.mxu0 0.0
      %1095 = vmatprep.subr.mxu0 0.0
      %1096 = vmatpush1.msra.mxu0 0.0
      %1097 = vmatprep.subr.mxu0 0.0
      %1098 = vmatpush1.msra.mxu0 0.0
      %1099 = vmatprep.subr.mxu0 0.0
      %1100 = vmatpush1.msra.mxu0 0.0
      %1101 = vmatprep.subr.mxu0 0.0
      %1102 = vmatpush1.msra.mxu0 0.0
      %1103 = vmatprep.subr.mxu0 0.0
      %1104 = vmatpush1.msra.mxu0 0.0
      %1105 = vmatprep.subr.mxu0 0.0
      %1106 = vmatpush1.msra.mxu0 0.0
      %1107 = vmatprep.subr.mxu0 0.0
      %1108 = vmatpush1.msra.mxu0 0.0
      %1109 = vmatprep.subr.mxu0 0.0
      %1110 = vmatpush1.msra.mxu0 0.0
      %1111 = vmatprep.subr.mxu0 0.0
      %1112 = vmatpush1.msra.mxu0 0.0
      %1113 = vmatprep.subr.mxu0 0.0
      %1114 = vmatpush1.msra.mxu0 0.0
      %1115 = vmatprep.subr.mxu0 0.0
      %1116 = vmatpush1.msra.mxu0 0.0
      %1117 = vmatprep.subr.mxu0 0.0
      %1118 = vmatpush1.msra.mxu0 0.0
      %1119 = vmatprep.subr.mxu0 0.0
      %1120 = vmatpush1.msra.mxu0 0.0
      %1121 = vmatprep.mubr.f32.mxu0 0.0
      %1122 = vmatmul.mubr.f32.gmra.mrb[0].mxu0 %v442
      %v1123 = vpop.f32.mrb[0].mxu0
      %v1124 = vadd.f32 %v438, %v1123
      %v1125 = vpop.f32.mrb[0].mxu0
      %1126 = vmatprep.mubr.f32.mxu0 0.0
      %1127 = vmatmul.mubr.f32.gmra.mrb[0].mxu0 %v445
      %v1128 = vpop.f32.mrb[0].mxu0
      %v1129 = vadd.f32 %v438, %v1128
      %v1130 = vpop.f32.mrb[0].mxu0
      %1131 = vmatprep.mubr.f32.mxu0 0.0
      %1132 = vmatmul.mubr.f32.gmra.mrb[0].mxu0 %v448
      %v1133 = vpop.f32.mrb[0].mxu0
      %v1134 = vadd.f32 %v438, %v1133
      %v1135 = vpop.f32.mrb[0].mxu0
      %1136 = vmatprep.mubr.f32.mxu0 0.0
      %1137 = vmatmul.mubr.f32.gmra.mrb[0].mxu0 %v451
      %v1138 = vpop.f32.mrb[0].mxu0
      %v1139 = vadd.f32 %v438, %v1138
      %v1140 = vpop.f32.mrb[0].mxu0
      %1141 = vmatprep.mubr.f32.mxu0 0.0
      %1142 = vmatmul.mubr.f32.gmra.mrb[0].mxu0 %v454
      %v1143 = vpop.f32.mrb[0].mxu0
      %v1144 = vadd.f32 %v438, %v1143
      %v1145 = vpop.f32.mrb[0].mxu0
      %1146 = vmatprep.mubr.f32.mxu0 0.0
      %1147 = vmatmul.mubr.f32.gmra.mrb[0].mxu0 %v457
      %v1148 = vpop.f32.mrb[0].mxu0
      %v1149 = vadd.f32 %v438, %v1148
      %v1150 = vpop.f32.mrb[0].mxu0
      %1151 = vmatprep.mubr.f32.mxu0 0.0
      %1152 = vmatmul.mubr.f32.gmra.mrb[0].mxu0 %v460
      %v1153 = vpop.f32.mrb[0].mxu0
      %v1154 = vadd.f32 %v438, %v1153
      %v1155 = vpop.f32.mrb[0].mxu0
      %1156 = vmatprep.mubr.f32.mxu0 0.0
      %1157 = vmatmul.mubr.f32.gmra.mrb[0].mxu0 %v463
      %v1158 = vpop.f32.mrb[0].mxu0
      %v1159 = vadd.f32 %v438, %v1158
      %v1160 = vpop.f32.mrb[0].mxu0
      %1161 = vmatprep.mubr.f32.mxu0 0.0
      %1162 = vmatmul.mubr.f32.gmra.mrb[0].mxu0 %v466
      %v1163 = vpop.f32.mrb[0].mxu0
      %v1164 = vadd.f32 %v438, %v1163
      %v1165 = vpop.f32.mrb[0].mxu0
      %1166 = vmatprep.mubr.f32.mxu0 0.0
      %1167 = vmatmul.mubr.f32.gmra.mrb[0].mxu0 %v469
      %v1168 = vpop.f32.mrb[0].mxu0
      %v1169 = vadd.f32 %v438, %v1168
      %v1170 = vpop.f32.mrb[0].mxu0
      %1171 = vmatprep.mubr.f32.mxu0 0.0
      %1172 = vmatmul.mubr.f32.gmra.mrb[0].mxu0 %v472
      %v1173 = vpop.f32.mrb[0].mxu0
      %v1174 = vadd.f32 %v438, %v1173
      %v1175 = vpop.f32.mrb[0].mxu0
      %1176 = vmatprep.mubr.f32.mxu0 0.0
      %1177 = vmatmul.mubr.f32.gmra.mrb[0].mxu0 %v475
      %v1178 = vpop.f32.mrb[0].mxu0
      %v1179 = vadd.f32 %v438, %v1178
      %v1180 = vpop.f32.mrb[0].mxu0
      %1181 = vmatprep.mubr.f32.mxu0 0.0
      %1182 = vmatmul.mubr.f32.gmra.mrb[0].mxu0 %v478
      %v1183 = vpop.f32.mrb[0].mxu0
      %v1184 = vadd.f32 %v438, %v1183
      %v1185 = vpop.f32.mrb[0].mxu0
      %1186 = vmatprep.mubr.f32.mxu0 0.0
      %1187 = vmatmul.mubr.f32.gmra.mrb[0].mxu0 %v481
      %v1188 = vpop.f32.mrb[0].mxu0
      %v1189 = vadd.f32 %v438, %v1188
      %v1190 = vpop.f32.mrb[0].mxu0
      %1191 = vmatprep.mubr.f32.mxu0 0.0
      %1192 = vmatmul.mubr.f32.gmra.mrb[0].mxu0 %v484
      %v1193 = vpop.f32.mrb[0].mxu0
      %v1194 = vadd.f32 %v438, %v1193
      %v1195 = vpop.f32.mrb[0].mxu0
      %1196 = vmatprep.mubr.f32.mxu0 0.0
      %1197 = vmatmul.mubr.f32.gmra.mrb[0].mxu0 %v487
      %v1198 = vpop.f32.mrb[0].mxu0
      %v1199 = vadd.f32 %v438, %v1198
      %v1200 = vpop.f32.mrb[0].mxu0
      %1201 = vmatprep.mubr.f32.mxu0 0.0
      %1202 = vmatmul.mubr.f32.gmra.mrb[0].mxu0 %v490
      %v1203 = vpop.f32.mrb[0].mxu0
      %v1204 = vadd.f32 %v438, %v1203
      %v1205 = vpop.f32.mrb[0].mxu0
      %1206 = vmatprep.mubr.f32.mxu0 0.0
      %1207 = vmatmul.mubr.f32.gmra.mrb[0].mxu0 %v493
      %v1208 = vpop.f32.mrb[0].mxu0
      %v1209 = vadd.f32 %v438, %v1208
      %v1210 = vpop.f32.mrb[0].mxu0
      %1211 = vmatprep.mubr.f32.mxu0 0.0
      %1212 = vmatmul.mubr.f32.gmra.mrb[0].mxu0 %v496
      %v1213 = vpop.f32.mrb[0].mxu0
      %v1214 = vadd.f32 %v438, %v1213
      %v1215 = vpop.f32.mrb[0].mxu0
      %1216 = vmatprep.mubr.f32.mxu0 0.0
      %1217 = vmatmul.mubr.f32.gmra.mrb[0].mxu0 %v499
      %v1218 = vpop.f32.mrb[0].mxu0
      %v1219 = vadd.f32 %v438, %v1218
      %v1220 = vpop.f32.mrb[0].mxu0
      %1221 = vmatprep.mubr.f32.mxu0 0.0
      %1222 = vmatmul.mubr.f32.gmra.mrb[0].mxu0 %v502
      %v1223 = vpop.f32.mrb[0].mxu0
      %v1224 = vadd.f32 %v438, %v1223
      %v1225 = vpop.f32.mrb[0].mxu0
      %1226 = vmatprep.mubr.f32.mxu0 0.0
      %1227 = vmatmul.mubr.f32.gmra.mrb[0].mxu0 %v505
      %v1228 = vpop.f32.mrb[0].mxu0
      %v1229 = vadd.f32 %v438, %v1228
      %v1230 = vpop.f32.mrb[0].mxu0
      %1231 = vmatprep.mubr.f32.mxu0 0.0
      %1232 = vmatmul.mubr.f32.gmra.mrb[0].mxu0 %v508
      %v1233 = vpop.f32.mrb[0].mxu0
      %v1234 = vadd.f32 %v438, %v1233
      %v1235 = vpop.f32.mrb[0].mxu0
      %1236 = vmatprep.mubr.f32.mxu0 0.0
      %1237 = vmatmul.mubr.f32.gmra.mrb[0].mxu0 %v511
      %v1238 = vpop.f32.mrb[0].mxu0
      %v1239 = vadd.f32 %v438, %v1238
      %v1240 = vpop.f32.mrb[0].mxu0
      %1241 = vmatprep.mubr.f32.mxu0 0.0
      %1242 = vmatmul.mubr.f32.gmra.mrb[0].mxu0 %v514
      %v1243 = vpop.f32.mrb[0].mxu0
      %v1244 = vadd.f32 %v438, %v1243
      %v1245 = vpop.f32.mrb[0].mxu0
      %1246 = vmatprep.mubr.f32.mxu0 0.0
      %1247 = vmatmul.mubr.f32.gmra.mrb[0].mxu0 %v517
      %v1248 = vpop.f32.mrb[0].mxu0
      %v1249 = vadd.f32 %v438, %v1248
      %v1250 = vpop.f32.mrb[0].mxu0
      %1251 = vmatprep.mubr.f32.mxu0 0.0
      %1252 = vmatmul.mubr.f32.gmra.mrb[0].mxu0 %v520
      %v1253 = vpop.f32.mrb[0].mxu0
      %v1254 = vadd.f32 %v438, %v1253
      %v1255 = vpop.f32.mrb[0].mxu0
      %1256 = vmatprep.mubr.f32.mxu0 0.0
      %1257 = vmatmul.mubr.f32.gmra.mrb[0].mxu0 %v523
      %v1258 = vpop.f32.mrb[0].mxu0
      %v1259 = vadd.f32 %v438, %v1258
      %v1260 = vpop.f32.mrb[0].mxu0
      %1261 = vmatprep.mubr.f32.mxu0 0.0
      %1262 = vmatmul.mubr.f32.gmra.mrb[0].mxu0 %v526
      %v1263 = vpop.f32.mrb[0].mxu0
      %v1264 = vadd.f32 %v438, %v1263
      %v1265 = vpop.f32.mrb[0].mxu0
      %1266 = vmatprep.mubr.f32.mxu0 0.0
      %1267 = vmatmul.mubr.f32.gmra.mrb[0].mxu0 %v529
      %v1268 = vpop.f32.mrb[0].mxu0
      %v1269 = vadd.f32 %v438, %v1268
      %v1270 = vpop.f32.mrb[0].mxu0
      %1271 = vmatprep.mubr.f32.mxu0 0.0
      %1272 = vmatmul.mubr.f32.gmra.mrb[0].mxu0 %v532
      %v1273 = vpop.f32.mrb[0].mxu0
      %v1274 = vadd.f32 %v438, %v1273
      %v1275 = vpop.f32.mrb[0].mxu0
      %1276 = vmatprep.mubr.f32.mxu0 0.0
      %1277 = vmatmul.mubr.f32.gmra.mrb[0].mxu0 %v535
      %v1278 = vpop.f32.mrb[0].mxu0
      %v1279 = vadd.f32 %v438, %v1278
      %v1280 = vpop.f32.mrb[0].mxu0
      %1281 = vmatprep.mubr.f32.mxu0 0.0
      %1282 = vmatmul.mubr.f32.gmra.mrb[0].mxu0 %v538
      %v1283 = vpop.f32.mrb[0].mxu0
      %v1284 = vadd.f32 %v438, %v1283
      %v1285 = vpop.f32.mrb[0].mxu0
      %1286 = vmatprep.mubr.f32.mxu0 0.0
      %1287 = vmatmul.mubr.f32.gmra.mrb[0].mxu0 %v541
      %v1288 = vpop.f32.mrb[0].mxu0
      %v1289 = vadd.f32 %v438, %v1288
      %v1290 = vpop.f32.mrb[0].mxu0
      %1291 = vmatprep.mubr.f32.mxu0 0.0
      %1292 = vmatmul.mubr.f32.gmra.mrb[0].mxu0 %v544
      %v1293 = vpop.f32.mrb[0].mxu0
      %v1294 = vadd.f32 %v438, %v1293
      %v1295 = vpop.f32.mrb[0].mxu0
      %1296 = vmatprep.mubr.f32.mxu0 0.0
      %1297 = vmatmul.mubr.f32.gmra.mrb[0].mxu0 %v547
      %v1298 = vpop.f32.mrb[0].mxu0
      %v1299 = vadd.f32 %v438, %v1298
      %v1300 = vpop.f32.mrb[0].mxu0
      %1301 = vmatprep.mubr.f32.mxu0 0.0
      %1302 = vmatmul.mubr.f32.gmra.mrb[0].mxu0 %v550
      %v1303 = vpop.f32.mrb[0].mxu0
      %v1304 = vadd.f32 %v438, %v1303
      %v1305 = vpop.f32.mrb[0].mxu0
      %1306 = vmatprep.mubr.f32.mxu0 0.0
      %1307 = vmatmul.mubr.f32.gmra.mrb[0].mxu0 %v553
      %v1308 = vpop.f32.mrb[0].mxu0
      %v1309 = vadd.f32 %v438, %v1308
      %v1310 = vpop.f32.mrb[0].mxu0
      %1311 = vmatprep.mubr.f32.mxu0 0.0
      %1312 = vmatmul.mubr.f32.gmra.mrb[0].mxu0 %v556
      %v1313 = vpop.f32.mrb[0].mxu0
      %v1314 = vadd.f32 %v438, %v1313
      %v1315 = vpop.f32.mrb[0].mxu0
      %1316 = vmatprep.mubr.f32.mxu0 0.0
      %1317 = vmatmul.mubr.f32.gmra.mrb[0].mxu0 %v559
      %v1318 = vpop.f32.mrb[0].mxu0
      %v1319 = vadd.f32 %v438, %v1318
      %v1320 = vpop.f32.mrb[0].mxu0
      %1321 = vmatprep.mubr.f32.mxu0 0.0
      %1322 = vmatmul.mubr.f32.gmra.mrb[0].mxu0 %v562
      %v1323 = vpop.f32.mrb[0].mxu0
      %v1324 = vadd.f32 %v438, %v1323
      %v1325 = vpop.f32.mrb[0].mxu0
      %1326 = vmatprep.mubr.f32.mxu0 0.0
      %1327 = vmatmul.mubr.f32.gmra.mrb[0].mxu0 %v565
      %v1328 = vpop.f32.mrb[0].mxu0
      %v1329 = vadd.f32 %v438, %v1328
      %v1330 = vpop.f32.mrb[0].mxu0
      %1331 = vmatprep.mubr.f32.mxu0 0.0
      %1332 = vmatmul.mubr.f32.gmra.mrb[0].mxu0 %v568
      %v1333 = vpop.f32.mrb[0].mxu0
      %v1334 = vadd.f32 %v438, %v1333
      %v1335 = vpop.f32.mrb[0].mxu0
      %1336 = vmatprep.mubr.f32.mxu0 0.0
      %1337 = vmatmul.mubr.f32.gmra.mrb[0].mxu0 %v571
      %v1338 = vpop.f32.mrb[0].mxu0
      %v1339 = vadd.f32 %v438, %v1338
      %v1340 = vpop.f32.mrb[0].mxu0
      %1341 = vmatprep.mubr.f32.mxu0 0.0
      %1342 = vmatmul.mubr.f32.gmra.mrb[0].mxu0 %v574
      %v1343 = vpop.f32.mrb[0].mxu0
      %v1344 = vadd.f32 %v438, %v1343
      %v1345 = vpop.f32.mrb[0].mxu0
      %1346 = vmatprep.mubr.f32.mxu0 0.0
      %1347 = vmatmul.mubr.f32.gmra.mrb[0].mxu0 %v577
      %v1348 = vpop.f32.mrb[0].mxu0
      %v1349 = vadd.f32 %v438, %v1348
      %v1350 = vpop.f32.mrb[0].mxu0
      %1351 = vmatprep.mubr.f32.mxu0 0.0
      %1352 = vmatmul.mubr.f32.gmra.mrb[0].mxu0 %v580
      %v1353 = vpop.f32.mrb[0].mxu0
      %v1354 = vadd.f32 %v438, %v1353
      %v1355 = vpop.f32.mrb[0].mxu0
      %1356 = vmatprep.mubr.f32.mxu0 0.0
      %1357 = vmatmul.mubr.f32.gmra.mrb[0].mxu0 %v583
      %v1358 = vpop.f32.mrb[0].mxu0
      %v1359 = vadd.f32 %v438, %v1358
      %v1360 = vpop.f32.mrb[0].mxu0
      %1361 = vmatprep.mubr.f32.mxu0 0.0
      %1362 = vmatmul.mubr.f32.gmra.mrb[0].mxu0 %v586
      %v1363 = vpop.f32.mrb[0].mxu0
      %v1364 = vadd.f32 %v438, %v1363
      %v1365 = vpop.f32.mrb[0].mxu0
      %1366 = vmatprep.mubr.f32.mxu0 0.0
      %1367 = vmatmul.mubr.f32.gmra.mrb[0].mxu0 %v589
      %v1368 = vpop.f32.mrb[0].mxu0
      %v1369 = vadd.f32 %v438, %v1368
      %v1370 = vpop.f32.mrb[0].mxu0
      %1371 = vmatprep.mubr.f32.mxu0 0.0
      %1372 = vmatmul.mubr.f32.gmra.mrb[0].mxu0 %v592
      %v1373 = vpop.f32.mrb[0].mxu0
      %v1374 = vadd.f32 %v438, %v1373
      %v1375 = vpop.f32.mrb[0].mxu0
      %1376 = vmatprep.mubr.f32.mxu0 0.0
      %1377 = vmatmul.mubr.f32.gmra.mrb[0].mxu0 %v595
      %v1378 = vpop.f32.mrb[0].mxu0
      %v1379 = vadd.f32 %v438, %v1378
      %v1380 = vpop.f32.mrb[0].mxu0
      %1381 = vmatprep.mubr.f32.mxu0 0.0
      %1382 = vmatmul.mubr.f32.gmra.mrb[0].mxu0 %v598
      %v1383 = vpop.f32.mrb[0].mxu0
      %v1384 = vadd.f32 %v438, %v1383
      %v1385 = vpop.f32.mrb[0].mxu0
      %1386 = vmatprep.mubr.f32.mxu0 0.0
      %1387 = vmatmul.mubr.f32.gmra.mrb[0].mxu0 %v601
      %v1388 = vpop.f32.mrb[0].mxu0
      %v1389 = vpop.f32.mrb[0].mxu0
      %1390 = vmatprep.mubr.f32.mxu0 0.0
      %1391 = vmatmul.mubr.f32.gmra.mrb[0].mxu0 %v604
      %v1392 = vpop.f32.mrb[0].mxu0
      %v1393 = vadd.f32 %v438, %v1392
      %v1394 = vpop.f32.mrb[0].mxu0
      %1395 = vmatprep.mubr.f32.mxu0 0.0
      %1396 = vmatmul.mubr.f32.gmra.mrb[0].mxu0 %v607
      %v1397 = vpop.f32.mrb[0].mxu0
      %v1398 = vadd.f32 %v438, %v1397
      %v1399 = vpop.f32.mrb[0].mxu0
      %1400 = vmatprep.mubr.f32.mxu0 0.0
      %1401 = vmatmul.mubr.f32.gmra.mrb[0].mxu0 %v610
      %v1402 = vpop.f32.mrb[0].mxu0
      %v1403 = vpop.f32.mrb[0].mxu0
      %1404 = vmatprep.mubr.f32.mxu0 0.0
      %1405 = vmatmul.mubr.f32.gmra.mrb[0].mxu0 %v613
      %v1406 = vpop.f32.mrb[0].mxu0
      %v1407 = vadd.f32 %v438, %v1406
      %v1408 = vpop.f32.mrb[0].mxu0
      %1409 = vmatprep.mubr.f32.mxu0 0.0
      %1410 = vmatmul.mubr.f32.gmra.mrb[0].mxu0 %v616
      %v1411 = vpop.f32.mrb[0].mxu0
      %v1412 = vadd.f32 %v438, %v1411
      %v1413 = vpop.f32.mrb[0].mxu0
      %1414 = vmatprep.mubr.f32.mxu0 0.0
      %1415 = vmatmul.mubr.f32.gmra.mrb[0].mxu0 %v619
      %v1416 = vpop.f32.mrb[0].mxu0
      %v1417 = vpop.f32.mrb[0].mxu0
      %1418 = vmatprep.mubr.f32.mxu0 0.0
      %1419 = vmatmul.mubr.f32.gmra.mrb[0].mxu0 %v622
      %v1420 = vpop.f32.mrb[0].mxu0
      %v1421 = vadd.f32 %v438, %v1420
      %v1422 = vpop.f32.mrb[0].mxu0
      %1423 = vmatprep.mubr.f32.mxu0 0.0
      %1424 = vmatmul.mubr.f32.gmra.mrb[0].mxu0 %v625
      %v1425 = vpop.f32.mrb[0].mxu0
      %v1426 = vadd.f32 %v438, %v1425
      %v1427 = vpop.f32.mrb[0].mxu0
      %1428 = vmatprep.mubr.f32.mxu0 0.0
      %1429 = vmatmul.mubr.f32.gmra.mrb[0].mxu0 %v628
      %v1430 = vpop.f32.mrb[0].mxu0
      %v1431 = vpop.f32.mrb[0].mxu0
      %1432 = vmatprep.mubr.f32.mxu0 0.0
      %1433 = vmatmul.mubr.f32.gmra.mrb[0].mxu0 %v631
      %v1434 = vpop.f32.mrb[0].mxu0
      %v1435 = vadd.f32 %v438, %v1434
      %v1436 = vpop.f32.mrb[0].mxu0
      %1437 = vmatprep.mubr.f32.mxu0 0.0
      %1438 = vmatmul.mubr.f32.gmra.mrb[0].mxu0 %v634
      %v1439 = vpop.f32.mrb[0].mxu0
      %v1440 = vadd.f32 %v438, %v1439
      %v1441 = vpop.f32.mrb[0].mxu0
      %1442 = vmatprep.mubr.f32.mxu0 0.0
      %1443 = vmatmul.mubr.f32.gmra.mrb[0].mxu0 %v637
      %v1444 = vpop.f32.mrb[0].mxu0
      %v1445 = vpop.f32.mrb[0].mxu0
      %1446 = vmatprep.mubr.f32.mxu0 0.0
      %1447 = vmatmul.mubr.f32.gmra.mrb[0].mxu0 %v640
      %v1448 = vpop.f32.mrb[0].mxu0
      %v1449 = vadd.f32 %v438, %v1448
      %v1450 = vpop.f32.mrb[0].mxu0
      %1451 = vmatprep.mubr.f32.mxu0 0.0
      %1452 = vmatmul.mubr.f32.gmra.mrb[0].mxu0 %v643
      %v1453 = vpop.f32.mrb[0].mxu0
      %v1454 = vadd.f32 %v438, %v1453
      %v1455 = vpop.f32.mrb[0].mxu0
      %1456 = vmatprep.mubr.f32.mxu0 0.0
      %1457 = vmatmul.mubr.f32.gmra.mrb[0].mxu0 %v646
      %v1458 = vpop.f32.mrb[0].mxu0
      %v1459 = vpop.f32.mrb[0].mxu0
      %1460 = vmatprep.mubr.f32.mxu0 0.0
      %1461 = vmatmul.mubr.f32.gmra.mrb[0].mxu0 %v649
      %v1462 = vpop.f32.mrb[0].mxu0
      %v1463 = vadd.f32 %v438, %v1462
      %v1464 = vpop.f32.mrb[0].mxu0
      %1465 = vmatprep.mubr.f32.mxu0 0.0
      %1466 = vmatmul.mubr.f32.gmra.mrb[0].mxu0 %v652
      %v1467 = vpop.f32.mrb[0].mxu0
      %v1468 = vadd.f32 %v438, %v1467
      %v1469 = vpop.f32.mrb[0].mxu0
      %1470 = vmatprep.mubr.f32.mxu0 0.0
      %1471 = vmatmul.mubr.f32.gmra.mrb[0].mxu0 %v655
      %v1472 = vpop.f32.mrb[0].mxu0
      %v1473 = vpop.f32.mrb[0].mxu0
      %1474 = vmatprep.mubr.f32.mxu0 0.0
      %1475 = vmatmul.mubr.f32.gmra.mrb[0].mxu0 %v658
      %v1476 = vpop.f32.mrb[0].mxu0
      %v1477 = vadd.f32 %v438, %v1476
      %v1478 = vpop.f32.mrb[0].mxu0
      %1479 = vmatprep.mubr.f32.mxu0 0.0
      %1480 = vmatmul.mubr.f32.gmra.mrb[0].mxu0 %v661
      %v1481 = vpop.f32.mrb[0].mxu0
      %v1482 = vadd.f32 %v438, %v1481
      %v1483 = vpop.f32.mrb[0].mxu0
      %1484 = vmatprep.mubr.f32.mxu0 0.0
      %1485 = vmatmul.mubr.f32.gmra.mrb[0].mxu0 %v664
      %v1486 = vpop.f32.mrb[0].mxu0
      %v1487 = vpop.f32.mrb[0].mxu0
      %1488 = vmatprep.mubr.f32.mxu0 0.0
      %1489 = vmatmul.mubr.f32.gmra.mrb[0].mxu0 %v667
      %v1490 = vpop.f32.mrb[0].mxu0
      %v1491 = vadd.f32 %v438, %v1490
      %v1492 = vpop.f32.mrb[0].mxu0
      %1493 = vmatprep.mubr.f32.mxu0 0.0
      %1494 = vmatmul.mubr.f32.gmra.mrb[0].mxu0 %v670
      %v1495 = vpop.f32.mrb[0].mxu0
      %v1496 = vadd.f32 %v438, %v1495
      %v1497 = vpop.f32.mrb[0].mxu0
      %1498 = vmatprep.mubr.f32.mxu0 0.0
      %1499 = vmatmul.mubr.f32.gmra.mrb[0].mxu0 %v673
      %v1500 = vpop.f32.mrb[0].mxu0
      %v1501 = vpop.f32.mrb[0].mxu0
      %1502 = vmatprep.mubr.f32.mxu0 0.0
      %1503 = vmatmul.mubr.f32.gmra.mrb[0].mxu0 %v676
      %v1504 = vpop.f32.mrb[0].mxu0
      %v1505 = vadd.f32 %v438, %v1504
      %v1506 = vpop.f32.mrb[0].mxu0
      %1507 = vmatprep.mubr.f32.mxu0 0.0
      %1508 = vmatmul.mubr.f32.gmra.mrb[0].mxu0 %v679
      %v1509 = vpop.f32.mrb[0].mxu0
      %v1510 = vadd.f32 %v438, %v1509
      %v1511 = vpop.f32.mrb[0].mxu0
      %1512 = vmatprep.mubr.f32.mxu0 0.0
      %1513 = vmatmul.mubr.f32.gmra.mrb[0].mxu0 %v682
      %v1514 = vpop.f32.mrb[0].mxu0
      %v1515 = vpop.f32.mrb[0].mxu0
      %1516 = vmatprep.mubr.f32.mxu0 0.0
      %1517 = vmatmul.mubr.f32.gmra.mrb[0].mxu0 %v685
      %v1518 = vpop.f32.mrb[0].mxu0
      %v1519 = vadd.f32 %v438, %v1518
      %v1520 = vpop.f32.mrb[0].mxu0
      %1521 = vmatprep.mubr.f32.mxu0 0.0
      %1522 = vmatmul.mubr.f32.gmra.mrb[0].mxu0 %v688
      %v1523 = vpop.f32.mrb[0].mxu0
      %v1524 = vadd.f32 %v438, %v1523
      %v1525 = vpop.f32.mrb[0].mxu0
      %1526 = vmatprep.mubr.f32.mxu0 0.0
      %1527 = vmatmul.mubr.f32.gmra.mrb[0].mxu0 %v691
      %v1528 = vpop.f32.mrb[0].mxu0
      %v1529 = vpop.f32.mrb[0].mxu0
      %1530 = vmatprep.mubr.f32.mxu0 0.0
      %1531 = vmatmul.mubr.f32.gmra.mrb[0].mxu0 %v694
      %v1532 = vpop.f32.mrb[0].mxu0
      %v1533 = vadd.f32 %v438, %v1532
      %v1534 = vpop.f32.mrb[0].mxu0
      %1535 = vmatprep.mubr.f32.mxu0 0.0
      %1536 = vmatmul.mubr.f32.gmra.mrb[0].mxu0 %v697
      %v1537 = vpop.f32.mrb[0].mxu0
      %v1538 = vadd.f32 %v438, %v1537
      %v1539 = vpop.f32.mrb[0].mxu0
      %1540 = vmatprep.mubr.f32.mxu0 0.0
      %1541 = vmatmul.mubr.f32.gmra.mrb[0].mxu0 %v700
      %v1542 = vpop.f32.mrb[0].mxu0
      %v1543 = vpop.f32.mrb[0].mxu0
      %1544 = vmatprep.mubr.f32.mxu0 0.0
      %1545 = vmatmul.mubr.f32.gmra.mrb[0].mxu0 %v703
      %v1546 = vpop.f32.mrb[0].mxu0
      %v1547 = vadd.f32 %v438, %v1546
      %v1548 = vpop.f32.mrb[0].mxu0
      %1549 = vmatprep.mubr.f32.mxu0 0.0
      %1550 = vmatmul.mubr.f32.gmra.mrb[0].mxu0 %v706
      %v1551 = vpop.f32.mrb[0].mxu0
      %v1552 = vadd.f32 %v438, %v1551
      %v1553 = vpop.f32.mrb[0].mxu0
      %1554 = vmatprep.mubr.f32.mxu0 0.0
      %1555 = vmatmul.mubr.f32.gmra.mrb[0].mxu0 %v709
      %v1556 = vpop.f32.mrb[0].mxu0
      %v1557 = vpop.f32.mrb[0].mxu0
      %1558 = vmatprep.mubr.f32.mxu0 0.0
      %1559 = vmatmul.mubr.f32.gmra.mrb[0].mxu0 %v712
      %v1560 = vpop.f32.mrb[0].mxu0
      %v1561 = vadd.f32 %v438, %v1560
      %v1562 = vpop.f32.mrb[0].mxu0
      %1563 = vmatprep.mubr.f32.mxu0 0.0
      %1564 = vmatmul.mubr.f32.gmra.mrb[0].mxu0 %v715
      %v1565 = vpop.f32.mrb[0].mxu0
      %v1566 = vadd.f32 %v438, %v1565
      %v1567 = vpop.f32.mrb[0].mxu0
      %1568 = vmatprep.mubr.f32.mxu0 0.0
      %1569 = vmatmul.mubr.f32.gmra.mrb[0].mxu0 %v718
      %v1570 = vpop.f32.mrb[0].mxu0
      %v1571 = vpop.f32.mrb[0].mxu0
      %1572 = vmatprep.mubr.f32.mxu0 0.0
      %1573 = vmatmul.mubr.f32.gmra.mrb[0].mxu0 %v721
      %v1574 = vpop.f32.mrb[0].mxu0
      %v1575 = vadd.f32 %v438, %v1574
      %v1576 = vpop.f32.mrb[0].mxu0
      %1577 = vmatprep.mubr.f32.mxu0 0.0
      %1578 = vmatmul.mubr.f32.gmra.mrb[0].mxu0 %v724
      %v1579 = vpop.f32.mrb[0].mxu0
      %v1580 = vadd.f32 %v438, %v1579
      %v1581 = vpop.f32.mrb[0].mxu0
      %1582 = vmatprep.mubr.f32.mxu0 0.0
      %1583 = vmatmul.mubr.f32.gmra.mrb[0].mxu0 %v727
      %v1584 = vpop.f32.mrb[0].mxu0
      %v1585 = vpop.f32.mrb[0].mxu0
      %1586 = vmatprep.mubr.f32.mxu0 0.0
      %1587 = vmatmul.mubr.f32.gmra.mrb[0].mxu0 %v730
      %v1588 = vpop.f32.mrb[0].mxu0
      %v1589 = vadd.f32 %v438, %v1588
      %v1590 = vpop.f32.mrb[0].mxu0
      %1591 = vmatprep.mubr.f32.mxu0 0.0
      %1592 = vmatmul.mubr.f32.gmra.mrb[0].mxu0 %v733
      %v1593 = vpop.f32.mrb[0].mxu0
      %v1594 = vadd.f32 %v438, %v1593
      %v1595 = vpop.f32.mrb[0].mxu0
      %1596 = vmatprep.mubr.f32.mxu0 0.0
      %1597 = vmatmul.mubr.f32.gmra.mrb[0].mxu0 %v736
      %v1598 = vpop.f32.mrb[0].mxu0
      %v1599 = vpop.f32.mrb[0].mxu0
      %1600 = vmatprep.mubr.f32.mxu0 0.0
      %1601 = vmatmul.mubr.f32.gmra.mrb[0].mxu0 %v739
      %v1602 = vpop.f32.mrb[0].mxu0
      %v1603 = vadd.f32 %v438, %v1602
      %v1604 = vpop.f32.mrb[0].mxu0
      %1605 = vmatprep.mubr.f32.mxu0 0.0
      %1606 = vmatmul.mubr.f32.gmra.mrb[0].mxu0 %v742
      %v1607 = vpop.f32.mrb[0].mxu0
      %v1608 = vadd.f32 %v438, %v1607
      %v1609 = vpop.f32.mrb[0].mxu0
      %1610 = vmatprep.mubr.f32.mxu0 0.0
      %1611 = vmatmul.mubr.f32.gmra.mrb[0].mxu0 %v745
      %v1612 = vpop.f32.mrb[0].mxu0
      %v1613 = vpop.f32.mrb[0].mxu0
      %1614 = vmatprep.mubr.f32.mxu0 0.0
      %1615 = vmatmul.mubr.f32.gmra.mrb[0].mxu0 %v748
      %v1616 = vpop.f32.mrb[0].mxu0
      %v1617 = vadd.f32 %v438, %v1616
      %v1618 = vpop.f32.mrb[0].mxu0
      %1619 = vmatprep.mubr.f32.mxu0 0.0
      %1620 = vmatmul.mubr.f32.gmra.mrb[0].mxu0 %v751
      %v1621 = vpop.f32.mrb[0].mxu0
      %v1622 = vadd.f32 %v438, %v1621
      %v1623 = vpop.f32.mrb[0].mxu0
      %1624 = vmatprep.mubr.f32.mxu0 0.0
      %1625 = vmatmul.mubr.f32.gmra.mrb[0].mxu0 %v754
      %v1626 = vpop.f32.mrb[0].mxu0
      %v1627 = vadd.f32 %v438, %v1626
      %v1628 = vpop.f32.mrb[0].mxu0
      %1629 = vmatprep.mubr.f32.mxu0 0.0
      %1630 = vmatmul.mubr.f32.gmra.mrb[0].mxu0 %v757
      %v1631 = vpop.f32.mrb[0].mxu0
      %v1632 = vadd.f32 %v438, %v1631
      %v1633 = vpop.f32.mrb[0].mxu0
      %1634 = vmatprep.mubr.f32.mxu0 0.0
      %1635 = vmatmul.mubr.f32.gmra.mrb[0].mxu0 %v760
      %v1636 = vpop.f32.mrb[0].mxu0
      %v1637 = vadd.f32 %v438, %v1636
      %v1638 = vpop.f32.mrb[0].mxu0
      %1639 = vmatprep.mubr.f32.mxu0 0.0
      %1640 = vmatmul.mubr.f32.gmra.mrb[0].mxu0 %v763
      %v1641 = vpop.f32.mrb[0].mxu0
      %v1642 = vadd.f32 %v438, %v1641
      %v1643 = vpop.f32.mrb[0].mxu0
      %1644 = vmatprep.mubr.f32.mxu0 0.0
      %1645 = vmatmul.mubr.f32.gmra.mrb[0].mxu0 %v766
      %v1646 = vpop.f32.mrb[0].mxu0
      %v1647 = vadd.f32 %v438, %v1646
      %v1648 = vpop.f32.mrb[0].mxu0
      %1649 = vmatprep.mubr.f32.mxu0 0.0
      %1650 = vmatmul.mubr.f32.gmra.mrb[0].mxu0 %v769
      %v1651 = vpop.f32.mrb[0].mxu0
      %v1652 = vadd.f32 %v438, %v1651
      %v1653 = vpop.f32.mrb[0].mxu0
      %1654 = vmatprep.mubr.f32.mxu0 0.0
      %1655 = vmatmul.mubr.f32.gmra.mrb[0].mxu0 %v772
      %v1656 = vpop.f32.mrb[0].mxu0
      %v1657 = vadd.f32 %v438, %v1656
      %v1658 = vpop.f32.mrb[0].mxu0
      %1659 = vmatprep.mubr.f32.mxu0 0.0
      %1660 = vmatmul.mubr.f32.gmra.mrb[0].mxu0 %v775
      %v1661 = vpop.f32.mrb[0].mxu0
      %v1662 = vadd.f32 %v438, %v1661
      %v1663 = vpop.f32.mrb[0].mxu0
      %1664 = vmatprep.mubr.f32.mxu0 0.0
      %1665 = vmatmul.mubr.f32.gmra.mrb[0].mxu0 %v778
      %v1666 = vpop.f32.mrb[0].mxu0
      %v1667 = vadd.f32 %v438, %v1666
      %v1668 = vpop.f32.mrb[0].mxu0
      %1669 = vmatprep.mubr.f32.mxu0 0.0
      %1670 = vmatmul.mubr.f32.gmra.mrb[0].mxu0 %v781
      %v1671 = vpop.f32.mrb[0].mxu0
      %v1672 = vadd.f32 %v438, %v1671
      %v1673 = vpop.f32.mrb[0].mxu0
      %1674 = vmatprep.mubr.f32.mxu0 0.0
      %1675 = vmatmul.mubr.f32.gmra.mrb[0].mxu0 %v784
      %v1676 = vpop.f32.mrb[0].mxu0
      %v1677 = vadd.f32 %v438, %v1676
      %v1678 = vpop.f32.mrb[0].mxu0
      %1679 = vmatprep.mubr.f32.mxu0 0.0
      %1680 = vmatmul.mubr.f32.gmra.mrb[0].mxu0 %v787
      %v1681 = vpop.f32.mrb[0].mxu0
      %v1682 = vadd.f32 %v438, %v1681
      %v1683 = vpop.f32.mrb[0].mxu0
      %1684 = vmatprep.mubr.f32.mxu0 0.0
      %1685 = vmatmul.mubr.f32.gmra.mrb[0].mxu0 %v790
      %v1686 = vpop.f32.mrb[0].mxu0
      %v1687 = vadd.f32 %v438, %v1686
      %v1688 = vpop.f32.mrb[0].mxu0
      %1689 = vmatprep.mubr.f32.mxu0 0.0
      %1690 = vmatmul.mubr.f32.gmra.mrb[0].mxu0 %v793
      %v1691 = vpop.f32.mrb[0].mxu0
      %v1692 = vadd.f32 %v438, %v1691
      %v1693 = vpop.f32.mrb[0].mxu0
      %1694 = vmatprep.mubr.f32.mxu0 0.0
      %1695 = vmatmul.mubr.f32.gmra.mrb[0].mxu0 %v796
      %v1696 = vpop.f32.mrb[0].mxu0
      %v1697 = vadd.f32 %v438, %v1696
      %v1698 = vpop.f32.mrb[0].mxu0
      %1699 = vmatprep.mubr.f32.mxu0 0.0
      %1700 = vmatmul.mubr.f32.gmra.mrb[0].mxu0 %v799
      %v1701 = vpop.f32.mrb[0].mxu0
      %v1702 = vadd.f32 %v438, %v1701
      %v1703 = vpop.f32.mrb[0].mxu0
      %1704 = vmatprep.mubr.f32.mxu0 0.0
      %1705 = vmatmul.mubr.f32.gmra.mrb[0].mxu0 %v802
      %v1706 = vpop.f32.mrb[0].mxu0
      %v1707 = vadd.f32 %v438, %v1706
      %v1708 = vpop.f32.mrb[0].mxu0
      %1709 = vmatprep.mubr.f32.mxu0 0.0
      %1710 = vmatmul.mubr.f32.gmra.mrb[0].mxu0 %v805
      %v1711 = vpop.f32.mrb[0].mxu0
      %v1712 = vadd.f32 %v438, %v1711
      %v1713 = vpop.f32.mrb[0].mxu0
      %1714 = vmatprep.mubr.f32.mxu0 0.0
      %1715 = vmatmul.mubr.f32.gmra.mrb[0].mxu0 %v808
      %v1716 = vpop.f32.mrb[0].mxu0
      %v1717 = vadd.f32 %v438, %v1716
      %v1718 = vpop.f32.mrb[0].mxu0
      %1719 = vmatprep.mubr.f32.mxu0 0.0
      %1720 = vmatmul.mubr.f32.gmra.mrb[0].mxu0 %v811
      %v1721 = vpop.f32.mrb[0].mxu0
      %v1722 = vadd.f32 %v438, %v1721
      %v1723 = vpop.f32.mrb[0].mxu0
      %1724 = vmatprep.mubr.f32.mxu0 0.0
      %1725 = vmatmul.mubr.f32.gmra.mrb[0].mxu0 %v814
      %v1726 = vpop.f32.mrb[0].mxu0
      %v1727 = vadd.f32 %v438, %v1726
      %v1728 = vpop.f32.mrb[0].mxu0
      %1729 = vmatprep.mubr.f32.mxu0 0.0
      %1730 = vmatmul.mubr.f32.gmra.mrb[0].mxu0 %v817
      %v1731 = vpop.f32.mrb[0].mxu0
      %v1732 = vadd.f32 %v438, %v1731
      %v1733 = vpop.f32.mrb[0].mxu0
      %1734 = vmatprep.mubr.f32.mxu0 0.0
      %1735 = vmatmul.mubr.f32.gmra.mrb[0].mxu0 %v820
      %v1736 = vpop.f32.mrb[0].mxu0
      %v1737 = vadd.f32 %v438, %v1736
      %v1738 = vpop.f32.mrb[0].mxu0
      %1739 = vmatprep.mubr.f32.mxu0 0.0
      %1740 = vmatmul.mubr.f32.gmra.mrb[0].mxu0 %v823
      %v1741 = vpop.f32.mrb[0].mxu0
      %v1742 = vadd.f32 %v438, %v1741
      %v1743 = vpop.f32.mrb[0].mxu0
      %1744 = vmatprep.mubr.f32.mxu0 0.0
      %1745 = vmatmul.mubr.f32.gmra.mrb[0].mxu0 %v826
      %v1746 = vpop.f32.mrb[0].mxu0
      %v1747 = vadd.f32 %v438, %v1746
      %v1748 = vpop.f32.mrb[0].mxu0
      %1749 = vmatprep.mubr.f32.mxu0 0.0
      %1750 = vmatmul.mubr.f32.gmra.mrb[0].mxu0 %v829
      %v1751 = vpop.f32.mrb[0].mxu0
      %v1752 = vadd.f32 %v438, %v1751
      %v1753 = vpop.f32.mrb[0].mxu0
      %1754 = vmatprep.mubr.f32.mxu0 0.0
      %1755 = vmatmul.mubr.f32.gmra.mrb[0].mxu0 %v832
      %v1756 = vpop.f32.mrb[0].mxu0
      %v1757 = vadd.f32 %v438, %v1756
      %v1758 = vpop.f32.mrb[0].mxu0
      %1759 = vmatprep.mubr.f32.mxu0 0.0
      %1760 = vmatmul.mubr.f32.gmra.mrb[0].mxu0 %v835
      %v1761 = vpop.f32.mrb[0].mxu0
      %v1762 = vadd.f32 %v438, %v1761
      %v1763 = vpop.f32.mrb[0].mxu0
      %1764 = vmatprep.mubr.f32.mxu0 0.0
      %1765 = vmatmul.mubr.f32.gmra.mrb[0].mxu0 %v838
      %v1766 = vpop.f32.mrb[0].mxu0
      %v1767 = vadd.f32 %v438, %v1766
      %v1768 = vpop.f32.mrb[0].mxu0
      %1769 = vmatprep.mubr.f32.mxu0 0.0
      %1770 = vmatmul.mubr.f32.gmra.mrb[0].mxu0 %v841
      %v1771 = vpop.f32.mrb[0].mxu0
      %v1772 = vadd.f32 %v438, %v1771
      %v1773 = vpop.f32.mrb[0].mxu0
      %1774 = vmatprep.mubr.f32.mxu0 0.0
      %1775 = vmatmul.mubr.f32.gmra.mrb[0].mxu0 %v844
      %v1776 = vpop.f32.mrb[0].mxu0
      %v1777 = vadd.f32 %v438, %v1776
      %v1778 = vpop.f32.mrb[0].mxu0
      %1779 = vmatprep.mubr.f32.mxu0 0.0
      %1780 = vmatmul.mubr.f32.gmra.mrb[0].mxu0 %v847
      %v1781 = vpop.f32.mrb[0].mxu0
      %v1782 = vadd.f32 %v438, %v1781
      %v1783 = vpop.f32.mrb[0].mxu0
      %1784 = vmatprep.mubr.f32.mxu0 0.0
      %1785 = vmatmul.mubr.f32.gmra.mrb[0].mxu0 %v850
      %v1786 = vpop.f32.mrb[0].mxu0
      %v1787 = vadd.f32 %v438, %v1786
      %v1788 = vpop.f32.mrb[0].mxu0
      %1789 = vmatprep.mubr.f32.mxu0 0.0
      %1790 = vmatmul.mubr.f32.gmra.mrb[0].mxu0 %v853
      %v1791 = vpop.f32.mrb[0].mxu0
      %v1792 = vadd.f32 %v438, %v1791
      %v1793 = vpop.f32.mrb[0].mxu0
      %1794 = vmatprep.mubr.f32.mxu0 0.0
      %1795 = vmatmul.mubr.f32.gmra.mrb[0].mxu0 %v856
      %v1796 = vpop.f32.mrb[0].mxu0
      %v1797 = vadd.f32 %v438, %v1796
      %v1798 = vpop.f32.mrb[0].mxu0
      %1799 = vmatprep.mubr.f32.mxu0 0.0
      %1800 = vmatmul.mubr.f32.gmra.mrb[0].mxu0 %v859
      %v1801 = vpop.f32.mrb[0].mxu0
      %v1802 = vadd.f32 %v438, %v1801
      %v1803 = vpop.f32.mrb[0].mxu0
      %1804 = vmatprep.mubr.f32.mxu0 0.0
      %1805 = vmatmul.mubr.f32.gmra.mrb[0].mxu0 %v862
      %v1806 = vpop.f32.mrb[0].mxu0
      %v1807 = vadd.f32 %v438, %v1806
      %v1808 = vpop.f32.mrb[0].mxu0
      %1809 = vmatprep.mubr.f32.mxu0 0.0
      %1810 = vmatmul.mubr.f32.gmra.mrb[0].mxu0 %v865
      %v1811 = vpop.f32.mrb[0].mxu0
      %v1812 = vadd.f32 %v438, %v1811
      %v1813 = vpop.f32.mrb[0].mxu0
      %1814 = vmatprep.mubr.f32.mxu0 0.0
      %1815 = vmatmul.mubr.f32.gmra.mrb[0].mxu0 %v868
      %v1816 = vpop.f32.mrb[0].mxu0
      %v1817 = vadd.f32 %v438, %v1816
      %v1818 = vpop.f32.mrb[0].mxu0
      %1819 = vmatprep.mubr.f32.mxu0 0.0
      %1820 = vmatmul.mubr.f32.gmra.mrb[0].mxu0 %v871
      %v1821 = vpop.f32.mrb[0].mxu0
      %v1822 = vadd.f32 %v438, %v1821
      %v1823 = vpop.f32.mrb[0].mxu0
      %1824 = vmatprep.mubr.f32.mxu0 0.0
      %1825 = vmatmul.mubr.f32.gmra.mrb[0].mxu0 %v874
      %v1826 = vpop.f32.mrb[0].mxu0
      %v1827 = vadd.f32 %v438, %v1826
      %v1828 = vpop.f32.mrb[0].mxu0
      %1829 = vmatprep.mubr.f32.mxu0 0.0
      %1830 = vmatmul.mubr.f32.gmra.mrb[0].mxu0 %v877
      %v1831 = vpop.f32.mrb[0].mxu0
      %v1832 = vadd.f32 %v438, %v1831
      %v1833 = vpop.f32.mrb[0].mxu0
      %1834 = vmatprep.mubr.f32.mxu0 0.0
      %1835 = vmatmul.mubr.f32.gmra.mrb[0].mxu0 %v880
      %v1836 = vpop.f32.mrb[0].mxu0
      %v1837 = vadd.f32 %v438, %v1836
      %v1838 = vpop.f32.mrb[0].mxu0
      %1839 = vmatprep.mubr.f32.mxu0 0.0
      %1840 = vmatmul.mubr.f32.gmra.mrb[0].mxu0 %v883
      %v1841 = vpop.f32.mrb[0].mxu0
      %v1842 = vadd.f32 %v438, %v1841
      %v1843 = vpop.f32.mrb[0].mxu0
      %1844 = vmatprep.mubr.f32.mxu0 0.0
      %1845 = vmatmul.mubr.f32.gmra.mrb[0].mxu0 %v886
      %v1846 = vpop.f32.mrb[0].mxu0
      %v1847 = vadd.f32 %v438, %v1846
      %v1848 = vpop.f32.mrb[0].mxu0
      %1849 = vmatprep.mubr.f32.mxu0 0.0
      %1850 = vmatmul.mubr.f32.gmra.mrb[0].mxu0 %v889
      %v1851 = vpop.f32.mrb[0].mxu0
      %v1852 = vadd.f32 %v438, %v1851
      %v1853 = vpop.f32.mrb[0].mxu0
      %1854 = vmatprep.mubr.f32.mxu0 0.0
      %1855 = vmatmul.mubr.f32.gmra.mrb[0].mxu0 %v892
      %v1856 = vpop.f32.mrb[0].mxu0
      %v1857 = vpop.f32.mrb[0].mxu0
      %1858 = vmatprep.mubr.f32.mxu0 0.0
      %1859 = vmatmul.mubr.f32.gmra.mrb[0].mxu0 %v895
      %v1860 = vpop.f32.mrb[0].mxu0
      %v1861 = vpop.f32.mrb[0].mxu0
      %1862 = vmatprep.mubr.f32.mxu0 0.0
      %1863 = vmatmul.mubr.f32.gmra.mrb[0].mxu0 %v898
      %v1864 = vpop.f32.mrb[0].mxu0
      %v1865 = vpop.f32.mrb[0].mxu0
      %1866 = vmatprep.mubr.f32.mxu0 0.0
      %1867 = vmatmul.mubr.f32.gmra.mrb[0].mxu0 %v901
      %v1868 = vpop.f32.mrb[0].mxu0
      %v1869 = vadd.f32 %v438, %v1868
      %v1870 = vpop.f32.mrb[0].mxu0
      %1871 = vmatprep.mubr.f32.mxu0 0.0
      %1872 = vmatmul.mubr.f32.gmra.mrb[0].mxu0 %v904
      %v1873 = vpop.f32.mrb[0].mxu0
      %v1874 = vadd.f32 %v438, %v1873
      %v1875 = vpop.f32.mrb[0].mxu0
      %1876 = vmatprep.mubr.f32.mxu0 0.0
      %1877 = vmatmul.mubr.f32.gmra.mrb[0].mxu0 %v907
      %v1878 = vpop.f32.mrb[0].mxu0
      %v1879 = vpop.f32.mrb[0].mxu0
      %1880 = vmatprep.mubr.f32.mxu0 0.0
      %1881 = vmatmul.mubr.f32.gmra.mrb[0].mxu0 %v910
      %v1882 = vpop.f32.mrb[0].mxu0
      %v1883 = vadd.f32 %v438, %v1882
      %v1884 = vpop.f32.mrb[0].mxu0
      %1885 = vmatprep.mubr.f32.mxu0 0.0
      %1886 = vmatmul.mubr.f32.gmra.mrb[0].mxu0 %v913
      %v1887 = vpop.f32.mrb[0].mxu0
      %v1888 = vadd.f32 %v438, %v1887
      %v1889 = vpop.f32.mrb[0].mxu0
      %1890 = vmatprep.mubr.f32.mxu0 0.0
      %1891 = vmatmul.mubr.f32.gmra.mrb[0].mxu0 %v916
      %v1892 = vpop.f32.mrb[0].mxu0
      %v1893 = vpop.f32.mrb[0].mxu0
      %1894 = vmatprep.mubr.f32.mxu0 0.0
      %1895 = vmatmul.mubr.f32.gmra.mrb[0].mxu0 %v919
      %v1896 = vpop.f32.mrb[0].mxu0
      %v1897 = vadd.f32 %v438, %v1896
      %v1898 = vpop.f32.mrb[0].mxu0
      %1899 = vmatprep.mubr.f32.mxu0 0.0
      %1900 = vmatmul.mubr.f32.gmra.mrb[0].mxu0 %v922
      %v1901 = vpop.f32.mrb[0].mxu0
      %v1902 = vadd.f32 %v438, %v1901
      %v1903 = vpop.f32.mrb[0].mxu0
      %1904 = vmatprep.mubr.f32.mxu0 0.0
      %1905 = vmatmul.mubr.f32.gmra.mrb[0].mxu0 %v925
      %v1906 = vpop.f32.mrb[0].mxu0
      %v1907 = vpop.f32.mrb[0].mxu0
      %1908 = vmatprep.mubr.f32.mxu0 0.0
      %1909 = vmatmul.mubr.f32.gmra.mrb[0].mxu0 %v928
      %v1910 = vpop.f32.mrb[0].mxu0
      %v1911 = vadd.f32 %v438, %v1910
      %v1912 = vpop.f32.mrb[0].mxu0
      %1913 = vmatprep.mubr.f32.mxu0 0.0
      %1914 = vmatmul.mubr.f32.gmra.mrb[0].mxu0 %v931
      %v1915 = vpop.f32.mrb[0].mxu0
      %v1916 = vadd.f32 %v438, %v1915
      %v1917 = vpop.f32.mrb[0].mxu0
      %1918 = vmatprep.mubr.f32.mxu0 0.0
      %1919 = vmatmul.mubr.f32.gmra.mrb[0].mxu0 %v934
      %v1920 = vpop.f32.mrb[0].mxu0
      %v1921 = vpop.f32.mrb[0].mxu0
      %1922 = vmatprep.mubr.f32.mxu0 0.0
      %1923 = vmatmul.mubr.f32.gmra.mrb[0].mxu0 %v937
      %v1924 = vpop.f32.mrb[0].mxu0
      %v1925 = vadd.f32 %v438, %v1924
      %v1926 = vpop.f32.mrb[0].mxu0
      %1927 = vmatprep.mubr.f32.mxu0 0.0
      %1928 = vmatmul.mubr.f32.gmra.mrb[0].mxu0 %v940
      %v1929 = vpop.f32.mrb[0].mxu0
      %v1930 = vadd.f32 %v438, %v1929
      %v1931 = vpop.f32.mrb[0].mxu0
      %1932 = vmatprep.mubr.f32.mxu0 0.0
      %1933 = vmatmul.mubr.f32.gmra.mrb[0].mxu0 %v943
      %v1934 = vpop.f32.mrb[0].mxu0
      %v1935 = vpop.f32.mrb[0].mxu0
      %1936 = vmatprep.mubr.f32.mxu0 0.0
      %1937 = vmatmul.mubr.f32.gmra.mrb[0].mxu0 %v946
      %v1938 = vpop.f32.mrb[0].mxu0
      %v1939 = vadd.f32 %v438, %v1938
      %v1940 = vpop.f32.mrb[0].mxu0
      %1941 = vmatprep.mubr.f32.mxu0 0.0
      %1942 = vmatmul.mubr.f32.gmra.mrb[0].mxu0 %v949
      %v1943 = vpop.f32.mrb[0].mxu0
      %v1944 = vadd.f32 %v438, %v1943
      %v1945 = vpop.f32.mrb[0].mxu0
      %1946 = vmatprep.mubr.f32.mxu0 0.0
      %1947 = vmatmul.mubr.f32.gmra.mrb[0].mxu0 %v952
      %v1948 = vpop.f32.mrb[0].mxu0
      %v1949 = vpop.f32.mrb[0].mxu0
      %1950 = vmatprep.mubr.f32.mxu0 0.0
      %1951 = vmatmul.mubr.f32.gmra.mrb[0].mxu0 %v955
      %v1952 = vpop.f32.mrb[0].mxu0
      %v1953 = vadd.f32 %v438, %v1952
      %v1954 = vpop.f32.mrb[0].mxu0
      %1955 = vmatprep.mubr.f32.mxu0 0.0
      %1956 = vmatmul.mubr.f32.gmra.mrb[0].mxu0 %v958
      %v1957 = vpop.f32.mrb[0].mxu0
      %v1958 = vadd.f32 %v438, %v1957
      %v1959 = vpop.f32.mrb[0].mxu0
      %1960 = vmatprep.mubr.f32.mxu0 0.0
      %1961 = vmatmul.mubr.f32.gmra.mrb[0].mxu0 %v961
      %v1962 = vpop.f32.mrb[0].mxu0
      %v1963 = vpop.f32.mrb[0].mxu0
      %1964 = vmatprep.mubr.f32.mxu0 0.0
      %1965 = vmatmul.mubr.f32.gmra.mrb[0].mxu0 %v964
      %v1966 = vpop.f32.mrb[0].mxu0
      %v1967 = vadd.f32 %v438, %v1966
      %v1968 = vpop.f32.mrb[0].mxu0
      %1969 = vmatprep.mubr.f32.mxu0 0.0
      %1970 = vmatmul.mubr.f32.gmra.mrb[0].mxu0 %v967
      %v1971 = vpop.f32.mrb[0].mxu0
      %v1972 = vadd.f32 %v438, %v1971
      %v1973 = vpop.f32.mrb[0].mxu0
      %1974 = vmatprep.mubr.f32.mxu0 0.0
      %1975 = vmatmul.mubr.f32.gmra.mrb[0].mxu0 %v970
      %v1976 = vpop.f32.mrb[0].mxu0
      %v1977 = vpop.f32.mrb[0].mxu0
      %1978 = vmatprep.mubr.f32.mxu0 0.0
      %1979 = vmatmul.mubr.f32.gmra.mrb[0].mxu0 %v973
      %v1980 = vpop.f32.mrb[0].mxu0
      %v1981 = vadd.f32 %v438, %v1980
      %v1982 = vpop.f32.mrb[0].mxu0
      %1983 = vmatprep.mubr.f32.mxu0 0.0
      %1984 = vmatmul.mubr.f32.gmra.mrb[0].mxu0 %v976
      %v1985 = vpop.f32.mrb[0].mxu0
      %v1986 = vadd.f32 %v438, %v1985
      %v1987 = vpop.f32.mrb[0].mxu0
      %1988 = vmatprep.mubr.f32.mxu0 0.0
      %1989 = vmatmul.mubr.f32.gmra.mrb[0].mxu0 %v979
      %v1990 = vpop.f32.mrb[0].mxu0
      %v1991 = vpop.f32.mrb[0].mxu0
      %1992 = vmatprep.mubr.f32.mxu0 0.0
      %1993 = vmatmul.mubr.f32.gmra.mrb[0].mxu0 %v982
      %v1994 = vpop.f32.mrb[0].mxu0
      %v1995 = vadd.f32 %v438, %v1994
      %v1996 = vpop.f32.mrb[0].mxu0
      %1997 = vmatprep.mubr.f32.mxu0 0.0
      %1998 = vmatmul.mubr.f32.gmra.mrb[0].mxu0 %v985
      %v1999 = vpop.f32.mrb[0].mxu0
      %v2000 = vadd.f32 %v438, %v1999
      %v2001 = vpop.f32.mrb[0].mxu0
      %2002 = vmatprep.mubr.f32.mxu0 0.0
      %2003 = vmatmul.mubr.f32.gmra.mrb[0].mxu0 %v988
      %v2004 = vpop.f32.mrb[0].mxu0
      %v2005 = vpop.f32.mrb[0].mxu0
      %2006 = vmatprep.mubr.f32.mxu0 0.0
      %2007 = vmatmul.mubr.f32.gmra.mrb[0].mxu0 %v991
      %v2008 = vpop.f32.mrb[0].mxu0
      %v2009 = vadd.f32 %v438, %v2008
      %v2010 = vpop.f32.mrb[0].mxu0
      %2011 = vmatprep.mubr.f32.mxu0 0.0
      %2012 = vmatmul.mubr.f32.gmra.mrb[0].mxu0 %v994
      %v2013 = vpop.f32.mrb[0].mxu0
      %v2014 = vadd.f32 %v438, %v2013
      %v2015 = vpop.f32.mrb[0].mxu0
      %2016 = vmatprep.mubr.f32.mxu0 0.0
      %2017 = vmatmul.mubr.f32.gmra.mrb[0].mxu0 %v997
      %v2018 = vpop.f32.mrb[0].mxu0
      %v2019 = vpop.f32.mrb[0].mxu0
      %2020 = vmatprep.mubr.f32.mxu0 0.0
      %2021 = vmatmul.mubr.f32.gmra.mrb[0].mxu0 %v1000
      %v2022 = vpop.f32.mrb[0].mxu0
      %v2023 = vadd.f32 %v438, %v2022
      %v2024 = vpop.f32.mrb[0].mxu0
      %2025 = vmatprep.mubr.f32.mxu0 0.0
      %2026 = vmatmul.mubr.f32.gmra.mrb[0].mxu0 %v1003
      %v2027 = vpop.f32.mrb[0].mxu0
      %v2028 = vadd.f32 %v438, %v2027
      %v2029 = vpop.f32.mrb[0].mxu0
      %2030 = vmatprep.mubr.f32.mxu0 0.0
      %2031 = vmatmul.mubr.f32.gmra.mrb[0].mxu0 %v1006
      %v2032 = vpop.f32.mrb[0].mxu0
      %v2033 = vpop.f32.mrb[0].mxu0
      %2034 = vmatprep.mubr.f32.mxu0 0.0
      %2035 = vmatmul.mubr.f32.gmra.mrb[0].mxu0 %v1009
      %v2036 = vpop.f32.mrb[0].mxu0
      %v2037 = vadd.f32 %v438, %v2036
      %v2038 = vpop.f32.mrb[0].mxu0
      %2039 = vmatprep.mubr.f32.mxu0 0.0
      %2040 = vmatmul.mubr.f32.gmra.mrb[0].mxu0 %v1012
      %v2041 = vpop.f32.mrb[0].mxu0
      %v2042 = vadd.f32 %v438, %v2041
      %v2043 = vpop.f32.mrb[0].mxu0
      %2044 = vmatprep.mubr.f32.mxu0 0.0
      %2045 = vmatmul.mubr.f32.gmra.mrb[0].mxu0 %v1015
      %v2046 = vpop.f32.mrb[0].mxu0
      %v2047 = vpop.f32.mrb[0].mxu0
      %2048 = vmatprep.mubr.f32.mxu0 0.0
      %2049 = vmatmul.mubr.f32.gmra.mrb[0].mxu0 %v1018
      %v2050 = vpop.f32.mrb[0].mxu0
      %v2051 = vadd.f32 %v438, %v2050
      %v2052 = vpop.f32.mrb[0].mxu0
      %2053 = vmatprep.mubr.f32.mxu0 0.0
      %2054 = vmatmul.mubr.f32.gmra.mrb[0].mxu0 %v1021
      %v2055 = vpop.f32.mrb[0].mxu0
      %v2056 = vadd.f32 %v438, %v2055
      %v2057 = vpop.f32.mrb[0].mxu0
      %2058 = vmatprep.mubr.f32.mxu0 0.0
      %2059 = vmatmul.mubr.f32.gmra.mrb[0].mxu0 %v1024
      %v2060 = vpop.f32.mrb[0].mxu0
      %v2061 = vpop.f32.mrb[0].mxu0
      %2062 = vmatprep.mubr.f32.mxu0 0.0
      %2063 = vmatmul.mubr.f32.gmra.mrb[0].mxu0 %v1027
      %v2064 = vpop.f32.mrb[0].mxu0
      %v2065 = vadd.f32 %v438, %v2064
      %v2066 = vpop.f32.mrb[0].mxu0
      %2067 = vmatprep.mubr.f32.mxu0 0.0
      %2068 = vmatmul.mubr.f32.gmra.mrb[0].mxu0 %v1030
      %v2069 = vpop.f32.mrb[0].mxu0
      %v2070 = vadd.f32 %v438, %v2069
      %v2071 = vpop.f32.mrb[0].mxu0
      %2072 = vmatprep.mubr.f32.mxu0 0.0
      %2073 = vmatmul.mubr.f32.gmra.mrb[0].mxu0 %v1033
      %v2074 = vpop.f32.mrb[0].mxu0
      %v2075 = vpop.f32.mrb[0].mxu0
      %2076 = vmatprep.mubr.f32.mxu0 0.0
      %2077 = vmatmul.mubr.f32.gmra.mrb[0].mxu0 %v1036
      %v2078 = vpop.f32.mrb[0].mxu0
      %v2079 = vadd.f32 %v438, %v2078
      %v2080 = vpop.f32.mrb[0].mxu0
      %2081 = vmatprep.mubr.f32.mxu0 0.0
      %2082 = vmatmul.mubr.f32.gmra.mrb[0].mxu0 %v1039
      %v2083 = vpop.f32.mrb[0].mxu0
      %v2084 = vadd.f32 %v438, %v2083
      %v2085 = vpop.f32.mrb[0].mxu0
      %2086 = vmatprep.mubr.f32.mxu0 0.0
      %2087 = vmatmul.mubr.f32.gmra.mrb[0].mxu0 %v1042
      %v2088 = vpop.f32.mrb[0].mxu0
      %v2089 = vpop.f32.mrb[0].mxu0
      %2090 = vmatprep.mubr.f32.mxu0 0.0
      %2091 = vmatmul.mubr.f32.gmra.mrb[0].mxu0 %v1045
      %v2092 = vpop.f32.mrb[0].mxu0
      %v2093 = vpop.f32.mrb[0].mxu0
      %2094 = vmatprep.mubr.f32.mxu0 0.0
      %2095 = vmatmul.mubr.f32.gmra.mrb[0].mxu0 %v1048
      %v2096 = vpop.f32.mrb[0].mxu0
      %v2097 = vpop.f32.mrb[0].mxu0
      %2098 = vmatprep.mubr.f32.mxu0 0.0
      %2099 = vmatmul.mubr.f32.gmra.mrb[0].mxu0 %v1051
      %v2100 = vpop.f32.mrb[0].mxu0
      %v2101 = vpop.f32.mrb[0].mxu0
      %2102 = vdwg.mxu0
      %v2103 = vmax.f32 %v1124, 0.0
      %v2104 = vmax.f32 %v1129, 0.0
      %v2105 = vmax.f32 %v1134, 0.0
      %v2106 = vmax.f32 %v1139, 0.0
      %v2107 = vmax.f32 %v1144, 0.0
      %v2108 = vmax.f32 %v1149, 0.0
      %v2109 = vmax.f32 %v1154, 0.0
      %v2110 = vmax.f32 %v1159, 0.0
      %v2111 = vmax.f32 %v1164, 0.0
      %v2112 = vmax.f32 %v1169, 0.0
      %v2113 = vmax.f32 %v1174, 0.0
      %v2114 = vmax.f32 %v1179, 0.0
      %v2115 = vmax.f32 %v1184, 0.0
      %v2116 = vmax.f32 %v1189, 0.0
      %v2117 = vmax.f32 %v1194, 0.0
      %v2118 = vmax.f32 %v1199, 0.0
      %v2119 = vmax.f32 %v1204, 0.0
      %v2120 = vmax.f32 %v1209, 0.0
      %v2121 = vmax.f32 %v1214, 0.0
      %v2122 = vmax.f32 %v1219, 0.0
      %v2123 = vmax.f32 %v1224, 0.0
      %v2124 = vmax.f32 %v1229, 0.0
      %v2125 = vmax.f32 %v1234, 0.0
      %v2126 = vmax.f32 %v1239, 0.0
      %v2127 = vmax.f32 %v1244, 0.0
      %v2128 = vmax.f32 %v1249, 0.0
      %v2129 = vmax.f32 %v1254, 0.0
      %v2130 = vmax.f32 %v1259, 0.0
      %v2131 = vmax.f32 %v1264, 0.0
      %v2132 = vmax.f32 %v1269, 0.0
      %v2133 = vmax.f32 %v1274, 0.0
      %v2134 = vmax.f32 %v1279, 0.0
      %v2135 = vmax.f32 %v1284, 0.0
      %v2136 = vmax.f32 %v1289, 0.0
      %v2137 = vmax.f32 %v1294, 0.0
      %v2138 = vmax.f32 %v1299, 0.0
      %v2139 = vmax.f32 %v1304, 0.0
      %v2140 = vmax.f32 %v1309, 0.0
      %v2141 = vmax.f32 %v1314, 0.0
      %v2142 = vmax.f32 %v1319, 0.0
      %v2143 = vmax.f32 %v1324, 0.0
      %v2144 = vmax.f32 %v1329, 0.0
      %v2145 = vmax.f32 %v1334, 0.0
      %v2146 = vmax.f32 %v1339, 0.0
      %v2147 = vmax.f32 %v1344, 0.0
      %v2148 = vmax.f32 %v1349, 0.0
      %v2149 = vmax.f32 %v1354, 0.0
      %v2150 = vmax.f32 %v1359, 0.0
      %v2151 = vmax.f32 %v1364, 0.0
      %v2152 = vmax.f32 %v1369, 0.0
      %v2153 = vmax.f32 %v1374, 0.0
      %v2154 = vmax.f32 %v1379, 0.0
      %v2155 = vmax.f32 %v1384, 0.0
      %v2156 = vmax.f32 %v1393, 0.0
      %v2157 = vmax.f32 %v1398, 0.0
      %v2158 = vmax.f32 %v1407, 0.0
      %v2159 = vmax.f32 %v1412, 0.0
      %v2160 = vmax.f32 %v1421, 0.0
      %v2161 = vmax.f32 %v1426, 0.0
      %v2162 = vmax.f32 %v1435, 0.0
      %v2163 = vmax.f32 %v1440, 0.0
      %v2164 = vmax.f32 %v1449, 0.0
      %v2165 = vmax.f32 %v1454, 0.0
      %v2166 = vmax.f32 %v1463, 0.0
      %v2167 = vmax.f32 %v1468, 0.0
      %v2168 = vmax.f32 %v1477, 0.0
      %v2169 = vmax.f32 %v1482, 0.0
      %v2170 = vmax.f32 %v1491, 0.0
      %v2171 = vmax.f32 %v1496, 0.0
      %v2172 = vmax.f32 %v1505, 0.0
      %v2173 = vmax.f32 %v1510, 0.0
      %v2174 = vmax.f32 %v1519, 0.0
      %v2175 = vmax.f32 %v1524, 0.0
      %v2176 = vmax.f32 %v1533, 0.0
      %v2177 = vmax.f32 %v1538, 0.0
      %v2178 = vmax.f32 %v1547, 0.0
      %v2179 = vmax.f32 %v1552, 0.0
      %v2180 = vmax.f32 %v1561, 0.0
      %v2181 = vmax.f32 %v1566, 0.0
      %v2182 = vmax.f32 %v1575, 0.0
      %v2183 = vmax.f32 %v1580, 0.0
      %v2184 = vmax.f32 %v1589, 0.0
      %v2185 = vmax.f32 %v1594, 0.0
      %v2186 = vmax.f32 %v1603, 0.0
      %v2187 = vmax.f32 %v1608, 0.0
      %v2188 = vmax.f32 %v1617, 0.0
      %v2189 = vmax.f32 %v1622, 0.0
      %v2190 = vmax.f32 %v1627, 0.0
      %v2191 = vmax.f32 %v1632, 0.0
      %v2192 = vmax.f32 %v1637, 0.0
      %v2193 = vmax.f32 %v1642, 0.0
      %v2194 = vmax.f32 %v1647, 0.0
      %v2195 = vmax.f32 %v1652, 0.0
      %v2196 = vmax.f32 %v1657, 0.0
      %v2197 = vmax.f32 %v1662, 0.0
      %v2198 = vmax.f32 %v1667, 0.0
      %v2199 = vmax.f32 %v1672, 0.0
      %v2200 = vmax.f32 %v1677, 0.0
      %v2201 = vmax.f32 %v1682, 0.0
      %v2202 = vmax.f32 %v1687, 0.0
      %v2203 = vmax.f32 %v1692, 0.0
      %v2204 = vmax.f32 %v1697, 0.0
      %v2205 = vmax.f32 %v1702, 0.0
      %v2206 = vmax.f32 %v1707, 0.0
      %v2207 = vmax.f32 %v1712, 0.0
      %v2208 = vmax.f32 %v1717, 0.0
      %v2209 = vmax.f32 %v1722, 0.0
      %v2210 = vmax.f32 %v1727, 0.0
      %v2211 = vmax.f32 %v1732, 0.0
      %v2212 = vmax.f32 %v1737, 0.0
      %v2213 = vmax.f32 %v1742, 0.0
      %v2214 = vmax.f32 %v1747, 0.0
      %v2215 = vmax.f32 %v1752, 0.0
      %v2216 = vmax.f32 %v1757, 0.0
      %v2217 = vmax.f32 %v1762, 0.0
      %v2218 = vmax.f32 %v1767, 0.0
      %v2219 = vmax.f32 %v1772, 0.0
      %v2220 = vmax.f32 %v1777, 0.0
      %v2221 = vmax.f32 %v1782, 0.0
      %v2222 = vmax.f32 %v1787, 0.0
      %v2223 = vmax.f32 %v1792, 0.0
      %v2224 = vmax.f32 %v1797, 0.0
      %v2225 = vmax.f32 %v1802, 0.0
      %v2226 = vmax.f32 %v1807, 0.0
      %v2227 = vmax.f32 %v1812, 0.0
      %v2228 = vmax.f32 %v1817, 0.0
      %v2229 = vmax.f32 %v1822, 0.0
      %v2230 = vmax.f32 %v1827, 0.0
      %v2231 = vmax.f32 %v1832, 0.0
      %v2232 = vmax.f32 %v1837, 0.0
      %v2233 = vmax.f32 %v1842, 0.0
      %v2234 = vmax.f32 %v1847, 0.0
      %v2235 = vmax.f32 %v1852, 0.0
      %v2236 = vmax.f32 %v1869, 0.0
      %v2237 = vmax.f32 %v1874, 0.0
      %v2238 = vmax.f32 %v1883, 0.0
      %v2239 = vmax.f32 %v1888, 0.0
      %v2240 = vmax.f32 %v1897, 0.0
      %v2241 = vmax.f32 %v1902, 0.0
      %v2242 = vmax.f32 %v1911, 0.0
      %v2243 = vmax.f32 %v1916, 0.0
      %v2244 = vmax.f32 %v1925, 0.0
      %v2245 = vmax.f32 %v1930, 0.0
      %v2246 = vmax.f32 %v1939, 0.0
      %v2247 = vmax.f32 %v1944, 0.0
      %v2248 = vmax.f32 %v1953, 0.0
      %v2249 = vmax.f32 %v1958, 0.0
      %v2250 = vmax.f32 %v1967, 0.0
      %v2251 = vmax.f32 %v1972, 0.0
      %v2252 = vmax.f32 %v1981, 0.0
      %v2253 = vmax.f32 %v1986, 0.0
      %v2254 = vmax.f32 %v1995, 0.0
      %v2255 = vmax.f32 %v2000, 0.0
      %v2256 = vmax.f32 %v2009, 0.0
      %v2257 = vmax.f32 %v2014, 0.0
      %v2258 = vmax.f32 %v2023, 0.0
      %v2259 = vmax.f32 %v2028, 0.0
      %v2260 = vmax.f32 %v2037, 0.0
      %v2261 = vmax.f32 %v2042, 0.0
      %v2262 = vmax.f32 %v2051, 0.0
      %v2263 = vmax.f32 %v2056, 0.0
      %v2264 = vmax.f32 %v2065, 0.0
      %v2265 = vmax.f32 %v2070, 0.0
      %v2266 = vmax.f32 %v2079, 0.0
      %v2267 = vmax.f32 %v2084, 0.0
      %v2268 = vld [vmem:[%s3] sm:$0xff]
      %v2269 = vld [vmem:[%s3 + $0x8] sm:$0xff]
      %v2270 = vld [vmem:[%s3 + $0x10] sm:$0xff]
      %v2271 = vld [vmem:[%s3 + $0x18] sm:$0xff]
      %v2272 = vld [vmem:[%s3 + $0x20] sm:$0xff]
      %v2273 = vld [vmem:[%s3 + $0x28] sm:$0xff]
      %v2274 = vld [vmem:[%s3 + $0x30] sm:$0xff]
      %v2275 = vld [vmem:[%s3 + $0x38] sm:$0xff]
      %v2276 = vld [vmem:[%s3 + $0x40] sm:$0xff]
      %v2277 = vld [vmem:[%s3 + $0x48] sm:$0xff]
      %v2278 = vld [vmem:[%s3 + $0x50] sm:$0xff]
      %v2279 = vld [vmem:[%s3 + $0x58] sm:$0xff]
      %v2280 = vld [vmem:[%s3 + $0x60] sm:$0xff]
      %v2281 = vld [vmem:[%s3 + $0x68] sm:$0xff]
      %v2282 = vld [vmem:[%s3 + $0x70] sm:$0xff]
      %v2283 = vld [vmem:[%s3 + $0x78] sm:$0xff]
      %v2284 = vld [vmem:[%s3 + $0x80] sm:$0xff]
      %v2285 = vld [vmem:[%s3 + $0x88] sm:$0xff]
      %vm2286 = vcmask 130048
      %v2288 = vsel %vm2286, %v2154, 0
      %v2291 = vsel %vm2286, %v2155, 0
      %v2294 = vsel %vm2286, %v2156, 0
      %v2297 = vsel %vm2286, %v2157, 0
      %v2300 = vsel %vm2286, %v2158, 0
      %v2303 = vsel %vm2286, %v2159, 0
      %v2306 = vsel %vm2286, %v2160, 0
      %v2309 = vsel %vm2286, %v2161, 0
      %v2312 = vsel %vm2286, %v2162, 0
      %v2315 = vsel %vm2286, %v2163, 0
      %v2318 = vsel %vm2286, %v2164, 0
      %v2321 = vsel %vm2286, %v2165, 0
      %v2324 = vsel %vm2286, %v2166, 0
      %v2327 = vsel %vm2286, %v2167, 0
      %v2330 = vsel %vm2286, %v2168, 0
      %v2333 = vsel %vm2286, %v2169, 0
      %v2336 = vsel %vm2286, %v2170, 0
      %v2339 = vsel %vm2286, %v2171, 0
      %v2342 = vsel %vm2286, %v2172, 0
      %v2345 = vsel %vm2286, %v2173, 0
      %v2348 = vsel %vm2286, %v2174, 0
      %v2351 = vsel %vm2286, %v2175, 0
      %v2354 = vsel %vm2286, %v2176, 0
      %v2357 = vsel %vm2286, %v2177, 0
      %v2360 = vsel %vm2286, %v2178, 0
      %v2363 = vsel %vm2286, %v2179, 0
      %v2366 = vsel %vm2286, %v2180, 0
      %v2369 = vsel %vm2286, %v2181, 0
      %v2372 = vsel %vm2286, %v2182, 0
      %v2375 = vsel %vm2286, %v2183, 0
      %v2378 = vsel %vm2286, %v2184, 0
      %v2381 = vsel %vm2286, %v2185, 0
      %2383 = vmatprep.subr.mxu0 0.0
      %2384 = vmatpush1.msra.mxu0 %v2270
      %2385 = vmatprep.subr.mxu0 0.0
      %2386 = vmatpush1.msra.mxu0 %v2271
      %2387 = vmatprep.subr.mxu0 0.0
      %2388 = vmatpush1.msra.mxu0 0.0
      %2389 = vmatprep.subr.mxu0 0.0
      %2390 = vmatpush1.msra.mxu0 0.0
      %2391 = vmatprep.subr.mxu0 0.0
      %2392 = vmatpush1.msra.mxu0 0.0
      %2393 = vmatprep.subr.mxu0 0.0
      %2394 = vmatpush1.msra.mxu0 0.0
      %2395 = vmatprep.subr.mxu0 0.0
      %2396 = vmatpush1.msra.mxu0 0.0
      %2397 = vmatprep.subr.mxu0 0.0
      %2398 = vmatpush1.msra.mxu0 0.0
      %2399 = vmatprep.subr.mxu0 0.0
      %2400 = vmatpush1.msra.mxu0 0.0
      %2401 = vmatprep.subr.mxu0 0.0
      %2402 = vmatpush1.msra.mxu0 0.0
      %2403 = vmatprep.subr.mxu0 0.0
      %2404 = vmatpush1.msra.mxu0 0.0
      %2405 = vmatprep.subr.mxu0 0.0
      %2406 = vmatpush1.msra.mxu0 0.0
      %2407 = vmatprep.subr.mxu0 0.0
      %2408 = vmatpush1.msra.mxu0 0.0
      %2409 = vmatprep.subr.mxu0 0.0
      %2410 = vmatpush1.msra.mxu0 0.0
      %2411 = vmatprep.subr.mxu0 0.0
      %2412 = vmatpush1.msra.mxu0 0.0
      %2413 = vmatprep.subr.mxu0 0.0
      %2414 = vmatpush1.msra.mxu0 0.0
      %2415 = vmatprep.subr.mxu0 0.0
      %2416 = vmatpush1.msra.mxu0 0.0
      %2417 = vmatprep.subr.mxu0 0.0
      %2418 = vmatpush1.msra.mxu0 0.0
      %2419 = vmatprep.subr.mxu0 0.0
      %2420 = vmatpush1.msra.mxu0 0.0
      %2421 = vmatprep.subr.mxu0 0.0
      %2422 = vmatpush1.msra.mxu0 0.0
      %2423 = vmatprep.subr.mxu0 0.0
      %2424 = vmatpush1.msra.mxu0 0.0
      %2425 = vmatprep.subr.mxu0 0.0
      %2426 = vmatpush1.msra.mxu0 0.0
      %2427 = vmatprep.subr.mxu0 0.0
      %2428 = vmatpush1.msra.mxu0 0.0
      %2429 = vmatprep.subr.mxu0 0.0
      %2430 = vmatpush1.msra.mxu0 0.0
      %2431 = vmatprep.subr.mxu0 0.0
      %2432 = vmatpush1.msra.mxu0 0.0
      %2433 = vmatprep.subr.mxu0 0.0
      %2434 = vmatpush1.msra.mxu0 0.0
      %2435 = vmatprep.subr.mxu0 0.0
      %2436 = vmatpush1.msra.mxu0 0.0
      %2437 = vmatprep.subr.mxu0 0.0
      %2438 = vmatpush1.msra.mxu0 0.0
      %2439 = vmatprep.subr.mxu0 0.0
      %2440 = vmatpush1.msra.mxu0 0.0
      %2441 = vmatprep.subr.mxu0 0.0
      %2442 = vmatpush1.msra.mxu0 0.0
      %2443 = vmatprep.subr.mxu0 0.0
      %2444 = vmatpush1.msra.mxu0 0.0
      %2445 = vmatprep.subr.mxu0 0.0
      %2446 = vmatpush1.msra.mxu0 0.0
      %2447 = vmatprep.mubr.f32.mxu0 0.0
      %2448 = vmatmul.mubr.f32.gmra.mrb[0].mxu0 %v2288
      %v2449 = vpop.f32.mrb[0].mxu0
      %v2450 = vadd.f32 0.0, %v2449
      %v2451 = vpop.f32.mrb[0].mxu0
      %2452 = vmatprep.mubr.f32.mxu0 0.0
      %2453 = vmatmul.mubr.f32.gmra.mrb[0].mxu0 %v2291
      %v2454 = vpop.f32.mrb[0].mxu0
      %v2455 = vadd.f32 0.0, %v2454
      %v2456 = vpop.f32.mrb[0].mxu0
      %2457 = vmatprep.mubr.f32.mxu0 0.0
      %2458 = vmatmul.mubr.f32.gmra.mrb[0].mxu0 %v2294
      %v2459 = vpop.f32.mrb[0].mxu0
      %v2460 = vadd.f32 0.0, %v2459
      %v2461 = vpop.f32.mrb[0].mxu0
      %2462 = vmatprep.mubr.f32.mxu0 0.0
      %2463 = vmatmul.mubr.f32.gmra.mrb[0].mxu0 %v2297
      %v2464 = vpop.f32.mrb[0].mxu0
      %v2465 = vadd.f32 0.0, %v2464
      %v2466 = vpop.f32.mrb[0].mxu0
      %2467 = vmatprep.mubr.f32.mxu0 0.0
      %2468 = vmatmul.mubr.f32.gmra.mrb[0].mxu0 %v2300
      %v2469 = vpop.f32.mrb[0].mxu0
      %v2470 = vadd.f32 0.0, %v2469
      %v2471 = vpop.f32.mrb[0].mxu0
      %2472 = vmatprep.mubr.f32.mxu0 0.0
      %2473 = vmatmul.mubr.f32.gmra.mrb[0].mxu0 %v2303
      %v2474 = vpop.f32.mrb[0].mxu0
      %v2475 = vadd.f32 0.0, %v2474
      %v2476 = vpop.f32.mrb[0].mxu0
      %2477 = vmatprep.mubr.f32.mxu0 0.0
      %2478 = vmatmul.mubr.f32.gmra.mrb[0].mxu0 %v2306
      %v2479 = vpop.f32.mrb[0].mxu0
      %v2480 = vadd.f32 0.0, %v2479
      %v2481 = vpop.f32.mrb[0].mxu0
      %2482 = vmatprep.mubr.f32.mxu0 0.0
      %2483 = vmatmul.mubr.f32.gmra.mrb[0].mxu0 %v2309
      %v2484 = vpop.f32.mrb[0].mxu0
      %v2485 = vadd.f32 0.0, %v2484
      %v2486 = vpop.f32.mrb[0].mxu0
      %2487 = vmatprep.mubr.f32.mxu0 0.0
      %2488 = vmatmul.mubr.f32.gmra.mrb[0].mxu0 %v2312
      %v2489 = vpop.f32.mrb[0].mxu0
      %v2490 = vadd.f32 0.0, %v2489
      %v2491 = vpop.f32.mrb[0].mxu0
      %2492 = vmatprep.mubr.f32.mxu0 0.0
      %2493 = vmatmul.mubr.f32.gmra.mrb[0].mxu0 %v2315
      %v2494 = vpop.f32.mrb[0].mxu0
      %v2495 = vadd.f32 0.0, %v2494
      %v2496 = vpop.f32.mrb[0].mxu0
      %2497 = vmatprep.mubr.f32.mxu0 0.0
      %2498 = vmatmul.mubr.f32.gmra.mrb[0].mxu0 %v2318
      %v2499 = vpop.f32.mrb[0].mxu0
      %v2500 = vadd.f32 0.0, %v2499
      %v2501 = vpop.f32.mrb[0].mxu0
      %2502 = vmatprep.mubr.f32.mxu0 0.0
      %2503 = vmatmul.mubr.f32.gmra.mrb[0].mxu0 %v2321
      %v2504 = vpop.f32.mrb[0].mxu0
      %v2505 = vadd.f32 0.0, %v2504
      %v2506 = vpop.f32.mrb[0].mxu0
      %2507 = vmatprep.mubr.f32.mxu0 0.0
      %2508 = vmatmul.mubr.f32.gmra.mrb[0].mxu0 %v2324
      %v2509 = vpop.f32.mrb[0].mxu0
      %v2510 = vadd.f32 0.0, %v2509
      %v2511 = vpop.f32.mrb[0].mxu0
      %2512 = vmatprep.mubr.f32.mxu0 0.0
      %2513 = vmatmul.mubr.f32.gmra.mrb[0].mxu0 %v2327
      %v2514 = vpop.f32.mrb[0].mxu0
      %v2515 = vadd.f32 0.0, %v2514
      %v2516 = vpop.f32.mrb[0].mxu0
      %2517 = vmatprep.mubr.f32.mxu0 0.0
      %2518 = vmatmul.mubr.f32.gmra.mrb[0].mxu0 %v2330
      %v2519 = vpop.f32.mrb[0].mxu0
      %v2520 = vadd.f32 0.0, %v2519
      %v2521 = vpop.f32.mrb[0].mxu0
      %2522 = vmatprep.mubr.f32.mxu0 0.0
      %2523 = vmatmul.mubr.f32.gmra.mrb[0].mxu0 %v2333
      %v2524 = vpop.f32.mrb[0].mxu0
      %v2525 = vadd.f32 0.0, %v2524
      %v2526 = vpop.f32.mrb[0].mxu0
      %2527 = vmatprep.mubr.f32.mxu0 0.0
      %2528 = vmatmul.mubr.f32.gmra.mrb[0].mxu0 %v2336
      %v2529 = vpop.f32.mrb[0].mxu0
      %v2530 = vadd.f32 0.0, %v2529
      %v2531 = vpop.f32.mrb[0].mxu0
      %2532 = vmatprep.mubr.f32.mxu0 0.0
      %2533 = vmatmul.mubr.f32.gmra.mrb[0].mxu0 %v2339
      %v2534 = vpop.f32.mrb[0].mxu0
      %v2535 = vadd.f32 0.0, %v2534
      %v2536 = vpop.f32.mrb[0].mxu0
      %2537 = vmatprep.mubr.f32.mxu0 0.0
      %2538 = vmatmul.mubr.f32.gmra.mrb[0].mxu0 %v2342
      %v2539 = vpop.f32.mrb[0].mxu0
      %v2540 = vadd.f32 0.0, %v2539
      %v2541 = vpop.f32.mrb[0].mxu0
      %2542 = vmatprep.mubr.f32.mxu0 0.0
      %2543 = vmatmul.mubr.f32.gmra.mrb[0].mxu0 %v2345
      %v2544 = vpop.f32.mrb[0].mxu0
      %v2545 = vadd.f32 0.0, %v2544
      %v2546 = vpop.f32.mrb[0].mxu0
      %2547 = vmatprep.mubr.f32.mxu0 0.0
      %2548 = vmatmul.mubr.f32.gmra.mrb[0].mxu0 %v2348
      %v2549 = vpop.f32.mrb[0].mxu0
      %v2550 = vadd.f32 0.0, %v2549
      %v2551 = vpop.f32.mrb[0].mxu0
      %2552 = vmatprep.mubr.f32.mxu0 0.0
      %2553 = vmatmul.mubr.f32.gmra.mrb[0].mxu0 %v2351
      %v2554 = vpop.f32.mrb[0].mxu0
      %v2555 = vadd.f32 0.0, %v2554
      %v2556 = vpop.f32.mrb[0].mxu0
      %2557 = vmatprep.mubr.f32.mxu0 0.0
      %2558 = vmatmul.mubr.f32.gmra.mrb[0].mxu0 %v2354
      %v2559 = vpop.f32.mrb[0].mxu0
      %v2560 = vadd.f32 0.0, %v2559
      %v2561 = vpop.f32.mrb[0].mxu0
      %2562 = vmatprep.mubr.f32.mxu0 0.0
      %2563 = vmatmul.mubr.f32.gmra.mrb[0].mxu0 %v2357
      %v2564 = vpop.f32.mrb[0].mxu0
      %v2565 = vadd.f32 0.0, %v2564
      %v2566 = vpop.f32.mrb[0].mxu0
      %2567 = vmatprep.mubr.f32.mxu0 0.0
      %2568 = vmatmul.mubr.f32.gmra.mrb[0].mxu0 %v2360
      %v2569 = vpop.f32.mrb[0].mxu0
      %v2570 = vadd.f32 0.0, %v2569
      %v2571 = vpop.f32.mrb[0].mxu0
      %2572 = vmatprep.mubr.f32.mxu0 0.0
      %2573 = vmatmul.mubr.f32.gmra.mrb[0].mxu0 %v2363
      %v2574 = vpop.f32.mrb[0].mxu0
      %v2575 = vadd.f32 0.0, %v2574
      %v2576 = vpop.f32.mrb[0].mxu0
      %2577 = vmatprep.mubr.f32.mxu0 0.0
      %2578 = vmatmul.mubr.f32.gmra.mrb[0].mxu0 %v2366
      %v2579 = vpop.f32.mrb[0].mxu0
      %v2580 = vadd.f32 0.0, %v2579
      %v2581 = vpop.f32.mrb[0].mxu0
      %2582 = vmatprep.mubr.f32.mxu0 0.0
      %2583 = vmatmul.mubr.f32.gmra.mrb[0].mxu0 %v2369
      %v2584 = vpop.f32.mrb[0].mxu0
      %v2585 = vadd.f32 0.0, %v2584
      %v2586 = vpop.f32.mrb[0].mxu0
      %2587 = vmatprep.mubr.f32.mxu0 0.0
      %2588 = vmatmul.mubr.f32.gmra.mrb[0].mxu0 %v2372
      %v2589 = vpop.f32.mrb[0].mxu0
      %v2590 = vadd.f32 0.0, %v2589
      %v2591 = vpop.f32.mrb[0].mxu0
      %2592 = vmatprep.mubr.f32.mxu0 0.0
      %2593 = vmatmul.mubr.f32.gmra.mrb[0].mxu0 %v2375
      %v2594 = vpop.f32.mrb[0].mxu0
      %v2595 = vadd.f32 0.0, %v2594
      %v2596 = vpop.f32.mrb[0].mxu0
      %2597 = vmatprep.mubr.f32.mxu0 0.0
      %2598 = vmatmul.mubr.f32.gmra.mrb[0].mxu0 %v2378
      %v2599 = vpop.f32.mrb[0].mxu0
      %v2600 = vpop.f32.mrb[0].mxu0
      %2601 = vmatprep.mubr.f32.mxu0 0.0
      %2602 = vmatmul.mubr.f32.gmra.mrb[0].mxu0 %v2381
      %v2603 = vpop.f32.mrb[0].mxu0
      %v2604 = vpop.f32.mrb[0].mxu0
      %2605 = vdwg.mxu0
      %v2607 = vsel %vm2286, %v2103, 0
      %v2610 = vsel %vm2286, %v2104, 0
      %v2613 = vsel %vm2286, %v2106, 0
      %v2616 = vsel %vm2286, %v2107, 0
      %v2619 = vsel %vm2286, %v2109, 0
      %v2622 = vsel %vm2286, %v2110, 0
      %v2625 = vsel %vm2286, %v2112, 0
      %v2628 = vsel %vm2286, %v2113, 0
      %v2631 = vsel %vm2286, %v2115, 0
      %v2634 = vsel %vm2286, %v2116, 0
      %v2637 = vsel %vm2286, %v2118, 0
      %v2640 = vsel %vm2286, %v2119, 0
      %v2643 = vsel %vm2286, %v2121, 0
      %v2646 = vsel %vm2286, %v2122, 0
      %v2649 = vsel %vm2286, %v2124, 0
      %v2652 = vsel %vm2286, %v2125, 0
      %v2655 = vsel %vm2286, %v2127, 0
      %v2658 = vsel %vm2286, %v2128, 0
      %v2661 = vsel %vm2286, %v2130, 0
      %v2664 = vsel %vm2286, %v2131, 0
      %v2667 = vsel %vm2286, %v2133, 0
      %v2670 = vsel %vm2286, %v2134, 0
      %v2673 = vsel %vm2286, %v2136, 0
      %v2676 = vsel %vm2286, %v2137, 0
      %v2679 = vsel %vm2286, %v2139, 0
      %v2682 = vsel %vm2286, %v2140, 0
      %v2685 = vsel %vm2286, %v2142, 0
      %v2688 = vsel %vm2286, %v2143, 0
      %v2691 = vsel %vm2286, %v2145, 0
      %v2694 = vsel %vm2286, %v2146, 0
      %v2697 = vsel %vm2286, %v2148, 0
      %v2700 = vsel %vm2286, %v2149, 0
      %2702 = vmatprep.subr.mxu0 0.0
      %2703 = vmatpush1.msra.mxu0 %v2268
      %2704 = vmatprep.subr.mxu0 0.0
      %2705 = vmatpush1.msra.mxu0 %v2269
      %2706 = vmatprep.subr.mxu0 0.0
      %2707 = vmatpush1.msra.mxu0 0.0
      %2708 = vmatprep.subr.mxu0 0.0
      %2709 = vmatpush1.msra.mxu0 0.0
      %2710 = vmatprep.subr.mxu0 0.0
      %2711 = vmatpush1.msra.mxu0 0.0
      %2712 = vmatprep.subr.mxu0 0.0
      %2713 = vmatpush1.msra.mxu0 0.0
      %2714 = vmatprep.subr.mxu0 0.0
      %2715 = vmatpush1.msra.mxu0 0.0
      %2716 = vmatprep.subr.mxu0 0.0
      %2717 = vmatpush1.msra.mxu0 0.0
      %2718 = vmatprep.subr.mxu0 0.0
      %2719 = vmatpush1.msra.mxu0 0.0
      %2720 = vmatprep.subr.mxu0 0.0
      %2721 = vmatpush1.msra.mxu0 0.0
      %2722 = vmatprep.subr.mxu0 0.0
      %2723 = vmatpush1.msra.mxu0 0.0
      %2724 = vmatprep.subr.mxu0 0.0
      %2725 = vmatpush1.msra.mxu0 0.0
      %2726 = vmatprep.subr.mxu0 0.0
      %2727 = vmatpush1.msra.mxu0 0.0
      %2728 = vmatprep.subr.mxu0 0.0
      %2729 = vmatpush1.msra.mxu0 0.0
      %2730 = vmatprep.subr.mxu0 0.0
      %2731 = vmatpush1.msra.mxu0 0.0
      %2732 = vmatprep.subr.mxu0 0.0
      %2733 = vmatpush1.msra.mxu0 0.0
      %2734 = vmatprep.subr.mxu0 0.0
      %2735 = vmatpush1.msra.mxu0 0.0
      %2736 = vmatprep.subr.mxu0 0.0
      %2737 = vmatpush1.msra.mxu0 0.0
      %2738 = vmatprep.subr.mxu0 0.0
      %2739 = vmatpush1.msra.mxu0 0.0
      %2740 = vmatprep.subr.mxu0 0.0
      %2741 = vmatpush1.msra.mxu0 0.0
      %2742 = vmatprep.subr.mxu0 0.0
      %2743 = vmatpush1.msra.mxu0 0.0
      %2744 = vmatprep.subr.mxu0 0.0
      %2745 = vmatpush1.msra.mxu0 0.0
      %2746 = vmatprep.subr.mxu0 0.0
      %2747 = vmatpush1.msra.mxu0 0.0
      %2748 = vmatprep.subr.mxu0 0.0
      %2749 = vmatpush1.msra.mxu0 0.0
      %2750 = vmatprep.subr.mxu0 0.0
      %2751 = vmatpush1.msra.mxu0 0.0
      %2752 = vmatprep.subr.mxu0 0.0
      %2753 = vmatpush1.msra.mxu0 0.0
      %2754 = vmatprep.subr.mxu0 0.0
      %2755 = vmatpush1.msra.mxu0 0.0
      %2756 = vmatprep.subr.mxu0 0.0
      %2757 = vmatpush1.msra.mxu0 0.0
      %2758 = vmatprep.subr.mxu0 0.0
      %2759 = vmatpush1.msra.mxu0 0.0
      %2760 = vmatprep.subr.mxu0 0.0
      %2761 = vmatpush1.msra.mxu0 0.0
      %2762 = vmatprep.subr.mxu0 0.0
      %2763 = vmatpush1.msra.mxu0 0.0
      %2764 = vmatprep.subr.mxu0 0.0
      %2765 = vmatpush1.msra.mxu0 0.0
      %2766 = vmatprep.mubr.f32.mxu0 0.0
      %2767 = vmatmul.mubr.f32.gmra.mrb[0].mxu0 %v2607
      %v2768 = vpop.f32.mrb[0].mxu0
      %v2769 = vadd.f32 %v2450, %v2768
      %v2770 = vpop.f32.mrb[0].mxu0
      %2771 = vmatprep.mubr.f32.mxu0 0.0
      %2772 = vmatmul.mubr.f32.gmra.mrb[0].mxu0 %v2610
      %v2773 = vpop.f32.mrb[0].mxu0
      %v2774 = vadd.f32 %v2455, %v2773
      %v2775 = vpop.f32.mrb[0].mxu0
      %2776 = vmatprep.mubr.f32.mxu0 0.0
      %2777 = vmatmul.mubr.f32.gmra.mrb[0].mxu0 %v2613
      %v2778 = vpop.f32.mrb[0].mxu0
      %v2779 = vadd.f32 %v2460, %v2778
      %v2780 = vpop.f32.mrb[0].mxu0
      %2781 = vmatprep.mubr.f32.mxu0 0.0
      %2782 = vmatmul.mubr.f32.gmra.mrb[0].mxu0 %v2616
      %v2783 = vpop.f32.mrb[0].mxu0
      %v2784 = vadd.f32 %v2465, %v2783
      %v2785 = vpop.f32.mrb[0].mxu0
      %2786 = vmatprep.mubr.f32.mxu0 0.0
      %2787 = vmatmul.mubr.f32.gmra.mrb[0].mxu0 %v2619
      %v2788 = vpop.f32.mrb[0].mxu0
      %v2789 = vadd.f32 %v2470, %v2788
      %v2790 = vpop.f32.mrb[0].mxu0
      %2791 = vmatprep.mubr.f32.mxu0 0.0
      %2792 = vmatmul.mubr.f32.gmra.mrb[0].mxu0 %v2622
      %v2793 = vpop.f32.mrb[0].mxu0
      %v2794 = vadd.f32 %v2475, %v2793
      %v2795 = vpop.f32.mrb[0].mxu0
      %2796 = vmatprep.mubr.f32.mxu0 0.0
      %2797 = vmatmul.mubr.f32.gmra.mrb[0].mxu0 %v2625
      %v2798 = vpop.f32.mrb[0].mxu0
      %v2799 = vadd.f32 %v2480, %v2798
      %v2800 = vpop.f32.mrb[0].mxu0
      %2801 = vmatprep.mubr.f32.mxu0 0.0
      %2802 = vmatmul.mubr.f32.gmra.mrb[0].mxu0 %v2628
      %v2803 = vpop.f32.mrb[0].mxu0
      %v2804 = vadd.f32 %v2485, %v2803
      %v2805 = vpop.f32.mrb[0].mxu0
      %2806 = vmatprep.mubr.f32.mxu0 0.0
      %2807 = vmatmul.mubr.f32.gmra.mrb[0].mxu0 %v2631
      %v2808 = vpop.f32.mrb[0].mxu0
      %v2809 = vadd.f32 %v2490, %v2808
      %v2810 = vpop.f32.mrb[0].mxu0
      %2811 = vmatprep.mubr.f32.mxu0 0.0
      %2812 = vmatmul.mubr.f32.gmra.mrb[0].mxu0 %v2634
      %v2813 = vpop.f32.mrb[0].mxu0
      %v2814 = vadd.f32 %v2495, %v2813
      %v2815 = vpop.f32.mrb[0].mxu0
      %2816 = vmatprep.mubr.f32.mxu0 0.0
      %2817 = vmatmul.mubr.f32.gmra.mrb[0].mxu0 %v2637
      %v2818 = vpop.f32.mrb[0].mxu0
      %v2819 = vadd.f32 %v2500, %v2818
      %v2820 = vpop.f32.mrb[0].mxu0
      %2821 = vmatprep.mubr.f32.mxu0 0.0
      %2822 = vmatmul.mubr.f32.gmra.mrb[0].mxu0 %v2640
      %v2823 = vpop.f32.mrb[0].mxu0
      %v2824 = vadd.f32 %v2505, %v2823
      %v2825 = vpop.f32.mrb[0].mxu0
      %2826 = vmatprep.mubr.f32.mxu0 0.0
      %2827 = vmatmul.mubr.f32.gmra.mrb[0].mxu0 %v2643
      %v2828 = vpop.f32.mrb[0].mxu0
      %v2829 = vadd.f32 %v2510, %v2828
      %v2830 = vpop.f32.mrb[0].mxu0
      %2831 = vmatprep.mubr.f32.mxu0 0.0
      %2832 = vmatmul.mubr.f32.gmra.mrb[0].mxu0 %v2646
      %v2833 = vpop.f32.mrb[0].mxu0
      %v2834 = vadd.f32 %v2515, %v2833
      %v2835 = vpop.f32.mrb[0].mxu0
      %2836 = vmatprep.mubr.f32.mxu0 0.0
      %2837 = vmatmul.mubr.f32.gmra.mrb[0].mxu0 %v2649
      %v2838 = vpop.f32.mrb[0].mxu0
      %v2839 = vadd.f32 %v2520, %v2838
      %v2840 = vpop.f32.mrb[0].mxu0
      %2841 = vmatprep.mubr.f32.mxu0 0.0
      %2842 = vmatmul.mubr.f32.gmra.mrb[0].mxu0 %v2652
      %v2843 = vpop.f32.mrb[0].mxu0
      %v2844 = vadd.f32 %v2525, %v2843
      %v2845 = vpop.f32.mrb[0].mxu0
      %2846 = vmatprep.mubr.f32.mxu0 0.0
      %2847 = vmatmul.mubr.f32.gmra.mrb[0].mxu0 %v2655
      %v2848 = vpop.f32.mrb[0].mxu0
      %v2849 = vadd.f32 %v2530, %v2848
      %v2850 = vpop.f32.mrb[0].mxu0
      %2851 = vmatprep.mubr.f32.mxu0 0.0
      %2852 = vmatmul.mubr.f32.gmra.mrb[0].mxu0 %v2658
      %v2853 = vpop.f32.mrb[0].mxu0
      %v2854 = vadd.f32 %v2535, %v2853
      %v2855 = vpop.f32.mrb[0].mxu0
      %2856 = vmatprep.mubr.f32.mxu0 0.0
      %2857 = vmatmul.mubr.f32.gmra.mrb[0].mxu0 %v2661
      %v2858 = vpop.f32.mrb[0].mxu0
      %v2859 = vadd.f32 %v2540, %v2858
      %v2860 = vpop.f32.mrb[0].mxu0
      %2861 = vmatprep.mubr.f32.mxu0 0.0
      %2862 = vmatmul.mubr.f32.gmra.mrb[0].mxu0 %v2664
      %v2863 = vpop.f32.mrb[0].mxu0
      %v2864 = vadd.f32 %v2545, %v2863
      %v2865 = vpop.f32.mrb[0].mxu0
      %2866 = vmatprep.mubr.f32.mxu0 0.0
      %2867 = vmatmul.mubr.f32.gmra.mrb[0].mxu0 %v2667
      %v2868 = vpop.f32.mrb[0].mxu0
      %v2869 = vadd.f32 %v2550, %v2868
      %v2870 = vpop.f32.mrb[0].mxu0
      %2871 = vmatprep.mubr.f32.mxu0 0.0
      %2872 = vmatmul.mubr.f32.gmra.mrb[0].mxu0 %v2670
      %v2873 = vpop.f32.mrb[0].mxu0
      %v2874 = vadd.f32 %v2555, %v2873
      %v2875 = vpop.f32.mrb[0].mxu0
      %2876 = vmatprep.mubr.f32.mxu0 0.0
      %2877 = vmatmul.mubr.f32.gmra.mrb[0].mxu0 %v2673
      %v2878 = vpop.f32.mrb[0].mxu0
      %v2879 = vadd.f32 %v2560, %v2878
      %v2880 = vpop.f32.mrb[0].mxu0
      %2881 = vmatprep.mubr.f32.mxu0 0.0
      %2882 = vmatmul.mubr.f32.gmra.mrb[0].mxu0 %v2676
      %v2883 = vpop.f32.mrb[0].mxu0
      %v2884 = vadd.f32 %v2565, %v2883
      %v2885 = vpop.f32.mrb[0].mxu0
      %2886 = vmatprep.mubr.f32.mxu0 0.0
      %2887 = vmatmul.mubr.f32.gmra.mrb[0].mxu0 %v2679
      %v2888 = vpop.f32.mrb[0].mxu0
      %v2889 = vadd.f32 %v2570, %v2888
      %v2890 = vpop.f32.mrb[0].mxu0
      %2891 = vmatprep.mubr.f32.mxu0 0.0
      %2892 = vmatmul.mubr.f32.gmra.mrb[0].mxu0 %v2682
      %v2893 = vpop.f32.mrb[0].mxu0
      %v2894 = vadd.f32 %v2575, %v2893
      %v2895 = vpop.f32.mrb[0].mxu0
      %2896 = vmatprep.mubr.f32.mxu0 0.0
      %2897 = vmatmul.mubr.f32.gmra.mrb[0].mxu0 %v2685
      %v2898 = vpop.f32.mrb[0].mxu0
      %v2899 = vadd.f32 %v2580, %v2898
      %v2900 = vpop.f32.mrb[0].mxu0
      %2901 = vmatprep.mubr.f32.mxu0 0.0
      %2902 = vmatmul.mubr.f32.gmra.mrb[0].mxu0 %v2688
      %v2903 = vpop.f32.mrb[0].mxu0
      %v2904 = vadd.f32 %v2585, %v2903
      %v2905 = vpop.f32.mrb[0].mxu0
      %2906 = vmatprep.mubr.f32.mxu0 0.0
      %2907 = vmatmul.mubr.f32.gmra.mrb[0].mxu0 %v2691
      %v2908 = vpop.f32.mrb[0].mxu0
      %v2909 = vadd.f32 %v2590, %v2908
      %v2910 = vpop.f32.mrb[0].mxu0
      %2911 = vmatprep.mubr.f32.mxu0 0.0
      %2912 = vmatmul.mubr.f32.gmra.mrb[0].mxu0 %v2694
      %v2913 = vpop.f32.mrb[0].mxu0
      %v2914 = vadd.f32 %v2595, %v2913
      %v2915 = vpop.f32.mrb[0].mxu0
      %2916 = vmatprep.mubr.f32.mxu0 0.0
      %2917 = vmatmul.mubr.f32.gmra.mrb[0].mxu0 %v2697
      %v2918 = vpop.f32.mrb[0].mxu0
      %v2919 = vpop.f32.mrb[0].mxu0
      %2920 = vmatprep.mubr.f32.mxu0 0.0
      %2921 = vmatmul.mubr.f32.gmra.mrb[0].mxu0 %v2700
      %v2922 = vpop.f32.mrb[0].mxu0
      %v2923 = vpop.f32.mrb[0].mxu0
      %2924 = vdwg.mxu0
      %vm2941 = vcmask 1046528
      %v2942 = vrot.slane %v2103, 1
      %v2943 = vrot.slane %v2104, 1
      %v2944 = vsel %vm2941, %v2942, %v2943
      %v2945 = vrot.slane %v2105, 1
      %v2946 = vsel %vm2941, %v2943, %v2945
      %v2947 = vrot.slane %v2106, 1
      %v2948 = vrot.slane %v2107, 1
      %v2949 = vsel %vm2941, %v2947, %v2948
      %v2950 = vrot.slane %v2108, 1
      %v2951 = vsel %vm2941, %v2948, %v2950
      %v2952 = vrot.slane %v2109, 1
      %v2953 = vrot.slane %v2110, 1
      %v2954 = vsel %vm2941, %v2952, %v2953
      %v2955 = vrot.slane %v2111, 1
      %v2956 = vsel %vm2941, %v2953, %v2955
      %v2957 = vrot.slane %v2112, 1
      %v2958 = vrot.slane %v2113, 1
      %v2959 = vsel %vm2941, %v2957, %v2958
      %v2960 = vrot.slane %v2114, 1
      %v2961 = vsel %vm2941, %v2958, %v2960
      %v2962 = vrot.slane %v2115, 1
      %v2963 = vrot.slane %v2116, 1
      %v2964 = vsel %vm2941, %v2962, %v2963
      %v2965 = vrot.slane %v2117, 1
      %v2966 = vsel %vm2941, %v2963, %v2965
      %v2967 = vrot.slane %v2118, 1
      %v2968 = vrot.slane %v2119, 1
      %v2969 = vsel %vm2941, %v2967, %v2968
      %v2970 = vrot.slane %v2120, 1
      %v2971 = vsel %vm2941, %v2968, %v2970
      %v2972 = vrot.slane %v2121, 1
      %v2973 = vrot.slane %v2122, 1
      %v2974 = vsel %vm2941, %v2972, %v2973
      %v2975 = vrot.slane %v2123, 1
      %v2976 = vsel %vm2941, %v2973, %v2975
      %v2977 = vrot.slane %v2124, 1
      %v2978 = vrot.slane %v2125, 1
      %v2979 = vsel %vm2941, %v2977, %v2978
      %v2980 = vrot.slane %v2126, 1
      %v2981 = vsel %vm2941, %v2978, %v2980
      %v2982 = vrot.slane %v2127, 1
      %v2983 = vrot.slane %v2128, 1
      %v2984 = vsel %vm2941, %v2982, %v2983
      %v2985 = vrot.slane %v2129, 1
      %v2986 = vsel %vm2941, %v2983, %v2985
      %v2987 = vrot.slane %v2130, 1
      %v2988 = vrot.slane %v2131, 1
      %v2989 = vsel %vm2941, %v2987, %v2988
      %v2990 = vrot.slane %v2132, 1
      %v2991 = vsel %vm2941, %v2988, %v2990
      %v2992 = vrot.slane %v2133, 1
      %v2993 = vrot.slane %v2134, 1
      %v2994 = vsel %vm2941, %v2992, %v2993
      %v2995 = vrot.slane %v2135, 1
      %v2996 = vsel %vm2941, %v2993, %v2995
      %v2997 = vrot.slane %v2136, 1
      %v2998 = vrot.slane %v2137, 1
      %v2999 = vsel %vm2941, %v2997, %v2998
      %v3000 = vrot.slane %v2138, 1
      %v3001 = vsel %vm2941, %v2998, %v3000
      %v3002 = vrot.slane %v2139, 1
      %v3003 = vrot.slane %v2140, 1
      %v3004 = vsel %vm2941, %v3002, %v3003
      %v3005 = vrot.slane %v2141, 1
      %v3006 = vsel %vm2941, %v3003, %v3005
      %v3007 = vrot.slane %v2142, 1
      %v3008 = vrot.slane %v2143, 1
      %v3009 = vsel %vm2941, %v3007, %v3008
      %v3010 = vrot.slane %v2144, 1
      %v3011 = vsel %vm2941, %v3008, %v3010
      %v3012 = vrot.slane %v2145, 1
      %v3013 = vrot.slane %v2146, 1
      %v3014 = vsel %vm2941, %v3012, %v3013
      %v3015 = vrot.slane %v2147, 1
      %v3016 = vsel %vm2941, %v3013, %v3015
      %v3017 = vrot.slane %v2148, 1
      %v3018 = vrot.slane %v2149, 1
      %v3019 = vsel %vm2941, %v3017, %v3018
      %v3020 = vrot.slane %v2150, 1
      %v3021 = vsel %vm2941, %v3018, %v3020
      %v3022 = vsel %vm2286, %v2944, 0
      %v3024 = vsel %vm2286, %v2946, 0
      %v3026 = vsel %vm2286, %v2949, 0
      %v3028 = vsel %vm2286, %v2951, 0
      %v3030 = vsel %vm2286, %v2954, 0
      %v3032 = vsel %vm2286, %v2956, 0
      %v3034 = vsel %vm2286, %v2959, 0
      %v3036 = vsel %vm2286, %v2961, 0
      %v3038 = vsel %vm2286, %v2964, 0
      %v3040 = vsel %vm2286, %v2966, 0
      %v3042 = vsel %vm2286, %v2969, 0
      %v3044 = vsel %vm2286, %v2971, 0
      %v3046 = vsel %vm2286, %v2974, 0
      %v3048 = vsel %vm2286, %v2976, 0
      %v3050 = vsel %vm2286, %v2979, 0
      %v3052 = vsel %vm2286, %v2981, 0
      %v3054 = vsel %vm2286, %v2984, 0
      %v3056 = vsel %vm2286, %v2986, 0
      %v3058 = vsel %vm2286, %v2989, 0
      %v3060 = vsel %vm2286, %v2991, 0
      %v3062 = vsel %vm2286, %v2994, 0
      %v3064 = vsel %vm2286, %v2996, 0
      %v3066 = vsel %vm2286, %v2999, 0
      %v3068 = vsel %vm2286, %v3001, 0
      %v3070 = vsel %vm2286, %v3004, 0
      %v3072 = vsel %vm2286, %v3006, 0
      %v3074 = vsel %vm2286, %v3009, 0
      %v3076 = vsel %vm2286, %v3011, 0
      %v3078 = vsel %vm2286, %v3014, 0
      %v3080 = vsel %vm2286, %v3016, 0
      %v3082 = vsel %vm2286, %v3019, 0
      %v3084 = vsel %vm2286, %v3021, 0
      %3086 = vmatprep.subr.mxu0 0.0
      %3087 = vmatpush1.msra.mxu0 %v2272
      %3088 = vmatprep.subr.mxu0 0.0
      %3089 = vmatpush1.msra.mxu0 %v2273
      %3090 = vmatprep.subr.mxu0 0.0
      %3091 = vmatpush1.msra.mxu0 0.0
      %3092 = vmatprep.subr.mxu0 0.0
      %3093 = vmatpush1.msra.mxu0 0.0
      %3094 = vmatprep.subr.mxu0 0.0
      %3095 = vmatpush1.msra.mxu0 0.0
      %3096 = vmatprep.subr.mxu0 0.0
      %3097 = vmatpush1.msra.mxu0 0.0
      %3098 = vmatprep.subr.mxu0 0.0
      %3099 = vmatpush1.msra.mxu0 0.0
      %3100 = vmatprep.subr.mxu0 0.0
      %3101 = vmatpush1.msra.mxu0 0.0
      %3102 = vmatprep.subr.mxu0 0.0
      %3103 = vmatpush1.msra.mxu0 0.0
      %3104 = vmatprep.subr.mxu0 0.0
      %3105 = vmatpush1.msra.mxu0 0.0
      %3106 = vmatprep.subr.mxu0 0.0
      %3107 = vmatpush1.msra.mxu0 0.0
      %3108 = vmatprep.subr.mxu0 0.0
      %3109 = vmatpush1.msra.mxu0 0.0
      %3110 = vmatprep.subr.mxu0 0.0
      %3111 = vmatpush1.msra.mxu0 0.0
      %3112 = vmatprep.subr.mxu0 0.0
      %3113 = vmatpush1.msra.mxu0 0.0
      %3114 = vmatprep.subr.mxu0 0.0
      %3115 = vmatpush1.msra.mxu0 0.0
      %3116 = vmatprep.subr.mxu0 0.0
      %3117 = vmatpush1.msra.mxu0 0.0
      %3118 = vmatprep.subr.mxu0 0.0
      %3119 = vmatpush1.msra.mxu0 0.0
      %3120 = vmatprep.subr.mxu0 0.0
      %3121 = vmatpush1.msra.mxu0 0.0
      %3122 = vmatprep.subr.mxu0 0.0
      %3123 = vmatpush1.msra.mxu0 0.0
      %3124 = vmatprep.subr.mxu0 0.0
      %3125 = vmatpush1.msra.mxu0 0.0
      %3126 = vmatprep.subr.mxu0 0.0
      %3127 = vmatpush1.msra.mxu0 0.0
      %3128 = vmatprep.subr.mxu0 0.0
      %3129 = vmatpush1.msra.mxu0 0.0
      %3130 = vmatprep.subr.mxu0 0.0
      %3131 = vmatpush1.msra.mxu0 0.0
      %3132 = vmatprep.subr.mxu0 0.0
      %3133 = vmatpush1.msra.mxu0 0.0
      %3134 = vmatprep.subr.mxu0 0.0
      %3135 = vmatpush1.msra.mxu0 0.0
      %3136 = vmatprep.subr.mxu0 0.0
      %3137 = vmatpush1.msra.mxu0 0.0
      %3138 = vmatprep.subr.mxu0 0.0
      %3139 = vmatpush1.msra.mxu0 0.0
      %3140 = vmatprep.subr.mxu0 0.0
      %3141 = vmatpush1.msra.mxu0 0.0
      %3142 = vmatprep.subr.mxu0 0.0
      %3143 = vmatpush1.msra.mxu0 0.0
      %3144 = vmatprep.subr.mxu0 0.0
      %3145 = vmatpush1.msra.mxu0 0.0
      %3146 = vmatprep.subr.mxu0 0.0
      %3147 = vmatpush1.msra.mxu0 0.0
      %3148 = vmatprep.subr.mxu0 0.0
      %3149 = vmatpush1.msra.mxu0 0.0
      %3150 = vmatprep.mubr.f32.mxu0 0.0
      %3151 = vmatmul.mubr.f32.gmra.mrb[0].mxu0 %v3022
      %v3152 = vpop.f32.mrb[0].mxu0
      %v3153 = vadd.f32 0.0, %v3152
      %v3154 = vpop.f32.mrb[0].mxu0
      %3155 = vmatprep.mubr.f32.mxu0 0.0
      %3156 = vmatmul.mubr.f32.gmra.mrb[0].mxu0 %v3024
      %v3157 = vpop.f32.mrb[0].mxu0
      %v3158 = vadd.f32 0.0, %v3157
      %v3159 = vpop.f32.mrb[0].mxu0
      %3160 = vmatprep.mubr.f32.mxu0 0.0
      %3161 = vmatmul.mubr.f32.gmra.mrb[0].mxu0 %v3026
      %v3162 = vpop.f32.mrb[0].mxu0
      %v3163 = vadd.f32 0.0, %v3162
      %v3164 = vpop.f32.mrb[0].mxu0
      %3165 = vmatprep.mubr.f32.mxu0 0.0
      %3166 = vmatmul.mubr.f32.gmra.mrb[0].mxu0 %v3028
      %v3167 = vpop.f32.mrb[0].mxu0
      %v3168 = vadd.f32 0.0, %v3167
      %v3169 = vpop.f32.mrb[0].mxu0
      %3170 = vmatprep.mubr.f32.mxu0 0.0
      %3171 = vmatmul.mubr.f32.gmra.mrb[0].mxu0 %v3030
      %v3172 = vpop.f32.mrb[0].mxu0
      %v3173 = vadd.f32 0.0, %v3172
      %v3174 = vpop.f32.mrb[0].mxu0
      %3175 = vmatprep.mubr.f32.mxu0 0.0
      %3176 = vmatmul.mubr.f32.gmra.mrb[0].mxu0 %v3032
      %v3177 = vpop.f32.mrb[0].mxu0
      %v3178 = vadd.f32 0.0, %v3177
      %v3179 = vpop.f32.mrb[0].mxu0
      %3180 = vmatprep.mubr.f32.mxu0 0.0
      %3181 = vmatmul.mubr.f32.gmra.mrb[0].mxu0 %v3034
      %v3182 = vpop.f32.mrb[0].mxu0
      %v3183 = vadd.f32 0.0, %v3182
      %v3184 = vpop.f32.mrb[0].mxu0
      %3185 = vmatprep.mubr.f32.mxu0 0.0
      %3186 = vmatmul.mubr.f32.gmra.mrb[0].mxu0 %v3036
      %v3187 = vpop.f32.mrb[0].mxu0
      %v3188 = vadd.f32 0.0, %v3187
      %v3189 = vpop.f32.mrb[0].mxu0
      %3190 = vmatprep.mubr.f32.mxu0 0.0
      %3191 = vmatmul.mubr.f32.gmra.mrb[0].mxu0 %v3038
      %v3192 = vpop.f32.mrb[0].mxu0
      %v3193 = vadd.f32 0.0, %v3192
      %v3194 = vpop.f32.mrb[0].mxu0
      %3195 = vmatprep.mubr.f32.mxu0 0.0
      %3196 = vmatmul.mubr.f32.gmra.mrb[0].mxu0 %v3040
      %v3197 = vpop.f32.mrb[0].mxu0
      %v3198 = vadd.f32 0.0, %v3197
      %v3199 = vpop.f32.mrb[0].mxu0
      %3200 = vmatprep.mubr.f32.mxu0 0.0
      %3201 = vmatmul.mubr.f32.gmra.mrb[0].mxu0 %v3042
      %v3202 = vpop.f32.mrb[0].mxu0
      %v3203 = vadd.f32 0.0, %v3202
      %v3204 = vpop.f32.mrb[0].mxu0
      %3205 = vmatprep.mubr.f32.mxu0 0.0
      %3206 = vmatmul.mubr.f32.gmra.mrb[0].mxu0 %v3044
      %v3207 = vpop.f32.mrb[0].mxu0
      %v3208 = vadd.f32 0.0, %v3207
      %v3209 = vpop.f32.mrb[0].mxu0
      %3210 = vmatprep.mubr.f32.mxu0 0.0
      %3211 = vmatmul.mubr.f32.gmra.mrb[0].mxu0 %v3046
      %v3212 = vpop.f32.mrb[0].mxu0
      %v3213 = vadd.f32 0.0, %v3212
      %v3214 = vpop.f32.mrb[0].mxu0
      %3215 = vmatprep.mubr.f32.mxu0 0.0
      %3216 = vmatmul.mubr.f32.gmra.mrb[0].mxu0 %v3048
      %v3217 = vpop.f32.mrb[0].mxu0
      %v3218 = vadd.f32 0.0, %v3217
      %v3219 = vpop.f32.mrb[0].mxu0
      %3220 = vmatprep.mubr.f32.mxu0 0.0
      %3221 = vmatmul.mubr.f32.gmra.mrb[0].mxu0 %v3050
      %v3222 = vpop.f32.mrb[0].mxu0
      %v3223 = vadd.f32 0.0, %v3222
      %v3224 = vpop.f32.mrb[0].mxu0
      %3225 = vmatprep.mubr.f32.mxu0 0.0
      %3226 = vmatmul.mubr.f32.gmra.mrb[0].mxu0 %v3052
      %v3227 = vpop.f32.mrb[0].mxu0
      %v3228 = vadd.f32 0.0, %v3227
      %v3229 = vpop.f32.mrb[0].mxu0
      %3230 = vmatprep.mubr.f32.mxu0 0.0
      %3231 = vmatmul.mubr.f32.gmra.mrb[0].mxu0 %v3054
      %v3232 = vpop.f32.mrb[0].mxu0
      %v3233 = vadd.f32 0.0, %v3232
      %v3234 = vpop.f32.mrb[0].mxu0
      %3235 = vmatprep.mubr.f32.mxu0 0.0
      %3236 = vmatmul.mubr.f32.gmra.mrb[0].mxu0 %v3056
      %v3237 = vpop.f32.mrb[0].mxu0
      %v3238 = vadd.f32 0.0, %v3237
      %v3239 = vpop.f32.mrb[0].mxu0
      %3240 = vmatprep.mubr.f32.mxu0 0.0
      %3241 = vmatmul.mubr.f32.gmra.mrb[0].mxu0 %v3058
      %v3242 = vpop.f32.mrb[0].mxu0
      %v3243 = vadd.f32 0.0, %v3242
      %v3244 = vpop.f32.mrb[0].mxu0
      %3245 = vmatprep.mubr.f32.mxu0 0.0
      %3246 = vmatmul.mubr.f32.gmra.mrb[0].mxu0 %v3060
      %v3247 = vpop.f32.mrb[0].mxu0
      %v3248 = vadd.f32 0.0, %v3247
      %v3249 = vpop.f32.mrb[0].mxu0
      %3250 = vmatprep.mubr.f32.mxu0 0.0
      %3251 = vmatmul.mubr.f32.gmra.mrb[0].mxu0 %v3062
      %v3252 = vpop.f32.mrb[0].mxu0
      %v3253 = vadd.f32 0.0, %v3252
      %v3254 = vpop.f32.mrb[0].mxu0
      %3255 = vmatprep.mubr.f32.mxu0 0.0
      %3256 = vmatmul.mubr.f32.gmra.mrb[0].mxu0 %v3064
      %v3257 = vpop.f32.mrb[0].mxu0
      %v3258 = vadd.f32 0.0, %v3257
      %v3259 = vpop.f32.mrb[0].mxu0
      %3260 = vmatprep.mubr.f32.mxu0 0.0
      %3261 = vmatmul.mubr.f32.gmra.mrb[0].mxu0 %v3066
      %v3262 = vpop.f32.mrb[0].mxu0
      %v3263 = vadd.f32 0.0, %v3262
      %v3264 = vpop.f32.mrb[0].mxu0
      %3265 = vmatprep.mubr.f32.mxu0 0.0
      %3266 = vmatmul.mubr.f32.gmra.mrb[0].mxu0 %v3068
      %v3267 = vpop.f32.mrb[0].mxu0
      %v3268 = vadd.f32 0.0, %v3267
      %v3269 = vpop.f32.mrb[0].mxu0
      %3270 = vmatprep.mubr.f32.mxu0 0.0
      %3271 = vmatmul.mubr.f32.gmra.mrb[0].mxu0 %v3070
      %v3272 = vpop.f32.mrb[0].mxu0
      %v3273 = vadd.f32 0.0, %v3272
      %v3274 = vpop.f32.mrb[0].mxu0
      %3275 = vmatprep.mubr.f32.mxu0 0.0
      %3276 = vmatmul.mubr.f32.gmra.mrb[0].mxu0 %v3072
      %v3277 = vpop.f32.mrb[0].mxu0
      %v3278 = vadd.f32 0.0, %v3277
      %v3279 = vpop.f32.mrb[0].mxu0
      %3280 = vmatprep.mubr.f32.mxu0 0.0
      %3281 = vmatmul.mubr.f32.gmra.mrb[0].mxu0 %v3074
      %v3282 = vpop.f32.mrb[0].mxu0
      %v3283 = vadd.f32 0.0, %v3282
      %v3284 = vpop.f32.mrb[0].mxu0
      %3285 = vmatprep.mubr.f32.mxu0 0.0
      %3286 = vmatmul.mubr.f32.gmra.mrb[0].mxu0 %v3076
      %v3287 = vpop.f32.mrb[0].mxu0
      %v3288 = vadd.f32 0.0, %v3287
      %v3289 = vpop.f32.mrb[0].mxu0
      %3290 = vmatprep.mubr.f32.mxu0 0.0
      %3291 = vmatmul.mubr.f32.gmra.mrb[0].mxu0 %v3078
      %v3292 = vpop.f32.mrb[0].mxu0
      %v3293 = vadd.f32 0.0, %v3292
      %v3294 = vpop.f32.mrb[0].mxu0
      %3295 = vmatprep.mubr.f32.mxu0 0.0
      %3296 = vmatmul.mubr.f32.gmra.mrb[0].mxu0 %v3080
      %v3297 = vpop.f32.mrb[0].mxu0
      %v3298 = vadd.f32 0.0, %v3297
      %v3299 = vpop.f32.mrb[0].mxu0
      %3300 = vmatprep.mubr.f32.mxu0 0.0
      %3301 = vmatmul.mubr.f32.gmra.mrb[0].mxu0 %v3082
      %v3302 = vpop.f32.mrb[0].mxu0
      %v3303 = vpop.f32.mrb[0].mxu0
      %3304 = vmatprep.mubr.f32.mxu0 0.0
      %3305 = vmatmul.mubr.f32.gmra.mrb[0].mxu0 %v3084
      %v3306 = vpop.f32.mrb[0].mxu0
      %v3307 = vpop.f32.mrb[0].mxu0
      %3308 = vdwg.mxu0
      %v3309 = vadd.f32 %v2769, %v3153
      %v3310 = vadd.f32 %v2774, %v3158
      %v3311 = vadd.f32 %v2779, %v3163
      %v3312 = vadd.f32 %v2784, %v3168
      %v3313 = vadd.f32 %v2789, %v3173
      %v3314 = vadd.f32 %v2794, %v3178
      %v3315 = vadd.f32 %v2799, %v3183
      %v3316 = vadd.f32 %v2804, %v3188
      %v3317 = vadd.f32 %v2809, %v3193
      %v3318 = vadd.f32 %v2814, %v3198
      %v3319 = vadd.f32 %v2819, %v3203
      %v3320 = vadd.f32 %v2824, %v3208
      %v3321 = vadd.f32 %v2829, %v3213
      %v3322 = vadd.f32 %v2834, %v3218
      %v3323 = vadd.f32 %v2839, %v3223
      %v3324 = vadd.f32 %v2844, %v3228
      %v3325 = vadd.f32 %v2849, %v3233
      %v3326 = vadd.f32 %v2854, %v3238
      %v3327 = vadd.f32 %v2859, %v3243
      %v3328 = vadd.f32 %v2864, %v3248
      %v3329 = vadd.f32 %v2869, %v3253
      %v3330 = vadd.f32 %v2874, %v3258
      %v3331 = vadd.f32 %v2879, %v3263
      %v3332 = vadd.f32 %v2884, %v3268
      %v3333 = vadd.f32 %v2889, %v3273
      %v3334 = vadd.f32 %v2894, %v3278
      %v3335 = vadd.f32 %v2899, %v3283
      %v3336 = vadd.f32 %v2904, %v3288
      %v3337 = vadd.f32 %v2909, %v3293
      %v3338 = vadd.f32 %v2914, %v3298
      %v3340 = vsel %vm2286, %v2188, 0
      %v3343 = vsel %vm2286, %v2189, 0
      %v3346 = vsel %vm2286, %v2191, 0
      %v3349 = vsel %vm2286, %v2192, 0
      %v3352 = vsel %vm2286, %v2194, 0
      %v3355 = vsel %vm2286, %v2195, 0
      %v3358 = vsel %vm2286, %v2197, 0
      %v3361 = vsel %vm2286, %v2198, 0
      %v3364 = vsel %vm2286, %v2200, 0
      %v3367 = vsel %vm2286, %v2201, 0
      %v3370 = vsel %vm2286, %v2203, 0
      %v3373 = vsel %vm2286, %v2204, 0
      %v3376 = vsel %vm2286, %v2206, 0
      %v3379 = vsel %vm2286, %v2207, 0
      %v3382 = vsel %vm2286, %v2209, 0
      %v3385 = vsel %vm2286, %v2210, 0
      %v3388 = vsel %vm2286, %v2212, 0
      %v3391 = vsel %vm2286, %v2213, 0
      %v3394 = vsel %vm2286, %v2215, 0
      %v3397 = vsel %vm2286, %v2216, 0
      %v3400 = vsel %vm2286, %v2218, 0
      %v3403 = vsel %vm2286, %v2219, 0
      %v3406 = vsel %vm2286, %v2221, 0
      %v3409 = vsel %vm2286, %v2222, 0
      %v3412 = vsel %vm2286, %v2224, 0
      %v3415 = vsel %vm2286, %v2225, 0
      %v3418 = vsel %vm2286, %v2227, 0
      %v3421 = vsel %vm2286, %v2228, 0
      %v3424 = vsel %vm2286, %v2230, 0
      %v3427 = vsel %vm2286, %v2231, 0
      %v3430 = vsel %vm2286, %v2233, 0
      %v3433 = vsel %vm2286, %v2234, 0
      %3435 = vmatprep.subr.mxu0 0.0
      %3436 = vmatpush1.msra.mxu0 %v2274
      %3437 = vmatprep.subr.mxu0 0.0
      %3438 = vmatpush1.msra.mxu0 %v2275
      %3439 = vmatprep.subr.mxu0 0.0
      %3440 = vmatpush1.msra.mxu0 0.0
      %3441 = vmatprep.subr.mxu0 0.0
      %3442 = vmatpush1.msra.mxu0 0.0
      %3443 = vmatprep.subr.mxu0 0.0
      %3444 = vmatpush1.msra.mxu0 0.0
      %3445 = vmatprep.subr.mxu0 0.0
      %3446 = vmatpush1.msra.mxu0 0.0
      %3447 = vmatprep.subr.mxu0 0.0
      %3448 = vmatpush1.msra.mxu0 0.0
      %3449 = vmatprep.subr.mxu0 0.0
      %3450 = vmatpush1.msra.mxu0 0.0
      %3451 = vmatprep.subr.mxu0 0.0
      %3452 = vmatpush1.msra.mxu0 0.0
      %3453 = vmatprep.subr.mxu0 0.0
      %3454 = vmatpush1.msra.mxu0 0.0
      %3455 = vmatprep.subr.mxu0 0.0
      %3456 = vmatpush1.msra.mxu0 0.0
      %3457 = vmatprep.subr.mxu0 0.0
      %3458 = vmatpush1.msra.mxu0 0.0
      %3459 = vmatprep.subr.mxu0 0.0
      %3460 = vmatpush1.msra.mxu0 0.0
      %3461 = vmatprep.subr.mxu0 0.0
      %3462 = vmatpush1.msra.mxu0 0.0
      %3463 = vmatprep.subr.mxu0 0.0
      %3464 = vmatpush1.msra.mxu0 0.0
      %3465 = vmatprep.subr.mxu0 0.0
      %3466 = vmatpush1.msra.mxu0 0.0
      %3467 = vmatprep.subr.mxu0 0.0
      %3468 = vmatpush1.msra.mxu0 0.0
      %3469 = vmatprep.subr.mxu0 0.0
      %3470 = vmatpush1.msra.mxu0 0.0
      %3471 = vmatprep.subr.mxu0 0.0
      %3472 = vmatpush1.msra.mxu0 0.0
      %3473 = vmatprep.subr.mxu0 0.0
      %3474 = vmatpush1.msra.mxu0 0.0
      %3475 = vmatprep.subr.mxu0 0.0
      %3476 = vmatpush1.msra.mxu0 0.0
      %3477 = vmatprep.subr.mxu0 0.0
      %3478 = vmatpush1.msra.mxu0 0.0
      %3479 = vmatprep.subr.mxu0 0.0
      %3480 = vmatpush1.msra.mxu0 0.0
      %3481 = vmatprep.subr.mxu0 0.0
      %3482 = vmatpush1.msra.mxu0 0.0
      %3483 = vmatprep.subr.mxu0 0.0
      %3484 = vmatpush1.msra.mxu0 0.0
      %3485 = vmatprep.subr.mxu0 0.0
      %3486 = vmatpush1.msra.mxu0 0.0
      %3487 = vmatprep.subr.mxu0 0.0
      %3488 = vmatpush1.msra.mxu0 0.0
      %3489 = vmatprep.subr.mxu0 0.0
      %3490 = vmatpush1.msra.mxu0 0.0
      %3491 = vmatprep.subr.mxu0 0.0
      %3492 = vmatpush1.msra.mxu0 0.0
      %3493 = vmatprep.subr.mxu0 0.0
      %3494 = vmatpush1.msra.mxu0 0.0
      %3495 = vmatprep.subr.mxu0 0.0
      %3496 = vmatpush1.msra.mxu0 0.0
      %3497 = vmatprep.subr.mxu0 0.0
      %3498 = vmatpush1.msra.mxu0 0.0
      %3499 = vmatprep.mubr.f32.mxu0 0.0
      %3500 = vmatmul.mubr.f32.gmra.mrb[0].mxu0 %v3340
      %v3501 = vpop.f32.mrb[0].mxu0
      %v3502 = vadd.f32 0.0, %v3501
      %v3503 = vpop.f32.mrb[0].mxu0
      %3504 = vmatprep.mubr.f32.mxu0 0.0
      %3505 = vmatmul.mubr.f32.gmra.mrb[0].mxu0 %v3343
      %v3506 = vpop.f32.mrb[0].mxu0
      %v3507 = vadd.f32 0.0, %v3506
      %v3508 = vpop.f32.mrb[0].mxu0
      %3509 = vmatprep.mubr.f32.mxu0 0.0
      %3510 = vmatmul.mubr.f32.gmra.mrb[0].mxu0 %v3346
      %v3511 = vpop.f32.mrb[0].mxu0
      %v3512 = vadd.f32 0.0, %v3511
      %v3513 = vpop.f32.mrb[0].mxu0
      %3514 = vmatprep.mubr.f32.mxu0 0.0
      %3515 = vmatmul.mubr.f32.gmra.mrb[0].mxu0 %v3349
      %v3516 = vpop.f32.mrb[0].mxu0
      %v3517 = vadd.f32 0.0, %v3516
      %v3518 = vpop.f32.mrb[0].mxu0
      %3519 = vmatprep.mubr.f32.mxu0 0.0
      %3520 = vmatmul.mubr.f32.gmra.mrb[0].mxu0 %v3352
      %v3521 = vpop.f32.mrb[0].mxu0
      %v3522 = vadd.f32 0.0, %v3521
      %v3523 = vpop.f32.mrb[0].mxu0
      %3524 = vmatprep.mubr.f32.mxu0 0.0
      %3525 = vmatmul.mubr.f32.gmra.mrb[0].mxu0 %v3355
      %v3526 = vpop.f32.mrb[0].mxu0
      %v3527 = vadd.f32 0.0, %v3526
      %v3528 = vpop.f32.mrb[0].mxu0
      %3529 = vmatprep.mubr.f32.mxu0 0.0
      %3530 = vmatmul.mubr.f32.gmra.mrb[0].mxu0 %v3358
      %v3531 = vpop.f32.mrb[0].mxu0
      %v3532 = vadd.f32 0.0, %v3531
      %v3533 = vpop.f32.mrb[0].mxu0
      %3534 = vmatprep.mubr.f32.mxu0 0.0
      %3535 = vmatmul.mubr.f32.gmra.mrb[0].mxu0 %v3361
      %v3536 = vpop.f32.mrb[0].mxu0
      %v3537 = vadd.f32 0.0, %v3536
      %v3538 = vpop.f32.mrb[0].mxu0
      %3539 = vmatprep.mubr.f32.mxu0 0.0
      %3540 = vmatmul.mubr.f32.gmra.mrb[0].mxu0 %v3364
      %v3541 = vpop.f32.mrb[0].mxu0
      %v3542 = vadd.f32 0.0, %v3541
      %v3543 = vpop.f32.mrb[0].mxu0
      %3544 = vmatprep.mubr.f32.mxu0 0.0
      %3545 = vmatmul.mubr.f32.gmra.mrb[0].mxu0 %v3367
      %v3546 = vpop.f32.mrb[0].mxu0
      %v3547 = vadd.f32 0.0, %v3546
      %v3548 = vpop.f32.mrb[0].mxu0
      %3549 = vmatprep.mubr.f32.mxu0 0.0
      %3550 = vmatmul.mubr.f32.gmra.mrb[0].mxu0 %v3370
      %v3551 = vpop.f32.mrb[0].mxu0
      %v3552 = vadd.f32 0.0, %v3551
      %v3553 = vpop.f32.mrb[0].mxu0
      %3554 = vmatprep.mubr.f32.mxu0 0.0
      %3555 = vmatmul.mubr.f32.gmra.mrb[0].mxu0 %v3373
      %v3556 = vpop.f32.mrb[0].mxu0
      %v3557 = vadd.f32 0.0, %v3556
      %v3558 = vpop.f32.mrb[0].mxu0
      %3559 = vmatprep.mubr.f32.mxu0 0.0
      %3560 = vmatmul.mubr.f32.gmra.mrb[0].mxu0 %v3376
      %v3561 = vpop.f32.mrb[0].mxu0
      %v3562 = vadd.f32 0.0, %v3561
      %v3563 = vpop.f32.mrb[0].mxu0
      %3564 = vmatprep.mubr.f32.mxu0 0.0
      %3565 = vmatmul.mubr.f32.gmra.mrb[0].mxu0 %v3379
      %v3566 = vpop.f32.mrb[0].mxu0
      %v3567 = vadd.f32 0.0, %v3566
      %v3568 = vpop.f32.mrb[0].mxu0
      %3569 = vmatprep.mubr.f32.mxu0 0.0
      %3570 = vmatmul.mubr.f32.gmra.mrb[0].mxu0 %v3382
      %v3571 = vpop.f32.mrb[0].mxu0
      %v3572 = vadd.f32 0.0, %v3571
      %v3573 = vpop.f32.mrb[0].mxu0
      %3574 = vmatprep.mubr.f32.mxu0 0.0
      %3575 = vmatmul.mubr.f32.gmra.mrb[0].mxu0 %v3385
      %v3576 = vpop.f32.mrb[0].mxu0
      %v3577 = vadd.f32 0.0, %v3576
      %v3578 = vpop.f32.mrb[0].mxu0
      %3579 = vmatprep.mubr.f32.mxu0 0.0
      %3580 = vmatmul.mubr.f32.gmra.mrb[0].mxu0 %v3388
      %v3581 = vpop.f32.mrb[0].mxu0
      %v3582 = vadd.f32 0.0, %v3581
      %v3583 = vpop.f32.mrb[0].mxu0
      %3584 = vmatprep.mubr.f32.mxu0 0.0
      %3585 = vmatmul.mubr.f32.gmra.mrb[0].mxu0 %v3391
      %v3586 = vpop.f32.mrb[0].mxu0
      %v3587 = vadd.f32 0.0, %v3586
      %v3588 = vpop.f32.mrb[0].mxu0
      %3589 = vmatprep.mubr.f32.mxu0 0.0
      %3590 = vmatmul.mubr.f32.gmra.mrb[0].mxu0 %v3394
      %v3591 = vpop.f32.mrb[0].mxu0
      %v3592 = vadd.f32 0.0, %v3591
      %v3593 = vpop.f32.mrb[0].mxu0
      %3594 = vmatprep.mubr.f32.mxu0 0.0
      %3595 = vmatmul.mubr.f32.gmra.mrb[0].mxu0 %v3397
      %v3596 = vpop.f32.mrb[0].mxu0
      %v3597 = vadd.f32 0.0, %v3596
      %v3598 = vpop.f32.mrb[0].mxu0
      %3599 = vmatprep.mubr.f32.mxu0 0.0
      %3600 = vmatmul.mubr.f32.gmra.mrb[0].mxu0 %v3400
      %v3601 = vpop.f32.mrb[0].mxu0
      %v3602 = vadd.f32 0.0, %v3601
      %v3603 = vpop.f32.mrb[0].mxu0
      %3604 = vmatprep.mubr.f32.mxu0 0.0
      %3605 = vmatmul.mubr.f32.gmra.mrb[0].mxu0 %v3403
      %v3606 = vpop.f32.mrb[0].mxu0
      %v3607 = vadd.f32 0.0, %v3606
      %v3608 = vpop.f32.mrb[0].mxu0
      %3609 = vmatprep.mubr.f32.mxu0 0.0
      %3610 = vmatmul.mubr.f32.gmra.mrb[0].mxu0 %v3406
      %v3611 = vpop.f32.mrb[0].mxu0
      %v3612 = vadd.f32 0.0, %v3611
      %v3613 = vpop.f32.mrb[0].mxu0
      %3614 = vmatprep.mubr.f32.mxu0 0.0
      %3615 = vmatmul.mubr.f32.gmra.mrb[0].mxu0 %v3409
      %v3616 = vpop.f32.mrb[0].mxu0
      %v3617 = vadd.f32 0.0, %v3616
      %v3618 = vpop.f32.mrb[0].mxu0
      %3619 = vmatprep.mubr.f32.mxu0 0.0
      %3620 = vmatmul.mubr.f32.gmra.mrb[0].mxu0 %v3412
      %v3621 = vpop.f32.mrb[0].mxu0
      %v3622 = vadd.f32 0.0, %v3621
      %v3623 = vpop.f32.mrb[0].mxu0
      %3624 = vmatprep.mubr.f32.mxu0 0.0
      %3625 = vmatmul.mubr.f32.gmra.mrb[0].mxu0 %v3415
      %v3626 = vpop.f32.mrb[0].mxu0
      %v3627 = vadd.f32 0.0, %v3626
      %v3628 = vpop.f32.mrb[0].mxu0
      %3629 = vmatprep.mubr.f32.mxu0 0.0
      %3630 = vmatmul.mubr.f32.gmra.mrb[0].mxu0 %v3418
      %v3631 = vpop.f32.mrb[0].mxu0
      %v3632 = vadd.f32 0.0, %v3631
      %v3633 = vpop.f32.mrb[0].mxu0
      %3634 = vmatprep.mubr.f32.mxu0 0.0
      %3635 = vmatmul.mubr.f32.gmra.mrb[0].mxu0 %v3421
      %v3636 = vpop.f32.mrb[0].mxu0
      %v3637 = vadd.f32 0.0, %v3636
      %v3638 = vpop.f32.mrb[0].mxu0
      %3639 = vmatprep.mubr.f32.mxu0 0.0
      %3640 = vmatmul.mubr.f32.gmra.mrb[0].mxu0 %v3424
      %v3641 = vpop.f32.mrb[0].mxu0
      %v3642 = vadd.f32 0.0, %v3641
      %v3643 = vpop.f32.mrb[0].mxu0
      %3644 = vmatprep.mubr.f32.mxu0 0.0
      %3645 = vmatmul.mubr.f32.gmra.mrb[0].mxu0 %v3427
      %v3646 = vpop.f32.mrb[0].mxu0
      %v3647 = vadd.f32 0.0, %v3646
      %v3648 = vpop.f32.mrb[0].mxu0
      %3649 = vmatprep.mubr.f32.mxu0 0.0
      %3650 = vmatmul.mubr.f32.gmra.mrb[0].mxu0 %v3430
      %v3651 = vpop.f32.mrb[0].mxu0
      %v3652 = vpop.f32.mrb[0].mxu0
      %3653 = vmatprep.mubr.f32.mxu0 0.0
      %3654 = vmatmul.mubr.f32.gmra.mrb[0].mxu0 %v3433
      %v3655 = vpop.f32.mrb[0].mxu0
      %v3656 = vpop.f32.mrb[0].mxu0
      %3657 = vdwg.mxu0
      %v3658 = vadd.f32 %v3309, %v3502
      %v3659 = vadd.f32 %v3310, %v3507
      %v3660 = vadd.f32 %v3311, %v3512
      %v3661 = vadd.f32 %v3312, %v3517
      %v3662 = vadd.f32 %v3313, %v3522
      %v3663 = vadd.f32 %v3314, %v3527
      %v3664 = vadd.f32 %v3315, %v3532
      %v3665 = vadd.f32 %v3316, %v3537
      %v3666 = vadd.f32 %v3317, %v3542
      %v3667 = vadd.f32 %v3318, %v3547
      %v3668 = vadd.f32 %v3319, %v3552
      %v3669 = vadd.f32 %v3320, %v3557
      %v3670 = vadd.f32 %v3321, %v3562
      %v3671 = vadd.f32 %v3322, %v3567
      %v3672 = vadd.f32 %v3323, %v3572
      %v3673 = vadd.f32 %v3324, %v3577
      %v3674 = vadd.f32 %v3325, %v3582
      %v3675 = vadd.f32 %v3326, %v3587
      %v3676 = vadd.f32 %v3327, %v3592
      %v3677 = vadd.f32 %v3328, %v3597
      %v3678 = vadd.f32 %v3329, %v3602
      %v3679 = vadd.f32 %v3330, %v3607
      %v3680 = vadd.f32 %v3331, %v3612
      %v3681 = vadd.f32 %v3332, %v3617
      %v3682 = vadd.f32 %v3333, %v3622
      %v3683 = vadd.f32 %v3334, %v3627
      %v3684 = vadd.f32 %v3335, %v3632
      %v3685 = vadd.f32 %v3336, %v3637
      %v3686 = vadd.f32 %v3337, %v3642
      %v3687 = vadd.f32 %v3338, %v3647
      %v3689 = vsel %vm2286, %v2236, 0
      %v3692 = vsel %vm2286, %v2237, 0
      %v3695 = vsel %vm2286, %v2238, 0
      %v3698 = vsel %vm2286, %v2239, 0
      %v3701 = vsel %vm2286, %v2240, 0
      %v3704 = vsel %vm2286, %v2241, 0
      %v3707 = vsel %vm2286, %v2242, 0
      %v3710 = vsel %vm2286, %v2243, 0
      %v3713 = vsel %vm2286, %v2244, 0
      %v3716 = vsel %vm2286, %v2245, 0
      %v3719 = vsel %vm2286, %v2246, 0
      %v3722 = vsel %vm2286, %v2247, 0
      %v3725 = vsel %vm2286, %v2248, 0
      %v3728 = vsel %vm2286, %v2249, 0
      %v3731 = vsel %vm2286, %v2250, 0
      %v3734 = vsel %vm2286, %v2251, 0
      %v3737 = vsel %vm2286, %v2252, 0
      %v3740 = vsel %vm2286, %v2253, 0
      %v3743 = vsel %vm2286, %v2254, 0
      %v3746 = vsel %vm2286, %v2255, 0
      %v3749 = vsel %vm2286, %v2256, 0
      %v3752 = vsel %vm2286, %v2257, 0
      %v3755 = vsel %vm2286, %v2258, 0
      %v3758 = vsel %vm2286, %v2259, 0
      %v3761 = vsel %vm2286, %v2260, 0
      %v3764 = vsel %vm2286, %v2261, 0
      %v3767 = vsel %vm2286, %v2262, 0
      %v3770 = vsel %vm2286, %v2263, 0
      %v3773 = vsel %vm2286, %v2264, 0
      %v3776 = vsel %vm2286, %v2265, 0
      %v3779 = vsel %vm2286, %v2266, 0
      %v3782 = vsel %vm2286, %v2267, 0
      %3784 = vmatprep.subr.mxu0 0.0
      %3785 = vmatpush1.msra.mxu0 %v2276
      %3786 = vmatprep.subr.mxu0 0.0
      %3787 = vmatpush1.msra.mxu0 %v2277
      %3788 = vmatprep.subr.mxu0 0.0
      %3789 = vmatpush1.msra.mxu0 0.0
      %3790 = vmatprep.subr.mxu0 0.0
      %3791 = vmatpush1.msra.mxu0 0.0
      %3792 = vmatprep.subr.mxu0 0.0
      %3793 = vmatpush1.msra.mxu0 0.0
      %3794 = vmatprep.subr.mxu0 0.0
      %3795 = vmatpush1.msra.mxu0 0.0
      %3796 = vmatprep.subr.mxu0 0.0
      %3797 = vmatpush1.msra.mxu0 0.0
      %3798 = vmatprep.subr.mxu0 0.0
      %3799 = vmatpush1.msra.mxu0 0.0
      %3800 = vmatprep.subr.mxu0 0.0
      %3801 = vmatpush1.msra.mxu0 0.0
      %3802 = vmatprep.subr.mxu0 0.0
      %3803 = vmatpush1.msra.mxu0 0.0
      %3804 = vmatprep.subr.mxu0 0.0
      %3805 = vmatpush1.msra.mxu0 0.0
      %3806 = vmatprep.subr.mxu0 0.0
      %3807 = vmatpush1.msra.mxu0 0.0
      %3808 = vmatprep.subr.mxu0 0.0
      %3809 = vmatpush1.msra.mxu0 0.0
      %3810 = vmatprep.subr.mxu0 0.0
      %3811 = vmatpush1.msra.mxu0 0.0
      %3812 = vmatprep.subr.mxu0 0.0
      %3813 = vmatpush1.msra.mxu0 0.0
      %3814 = vmatprep.subr.mxu0 0.0
      %3815 = vmatpush1.msra.mxu0 0.0
      %3816 = vmatprep.subr.mxu0 0.0
      %3817 = vmatpush1.msra.mxu0 0.0
      %3818 = vmatprep.subr.mxu0 0.0
      %3819 = vmatpush1.msra.mxu0 0.0
      %3820 = vmatprep.subr.mxu0 0.0
      %3821 = vmatpush1.msra.mxu0 0.0
      %3822 = vmatprep.subr.mxu0 0.0
      %3823 = vmatpush1.msra.mxu0 0.0
      %3824 = vmatprep.subr.mxu0 0.0
      %3825 = vmatpush1.msra.mxu0 0.0
      %3826 = vmatprep.subr.mxu0 0.0
      %3827 = vmatpush1.msra.mxu0 0.0
      %3828 = vmatprep.subr.mxu0 0.0
      %3829 = vmatpush1.msra.mxu0 0.0
      %3830 = vmatprep.subr.mxu0 0.0
      %3831 = vmatpush1.msra.mxu0 0.0
      %3832 = vmatprep.subr.mxu0 0.0
      %3833 = vmatpush1.msra.mxu0 0.0
      %3834 = vmatprep.subr.mxu0 0.0
      %3835 = vmatpush1.msra.mxu0 0.0
      %3836 = vmatprep.subr.mxu0 0.0
      %3837 = vmatpush1.msra.mxu0 0.0
      %3838 = vmatprep.subr.mxu0 0.0
      %3839 = vmatpush1.msra.mxu0 0.0
      %3840 = vmatprep.subr.mxu0 0.0
      %3841 = vmatpush1.msra.mxu0 0.0
      %3842 = vmatprep.subr.mxu0 0.0
      %3843 = vmatpush1.msra.mxu0 0.0
      %3844 = vmatprep.subr.mxu0 0.0
      %3845 = vmatpush1.msra.mxu0 0.0
      %3846 = vmatprep.subr.mxu0 0.0
      %3847 = vmatpush1.msra.mxu0 0.0
      %3848 = vmatprep.mubr.f32.mxu0 0.0
      %3849 = vmatmul.mubr.f32.gmra.mrb[0].mxu0 %v3689
      %v3850 = vpop.f32.mrb[0].mxu0
      %v3851 = vadd.f32 0.0, %v3850
      %v3852 = vpop.f32.mrb[0].mxu0
      %3853 = vmatprep.mubr.f32.mxu0 0.0
      %3854 = vmatmul.mubr.f32.gmra.mrb[0].mxu0 %v3692
      %v3855 = vpop.f32.mrb[0].mxu0
      %v3856 = vadd.f32 0.0, %v3855
      %v3857 = vpop.f32.mrb[0].mxu0
      %3858 = vmatprep.mubr.f32.mxu0 0.0
      %3859 = vmatmul.mubr.f32.gmra.mrb[0].mxu0 %v3695
      %v3860 = vpop.f32.mrb[0].mxu0
      %v3861 = vadd.f32 0.0, %v3860
      %v3862 = vpop.f32.mrb[0].mxu0
      %3863 = vmatprep.mubr.f32.mxu0 0.0
      %3864 = vmatmul.mubr.f32.gmra.mrb[0].mxu0 %v3698
      %v3865 = vpop.f32.mrb[0].mxu0
      %v3866 = vadd.f32 0.0, %v3865
      %v3867 = vpop.f32.mrb[0].mxu0
      %3868 = vmatprep.mubr.f32.mxu0 0.0
      %3869 = vmatmul.mubr.f32.gmra.mrb[0].mxu0 %v3701
      %v3870 = vpop.f32.mrb[0].mxu0
      %v3871 = vadd.f32 0.0, %v3870
      %v3872 = vpop.f32.mrb[0].mxu0
      %3873 = vmatprep.mubr.f32.mxu0 0.0
      %3874 = vmatmul.mubr.f32.gmra.mrb[0].mxu0 %v3704
      %v3875 = vpop.f32.mrb[0].mxu0
      %v3876 = vadd.f32 0.0, %v3875
      %v3877 = vpop.f32.mrb[0].mxu0
      %3878 = vmatprep.mubr.f32.mxu0 0.0
      %3879 = vmatmul.mubr.f32.gmra.mrb[0].mxu0 %v3707
      %v3880 = vpop.f32.mrb[0].mxu0
      %v3881 = vadd.f32 0.0, %v3880
      %v3882 = vpop.f32.mrb[0].mxu0
      %3883 = vmatprep.mubr.f32.mxu0 0.0
      %3884 = vmatmul.mubr.f32.gmra.mrb[0].mxu0 %v3710
      %v3885 = vpop.f32.mrb[0].mxu0
      %v3886 = vadd.f32 0.0, %v3885
      %v3887 = vpop.f32.mrb[0].mxu0
      %3888 = vmatprep.mubr.f32.mxu0 0.0
      %3889 = vmatmul.mubr.f32.gmra.mrb[0].mxu0 %v3713
      %v3890 = vpop.f32.mrb[0].mxu0
      %v3891 = vadd.f32 0.0, %v3890
      %v3892 = vpop.f32.mrb[0].mxu0
      %3893 = vmatprep.mubr.f32.mxu0 0.0
      %3894 = vmatmul.mubr.f32.gmra.mrb[0].mxu0 %v3716
      %v3895 = vpop.f32.mrb[0].mxu0
      %v3896 = vadd.f32 0.0, %v3895
      %v3897 = vpop.f32.mrb[0].mxu0
      %3898 = vmatprep.mubr.f32.mxu0 0.0
      %3899 = vmatmul.mubr.f32.gmra.mrb[0].mxu0 %v3719
      %v3900 = vpop.f32.mrb[0].mxu0
      %v3901 = vadd.f32 0.0, %v3900
      %v3902 = vpop.f32.mrb[0].mxu0
      %3903 = vmatprep.mubr.f32.mxu0 0.0
      %3904 = vmatmul.mubr.f32.gmra.mrb[0].mxu0 %v3722
      %v3905 = vpop.f32.mrb[0].mxu0
      %v3906 = vadd.f32 0.0, %v3905
      %v3907 = vpop.f32.mrb[0].mxu0
      %3908 = vmatprep.mubr.f32.mxu0 0.0
      %3909 = vmatmul.mubr.f32.gmra.mrb[0].mxu0 %v3725
      %v3910 = vpop.f32.mrb[0].mxu0
      %v3911 = vadd.f32 0.0, %v3910
      %v3912 = vpop.f32.mrb[0].mxu0
      %3913 = vmatprep.mubr.f32.mxu0 0.0
      %3914 = vmatmul.mubr.f32.gmra.mrb[0].mxu0 %v3728
      %v3915 = vpop.f32.mrb[0].mxu0
      %v3916 = vadd.f32 0.0, %v3915
      %v3917 = vpop.f32.mrb[0].mxu0
      %3918 = vmatprep.mubr.f32.mxu0 0.0
      %3919 = vmatmul.mubr.f32.gmra.mrb[0].mxu0 %v3731
      %v3920 = vpop.f32.mrb[0].mxu0
      %v3921 = vadd.f32 0.0, %v3920
      %v3922 = vpop.f32.mrb[0].mxu0
      %3923 = vmatprep.mubr.f32.mxu0 0.0
      %3924 = vmatmul.mubr.f32.gmra.mrb[0].mxu0 %v3734
      %v3925 = vpop.f32.mrb[0].mxu0
      %v3926 = vadd.f32 0.0, %v3925
      %v3927 = vpop.f32.mrb[0].mxu0
      %3928 = vmatprep.mubr.f32.mxu0 0.0
      %3929 = vmatmul.mubr.f32.gmra.mrb[0].mxu0 %v3737
      %v3930 = vpop.f32.mrb[0].mxu0
      %v3931 = vadd.f32 0.0, %v3930
      %v3932 = vpop.f32.mrb[0].mxu0
      %3933 = vmatprep.mubr.f32.mxu0 0.0
      %3934 = vmatmul.mubr.f32.gmra.mrb[0].mxu0 %v3740
      %v3935 = vpop.f32.mrb[0].mxu0
      %v3936 = vadd.f32 0.0, %v3935
      %v3937 = vpop.f32.mrb[0].mxu0
      %3938 = vmatprep.mubr.f32.mxu0 0.0
      %3939 = vmatmul.mubr.f32.gmra.mrb[0].mxu0 %v3743
      %v3940 = vpop.f32.mrb[0].mxu0
      %v3941 = vadd.f32 0.0, %v3940
      %v3942 = vpop.f32.mrb[0].mxu0
      %3943 = vmatprep.mubr.f32.mxu0 0.0
      %3944 = vmatmul.mubr.f32.gmra.mrb[0].mxu0 %v3746
      %v3945 = vpop.f32.mrb[0].mxu0
      %v3946 = vadd.f32 0.0, %v3945
      %v3947 = vpop.f32.mrb[0].mxu0
      %3948 = vmatprep.mubr.f32.mxu0 0.0
      %3949 = vmatmul.mubr.f32.gmra.mrb[0].mxu0 %v3749
      %v3950 = vpop.f32.mrb[0].mxu0
      %v3951 = vadd.f32 0.0, %v3950
      %v3952 = vpop.f32.mrb[0].mxu0
      %3953 = vmatprep.mubr.f32.mxu0 0.0
      %3954 = vmatmul.mubr.f32.gmra.mrb[0].mxu0 %v3752
      %v3955 = vpop.f32.mrb[0].mxu0
      %v3956 = vadd.f32 0.0, %v3955
      %v3957 = vpop.f32.mrb[0].mxu0
      %3958 = vmatprep.mubr.f32.mxu0 0.0
      %3959 = vmatmul.mubr.f32.gmra.mrb[0].mxu0 %v3755
      %v3960 = vpop.f32.mrb[0].mxu0
      %v3961 = vadd.f32 0.0, %v3960
      %v3962 = vpop.f32.mrb[0].mxu0
      %3963 = vmatprep.mubr.f32.mxu0 0.0
      %3964 = vmatmul.mubr.f32.gmra.mrb[0].mxu0 %v3758
      %v3965 = vpop.f32.mrb[0].mxu0
      %v3966 = vadd.f32 0.0, %v3965
      %v3967 = vpop.f32.mrb[0].mxu0
      %3968 = vmatprep.mubr.f32.mxu0 0.0
      %3969 = vmatmul.mubr.f32.gmra.mrb[0].mxu0 %v3761
      %v3970 = vpop.f32.mrb[0].mxu0
      %v3971 = vadd.f32 0.0, %v3970
      %v3972 = vpop.f32.mrb[0].mxu0
      %3973 = vmatprep.mubr.f32.mxu0 0.0
      %3974 = vmatmul.mubr.f32.gmra.mrb[0].mxu0 %v3764
      %v3975 = vpop.f32.mrb[0].mxu0
      %v3976 = vadd.f32 0.0, %v3975
      %v3977 = vpop.f32.mrb[0].mxu0
      %3978 = vmatprep.mubr.f32.mxu0 0.0
      %3979 = vmatmul.mubr.f32.gmra.mrb[0].mxu0 %v3767
      %v3980 = vpop.f32.mrb[0].mxu0
      %v3981 = vadd.f32 0.0, %v3980
      %v3982 = vpop.f32.mrb[0].mxu0
      %3983 = vmatprep.mubr.f32.mxu0 0.0
      %3984 = vmatmul.mubr.f32.gmra.mrb[0].mxu0 %v3770
      %v3985 = vpop.f32.mrb[0].mxu0
      %v3986 = vadd.f32 0.0, %v3985
      %v3987 = vpop.f32.mrb[0].mxu0
      %3988 = vmatprep.mubr.f32.mxu0 0.0
      %3989 = vmatmul.mubr.f32.gmra.mrb[0].mxu0 %v3773
      %v3990 = vpop.f32.mrb[0].mxu0
      %v3991 = vadd.f32 0.0, %v3990
      %v3992 = vpop.f32.mrb[0].mxu0
      %3993 = vmatprep.mubr.f32.mxu0 0.0
      %3994 = vmatmul.mubr.f32.gmra.mrb[0].mxu0 %v3776
      %v3995 = vpop.f32.mrb[0].mxu0
      %v3996 = vadd.f32 0.0, %v3995
      %v3997 = vpop.f32.mrb[0].mxu0
      %3998 = vmatprep.mubr.f32.mxu0 0.0
      %3999 = vmatmul.mubr.f32.gmra.mrb[0].mxu0 %v3779
      %v4000 = vpop.f32.mrb[0].mxu0
      %v4001 = vpop.f32.mrb[0].mxu0
      %4002 = vmatprep.mubr.f32.mxu0 0.0
      %4003 = vmatmul.mubr.f32.gmra.mrb[0].mxu0 %v3782
      %v4004 = vpop.f32.mrb[0].mxu0
      %v4005 = vpop.f32.mrb[0].mxu0
      %4006 = vdwg.mxu0
      %v4007 = vadd.f32 %v3658, %v3851
      %v4008 = vadd.f32 %v3659, %v3856
      %v4009 = vadd.f32 %v3660, %v3861
      %v4010 = vadd.f32 %v3661, %v3866
      %v4011 = vadd.f32 %v3662, %v3871
      %v4012 = vadd.f32 %v3663, %v3876
      %v4013 = vadd.f32 %v3664, %v3881
      %v4014 = vadd.f32 %v3665, %v3886
      %v4015 = vadd.f32 %v3666, %v3891
      %v4016 = vadd.f32 %v3667, %v3896
      %v4017 = vadd.f32 %v3668, %v3901
      %v4018 = vadd.f32 %v3669, %v3906
      %v4019 = vadd.f32 %v3670, %v3911
      %v4020 = vadd.f32 %v3671, %v3916
      %v4021 = vadd.f32 %v3672, %v3921
      %v4022 = vadd.f32 %v3673, %v3926
      %v4023 = vadd.f32 %v3674, %v3931
      %v4024 = vadd.f32 %v3675, %v3936
      %v4025 = vadd.f32 %v3676, %v3941
      %v4026 = vadd.f32 %v3677, %v3946
      %v4027 = vadd.f32 %v3678, %v3951
      %v4028 = vadd.f32 %v3679, %v3956
      %v4029 = vadd.f32 %v3680, %v3961
      %v4030 = vadd.f32 %v3681, %v3966
      %v4031 = vadd.f32 %v3682, %v3971
      %v4032 = vadd.f32 %v3683, %v3976
      %v4033 = vadd.f32 %v3684, %v3981
      %v4034 = vadd.f32 %v3685, %v3986
      %v4035 = vadd.f32 %v3686, %v3991
      %v4036 = vadd.f32 %v3687, %v3996
      %v4053 = vrot.slane %v2188, 1
      %v4054 = vrot.slane %v2189, 1
      %v4055 = vsel %vm2941, %v4053, %v4054
      %v4056 = vrot.slane %v2190, 1
      %v4057 = vsel %vm2941, %v4054, %v4056
      %v4058 = vrot.slane %v2191, 1
      %v4059 = vrot.slane %v2192, 1
      %v4060 = vsel %vm2941, %v4058, %v4059
      %v4061 = vrot.slane %v2193, 1
      %v4062 = vsel %vm2941, %v4059, %v4061
      %v4063 = vrot.slane %v2194, 1
      %v4064 = vrot.slane %v2195, 1
      %v4065 = vsel %vm2941, %v4063, %v4064
      %v4066 = vrot.slane %v2196, 1
      %v4067 = vsel %vm2941, %v4064, %v4066
      %v4068 = vrot.slane %v2197, 1
      %v4069 = vrot.slane %v2198, 1
      %v4070 = vsel %vm2941, %v4068, %v4069
      %v4071 = vrot.slane %v2199, 1
      %v4072 = vsel %vm2941, %v4069, %v4071
      %v4073 = vrot.slane %v2200, 1
      %v4074 = vrot.slane %v2201, 1
      %v4075 = vsel %vm2941, %v4073, %v4074
      %v4076 = vrot.slane %v2202, 1
      %v4077 = vsel %vm2941, %v4074, %v4076
      %v4078 = vrot.slane %v2203, 1
      %v4079 = vrot.slane %v2204, 1
      %v4080 = vsel %vm2941, %v4078, %v4079
      %v4081 = vrot.slane %v2205, 1
      %v4082 = vsel %vm2941, %v4079, %v4081
      %v4083 = vrot.slane %v2206, 1
      %v4084 = vrot.slane %v2207, 1
      %v4085 = vsel %vm2941, %v4083, %v4084
      %v4086 = vrot.slane %v2208, 1
      %v4087 = vsel %vm2941, %v4084, %v4086
      %v4088 = vrot.slane %v2209, 1
      %v4089 = vrot.slane %v2210, 1
      %v4090 = vsel %vm2941, %v4088, %v4089
      %v4091 = vrot.slane %v2211, 1
      %v4092 = vsel %vm2941, %v4089, %v4091
      %v4093 = vrot.slane %v2212, 1
      %v4094 = vrot.slane %v2213, 1
      %v4095 = vsel %vm2941, %v4093, %v4094
      %v4096 = vrot.slane %v2214, 1
      %v4097 = vsel %vm2941, %v4094, %v4096
      %v4098 = vrot.slane %v2215, 1
      %v4099 = vrot.slane %v2216, 1
      %v4100 = vsel %vm2941, %v4098, %v4099
      %v4101 = vrot.slane %v2217, 1
      %v4102 = vsel %vm2941, %v4099, %v4101
      %v4103 = vrot.slane %v2218, 1
      %v4104 = vrot.slane %v2219, 1
      %v4105 = vsel %vm2941, %v4103, %v4104
      %v4106 = vrot.slane %v2220, 1
      %v4107 = vsel %vm2941, %v4104, %v4106
      %v4108 = vrot.slane %v2221, 1
      %v4109 = vrot.slane %v2222, 1
      %v4110 = vsel %vm2941, %v4108, %v4109
      %v4111 = vrot.slane %v2223, 1
      %v4112 = vsel %vm2941, %v4109, %v4111
      %v4113 = vrot.slane %v2224, 1
      %v4114 = vrot.slane %v2225, 1
      %v4115 = vsel %vm2941, %v4113, %v4114
      %v4116 = vrot.slane %v2226, 1
      %v4117 = vsel %vm2941, %v4114, %v4116
      %v4118 = vrot.slane %v2227, 1
      %v4119 = vrot.slane %v2228, 1
      %v4120 = vsel %vm2941, %v4118, %v4119
      %v4121 = vrot.slane %v2229, 1
      %v4122 = vsel %vm2941, %v4119, %v4121
      %v4123 = vrot.slane %v2230, 1
      %v4124 = vrot.slane %v2231, 1
      %v4125 = vsel %vm2941, %v4123, %v4124
      %v4126 = vrot.slane %v2232, 1
      %v4127 = vsel %vm2941, %v4124, %v4126
      %v4128 = vrot.slane %v2233, 1
      %v4129 = vrot.slane %v2234, 1
      %v4130 = vsel %vm2941, %v4128, %v4129
      %v4131 = vrot.slane %v2235, 1
      %v4132 = vsel %vm2941, %v4129, %v4131
      %v4133 = vsel %vm2286, %v4055, 0
      %v4135 = vsel %vm2286, %v4057, 0
      %v4137 = vsel %vm2286, %v4060, 0
      %v4139 = vsel %vm2286, %v4062, 0
      %v4141 = vsel %vm2286, %v4065, 0
      %v4143 = vsel %vm2286, %v4067, 0
      %v4145 = vsel %vm2286, %v4070, 0
      %v4147 = vsel %vm2286, %v4072, 0
      %v4149 = vsel %vm2286, %v4075, 0
      %v4151 = vsel %vm2286, %v4077, 0
      %v4153 = vsel %vm2286, %v4080, 0
      %v4155 = vsel %vm2286, %v4082, 0
      %v4157 = vsel %vm2286, %v4085, 0
      %v4159 = vsel %vm2286, %v4087, 0
      %v4161 = vsel %vm2286, %v4090, 0
      %v4163 = vsel %vm2286, %v4092, 0
      %v4165 = vsel %vm2286, %v4095, 0
      %v4167 = vsel %vm2286, %v4097, 0
      %v4169 = vsel %vm2286, %v4100, 0
      %v4171 = vsel %vm2286, %v4102, 0
      %v4173 = vsel %vm2286, %v4105, 0
      %v4175 = vsel %vm2286, %v4107, 0
      %v4177 = vsel %vm2286, %v4110, 0
      %v4179 = vsel %vm2286, %v4112, 0
      %v4181 = vsel %vm2286, %v4115, 0
      %v4183 = vsel %vm2286, %v4117, 0
      %v4185 = vsel %vm2286, %v4120, 0
      %v4187 = vsel %vm2286, %v4122, 0
      %v4189 = vsel %vm2286, %v4125, 0
      %v4191 = vsel %vm2286, %v4127, 0
      %v4193 = vsel %vm2286, %v4130, 0
      %v4195 = vsel %vm2286, %v4132, 0
      %4197 = vmatprep.subr.mxu0 0.0
      %4198 = vmatpush1.msra.mxu0 %v2278
      %4199 = vmatprep.subr.mxu0 0.0
      %4200 = vmatpush1.msra.mxu0 %v2279
      %4201 = vmatprep.subr.mxu0 0.0
      %4202 = vmatpush1.msra.mxu0 0.0
      %4203 = vmatprep.subr.mxu0 0.0
      %4204 = vmatpush1.msra.mxu0 0.0
      %4205 = vmatprep.subr.mxu0 0.0
      %4206 = vmatpush1.msra.mxu0 0.0
      %4207 = vmatprep.subr.mxu0 0.0
      %4208 = vmatpush1.msra.mxu0 0.0
      %4209 = vmatprep.subr.mxu0 0.0
      %4210 = vmatpush1.msra.mxu0 0.0
      %4211 = vmatprep.subr.mxu0 0.0
      %4212 = vmatpush1.msra.mxu0 0.0
      %4213 = vmatprep.subr.mxu0 0.0
      %4214 = vmatpush1.msra.mxu0 0.0
      %4215 = vmatprep.subr.mxu0 0.0
      %4216 = vmatpush1.msra.mxu0 0.0
      %4217 = vmatprep.subr.mxu0 0.0
      %4218 = vmatpush1.msra.mxu0 0.0
      %4219 = vmatprep.subr.mxu0 0.0
      %4220 = vmatpush1.msra.mxu0 0.0
      %4221 = vmatprep.subr.mxu0 0.0
      %4222 = vmatpush1.msra.mxu0 0.0
      %4223 = vmatprep.subr.mxu0 0.0
      %4224 = vmatpush1.msra.mxu0 0.0
      %4225 = vmatprep.subr.mxu0 0.0
      %4226 = vmatpush1.msra.mxu0 0.0
      %4227 = vmatprep.subr.mxu0 0.0
      %4228 = vmatpush1.msra.mxu0 0.0
      %4229 = vmatprep.subr.mxu0 0.0
      %4230 = vmatpush1.msra.mxu0 0.0
      %4231 = vmatprep.subr.mxu0 0.0
      %4232 = vmatpush1.msra.mxu0 0.0
      %4233 = vmatprep.subr.mxu0 0.0
      %4234 = vmatpush1.msra.mxu0 0.0
      %4235 = vmatprep.subr.mxu0 0.0
      %4236 = vmatpush1.msra.mxu0 0.0
      %4237 = vmatprep.subr.mxu0 0.0
      %4238 = vmatpush1.msra.mxu0 0.0
      %4239 = vmatprep.subr.mxu0 0.0
      %4240 = vmatpush1.msra.mxu0 0.0
      %4241 = vmatprep.subr.mxu0 0.0
      %4242 = vmatpush1.msra.mxu0 0.0
      %4243 = vmatprep.subr.mxu0 0.0
      %4244 = vmatpush1.msra.mxu0 0.0
      %4245 = vmatprep.subr.mxu0 0.0
      %4246 = vmatpush1.msra.mxu0 0.0
      %4247 = vmatprep.subr.mxu0 0.0
      %4248 = vmatpush1.msra.mxu0 0.0
      %4249 = vmatprep.subr.mxu0 0.0
      %4250 = vmatpush1.msra.mxu0 0.0
      %4251 = vmatprep.subr.mxu0 0.0
      %4252 = vmatpush1.msra.mxu0 0.0
      %4253 = vmatprep.subr.mxu0 0.0
      %4254 = vmatpush1.msra.mxu0 0.0
      %4255 = vmatprep.subr.mxu0 0.0
      %4256 = vmatpush1.msra.mxu0 0.0
      %4257 = vmatprep.subr.mxu0 0.0
      %4258 = vmatpush1.msra.mxu0 0.0
      %4259 = vmatprep.subr.mxu0 0.0
      %4260 = vmatpush1.msra.mxu0 0.0
      %4261 = vmatprep.mubr.f32.mxu0 0.0
      %4262 = vmatmul.mubr.f32.gmra.mrb[0].mxu0 %v4133
      %v4263 = vpop.f32.mrb[0].mxu0
      %v4264 = vadd.f32 0.0, %v4263
      %v4265 = vpop.f32.mrb[0].mxu0
      %4266 = vmatprep.mubr.f32.mxu0 0.0
      %4267 = vmatmul.mubr.f32.gmra.mrb[0].mxu0 %v4135
      %v4268 = vpop.f32.mrb[0].mxu0
      %v4269 = vadd.f32 0.0, %v4268
      %v4270 = vpop.f32.mrb[0].mxu0
      %4271 = vmatprep.mubr.f32.mxu0 0.0
      %4272 = vmatmul.mubr.f32.gmra.mrb[0].mxu0 %v4137
      %v4273 = vpop.f32.mrb[0].mxu0
      %v4274 = vadd.f32 0.0, %v4273
      %v4275 = vpop.f32.mrb[0].mxu0
      %4276 = vmatprep.mubr.f32.mxu0 0.0
      %4277 = vmatmul.mubr.f32.gmra.mrb[0].mxu0 %v4139
      %v4278 = vpop.f32.mrb[0].mxu0
      %v4279 = vadd.f32 0.0, %v4278
      %v4280 = vpop.f32.mrb[0].mxu0
      %4281 = vmatprep.mubr.f32.mxu0 0.0
      %4282 = vmatmul.mubr.f32.gmra.mrb[0].mxu0 %v4141
      %v4283 = vpop.f32.mrb[0].mxu0
      %v4284 = vadd.f32 0.0, %v4283
      %v4285 = vpop.f32.mrb[0].mxu0
      %4286 = vmatprep.mubr.f32.mxu0 0.0
      %4287 = vmatmul.mubr.f32.gmra.mrb[0].mxu0 %v4143
      %v4288 = vpop.f32.mrb[0].mxu0
      %v4289 = vadd.f32 0.0, %v4288
      %v4290 = vpop.f32.mrb[0].mxu0
      %4291 = vmatprep.mubr.f32.mxu0 0.0
      %4292 = vmatmul.mubr.f32.gmra.mrb[0].mxu0 %v4145
      %v4293 = vpop.f32.mrb[0].mxu0
      %v4294 = vadd.f32 0.0, %v4293
      %v4295 = vpop.f32.mrb[0].mxu0
      %4296 = vmatprep.mubr.f32.mxu0 0.0
      %4297 = vmatmul.mubr.f32.gmra.mrb[0].mxu0 %v4147
      %v4298 = vpop.f32.mrb[0].mxu0
      %v4299 = vadd.f32 0.0, %v4298
      %v4300 = vpop.f32.mrb[0].mxu0
      %4301 = vmatprep.mubr.f32.mxu0 0.0
      %4302 = vmatmul.mubr.f32.gmra.mrb[0].mxu0 %v4149
      %v4303 = vpop.f32.mrb[0].mxu0
      %v4304 = vadd.f32 0.0, %v4303
      %v4305 = vpop.f32.mrb[0].mxu0
      %4306 = vmatprep.mubr.f32.mxu0 0.0
      %4307 = vmatmul.mubr.f32.gmra.mrb[0].mxu0 %v4151
      %v4308 = vpop.f32.mrb[0].mxu0
      %v4309 = vadd.f32 0.0, %v4308
      %v4310 = vpop.f32.mrb[0].mxu0
      %4311 = vmatprep.mubr.f32.mxu0 0.0
      %4312 = vmatmul.mubr.f32.gmra.mrb[0].mxu0 %v4153
      %v4313 = vpop.f32.mrb[0].mxu0
      %v4314 = vadd.f32 0.0, %v4313
      %v4315 = vpop.f32.mrb[0].mxu0
      %4316 = vmatprep.mubr.f32.mxu0 0.0
      %4317 = vmatmul.mubr.f32.gmra.mrb[0].mxu0 %v4155
      %v4318 = vpop.f32.mrb[0].mxu0
      %v4319 = vadd.f32 0.0, %v4318
      %v4320 = vpop.f32.mrb[0].mxu0
      %4321 = vmatprep.mubr.f32.mxu0 0.0
      %4322 = vmatmul.mubr.f32.gmra.mrb[0].mxu0 %v4157
      %v4323 = vpop.f32.mrb[0].mxu0
      %v4324 = vadd.f32 0.0, %v4323
      %v4325 = vpop.f32.mrb[0].mxu0
      %4326 = vmatprep.mubr.f32.mxu0 0.0
      %4327 = vmatmul.mubr.f32.gmra.mrb[0].mxu0 %v4159
      %v4328 = vpop.f32.mrb[0].mxu0
      %v4329 = vadd.f32 0.0, %v4328
      %v4330 = vpop.f32.mrb[0].mxu0
      %4331 = vmatprep.mubr.f32.mxu0 0.0
      %4332 = vmatmul.mubr.f32.gmra.mrb[0].mxu0 %v4161
      %v4333 = vpop.f32.mrb[0].mxu0
      %v4334 = vadd.f32 0.0, %v4333
      %v4335 = vpop.f32.mrb[0].mxu0
      %4336 = vmatprep.mubr.f32.mxu0 0.0
      %4337 = vmatmul.mubr.f32.gmra.mrb[0].mxu0 %v4163
      %v4338 = vpop.f32.mrb[0].mxu0
      %v4339 = vadd.f32 0.0, %v4338
      %v4340 = vpop.f32.mrb[0].mxu0
      %4341 = vmatprep.mubr.f32.mxu0 0.0
      %4342 = vmatmul.mubr.f32.gmra.mrb[0].mxu0 %v4165
      %v4343 = vpop.f32.mrb[0].mxu0
      %v4344 = vadd.f32 0.0, %v4343
      %v4345 = vpop.f32.mrb[0].mxu0
      %4346 = vmatprep.mubr.f32.mxu0 0.0
      %4347 = vmatmul.mubr.f32.gmra.mrb[0].mxu0 %v4167
      %v4348 = vpop.f32.mrb[0].mxu0
      %v4349 = vadd.f32 0.0, %v4348
      %v4350 = vpop.f32.mrb[0].mxu0
      %4351 = vmatprep.mubr.f32.mxu0 0.0
      %4352 = vmatmul.mubr.f32.gmra.mrb[0].mxu0 %v4169
      %v4353 = vpop.f32.mrb[0].mxu0
      %v4354 = vadd.f32 0.0, %v4353
      %v4355 = vpop.f32.mrb[0].mxu0
      %4356 = vmatprep.mubr.f32.mxu0 0.0
      %4357 = vmatmul.mubr.f32.gmra.mrb[0].mxu0 %v4171
      %v4358 = vpop.f32.mrb[0].mxu0
      %v4359 = vadd.f32 0.0, %v4358
      %v4360 = vpop.f32.mrb[0].mxu0
      %4361 = vmatprep.mubr.f32.mxu0 0.0
      %4362 = vmatmul.mubr.f32.gmra.mrb[0].mxu0 %v4173
      %v4363 = vpop.f32.mrb[0].mxu0
      %v4364 = vadd.f32 0.0, %v4363
      %v4365 = vpop.f32.mrb[0].mxu0
      %4366 = vmatprep.mubr.f32.mxu0 0.0
      %4367 = vmatmul.mubr.f32.gmra.mrb[0].mxu0 %v4175
      %v4368 = vpop.f32.mrb[0].mxu0
      %v4369 = vadd.f32 0.0, %v4368
      %v4370 = vpop.f32.mrb[0].mxu0
      %4371 = vmatprep.mubr.f32.mxu0 0.0
      %4372 = vmatmul.mubr.f32.gmra.mrb[0].mxu0 %v4177
      %v4373 = vpop.f32.mrb[0].mxu0
      %v4374 = vadd.f32 0.0, %v4373
      %v4375 = vpop.f32.mrb[0].mxu0
      %4376 = vmatprep.mubr.f32.mxu0 0.0
      %4377 = vmatmul.mubr.f32.gmra.mrb[0].mxu0 %v4179
      %v4378 = vpop.f32.mrb[0].mxu0
      %v4379 = vadd.f32 0.0, %v4378
      %v4380 = vpop.f32.mrb[0].mxu0
      %4381 = vmatprep.mubr.f32.mxu0 0.0
      %4382 = vmatmul.mubr.f32.gmra.mrb[0].mxu0 %v4181
      %v4383 = vpop.f32.mrb[0].mxu0
      %v4384 = vadd.f32 0.0, %v4383
      %v4385 = vpop.f32.mrb[0].mxu0
      %4386 = vmatprep.mubr.f32.mxu0 0.0
      %4387 = vmatmul.mubr.f32.gmra.mrb[0].mxu0 %v4183
      %v4388 = vpop.f32.mrb[0].mxu0
      %v4389 = vadd.f32 0.0, %v4388
      %v4390 = vpop.f32.mrb[0].mxu0
      %4391 = vmatprep.mubr.f32.mxu0 0.0
      %4392 = vmatmul.mubr.f32.gmra.mrb[0].mxu0 %v4185
      %v4393 = vpop.f32.mrb[0].mxu0
      %v4394 = vadd.f32 0.0, %v4393
      %v4395 = vpop.f32.mrb[0].mxu0
      %4396 = vmatprep.mubr.f32.mxu0 0.0
      %4397 = vmatmul.mubr.f32.gmra.mrb[0].mxu0 %v4187
      %v4398 = vpop.f32.mrb[0].mxu0
      %v4399 = vadd.f32 0.0, %v4398
      %v4400 = vpop.f32.mrb[0].mxu0
      %4401 = vmatprep.mubr.f32.mxu0 0.0
      %4402 = vmatmul.mubr.f32.gmra.mrb[0].mxu0 %v4189
      %v4403 = vpop.f32.mrb[0].mxu0
      %v4404 = vadd.f32 0.0, %v4403
      %v4405 = vpop.f32.mrb[0].mxu0
      %4406 = vmatprep.mubr.f32.mxu0 0.0
      %4407 = vmatmul.mubr.f32.gmra.mrb[0].mxu0 %v4191
      %v4408 = vpop.f32.mrb[0].mxu0
      %v4409 = vadd.f32 0.0, %v4408
      %v4410 = vpop.f32.mrb[0].mxu0
      %4411 = vmatprep.mubr.f32.mxu0 0.0
      %4412 = vmatmul.mubr.f32.gmra.mrb[0].mxu0 %v4193
      %v4413 = vpop.f32.mrb[0].mxu0
      %v4414 = vpop.f32.mrb[0].mxu0
      %4415 = vmatprep.mubr.f32.mxu0 0.0
      %4416 = vmatmul.mubr.f32.gmra.mrb[0].mxu0 %v4195
      %v4417 = vpop.f32.mrb[0].mxu0
      %v4418 = vpop.f32.mrb[0].mxu0
      %4419 = vdwg.mxu0
      %v4420 = vadd.f32 %v4007, %v4264
      %v4421 = vadd.f32 %v4008, %v4269
      %v4422 = vadd.f32 %v4009, %v4274
      %v4423 = vadd.f32 %v4010, %v4279
      %v4424 = vadd.f32 %v4011, %v4284
      %v4425 = vadd.f32 %v4012, %v4289
      %v4426 = vadd.f32 %v4013, %v4294
      %v4427 = vadd.f32 %v4014, %v4299
      %v4428 = vadd.f32 %v4015, %v4304
      %v4429 = vadd.f32 %v4016, %v4309
      %v4430 = vadd.f32 %v4017, %v4314
      %v4431 = vadd.f32 %v4018, %v4319
      %v4432 = vadd.f32 %v4019, %v4324
      %v4433 = vadd.f32 %v4020, %v4329
      %v4434 = vadd.f32 %v4021, %v4334
      %v4435 = vadd.f32 %v4022, %v4339
      %v4436 = vadd.f32 %v4023, %v4344
      %v4437 = vadd.f32 %v4024, %v4349
      %v4438 = vadd.f32 %v4025, %v4354
      %v4439 = vadd.f32 %v4026, %v4359
      %v4440 = vadd.f32 %v4027, %v4364
      %v4441 = vadd.f32 %v4028, %v4369
      %v4442 = vadd.f32 %v4029, %v4374
      %v4443 = vadd.f32 %v4030, %v4379
      %v4444 = vadd.f32 %v4031, %v4384
      %v4445 = vadd.f32 %v4032, %v4389
      %v4446 = vadd.f32 %v4033, %v4394
      %v4447 = vadd.f32 %v4034, %v4399
      %v4448 = vadd.f32 %v4035, %v4404
      %v4449 = vadd.f32 %v4036, %v4409
      %v4451 = vsel %vm2286, %v2151, 0
      %v4454 = vsel %vm2286, %v2152, 0
      %4456 = vmatprep.subr.mxu0 0.0
      %4457 = vmatpush1.msra.mxu0 %v2280
      %4458 = vmatprep.subr.mxu0 0.0
      %4459 = vmatpush1.msra.mxu0 %v2281
      %4460 = vmatprep.subr.mxu0 0.0
      %4461 = vmatpush1.msra.mxu0 0.0
      %4462 = vmatprep.subr.mxu0 0.0
      %4463 = vmatpush1.msra.mxu0 0.0
      %4464 = vmatprep.subr.mxu0 0.0
      %4465 = vmatpush1.msra.mxu0 0.0
      %4466 = vmatprep.subr.mxu0 0.0
      %4467 = vmatpush1.msra.mxu0 0.0
      %4468 = vmatprep.subr.mxu0 0.0
      %4469 = vmatpush1.msra.mxu0 0.0
      %4470 = vmatprep.subr.mxu0 0.0
      %4471 = vmatpush1.msra.mxu0 0.0
      %4472 = vmatprep.subr.mxu0 0.0
      %4473 = vmatpush1.msra.mxu0 0.0
      %4474 = vmatprep.subr.mxu0 0.0
      %4475 = vmatpush1.msra.mxu0 0.0
      %4476 = vmatprep.subr.mxu0 0.0
      %4477 = vmatpush1.msra.mxu0 0.0
      %4478 = vmatprep.subr.mxu0 0.0
      %4479 = vmatpush1.msra.mxu0 0.0
      %4480 = vmatprep.subr.mxu0 0.0
      %4481 = vmatpush1.msra.mxu0 0.0
      %4482 = vmatprep.subr.mxu0 0.0
      %4483 = vmatpush1.msra.mxu0 0.0
      %4484 = vmatprep.subr.mxu0 0.0
      %4485 = vmatpush1.msra.mxu0 0.0
      %4486 = vmatprep.subr.mxu0 0.0
      %4487 = vmatpush1.msra.mxu0 0.0
      %4488 = vmatprep.subr.mxu0 0.0
      %4489 = vmatpush1.msra.mxu0 0.0
      %4490 = vmatprep.subr.mxu0 0.0
      %4491 = vmatpush1.msra.mxu0 0.0
      %4492 = vmatprep.subr.mxu0 0.0
      %4493 = vmatpush1.msra.mxu0 0.0
      %4494 = vmatprep.subr.mxu0 0.0
      %4495 = vmatpush1.msra.mxu0 0.0
      %4496 = vmatprep.subr.mxu0 0.0
      %4497 = vmatpush1.msra.mxu0 0.0
      %4498 = vmatprep.subr.mxu0 0.0
      %4499 = vmatpush1.msra.mxu0 0.0
      %4500 = vmatprep.subr.mxu0 0.0
      %4501 = vmatpush1.msra.mxu0 0.0
      %4502 = vmatprep.subr.mxu0 0.0
      %4503 = vmatpush1.msra.mxu0 0.0
      %4504 = vmatprep.subr.mxu0 0.0
      %4505 = vmatpush1.msra.mxu0 0.0
      %4506 = vmatprep.subr.mxu0 0.0
      %4507 = vmatpush1.msra.mxu0 0.0
      %4508 = vmatprep.subr.mxu0 0.0
      %4509 = vmatpush1.msra.mxu0 0.0
      %4510 = vmatprep.subr.mxu0 0.0
      %4511 = vmatpush1.msra.mxu0 0.0
      %4512 = vmatprep.subr.mxu0 0.0
      %4513 = vmatpush1.msra.mxu0 0.0
      %4514 = vmatprep.subr.mxu0 0.0
      %4515 = vmatpush1.msra.mxu0 0.0
      %4516 = vmatprep.subr.mxu0 0.0
      %4517 = vmatpush1.msra.mxu0 0.0
      %4518 = vmatprep.subr.mxu0 0.0
      %4519 = vmatpush1.msra.mxu0 0.0
      %4520 = vmatprep.mubr.f32.mxu0 0.0
      %4521 = vmatmul.mubr.f32.gmra.mrb[0].mxu0 %v2613
      %v4522 = vpop.f32.mrb[0].mxu0
      %v4523 = vadd.f32 0.0, %v4522
      %v4524 = vpop.f32.mrb[0].mxu0
      %4525 = vmatprep.mubr.f32.mxu0 0.0
      %4526 = vmatmul.mubr.f32.gmra.mrb[0].mxu0 %v2616
      %v4527 = vpop.f32.mrb[0].mxu0
      %v4528 = vadd.f32 0.0, %v4527
      %v4529 = vpop.f32.mrb[0].mxu0
      %4530 = vmatprep.mubr.f32.mxu0 0.0
      %4531 = vmatmul.mubr.f32.gmra.mrb[0].mxu0 %v2619
      %v4532 = vpop.f32.mrb[0].mxu0
      %v4533 = vadd.f32 0.0, %v4532
      %v4534 = vpop.f32.mrb[0].mxu0
      %4535 = vmatprep.mubr.f32.mxu0 0.0
      %4536 = vmatmul.mubr.f32.gmra.mrb[0].mxu0 %v2622
      %v4537 = vpop.f32.mrb[0].mxu0
      %v4538 = vadd.f32 0.0, %v4537
      %v4539 = vpop.f32.mrb[0].mxu0
      %4540 = vmatprep.mubr.f32.mxu0 0.0
      %4541 = vmatmul.mubr.f32.gmra.mrb[0].mxu0 %v2625
      %v4542 = vpop.f32.mrb[0].mxu0
      %v4543 = vadd.f32 0.0, %v4542
      %v4544 = vpop.f32.mrb[0].mxu0
      %4545 = vmatprep.mubr.f32.mxu0 0.0
      %4546 = vmatmul.mubr.f32.gmra.mrb[0].mxu0 %v2628
      %v4547 = vpop.f32.mrb[0].mxu0
      %v4548 = vadd.f32 0.0, %v4547
      %v4549 = vpop.f32.mrb[0].mxu0
      %4550 = vmatprep.mubr.f32.mxu0 0.0
      %4551 = vmatmul.mubr.f32.gmra.mrb[0].mxu0 %v2631
      %v4552 = vpop.f32.mrb[0].mxu0
      %v4553 = vadd.f32 0.0, %v4552
      %v4554 = vpop.f32.mrb[0].mxu0
      %4555 = vmatprep.mubr.f32.mxu0 0.0
      %4556 = vmatmul.mubr.f32.gmra.mrb[0].mxu0 %v2634
      %v4557 = vpop.f32.mrb[0].mxu0
      %v4558 = vadd.f32 0.0, %v4557
      %v4559 = vpop.f32.mrb[0].mxu0
      %4560 = vmatprep.mubr.f32.mxu0 0.0
      %4561 = vmatmul.mubr.f32.gmra.mrb[0].mxu0 %v2637
      %v4562 = vpop.f32.mrb[0].mxu0
      %v4563 = vadd.f32 0.0, %v4562
      %v4564 = vpop.f32.mrb[0].mxu0
      %4565 = vmatprep.mubr.f32.mxu0 0.0
      %4566 = vmatmul.mubr.f32.gmra.mrb[0].mxu0 %v2640
      %v4567 = vpop.f32.mrb[0].mxu0
      %v4568 = vadd.f32 0.0, %v4567
      %v4569 = vpop.f32.mrb[0].mxu0
      %4570 = vmatprep.mubr.f32.mxu0 0.0
      %4571 = vmatmul.mubr.f32.gmra.mrb[0].mxu0 %v2643
      %v4572 = vpop.f32.mrb[0].mxu0
      %v4573 = vadd.f32 0.0, %v4572
      %v4574 = vpop.f32.mrb[0].mxu0
      %4575 = vmatprep.mubr.f32.mxu0 0.0
      %4576 = vmatmul.mubr.f32.gmra.mrb[0].mxu0 %v2646
      %v4577 = vpop.f32.mrb[0].mxu0
      %v4578 = vadd.f32 0.0, %v4577
      %v4579 = vpop.f32.mrb[0].mxu0
      %4580 = vmatprep.mubr.f32.mxu0 0.0
      %4581 = vmatmul.mubr.f32.gmra.mrb[0].mxu0 %v2649
      %v4582 = vpop.f32.mrb[0].mxu0
      %v4583 = vadd.f32 0.0, %v4582
      %v4584 = vpop.f32.mrb[0].mxu0
      %4585 = vmatprep.mubr.f32.mxu0 0.0
      %4586 = vmatmul.mubr.f32.gmra.mrb[0].mxu0 %v2652
      %v4587 = vpop.f32.mrb[0].mxu0
      %v4588 = vadd.f32 0.0, %v4587
      %v4589 = vpop.f32.mrb[0].mxu0
      %4590 = vmatprep.mubr.f32.mxu0 0.0
      %4591 = vmatmul.mubr.f32.gmra.mrb[0].mxu0 %v2655
      %v4592 = vpop.f32.mrb[0].mxu0
      %v4593 = vadd.f32 0.0, %v4592
      %v4594 = vpop.f32.mrb[0].mxu0
      %4595 = vmatprep.mubr.f32.mxu0 0.0
      %4596 = vmatmul.mubr.f32.gmra.mrb[0].mxu0 %v2658
      %v4597 = vpop.f32.mrb[0].mxu0
      %v4598 = vadd.f32 0.0, %v4597
      %v4599 = vpop.f32.mrb[0].mxu0
      %4600 = vmatprep.mubr.f32.mxu0 0.0
      %4601 = vmatmul.mubr.f32.gmra.mrb[0].mxu0 %v2661
      %v4602 = vpop.f32.mrb[0].mxu0
      %v4603 = vadd.f32 0.0, %v4602
      %v4604 = vpop.f32.mrb[0].mxu0
      %4605 = vmatprep.mubr.f32.mxu0 0.0
      %4606 = vmatmul.mubr.f32.gmra.mrb[0].mxu0 %v2664
      %v4607 = vpop.f32.mrb[0].mxu0
      %v4608 = vadd.f32 0.0, %v4607
      %v4609 = vpop.f32.mrb[0].mxu0
      %4610 = vmatprep.mubr.f32.mxu0 0.0
      %4611 = vmatmul.mubr.f32.gmra.mrb[0].mxu0 %v2667
      %v4612 = vpop.f32.mrb[0].mxu0
      %v4613 = vadd.f32 0.0, %v4612
      %v4614 = vpop.f32.mrb[0].mxu0
      %4615 = vmatprep.mubr.f32.mxu0 0.0
      %4616 = vmatmul.mubr.f32.gmra.mrb[0].mxu0 %v2670
      %v4617 = vpop.f32.mrb[0].mxu0
      %v4618 = vadd.f32 0.0, %v4617
      %v4619 = vpop.f32.mrb[0].mxu0
      %4620 = vmatprep.mubr.f32.mxu0 0.0
      %4621 = vmatmul.mubr.f32.gmra.mrb[0].mxu0 %v2673
      %v4622 = vpop.f32.mrb[0].mxu0
      %v4623 = vadd.f32 0.0, %v4622
      %v4624 = vpop.f32.mrb[0].mxu0
      %4625 = vmatprep.mubr.f32.mxu0 0.0
      %4626 = vmatmul.mubr.f32.gmra.mrb[0].mxu0 %v2676
      %v4627 = vpop.f32.mrb[0].mxu0
      %v4628 = vadd.f32 0.0, %v4627
      %v4629 = vpop.f32.mrb[0].mxu0
      %4630 = vmatprep.mubr.f32.mxu0 0.0
      %4631 = vmatmul.mubr.f32.gmra.mrb[0].mxu0 %v2679
      %v4632 = vpop.f32.mrb[0].mxu0
      %v4633 = vadd.f32 0.0, %v4632
      %v4634 = vpop.f32.mrb[0].mxu0
      %4635 = vmatprep.mubr.f32.mxu0 0.0
      %4636 = vmatmul.mubr.f32.gmra.mrb[0].mxu0 %v2682
      %v4637 = vpop.f32.mrb[0].mxu0
      %v4638 = vadd.f32 0.0, %v4637
      %v4639 = vpop.f32.mrb[0].mxu0
      %4640 = vmatprep.mubr.f32.mxu0 0.0
      %4641 = vmatmul.mubr.f32.gmra.mrb[0].mxu0 %v2685
      %v4642 = vpop.f32.mrb[0].mxu0
      %v4643 = vadd.f32 0.0, %v4642
      %v4644 = vpop.f32.mrb[0].mxu0
      %4645 = vmatprep.mubr.f32.mxu0 0.0
      %4646 = vmatmul.mubr.f32.gmra.mrb[0].mxu0 %v2688
      %v4647 = vpop.f32.mrb[0].mxu0
      %v4648 = vadd.f32 0.0, %v4647
      %v4649 = vpop.f32.mrb[0].mxu0
      %4650 = vmatprep.mubr.f32.mxu0 0.0
      %4651 = vmatmul.mubr.f32.gmra.mrb[0].mxu0 %v2691
      %v4652 = vpop.f32.mrb[0].mxu0
      %v4653 = vadd.f32 0.0, %v4652
      %v4654 = vpop.f32.mrb[0].mxu0
      %4655 = vmatprep.mubr.f32.mxu0 0.0
      %4656 = vmatmul.mubr.f32.gmra.mrb[0].mxu0 %v2694
      %v4657 = vpop.f32.mrb[0].mxu0
      %v4658 = vadd.f32 0.0, %v4657
      %v4659 = vpop.f32.mrb[0].mxu0
      %4660 = vmatprep.mubr.f32.mxu0 0.0
      %4661 = vmatmul.mubr.f32.gmra.mrb[0].mxu0 %v2697
      %v4662 = vpop.f32.mrb[0].mxu0
      %v4663 = vadd.f32 0.0, %v4662
      %v4664 = vpop.f32.mrb[0].mxu0
      %4665 = vmatprep.mubr.f32.mxu0 0.0
      %4666 = vmatmul.mubr.f32.gmra.mrb[0].mxu0 %v2700
      %v4667 = vpop.f32.mrb[0].mxu0
      %v4668 = vadd.f32 0.0, %v4667
      %v4669 = vpop.f32.mrb[0].mxu0
      %4670 = vmatprep.mubr.f32.mxu0 0.0
      %4671 = vmatmul.mubr.f32.gmra.mrb[0].mxu0 %v4451
      %v4672 = vpop.f32.mrb[0].mxu0
      %v4673 = vpop.f32.mrb[0].mxu0
      %4674 = vmatprep.mubr.f32.mxu0 0.0
      %4675 = vmatmul.mubr.f32.gmra.mrb[0].mxu0 %v4454
      %v4676 = vpop.f32.mrb[0].mxu0
      %v4677 = vpop.f32.mrb[0].mxu0
      %4678 = vdwg.mxu0
      %v4679 = vadd.f32 %v4420, %v4523
      %v4680 = vadd.f32 %v4421, %v4528
      %v4681 = vadd.f32 %v4422, %v4533
      %v4682 = vadd.f32 %v4423, %v4538
      %v4683 = vadd.f32 %v4424, %v4543
      %v4684 = vadd.f32 %v4425, %v4548
      %v4685 = vadd.f32 %v4426, %v4553
      %v4686 = vadd.f32 %v4427, %v4558
      %v4687 = vadd.f32 %v4428, %v4563
      %v4688 = vadd.f32 %v4429, %v4568
      %v4689 = vadd.f32 %v4430, %v4573
      %v4690 = vadd.f32 %v4431, %v4578
      %v4691 = vadd.f32 %v4432, %v4583
      %v4692 = vadd.f32 %v4433, %v4588
      %v4693 = vadd.f32 %v4434, %v4593
      %v4694 = vadd.f32 %v4435, %v4598
      %v4695 = vadd.f32 %v4436, %v4603
      %v4696 = vadd.f32 %v4437, %v4608
      %v4697 = vadd.f32 %v4438, %v4613
      %v4698 = vadd.f32 %v4439, %v4618
      %v4699 = vadd.f32 %v4440, %v4623
      %v4700 = vadd.f32 %v4441, %v4628
      %v4701 = vadd.f32 %v4442, %v4633
      %v4702 = vadd.f32 %v4443, %v4638
      %v4703 = vadd.f32 %v4444, %v4643
      %v4704 = vadd.f32 %v4445, %v4648
      %v4705 = vadd.f32 %v4446, %v4653
      %v4706 = vadd.f32 %v4447, %v4658
      %v4707 = vadd.f32 %v4448, %v4663
      %v4708 = vadd.f32 %v4449, %v4668
      %v4710 = vsel %vm2286, %v2186, 0
      %v4713 = vsel %vm2286, %v2187, 0
      %4715 = vmatprep.subr.mxu0 0.0
      %4716 = vmatpush1.msra.mxu0 %v2282
      %4717 = vmatprep.subr.mxu0 0.0
      %4718 = vmatpush1.msra.mxu0 %v2283
      %4719 = vmatprep.subr.mxu0 0.0
      %4720 = vmatpush1.msra.mxu0 0.0
      %4721 = vmatprep.subr.mxu0 0.0
      %4722 = vmatpush1.msra.mxu0 0.0
      %4723 = vmatprep.subr.mxu0 0.0
      %4724 = vmatpush1.msra.mxu0 0.0
      %4725 = vmatprep.subr.mxu0 0.0
      %4726 = vmatpush1.msra.mxu0 0.0
      %4727 = vmatprep.subr.mxu0 0.0
      %4728 = vmatpush1.msra.mxu0 0.0
      %4729 = vmatprep.subr.mxu0 0.0
      %4730 = vmatpush1.msra.mxu0 0.0
      %4731 = vmatprep.subr.mxu0 0.0
      %4732 = vmatpush1.msra.mxu0 0.0
      %4733 = vmatprep.subr.mxu0 0.0
      %4734 = vmatpush1.msra.mxu0 0.0
      %4735 = vmatprep.subr.mxu0 0.0
      %4736 = vmatpush1.msra.mxu0 0.0
      %4737 = vmatprep.subr.mxu0 0.0
      %4738 = vmatpush1.msra.mxu0 0.0
      %4739 = vmatprep.subr.mxu0 0.0
      %4740 = vmatpush1.msra.mxu0 0.0
      %4741 = vmatprep.subr.mxu0 0.0
      %4742 = vmatpush1.msra.mxu0 0.0
      %4743 = vmatprep.subr.mxu0 0.0
      %4744 = vmatpush1.msra.mxu0 0.0
      %4745 = vmatprep.subr.mxu0 0.0
      %4746 = vmatpush1.msra.mxu0 0.0
      %4747 = vmatprep.subr.mxu0 0.0
      %4748 = vmatpush1.msra.mxu0 0.0
      %4749 = vmatprep.subr.mxu0 0.0
      %4750 = vmatpush1.msra.mxu0 0.0
      %4751 = vmatprep.subr.mxu0 0.0
      %4752 = vmatpush1.msra.mxu0 0.0
      %4753 = vmatprep.subr.mxu0 0.0
      %4754 = vmatpush1.msra.mxu0 0.0
      %4755 = vmatprep.subr.mxu0 0.0
      %4756 = vmatpush1.msra.mxu0 0.0
      %4757 = vmatprep.subr.mxu0 0.0
      %4758 = vmatpush1.msra.mxu0 0.0
      %4759 = vmatprep.subr.mxu0 0.0
      %4760 = vmatpush1.msra.mxu0 0.0
      %4761 = vmatprep.subr.mxu0 0.0
      %4762 = vmatpush1.msra.mxu0 0.0
      %4763 = vmatprep.subr.mxu0 0.0
      %4764 = vmatpush1.msra.mxu0 0.0
      %4765 = vmatprep.subr.mxu0 0.0
      %4766 = vmatpush1.msra.mxu0 0.0
      %4767 = vmatprep.subr.mxu0 0.0
      %4768 = vmatpush1.msra.mxu0 0.0
      %4769 = vmatprep.subr.mxu0 0.0
      %4770 = vmatpush1.msra.mxu0 0.0
      %4771 = vmatprep.subr.mxu0 0.0
      %4772 = vmatpush1.msra.mxu0 0.0
      %4773 = vmatprep.subr.mxu0 0.0
      %4774 = vmatpush1.msra.mxu0 0.0
      %4775 = vmatprep.subr.mxu0 0.0
      %4776 = vmatpush1.msra.mxu0 0.0
      %4777 = vmatprep.subr.mxu0 0.0
      %4778 = vmatpush1.msra.mxu0 0.0
      %4779 = vmatprep.mubr.f32.mxu0 0.0
      %4780 = vmatmul.mubr.f32.gmra.mrb[0].mxu0 %v2294
      %v4781 = vpop.f32.mrb[0].mxu0
      %v4782 = vadd.f32 0.0, %v4781
      %v4783 = vpop.f32.mrb[0].mxu0
      %4784 = vmatprep.mubr.f32.mxu0 0.0
      %4785 = vmatmul.mubr.f32.gmra.mrb[0].mxu0 %v2297
      %v4786 = vpop.f32.mrb[0].mxu0
      %v4787 = vadd.f32 0.0, %v4786
      %v4788 = vpop.f32.mrb[0].mxu0
      %4789 = vmatprep.mubr.f32.mxu0 0.0
      %4790 = vmatmul.mubr.f32.gmra.mrb[0].mxu0 %v2300
      %v4791 = vpop.f32.mrb[0].mxu0
      %v4792 = vadd.f32 0.0, %v4791
      %v4793 = vpop.f32.mrb[0].mxu0
      %4794 = vmatprep.mubr.f32.mxu0 0.0
      %4795 = vmatmul.mubr.f32.gmra.mrb[0].mxu0 %v2303
      %v4796 = vpop.f32.mrb[0].mxu0
      %v4797 = vadd.f32 0.0, %v4796
      %v4798 = vpop.f32.mrb[0].mxu0
      %4799 = vmatprep.mubr.f32.mxu0 0.0
      %4800 = vmatmul.mubr.f32.gmra.mrb[0].mxu0 %v2306
      %v4801 = vpop.f32.mrb[0].mxu0
      %v4802 = vadd.f32 0.0, %v4801
      %v4803 = vpop.f32.mrb[0].mxu0
      %4804 = vmatprep.mubr.f32.mxu0 0.0
      %4805 = vmatmul.mubr.f32.gmra.mrb[0].mxu0 %v2309
      %v4806 = vpop.f32.mrb[0].mxu0
      %v4807 = vadd.f32 0.0, %v4806
      %v4808 = vpop.f32.mrb[0].mxu0
      %4809 = vmatprep.mubr.f32.mxu0 0.0
      %4810 = vmatmul.mubr.f32.gmra.mrb[0].mxu0 %v2312
      %v4811 = vpop.f32.mrb[0].mxu0
      %v4812 = vadd.f32 0.0, %v4811
      %v4813 = vpop.f32.mrb[0].mxu0
      %4814 = vmatprep.mubr.f32.mxu0 0.0
      %4815 = vmatmul.mubr.f32.gmra.mrb[0].mxu0 %v2315
      %v4816 = vpop.f32.mrb[0].mxu0
      %v4817 = vadd.f32 0.0, %v4816
      %v4818 = vpop.f32.mrb[0].mxu0
      %4819 = vmatprep.mubr.f32.mxu0 0.0
      %4820 = vmatmul.mubr.f32.gmra.mrb[0].mxu0 %v2318
      %v4821 = vpop.f32.mrb[0].mxu0
      %v4822 = vadd.f32 0.0, %v4821
      %v4823 = vpop.f32.mrb[0].mxu0
      %4824 = vmatprep.mubr.f32.mxu0 0.0
      %4825 = vmatmul.mubr.f32.gmra.mrb[0].mxu0 %v2321
      %v4826 = vpop.f32.mrb[0].mxu0
      %v4827 = vadd.f32 0.0, %v4826
      %v4828 = vpop.f32.mrb[0].mxu0
      %4829 = vmatprep.mubr.f32.mxu0 0.0
      %4830 = vmatmul.mubr.f32.gmra.mrb[0].mxu0 %v2324
      %v4831 = vpop.f32.mrb[0].mxu0
      %v4832 = vadd.f32 0.0, %v4831
      %v4833 = vpop.f32.mrb[0].mxu0
      %4834 = vmatprep.mubr.f32.mxu0 0.0
      %4835 = vmatmul.mubr.f32.gmra.mrb[0].mxu0 %v2327
      %v4836 = vpop.f32.mrb[0].mxu0
      %v4837 = vadd.f32 0.0, %v4836
      %v4838 = vpop.f32.mrb[0].mxu0
      %4839 = vmatprep.mubr.f32.mxu0 0.0
      %4840 = vmatmul.mubr.f32.gmra.mrb[0].mxu0 %v2330
      %v4841 = vpop.f32.mrb[0].mxu0
      %v4842 = vadd.f32 0.0, %v4841
      %v4843 = vpop.f32.mrb[0].mxu0
      %4844 = vmatprep.mubr.f32.mxu0 0.0
      %4845 = vmatmul.mubr.f32.gmra.mrb[0].mxu0 %v2333
      %v4846 = vpop.f32.mrb[0].mxu0
      %v4847 = vadd.f32 0.0, %v4846
      %v4848 = vpop.f32.mrb[0].mxu0
      %4849 = vmatprep.mubr.f32.mxu0 0.0
      %4850 = vmatmul.mubr.f32.gmra.mrb[0].mxu0 %v2336
      %v4851 = vpop.f32.mrb[0].mxu0
      %v4852 = vadd.f32 0.0, %v4851
      %v4853 = vpop.f32.mrb[0].mxu0
      %4854 = vmatprep.mubr.f32.mxu0 0.0
      %4855 = vmatmul.mubr.f32.gmra.mrb[0].mxu0 %v2339
      %v4856 = vpop.f32.mrb[0].mxu0
      %v4857 = vadd.f32 0.0, %v4856
      %v4858 = vpop.f32.mrb[0].mxu0
      %4859 = vmatprep.mubr.f32.mxu0 0.0
      %4860 = vmatmul.mubr.f32.gmra.mrb[0].mxu0 %v2342
      %v4861 = vpop.f32.mrb[0].mxu0
      %v4862 = vadd.f32 0.0, %v4861
      %v4863 = vpop.f32.mrb[0].mxu0
      %4864 = vmatprep.mubr.f32.mxu0 0.0
      %4865 = vmatmul.mubr.f32.gmra.mrb[0].mxu0 %v2345
      %v4866 = vpop.f32.mrb[0].mxu0
      %v4867 = vadd.f32 0.0, %v4866
      %v4868 = vpop.f32.mrb[0].mxu0
      %4869 = vmatprep.mubr.f32.mxu0 0.0
      %4870 = vmatmul.mubr.f32.gmra.mrb[0].mxu0 %v2348
      %v4871 = vpop.f32.mrb[0].mxu0
      %v4872 = vadd.f32 0.0, %v4871
      %v4873 = vpop.f32.mrb[0].mxu0
      %4874 = vmatprep.mubr.f32.mxu0 0.0
      %4875 = vmatmul.mubr.f32.gmra.mrb[0].mxu0 %v2351
      %v4876 = vpop.f32.mrb[0].mxu0
      %v4877 = vadd.f32 0.0, %v4876
      %v4878 = vpop.f32.mrb[0].mxu0
      %4879 = vmatprep.mubr.f32.mxu0 0.0
      %4880 = vmatmul.mubr.f32.gmra.mrb[0].mxu0 %v2354
      %v4881 = vpop.f32.mrb[0].mxu0
      %v4882 = vadd.f32 0.0, %v4881
      %v4883 = vpop.f32.mrb[0].mxu0
      %4884 = vmatprep.mubr.f32.mxu0 0.0
      %4885 = vmatmul.mubr.f32.gmra.mrb[0].mxu0 %v2357
      %v4886 = vpop.f32.mrb[0].mxu0
      %v4887 = vadd.f32 0.0, %v4886
      %v4888 = vpop.f32.mrb[0].mxu0
      %4889 = vmatprep.mubr.f32.mxu0 0.0
      %4890 = vmatmul.mubr.f32.gmra.mrb[0].mxu0 %v2360
      %v4891 = vpop.f32.mrb[0].mxu0
      %v4892 = vadd.f32 0.0, %v4891
      %v4893 = vpop.f32.mrb[0].mxu0
      %4894 = vmatprep.mubr.f32.mxu0 0.0
      %4895 = vmatmul.mubr.f32.gmra.mrb[0].mxu0 %v2363
      %v4896 = vpop.f32.mrb[0].mxu0
      %v4897 = vadd.f32 0.0, %v4896
      %v4898 = vpop.f32.mrb[0].mxu0
      %4899 = vmatprep.mubr.f32.mxu0 0.0
      %4900 = vmatmul.mubr.f32.gmra.mrb[0].mxu0 %v2366
      %v4901 = vpop.f32.mrb[0].mxu0
      %v4902 = vadd.f32 0.0, %v4901
      %v4903 = vpop.f32.mrb[0].mxu0
      %4904 = vmatprep.mubr.f32.mxu0 0.0
      %4905 = vmatmul.mubr.f32.gmra.mrb[0].mxu0 %v2369
      %v4906 = vpop.f32.mrb[0].mxu0
      %v4907 = vadd.f32 0.0, %v4906
      %v4908 = vpop.f32.mrb[0].mxu0
      %4909 = vmatprep.mubr.f32.mxu0 0.0
      %4910 = vmatmul.mubr.f32.gmra.mrb[0].mxu0 %v2372
      %v4911 = vpop.f32.mrb[0].mxu0
      %v4912 = vadd.f32 0.0, %v4911
      %v4913 = vpop.f32.mrb[0].mxu0
      %4914 = vmatprep.mubr.f32.mxu0 0.0
      %4915 = vmatmul.mubr.f32.gmra.mrb[0].mxu0 %v2375
      %v4916 = vpop.f32.mrb[0].mxu0
      %v4917 = vadd.f32 0.0, %v4916
      %v4918 = vpop.f32.mrb[0].mxu0
      %4919 = vmatprep.mubr.f32.mxu0 0.0
      %4920 = vmatmul.mubr.f32.gmra.mrb[0].mxu0 %v2378
      %v4921 = vpop.f32.mrb[0].mxu0
      %v4922 = vadd.f32 0.0, %v4921
      %v4923 = vpop.f32.mrb[0].mxu0
      %4924 = vmatprep.mubr.f32.mxu0 0.0
      %4925 = vmatmul.mubr.f32.gmra.mrb[0].mxu0 %v2381
      %v4926 = vpop.f32.mrb[0].mxu0
      %v4927 = vadd.f32 0.0, %v4926
      %v4928 = vpop.f32.mrb[0].mxu0
      %4929 = vmatprep.mubr.f32.mxu0 0.0
      %4930 = vmatmul.mubr.f32.gmra.mrb[0].mxu0 %v4710
      %v4931 = vpop.f32.mrb[0].mxu0
      %v4932 = vpop.f32.mrb[0].mxu0
      %4933 = vmatprep.mubr.f32.mxu0 0.0
      %4934 = vmatmul.mubr.f32.gmra.mrb[0].mxu0 %v4713
      %v4935 = vpop.f32.mrb[0].mxu0
      %v4936 = vpop.f32.mrb[0].mxu0
      %4937 = vdwg.mxu0
      %v4938 = vadd.f32 %v4679, %v4782
      %v4939 = vadd.f32 %v4680, %v4787
      %v4940 = vadd.f32 %v4681, %v4792
      %v4941 = vadd.f32 %v4682, %v4797
      %v4942 = vadd.f32 %v4683, %v4802
      %v4943 = vadd.f32 %v4684, %v4807
      %v4944 = vadd.f32 %v4685, %v4812
      %v4945 = vadd.f32 %v4686, %v4817
      %v4946 = vadd.f32 %v4687, %v4822
      %v4947 = vadd.f32 %v4688, %v4827
      %v4948 = vadd.f32 %v4689, %v4832
      %v4949 = vadd.f32 %v4690, %v4837
      %v4950 = vadd.f32 %v4691, %v4842
      %v4951 = vadd.f32 %v4692, %v4847
      %v4952 = vadd.f32 %v4693, %v4852
      %v4953 = vadd.f32 %v4694, %v4857
      %v4954 = vadd.f32 %v4695, %v4862
      %v4955 = vadd.f32 %v4696, %v4867
      %v4956 = vadd.f32 %v4697, %v4872
      %v4957 = vadd.f32 %v4698, %v4877
      %v4958 = vadd.f32 %v4699, %v4882
      %v4959 = vadd.f32 %v4700, %v4887
      %v4960 = vadd.f32 %v4701, %v4892
      %v4961 = vadd.f32 %v4702, %v4897
      %v4962 = vadd.f32 %v4703, %v4902
      %v4963 = vadd.f32 %v4704, %v4907
      %v4964 = vadd.f32 %v4705, %v4912
      %v4965 = vadd.f32 %v4706, %v4917
      %v4966 = vadd.f32 %v4707, %v4922
      %v4967 = vadd.f32 %v4708, %v4927
      %v4969 = vrot.slane %v2151, 1
      %v4970 = vrot.slane %v2152, 1
      %v4971 = vsel %vm2941, %v4969, %v4970
      %v4972 = vrot.slane %v2153, 1
      %v4973 = vsel %vm2941, %v4970, %v4972
      %v4974 = vsel %vm2286, %v4971, 0
      %v4976 = vsel %vm2286, %v4973, 0
      %4978 = vmatprep.subr.mxu0 0.0
      %4979 = vmatpush1.msra.mxu0 %v2284
      %4980 = vmatprep.subr.mxu0 0.0
      %4981 = vmatpush1.msra.mxu0 %v2285
      %4982 = vmatprep.subr.mxu0 0.0
      %4983 = vmatpush1.msra.mxu0 0.0
      %4984 = vmatprep.subr.mxu0 0.0
      %4985 = vmatpush1.msra.mxu0 0.0
      %4986 = vmatprep.subr.mxu0 0.0
      %4987 = vmatpush1.msra.mxu0 0.0
      %4988 = vmatprep.subr.mxu0 0.0
      %4989 = vmatpush1.msra.mxu0 0.0
      %4990 = vmatprep.subr.mxu0 0.0
      %4991 = vmatpush1.msra.mxu0 0.0
      %4992 = vmatprep.subr.mxu0 0.0
      %4993 = vmatpush1.msra.mxu0 0.0
      %4994 = vmatprep.subr.mxu0 0.0
      %4995 = vmatpush1.msra.mxu0 0.0
      %4996 = vmatprep.subr.mxu0 0.0
      %4997 = vmatpush1.msra.mxu0 0.0
      %4998 = vmatprep.subr.mxu0 0.0
      %4999 = vmatpush1.msra.mxu0 0.0
      %5000 = vmatprep.subr.mxu0 0.0
      %5001 = vmatpush1.msra.mxu0 0.0
      %5002 = vmatprep.subr.mxu0 0.0
      %5003 = vmatpush1.msra.mxu0 0.0
      %5004 = vmatprep.subr.mxu0 0.0
      %5005 = vmatpush1.msra.mxu0 0.0
      %5006 = vmatprep.subr.mxu0 0.0
      %5007 = vmatpush1.msra.mxu0 0.0
      %5008 = vmatprep.subr.mxu0 0.0
      %5009 = vmatpush1.msra.mxu0 0.0
      %5010 = vmatprep.subr.mxu0 0.0
      %5011 = vmatpush1.msra.mxu0 0.0
      %5012 = vmatprep.subr.mxu0 0.0
      %5013 = vmatpush1.msra.mxu0 0.0
      %5014 = vmatprep.subr.mxu0 0.0
      %5015 = vmatpush1.msra.mxu0 0.0
      %5016 = vmatprep.subr.mxu0 0.0
      %5017 = vmatpush1.msra.mxu0 0.0
      %5018 = vmatprep.subr.mxu0 0.0
      %5019 = vmatpush1.msra.mxu0 0.0
      %5020 = vmatprep.subr.mxu0 0.0
      %5021 = vmatpush1.msra.mxu0 0.0
      %5022 = vmatprep.subr.mxu0 0.0
      %5023 = vmatpush1.msra.mxu0 0.0
      %5024 = vmatprep.subr.mxu0 0.0
      %5025 = vmatpush1.msra.mxu0 0.0
      %5026 = vmatprep.subr.mxu0 0.0
      %5027 = vmatpush1.msra.mxu0 0.0
      %5028 = vmatprep.subr.mxu0 0.0
      %5029 = vmatpush1.msra.mxu0 0.0
      %5030 = vmatprep.subr.mxu0 0.0
      %5031 = vmatpush1.msra.mxu0 0.0
      %5032 = vmatprep.subr.mxu0 0.0
      %5033 = vmatpush1.msra.mxu0 0.0
      %5034 = vmatprep.subr.mxu0 0.0
      %5035 = vmatpush1.msra.mxu0 0.0
      %5036 = vmatprep.subr.mxu0 0.0
      %5037 = vmatpush1.msra.mxu0 0.0
      %5038 = vmatprep.subr.mxu0 0.0
      %5039 = vmatpush1.msra.mxu0 0.0
      %5040 = vmatprep.subr.mxu0 0.0
      %5041 = vmatpush1.msra.mxu0 0.0
      %5042 = vmatprep.mubr.f32.mxu0 0.0
      %5043 = vmatmul.mubr.f32.gmra.mrb[0].mxu0 %v3026
      %v5044 = vpop.f32.mrb[0].mxu0
      %v5045 = vadd.f32 0.0, %v5044
      %v5046 = vpop.f32.mrb[0].mxu0
      %5047 = vmatprep.mubr.f32.mxu0 0.0
      %5048 = vmatmul.mubr.f32.gmra.mrb[0].mxu0 %v3028
      %v5049 = vpop.f32.mrb[0].mxu0
      %v5050 = vadd.f32 0.0, %v5049
      %v5051 = vpop.f32.mrb[0].mxu0
      %5052 = vmatprep.mubr.f32.mxu0 0.0
      %5053 = vmatmul.mubr.f32.gmra.mrb[0].mxu0 %v3030
      %v5054 = vpop.f32.mrb[0].mxu0
      %v5055 = vadd.f32 0.0, %v5054
      %v5056 = vpop.f32.mrb[0].mxu0
      %5057 = vmatprep.mubr.f32.mxu0 0.0
      %5058 = vmatmul.mubr.f32.gmra.mrb[0].mxu0 %v3032
      %v5059 = vpop.f32.mrb[0].mxu0
      %v5060 = vadd.f32 0.0, %v5059
      %v5061 = vpop.f32.mrb[0].mxu0
      %5062 = vmatprep.mubr.f32.mxu0 0.0
      %5063 = vmatmul.mubr.f32.gmra.mrb[0].mxu0 %v3034
      %v5064 = vpop.f32.mrb[0].mxu0
      %v5065 = vadd.f32 0.0, %v5064
      %v5066 = vpop.f32.mrb[0].mxu0
      %5067 = vmatprep.mubr.f32.mxu0 0.0
      %5068 = vmatmul.mubr.f32.gmra.mrb[0].mxu0 %v3036
      %v5069 = vpop.f32.mrb[0].mxu0
      %v5070 = vadd.f32 0.0, %v5069
      %v5071 = vpop.f32.mrb[0].mxu0
      %5072 = vmatprep.mubr.f32.mxu0 0.0
      %5073 = vmatmul.mubr.f32.gmra.mrb[0].mxu0 %v3038
      %v5074 = vpop.f32.mrb[0].mxu0
      %v5075 = vadd.f32 0.0, %v5074
      %v5076 = vpop.f32.mrb[0].mxu0
      %5077 = vmatprep.mubr.f32.mxu0 0.0
      %5078 = vmatmul.mubr.f32.gmra.mrb[0].mxu0 %v3040
      %v5079 = vpop.f32.mrb[0].mxu0
      %v5080 = vadd.f32 0.0, %v5079
      %v5081 = vpop.f32.mrb[0].mxu0
      %5082 = vmatprep.mubr.f32.mxu0 0.0
      %5083 = vmatmul.mubr.f32.gmra.mrb[0].mxu0 %v3042
      %v5084 = vpop.f32.mrb[0].mxu0
      %v5085 = vadd.f32 0.0, %v5084
      %v5086 = vpop.f32.mrb[0].mxu0
      %5087 = vmatprep.mubr.f32.mxu0 0.0
      %5088 = vmatmul.mubr.f32.gmra.mrb[0].mxu0 %v3044
      %v5089 = vpop.f32.mrb[0].mxu0
      %v5090 = vadd.f32 0.0, %v5089
      %v5091 = vpop.f32.mrb[0].mxu0
      %5092 = vmatprep.mubr.f32.mxu0 0.0
      %5093 = vmatmul.mubr.f32.gmra.mrb[0].mxu0 %v3046
      %v5094 = vpop.f32.mrb[0].mxu0
      %v5095 = vadd.f32 0.0, %v5094
      %v5096 = vpop.f32.mrb[0].mxu0
      %5097 = vmatprep.mubr.f32.mxu0 0.0
      %5098 = vmatmul.mubr.f32.gmra.mrb[0].mxu0 %v3048
      %v5099 = vpop.f32.mrb[0].mxu0
      %v5100 = vadd.f32 0.0, %v5099
      %v5101 = vpop.f32.mrb[0].mxu0
      %5102 = vmatprep.mubr.f32.mxu0 0.0
      %5103 = vmatmul.mubr.f32.gmra.mrb[0].mxu0 %v3050
      %v5104 = vpop.f32.mrb[0].mxu0
      %v5105 = vadd.f32 0.0, %v5104
      %v5106 = vpop.f32.mrb[0].mxu0
      %5107 = vmatprep.mubr.f32.mxu0 0.0
      %5108 = vmatmul.mubr.f32.gmra.mrb[0].mxu0 %v3052
      %v5109 = vpop.f32.mrb[0].mxu0
      %v5110 = vadd.f32 0.0, %v5109
      %v5111 = vpop.f32.mrb[0].mxu0
      %5112 = vmatprep.mubr.f32.mxu0 0.0
      %5113 = vmatmul.mubr.f32.gmra.mrb[0].mxu0 %v3054
      %v5114 = vpop.f32.mrb[0].mxu0
      %v5115 = vadd.f32 0.0, %v5114
      %v5116 = vpop.f32.mrb[0].mxu0
      %5117 = vmatprep.mubr.f32.mxu0 0.0
      %5118 = vmatmul.mubr.f32.gmra.mrb[0].mxu0 %v3056
      %v5119 = vpop.f32.mrb[0].mxu0
      %v5120 = vadd.f32 0.0, %v5119
      %v5121 = vpop.f32.mrb[0].mxu0
      %5122 = vmatprep.mubr.f32.mxu0 0.0
      %5123 = vmatmul.mubr.f32.gmra.mrb[0].mxu0 %v3058
      %v5124 = vpop.f32.mrb[0].mxu0
      %v5125 = vadd.f32 0.0, %v5124
      %v5126 = vpop.f32.mrb[0].mxu0
      %5127 = vmatprep.mubr.f32.mxu0 0.0
      %5128 = vmatmul.mubr.f32.gmra.mrb[0].mxu0 %v3060
      %v5129 = vpop.f32.mrb[0].mxu0
      %v5130 = vadd.f32 0.0, %v5129
      %v5131 = vpop.f32.mrb[0].mxu0
      %5132 = vmatprep.mubr.f32.mxu0 0.0
      %5133 = vmatmul.mubr.f32.gmra.mrb[0].mxu0 %v3062
      %v5134 = vpop.f32.mrb[0].mxu0
      %v5135 = vadd.f32 0.0, %v5134
      %v5136 = vpop.f32.mrb[0].mxu0
      %5137 = vmatprep.mubr.f32.mxu0 0.0
      %5138 = vmatmul.mubr.f32.gmra.mrb[0].mxu0 %v3064
      %v5139 = vpop.f32.mrb[0].mxu0
      %v5140 = vadd.f32 0.0, %v5139
      %v5141 = vpop.f32.mrb[0].mxu0
      %5142 = vmatprep.mubr.f32.mxu0 0.0
      %5143 = vmatmul.mubr.f32.gmra.mrb[0].mxu0 %v3066
      %v5144 = vpop.f32.mrb[0].mxu0
      %v5145 = vadd.f32 0.0, %v5144
      %v5146 = vpop.f32.mrb[0].mxu0
      %5147 = vmatprep.mubr.f32.mxu0 0.0
      %5148 = vmatmul.mubr.f32.gmra.mrb[0].mxu0 %v3068
      %v5149 = vpop.f32.mrb[0].mxu0
      %v5150 = vadd.f32 0.0, %v5149
      %v5151 = vpop.f32.mrb[0].mxu0
      %5152 = vmatprep.mubr.f32.mxu0 0.0
      %5153 = vmatmul.mubr.f32.gmra.mrb[0].mxu0 %v3070
      %v5154 = vpop.f32.mrb[0].mxu0
      %v5155 = vadd.f32 0.0, %v5154
      %v5156 = vpop.f32.mrb[0].mxu0
      %5157 = vmatprep.mubr.f32.mxu0 0.0
      %5158 = vmatmul.mubr.f32.gmra.mrb[0].mxu0 %v3072
      %v5159 = vpop.f32.mrb[0].mxu0
      %v5160 = vadd.f32 0.0, %v5159
      %v5161 = vpop.f32.mrb[0].mxu0
      %5162 = vmatprep.mubr.f32.mxu0 0.0
      %5163 = vmatmul.mubr.f32.gmra.mrb[0].mxu0 %v3074
      %v5164 = vpop.f32.mrb[0].mxu0
      %v5165 = vadd.f32 0.0, %v5164
      %v5166 = vpop.f32.mrb[0].mxu0
      %5167 = vmatprep.mubr.f32.mxu0 0.0
      %5168 = vmatmul.mubr.f32.gmra.mrb[0].mxu0 %v3076
      %v5169 = vpop.f32.mrb[0].mxu0
      %v5170 = vadd.f32 0.0, %v5169
      %v5171 = vpop.f32.mrb[0].mxu0
      %5172 = vmatprep.mubr.f32.mxu0 0.0
      %5173 = vmatmul.mubr.f32.gmra.mrb[0].mxu0 %v3078
      %v5174 = vpop.f32.mrb[0].mxu0
      %v5175 = vadd.f32 0.0, %v5174
      %v5176 = vpop.f32.mrb[0].mxu0
      %5177 = vmatprep.mubr.f32.mxu0 0.0
      %5178 = vmatmul.mubr.f32.gmra.mrb[0].mxu0 %v3080
      %v5179 = vpop.f32.mrb[0].mxu0
      %v5180 = vadd.f32 0.0, %v5179
      %v5181 = vpop.f32.mrb[0].mxu0
      %5182 = vmatprep.mubr.f32.mxu0 0.0
      %5183 = vmatmul.mubr.f32.gmra.mrb[0].mxu0 %v3082
      %v5184 = vpop.f32.mrb[0].mxu0
      %v5185 = vadd.f32 0.0, %v5184
      %v5186 = vpop.f32.mrb[0].mxu0
      %5187 = vmatprep.mubr.f32.mxu0 0.0
      %5188 = vmatmul.mubr.f32.gmra.mrb[0].mxu0 %v3084
      %v5189 = vpop.f32.mrb[0].mxu0
      %v5190 = vadd.f32 0.0, %v5189
      %v5191 = vpop.f32.mrb[0].mxu0
      %5192 = vmatprep.mubr.f32.mxu0 0.0
      %5193 = vmatmul.mubr.f32.gmra.mrb[0].mxu0 %v4974
      %v5194 = vpop.f32.mrb[0].mxu0
      %v5195 = vpop.f32.mrb[0].mxu0
      %5196 = vmatprep.mubr.f32.mxu0 0.0
      %5197 = vmatmul.mubr.f32.gmra.mrb[0].mxu0 %v4976
      %v5198 = vpop.f32.mrb[0].mxu0
      %v5199 = vpop.f32.mrb[0].mxu0
      %5200 = vdwg.mxu0
      %v5201 = vadd.f32 %v4938, %v5045
      %v5202 = vadd.f32 %v4939, %v5050
      %v5203 = vadd.f32 %v4940, %v5055
      %v5204 = vadd.f32 %v4941, %v5060
      %v5205 = vadd.f32 %v4942, %v5065
      %v5206 = vadd.f32 %v4943, %v5070
      %v5207 = vadd.f32 %v4944, %v5075
      %v5208 = vadd.f32 %v4945, %v5080
      %v5209 = vadd.f32 %v4946, %v5085
      %v5210 = vadd.f32 %v4947, %v5090
      %v5211 = vadd.f32 %v4948, %v5095
      %v5212 = vadd.f32 %v4949, %v5100
      %v5213 = vadd.f32 %v4950, %v5105
      %v5214 = vadd.f32 %v4951, %v5110
      %v5215 = vadd.f32 %v4952, %v5115
      %v5216 = vadd.f32 %v4953, %v5120
      %v5217 = vadd.f32 %v4954, %v5125
      %v5218 = vadd.f32 %v4955, %v5130
      %v5219 = vadd.f32 %v4956, %v5135
      %v5220 = vadd.f32 %v4957, %v5140
      %v5221 = vadd.f32 %v4958, %v5145
      %v5222 = vadd.f32 %v4959, %v5150
      %v5223 = vadd.f32 %v4960, %v5155
      %v5224 = vadd.f32 %v4961, %v5160
      %v5225 = vadd.f32 %v4962, %v5165
      %v5226 = vadd.f32 %v4963, %v5170
      %v5227 = vadd.f32 %v4964, %v5175
      %v5228 = vadd.f32 %v4965, %v5180
      %v5229 = vadd.f32 %v4966, %v5185
      %v5230 = vadd.f32 %v4967, %v5190
      %v5231 = vld [vmem:[%s4] sm:$0x1]
      %v5233 = vlaneseq
      %v5234 = vshrl.u32 %v5233, 7
      %v5235 = vsub.s32 0, %v5234
      %v5236 = vrot.slane %v5231, %v5235
      %v5238 = vadd.f32 %v5201, %v5236
      %v5239 = vadd.f32 %v5202, %v5236
      %v5240 = vadd.f32 %v5203, %v5236
      %v5241 = vadd.f32 %v5204, %v5236
      %v5242 = vadd.f32 %v5205, %v5236
      %v5243 = vadd.f32 %v5206, %v5236
      %v5244 = vadd.f32 %v5207, %v5236
      %v5245 = vadd.f32 %v5208, %v5236
      %v5246 = vadd.f32 %v5209, %v5236
      %v5247 = vadd.f32 %v5210, %v5236
      %v5248 = vadd.f32 %v5211, %v5236
      %v5249 = vadd.f32 %v5212, %v5236
      %v5250 = vadd.f32 %v5213, %v5236
      %v5251 = vadd.f32 %v5214, %v5236
      %v5252 = vadd.f32 %v5215, %v5236
      %v5253 = vadd.f32 %v5216, %v5236
      %v5254 = vadd.f32 %v5217, %v5236
      %v5255 = vadd.f32 %v5218, %v5236
      %v5256 = vadd.f32 %v5219, %v5236
      %v5257 = vadd.f32 %v5220, %v5236
      %v5258 = vadd.f32 %v5221, %v5236
      %v5259 = vadd.f32 %v5222, %v5236
      %v5260 = vadd.f32 %v5223, %v5236
      %v5261 = vadd.f32 %v5224, %v5236
      %v5262 = vadd.f32 %v5225, %v5236
      %v5263 = vadd.f32 %v5226, %v5236
      %v5264 = vadd.f32 %v5227, %v5236
      %v5265 = vadd.f32 %v5228, %v5236
      %v5266 = vadd.f32 %v5229, %v5236
      %v5267 = vadd.f32 %v5230, %v5236
      %v5268 = vmax.f32 %v5238, 0.0
      %v5269 = vmax.f32 %v5239, 0.0
      %v5270 = vmax.f32 %v5240, 0.0
      %v5271 = vmax.f32 %v5241, 0.0
      %v5272 = vmax.f32 %v5242, 0.0
      %v5273 = vmax.f32 %v5243, 0.0
      %v5274 = vmax.f32 %v5244, 0.0
      %v5275 = vmax.f32 %v5245, 0.0
      %v5276 = vmax.f32 %v5246, 0.0
      %v5277 = vmax.f32 %v5247, 0.0
      %v5278 = vmax.f32 %v5248, 0.0
      %v5279 = vmax.f32 %v5249, 0.0
      %v5280 = vmax.f32 %v5250, 0.0
      %v5281 = vmax.f32 %v5251, 0.0
      %v5282 = vmax.f32 %v5252, 0.0
      %v5283 = vmax.f32 %v5253, 0.0
      %v5284 = vmax.f32 %v5254, 0.0
      %v5285 = vmax.f32 %v5255, 0.0
      %v5286 = vmax.f32 %v5256, 0.0
      %v5287 = vmax.f32 %v5257, 0.0
      %v5288 = vmax.f32 %v5258, 0.0
      %v5289 = vmax.f32 %v5259, 0.0
      %v5290 = vmax.f32 %v5260, 0.0
      %v5291 = vmax.f32 %v5261, 0.0
      %v5292 = vmax.f32 %v5262, 0.0
      %v5293 = vmax.f32 %v5263, 0.0
      %v5294 = vmax.f32 %v5264, 0.0
      %v5295 = vmax.f32 %v5265, 0.0
      %v5296 = vmax.f32 %v5266, 0.0
      %v5297 = vmax.f32 %v5267, 0.0
      %vm5298 = vcmask 261120
      %5299 = vst.msk [vmem:[%s224] sm:$0xff] %vm5298, %v5268
      %vm5300 = vcmask 260096
      %5301 = vst.msk [vmem:[%s224 + $0x8] sm:$0x7f] %vm5300, %v5269
      %5302 = vst.msk [vmem:[%s224 + $0x10] sm:$0xff] %vm5298, %v5270
      %5303 = vst.msk [vmem:[%s224 + $0x18] sm:$0x7f] %vm5300, %v5271
      %5304 = vst.msk [vmem:[%s224 + $0x20] sm:$0xff] %vm5298, %v5272
      %5305 = vst.msk [vmem:[%s224 + $0x28] sm:$0x7f] %vm5300, %v5273
      %5306 = vst.msk [vmem:[%s224 + $0x30] sm:$0xff] %vm5298, %v5274
      %5307 = vst.msk [vmem:[%s224 + $0x38] sm:$0x7f] %vm5300, %v5275
      %5308 = vst.msk [vmem:[%s224 + $0x40] sm:$0xff] %vm5298, %v5276
      %5309 = vst.msk [vmem:[%s224 + $0x48] sm:$0x7f] %vm5300, %v5277
      %5310 = vst.msk [vmem:[%s224 + $0x50] sm:$0xff] %vm5298, %v5278
      %5311 = vst.msk [vmem:[%s224 + $0x58] sm:$0x7f] %vm5300, %v5279
      %5312 = vst.msk [vmem:[%s224 + $0x60] sm:$0xff] %vm5298, %v5280
      %5313 = vst.msk [vmem:[%s224 + $0x68] sm:$0x7f] %vm5300, %v5281
      %5314 = vst.msk [vmem:[%s224 + $0x70] sm:$0xff] %vm5298, %v5282
      %5315 = vst.msk [vmem:[%s224 + $0x78] sm:$0x7f] %vm5300, %v5283
      %5316 = vst.msk [vmem:[%s224 + $0x80] sm:$0xff] %vm5298, %v5284
      %5317 = vst.msk [vmem:[%s224 + $0x88] sm:$0x7f] %vm5300, %v5285
      %5318 = vst.msk [vmem:[%s224 + $0x90] sm:$0xff] %vm5298, %v5286
      %5319 = vst.msk [vmem:[%s224 + $0x98] sm:$0x7f] %vm5300, %v5287
      %5320 = vst.msk [vmem:[%s224 + $0xa0] sm:$0xff] %vm5298, %v5288
      %5321 = vst.msk [vmem:[%s224 + $0xa8] sm:$0x7f] %vm5300, %v5289
      %5322 = vst.msk [vmem:[%s224 + $0xb0] sm:$0xff] %vm5298, %v5290
      %5323 = vst.msk [vmem:[%s224 + $0xb8] sm:$0x7f] %vm5300, %v5291
      %5324 = vst.msk [vmem:[%s224 + $0xc0] sm:$0xff] %vm5298, %v5292
      %5325 = vst.msk [vmem:[%s224 + $0xc8] sm:$0x7f] %vm5300, %v5293
      %5326 = vst.msk [vmem:[%s224 + $0xd0] sm:$0xff] %vm5298, %v5294
      %5327 = vst.msk [vmem:[%s224 + $0xd8] sm:$0x7f] %vm5300, %v5295
      %5328 = vst.msk [vmem:[%s224 + $0xe0] sm:$0xff] %vm5298, %v5296
      %5329 = vst.msk [vmem:[%s224 + $0xe8] sm:$0x7f] %vm5300, %v5297
      %p5330 = scmp.lt.s32.totalorder %s16, 1
      %s5331 = scalar_select %p5330, %s16, 1
      %s5332 = smul.addr %s5331, 30
      %s5333 = smul.addr %s5332, 8
      %s5334 = scalar_lea.vmem %s5, %s5333
      // Predicated region
      $region41: #{dqn_cnn_forward.2} parent=39 // pred_check
        %p5335 = pneg %p144
      $region42: #{dqn_cnn_forward.2} parent=39 // pred_check_branch
        %5337 = sbr.rel (%p5335) target = $region44
      $region43: #{dqn_cnn_forward.2} parent=39 // pred_region
        _
      $region44: #{dqn_cnn_forward.2} parent=39 // pred_fallthru
        _
    $region40: #{dqn_cnn_forward.2} parent=5 // pred_fallthru
      _
    %p5338 = scmp.le.s32.totalorder 2, %s11
    // Predicated region
    $region45: #{dqn_cnn_forward.2} parent=5 // pred_check
      %p5339 = pneg %p5338
    $region46: #{dqn_cnn_forward.2} parent=5 // pred_check_branch
      %5341 = sbr.rel (%p5339) target = $region48
    $region47: #{dqn_cnn_forward.2} parent=5 // pred_region
      %s5342 = ssub.s32 %s11, 2
      // Predicated region
      $region49: #{dqn_cnn_forward.2} parent=47 // pred_check
        %p5343 = pneg %p150
      $region50: #{dqn_cnn_forward.2} parent=47 // pred_check_branch
        %5345 = sbr.rel (%p5343) target = $region52
      $region51: #{dqn_cnn_forward.2} parent=47 // pred_region
        %p5346 = scmp.lt.s32.totalorder %s17, 1
        %s5347 = scalar_select %p5346, %s17, 1
        %s5348 = smul.addr %s5347, 30
        %s5349 = smul.addr %s5348, 8
        %s5350 = scalar_lea.vmem %s5, %s5349
      $region52: #{dqn_cnn_forward.2} parent=47 // pred_fallthru
        _
    $region48: #{dqn_cnn_forward.2} parent=5 // pred_fallthru
      _
  $region6: #{dqn_cnn_forward.2} parent=0 // loop_footer
    %s15 = sadd.s32 1, %s11
  $region7: #{dqn_cnn_forward.2} parent=0 // loop_footer_branch
    %10 = sbr.rel target = $region3
  $region8: #{dqn_cnn_forward.2} parent=0 // loop_exit
    _

// kernel: dqn_cnn_forward.3
$region0: #{dqn_cnn_forward.3}
  #allocation0 [shape = 'u32[]', space=smem, size = 0x4, offset = 0x4, fixed_abs, tag = 'smem constant byte address 0x4 - core index']
  #allocation1 [shape = 'u32[144,128]{1,0:T(1,128)}', space=vmem, size = 0x12000, scoped, tag = 'internal scratch']
  %s0 = inlined_call_operand.vmem [shape: f32[2,7200], index: 0, kind: input, shape index: {}]
  %s1 = inlined_call_operand.vmem [shape: f32[7200,256], index: 1, kind: input, shape index: {}]
  %s2 = inlined_call_operand.vmem [shape: f32[1,256], index: 2, kind: input, shape index: {}]
  %s3 = inlined_call_operand.vmem [shape: f32[256,6], index: 3, kind: input, shape index: {}]
  %s4 = inlined_call_operand.vmem [shape: f32[1,6], index: 4, kind: input, shape index: {}]
  %s5 = inlined_call_operand.hbm [shape: f32[2,6], index: 5, kind: output, shape index: {}]
  %s6 = sld [smem:[#allocation0]]
  $region30: #{dqn_cnn_forward.3} parent=0
    _
  %s8 = ssub.s32 1, %s6
  %s9 = scalar_select 0, %s8, %s6
  $region1: #{dqn_cnn_forward.3} parent=0
    #allocation2 [shape = 'u8[1024]{0}', space=vmem, size = 0x400, scoped, tag = 'output window, operand 0, single buffered']
    #allocation3 [shape = 's32[1]{0}', space=sflag, size = 0x4, scoped, tag = 'scoped memory for dqn_cnn_forward.3']
    %10 = vsyncpa [#allocation3], 0
    // Predicated region
    $region2: #{dqn_cnn_forward.3} parent=1 // pred_check
      _
    $region3: #{dqn_cnn_forward.3} parent=1 // pred_check_branch
      %12 = sbr.rel (0) target = $region5
    $region4: #{dqn_cnn_forward.3} parent=1 // pred_region
      _
    $region5: #{dqn_cnn_forward.3} parent=1 // pred_fallthru
      _
    // Predicated region
    $region6: #{dqn_cnn_forward.3} parent=1 // pred_check
      _
    $region7: #{dqn_cnn_forward.3} parent=1 // pred_check_branch
      %14 = sbr.rel (0) target = $region9
    $region8: #{dqn_cnn_forward.3} parent=1 // pred_region
      _
    $region9: #{dqn_cnn_forward.3} parent=1 // pred_fallthru
      _
    // Predicated region
    $region10: #{dqn_cnn_forward.3} parent=1 // pred_check
      _
    $region11: #{dqn_cnn_forward.3} parent=1 // pred_check_branch
      %16 = sbr.rel (0) target = $region13
    $region12: #{dqn_cnn_forward.3} parent=1 // pred_region
      _
    $region13: #{dqn_cnn_forward.3} parent=1 // pred_fallthru
      _
    // Predicated region
    $region14: #{dqn_cnn_forward.3} parent=1 // pred_check
      _
    $region15: #{dqn_cnn_forward.3} parent=1 // pred_check_branch
      %18 = sbr.rel (0) target = $region17
    $region16: #{dqn_cnn_forward.3} parent=1 // pred_region
      _
    $region17: #{dqn_cnn_forward.3} parent=1 // pred_fallthru
      _
    // Predicated region
    $region18: #{dqn_cnn_forward.3} parent=1 // pred_check
      _
    $region19: #{dqn_cnn_forward.3} parent=1 // pred_check_branch
      %20 = sbr.rel (0) target = $region21
    $region20: #{dqn_cnn_forward.3} parent=1 // pred_region
      _
    $region21: #{dqn_cnn_forward.3} parent=1 // pred_fallthru
      _
    %v21 = vld [vmem:[%s0] sm:$0xff]
    %v22 = vld [vmem:[%s0 + $0x8] sm:$0xff]
    %v23 = vld [vmem:[%s0 + $0x10] sm:$0xff]
    %v24 = vld [vmem:[%s0 + $0x18] sm:$0xff]
    %v25 = vld [vmem:[%s0 + $0x20] sm:$0xff]
    %v26 = vld [vmem:[%s0 + $0x28] sm:$0xff]
    %v27 = vld [vmem:[%s0 + $0x30] sm:$0xff]
    %v28 = vld [vmem:[%s0 + $0x38] sm:$0xff]
    %v29 = vld [vmem:[%s0 + $0x40] sm:$0xff]
    %v30 = vld [vmem:[%s0 + $0x48] sm:$0xff]
    %v31 = vld [vmem:[%s0 + $0x50] sm:$0xff]
    %v32 = vld [vmem:[%s0 + $0x58] sm:$0xff]
    %v33 = vld [vmem:[%s0 + $0x60] sm:$0xff]
    %v34 = vld [vmem:[%s0 + $0x68] sm:$0xff]
    %v35 = vld [vmem:[%s0 + $0x70] sm:$0x3]
    %v36 = vld [vmem:[%s1] sm:$0xff]
    %v37 = vld [vmem:[%s1 + $0x8] sm:$0xff]
    %v38 = vld [vmem:[%s1 + $0x10] sm:$0xff]
    %v39 = vld [vmem:[%s1 + $0x18] sm:$0xff]
    %v40 = vld [vmem:[%s1 + $0x20] sm:$0xff]
    %v41 = vld [vmem:[%s1 + $0x28] sm:$0xff]
    %v42 = vld [vmem:[%s1 + $0x30] sm:$0xff]
    %v43 = vld [vmem:[%s1 + $0x38] sm:$0xff]
    %v44 = vld [vmem:[%s1 + $0x40] sm:$0xff]
    %v45 = vld [vmem:[%s1 + $0x48] sm:$0xff]
    %v46 = vld [vmem:[%s1 + $0x50] sm:$0xff]
    %v47 = vld [vmem:[%s1 + $0x58] sm:$0xff]
    %v48 = vld [vmem:[%s1 + $0x60] sm:$0xff]
    %v49 = vld [vmem:[%s1 + $0x68] sm:$0xff]
    %v50 = vld [vmem:[%s1 + $0x70] sm:$0xff]
    %v51 = vld [vmem:[%s1 + $0x78] sm:$0xff]
    %v52 = vld [vmem:[%s1 + $0x80] sm:$0xff]
    %v53 = vld [vmem:[%s1 + $0x88] sm:$0xff]
    %v54 = vld [vmem:[%s1 + $0x90] sm:$0xff]
    %v55 = vld [vmem:[%s1 + $0x98] sm:$0xff]
    %v56 = vld [vmem:[%s1 + $0xa0] sm:$0xff]
    %v57 = vld [vmem:[%s1 + $0xa8] sm:$0xff]
    %v58 = vld [vmem:[%s1 + $0xb0] sm:$0xff]
    %v59 = vld [vmem:[%s1 + $0xb8] sm:$0xff]
    %v60 = vld [vmem:[%s1 + $0xc0] sm:$0xff]
    %v61 = vld [vmem:[%s1 + $0xc8] sm:$0xff]
    %v62 = vld [vmem:[%s1 + $0xd0] sm:$0xff]
    %v63 = vld [vmem:[%s1 + $0xd8] sm:$0xff]
    %v64 = vld [vmem:[%s1 + $0xe0] sm:$0xff]
    %v65 = vld [vmem:[%s1 + $0xe8] sm:$0xff]
    %v66 = vld [vmem:[%s1 + $0xf0] sm:$0xff]
    %v67 = vld [vmem:[%s1 + $0xf8] sm:$0xff]
    %v68 = vld [vmem:[%s1 + $0x100] sm:$0xff]
    %v69 = vld [vmem:[%s1 + $0x108] sm:$0xff]
    %v70 = vld [vmem:[%s1 + $0x110] sm:$0xff]
    %v71 = vld [vmem:[%s1 + $0x118] sm:$0xff]
    %v72 = vld [vmem:[%s1 + $0x120] sm:$0xff]
    %v73 = vld [vmem:[%s1 + $0x128] sm:$0xff]
    %v74 = vld [vmem:[%s1 + $0x130] sm:$0xff]
    %v75 = vld [vmem:[%s1 + $0x138] sm:$0xff]
    %v76 = vld [vmem:[%s1 + $0x140] sm:$0xff]
    %v77 = vld [vmem:[%s1 + $0x148] sm:$0xff]
    %v78 = vld [vmem:[%s1 + $0x150] sm:$0xff]
    %v79 = vld [vmem:[%s1 + $0x158] sm:$0xff]
    %v80 = vld [vmem:[%s1 + $0x160] sm:$0xff]
    %v81 = vld [vmem:[%s1 + $0x168] sm:$0xff]
    %v82 = vld [vmem:[%s1 + $0x170] sm:$0xff]
    %v83 = vld [vmem:[%s1 + $0x178] sm:$0xff]
    %v84 = vld [vmem:[%s1 + $0x180] sm:$0xff]
    %v85 = vld [vmem:[%s1 + $0x188] sm:$0xff]
    %v86 = vld [vmem:[%s1 + $0x190] sm:$0xff]
    %v87 = vld [vmem:[%s1 + $0x198] sm:$0xff]
    %v88 = vld [vmem:[%s1 + $0x1a0] sm:$0xff]
    %v89 = vld [vmem:[%s1 + $0x1a8] sm:$0xff]
    %v90 = vld [vmem:[%s1 + $0x1b0] sm:$0xff]
    %v91 = vld [vmem:[%s1 + $0x1b8] sm:$0xff]
    %v92 = vld [vmem:[%s1 + $0x1c0] sm:$0xff]
    %v93 = vld [vmem:[%s1 + $0x1c8] sm:$0xff]
    %v94 = vld [vmem:[%s1 + $0x1d0] sm:$0xff]
    %v95 = vld [vmem:[%s1 + $0x1d8] sm:$0xff]
    %v96 = vld [vmem:[%s1 + $0x1e0] sm:$0xff]
    %v97 = vld [vmem:[%s1 + $0x1e8] sm:$0xff]
    %v98 = vld [vmem:[%s1 + $0x1f0] sm:$0xff]
    %v99 = vld [vmem:[%s1 + $0x1f8] sm:$0xff]
    %v100 = vld [vmem:[%s1 + $0x200] sm:$0xff]
    %v101 = vld [vmem:[%s1 + $0x208] sm:$0xff]
    %v102 = vld [vmem:[%s1 + $0x210] sm:$0xff]
    %v103 = vld [vmem:[%s1 + $0x218] sm:$0xff]
    %v104 = vld [vmem:[%s1 + $0x220] sm:$0xff]
    %v105 = vld [vmem:[%s1 + $0x228] sm:$0xff]
    %v106 = vld [vmem:[%s1 + $0x230] sm:$0xff]
    %v107 = vld [vmem:[%s1 + $0x238] sm:$0xff]
    %v108 = vld [vmem:[%s1 + $0x240] sm:$0xff]
    %v109 = vld [vmem:[%s1 + $0x248] sm:$0xff]
    %v110 = vld [vmem:[%s1 + $0x250] sm:$0xff]
    %v111 = vld [vmem:[%s1 + $0x258] sm:$0xff]
    %v112 = vld [vmem:[%s1 + $0x260] sm:$0xff]
    %v113 = vld [vmem:[%s1 + $0x268] sm:$0xff]
    %v114 = vld [vmem:[%s1 + $0x270] sm:$0xff]
    %v115 = vld [vmem:[%s1 + $0x278] sm:$0xff]
    %v116 = vld [vmem:[%s1 + $0x280] sm:$0xff]
    %v117 = vld [vmem:[%s1 + $0x288] sm:$0xff]
    %v118 = vld [vmem:[%s1 + $0x290] sm:$0xff]
    %v119 = vld [vmem:[%s1 + $0x298] sm:$0xff]
    %v120 = vld [vmem:[%s1 + $0x2a0] sm:$0xff]
    %v121 = vld [vmem:[%s1 + $0x2a8] sm:$0xff]
    %v122 = vld [vmem:[%s1 + $0x2b0] sm:$0xff]
    %v123 = vld [vmem:[%s1 + $0x2b8] sm:$0xff]
    %v124 = vld [vmem:[%s1 + $0x2c0] sm:$0xff]
    %v125 = vld [vmem:[%s1 + $0x2c8] sm:$0xff]
    %v126 = vld [vmem:[%s1 + $0x2d0] sm:$0xff]
    %v127 = vld [vmem:[%s1 + $0x2d8] sm:$0xff]
    %v128 = vld [vmem:[%s1 + $0x2e0] sm:$0xff]
    %v129 = vld [vmem:[%s1 + $0x2e8] sm:$0xff]
    %v130 = vld [vmem:[%s1 + $0x2f0] sm:$0xff]
    %v131 = vld [vmem:[%s1 + $0x2f8] sm:$0xff]
    %v132 = vld [vmem:[%s1 + $0x300] sm:$0xff]
    %v133 = vld [vmem:[%s1 + $0x308] sm:$0xff]
    %v134 = vld [vmem:[%s1 + $0x310] sm:$0xff]
    %v135 = vld [vmem:[%s1 + $0x318] sm:$0xff]
    %v136 = vld [vmem:[%s1 + $0x320] sm:$0xff]
    %v137 = vld [vmem:[%s1 + $0x328] sm:$0xff]
    %v138 = vld [vmem:[%s1 + $0x330] sm:$0xff]
    %v139 = vld [vmem:[%s1 + $0x338] sm:$0xff]
    %v140 = vld [vmem:[%s1 + $0x340] sm:$0xff]
    %v141 = vld [vmem:[%s1 + $0x348] sm:$0xff]
    %v142 = vld [vmem:[%s1 + $0x350] sm:$0xff]
    %v143 = vld [vmem:[%s1 + $0x358] sm:$0xff]
    %v144 = vld [vmem:[%s1 + $0x360] sm:$0xff]
    %v145 = vld [vmem:[%s1 + $0x368] sm:$0xff]
    %v146 = vld [vmem:[%s1 + $0x370] sm:$0xff]
    %v147 = vld [vmem:[%s1 + $0x378] sm:$0xff]
    %v148 = vld [vmem:[%s1 + $0x380] sm:$0xff]
    %v149 = vld [vmem:[%s1 + $0x388] sm:$0xff]
    %v150 = vld [vmem:[%s1 + $0x390] sm:$0xff]
    %v151 = vld [vmem:[%s1 + $0x398] sm:$0xff]
    %v152 = vld [vmem:[%s1 + $0x3a0] sm:$0xff]
    %v153 = vld [vmem:[%s1 + $0x3a8] sm:$0xff]
    %v154 = vld [vmem:[%s1 + $0x3b0] sm:$0xff]
    %v155 = vld [vmem:[%s1 + $0x3b8] sm:$0xff]
    %v156 = vld [vmem:[%s1 + $0x3c0] sm:$0xff]
    %v157 = vld [vmem:[%s1 + $0x3c8] sm:$0xff]
    %v158 = vld [vmem:[%s1 + $0x3d0] sm:$0xff]
    %v159 = vld [vmem:[%s1 + $0x3d8] sm:$0xff]
    %v160 = vld [vmem:[%s1 + $0x3e0] sm:$0xff]
    %v161 = vld [vmem:[%s1 + $0x3e8] sm:$0xff]
    %v162 = vld [vmem:[%s1 + $0x3f0] sm:$0xff]
    %v163 = vld [vmem:[%s1 + $0x3f8] sm:$0xff]
    %v164 = vld [vmem:[%s1 + $0x400] sm:$0xff]
    %v165 = vld [vmem:[%s1 + $0x408] sm:$0xff]
    %v166 = vld [vmem:[%s1 + $0x410] sm:$0xff]
    %v167 = vld [vmem:[%s1 + $0x418] sm:$0xff]
    %v168 = vld [vmem:[%s1 + $0x420] sm:$0xff]
    %v169 = vld [vmem:[%s1 + $0x428] sm:$0xff]
    %v170 = vld [vmem:[%s1 + $0x430] sm:$0xff]
    %v171 = vld [vmem:[%s1 + $0x438] sm:$0xff]
    %v172 = vld [vmem:[%s1 + $0x440] sm:$0xff]
    %v173 = vld [vmem:[%s1 + $0x448] sm:$0xff]
    %v174 = vld [vmem:[%s1 + $0x450] sm:$0xff]
    %v175 = vld [vmem:[%s1 + $0x458] sm:$0xff]
    %v176 = vld [vmem:[%s1 + $0x460] sm:$0xff]
    %v177 = vld [vmem:[%s1 + $0x468] sm:$0xff]
    %v178 = vld [vmem:[%s1 + $0x470] sm:$0xff]
    %v179 = vld [vmem:[%s1 + $0x478] sm:$0xff]
    %v180 = vld [vmem:[%s1 + $0x480] sm:$0xff]
    %v181 = vld [vmem:[%s1 + $0x488] sm:$0xff]
    %v182 = vld [vmem:[%s1 + $0x490] sm:$0xff]
    %v183 = vld [vmem:[%s1 + $0x498] sm:$0xff]
    %v184 = vld [vmem:[%s1 + $0x4a0] sm:$0xff]
    %v185 = vld [vmem:[%s1 + $0x4a8] sm:$0xff]
    %v186 = vld [vmem:[%s1 + $0x4b0] sm:$0xff]
    %v187 = vld [vmem:[%s1 + $0x4b8] sm:$0xff]
    %v188 = vld [vmem:[%s1 + $0x4c0] sm:$0xff]
    %v189 = vld [vmem:[%s1 + $0x4c8] sm:$0xff]
    %v190 = vld [vmem:[%s1 + $0x4d0] sm:$0xff]
    %v191 = vld [vmem:[%s1 + $0x4d8] sm:$0xff]
    %v192 = vld [vmem:[%s1 + $0x4e0] sm:$0xff]
    %v193 = vld [vmem:[%s1 + $0x4e8] sm:$0xff]
    %v194 = vld [vmem:[%s1 + $0x4f0] sm:$0xff]
    %v195 = vld [vmem:[%s1 + $0x4f8] sm:$0xff]
    %v196 = vld [vmem:[%s1 + $0x500] sm:$0xff]
    %v197 = vld [vmem:[%s1 + $0x508] sm:$0xff]
    %v198 = vld [vmem:[%s1 + $0x510] sm:$0xff]
    %v199 = vld [vmem:[%s1 + $0x518] sm:$0xff]
    %v200 = vld [vmem:[%s1 + $0x520] sm:$0xff]
    %v201 = vld [vmem:[%s1 + $0x528] sm:$0xff]
    %v202 = vld [vmem:[%s1 + $0x530] sm:$0xff]
    %v203 = vld [vmem:[%s1 + $0x538] sm:$0xff]
    %v204 = vld [vmem:[%s1 + $0x540] sm:$0xff]
    %v205 = vld [vmem:[%s1 + $0x548] sm:$0xff]
    %v206 = vld [vmem:[%s1 + $0x550] sm:$0xff]
    %v207 = vld [vmem:[%s1 + $0x558] sm:$0xff]
    %v208 = vld [vmem:[%s1 + $0x560] sm:$0xff]
    %v209 = vld [vmem:[%s1 + $0x568] sm:$0xff]
    %v210 = vld [vmem:[%s1 + $0x570] sm:$0xff]
    %v211 = vld [vmem:[%s1 + $0x578] sm:$0xff]
    %v212 = vld [vmem:[%s1 + $0x580] sm:$0xff]
    %v213 = vld [vmem:[%s1 + $0x588] sm:$0xff]
    %v214 = vld [vmem:[%s1 + $0x590] sm:$0xff]
    %v215 = vld [vmem:[%s1 + $0x598] sm:$0xff]
    %v216 = vld [vmem:[%s1 + $0x5a0] sm:$0xff]
    %v217 = vld [vmem:[%s1 + $0x5a8] sm:$0xff]
    %v218 = vld [vmem:[%s1 + $0x5b0] sm:$0xff]
    %v219 = vld [vmem:[%s1 + $0x5b8] sm:$0xff]
    %v220 = vld [vmem:[%s1 + $0x5c0] sm:$0xff]
    %v221 = vld [vmem:[%s1 + $0x5c8] sm:$0xff]
    %v222 = vld [vmem:[%s1 + $0x5d0] sm:$0xff]
    %v223 = vld [vmem:[%s1 + $0x5d8] sm:$0xff]
    %v224 = vld [vmem:[%s1 + $0x5e0] sm:$0xff]
    %v225 = vld [vmem:[%s1 + $0x5e8] sm:$0xff]
    %v226 = vld [vmem:[%s1 + $0x5f0] sm:$0xff]
    %v227 = vld [vmem:[%s1 + $0x5f8] sm:$0xff]
    %v228 = vld [vmem:[%s1 + $0x600] sm:$0xff]
    %v229 = vld [vmem:[%s1 + $0x608] sm:$0xff]
    %v230 = vld [vmem:[%s1 + $0x610] sm:$0xff]
    %v231 = vld [vmem:[%s1 + $0x618] sm:$0xff]
    %v232 = vld [vmem:[%s1 + $0x620] sm:$0xff]
    %v233 = vld [vmem:[%s1 + $0x628] sm:$0xff]
    %v234 = vld [vmem:[%s1 + $0x630] sm:$0xff]
    %v235 = vld [vmem:[%s1 + $0x638] sm:$0xff]
    %v236 = vld [vmem:[%s1 + $0x640] sm:$0xff]
    %v237 = vld [vmem:[%s1 + $0x648] sm:$0xff]
    %v238 = vld [vmem:[%s1 + $0x650] sm:$0xff]
    %v239 = vld [vmem:[%s1 + $0x658] sm:$0xff]
    %v240 = vld [vmem:[%s1 + $0x660] sm:$0xff]
    %v241 = vld [vmem:[%s1 + $0x668] sm:$0xff]
    %v242 = vld [vmem:[%s1 + $0x670] sm:$0xff]
    %v243 = vld [vmem:[%s1 + $0x678] sm:$0xff]
    %v244 = vld [vmem:[%s1 + $0x680] sm:$0xff]
    %v245 = vld [vmem:[%s1 + $0x688] sm:$0xff]
    %v246 = vld [vmem:[%s1 + $0x690] sm:$0xff]
    %v247 = vld [vmem:[%s1 + $0x698] sm:$0xff]
    %v248 = vld [vmem:[%s1 + $0x6a0] sm:$0xff]
    %v249 = vld [vmem:[%s1 + $0x6a8] sm:$0xff]
    %v250 = vld [vmem:[%s1 + $0x6b0] sm:$0xff]
    %v251 = vld [vmem:[%s1 + $0x6b8] sm:$0xff]
    %v252 = vld [vmem:[%s1 + $0x6c0] sm:$0xff]
    %v253 = vld [vmem:[%s1 + $0x6c8] sm:$0xff]
    %v254 = vld [vmem:[%s1 + $0x6d0] sm:$0xff]
    %v255 = vld [vmem:[%s1 + $0x6d8] sm:$0xff]
    %v256 = vld [vmem:[%s1 + $0x6e0] sm:$0xff]
    %v257 = vld [vmem:[%s1 + $0x6e8] sm:$0xff]
    %v258 = vld [vmem:[%s1 + $0x6f0] sm:$0xff]
    %v259 = vld [vmem:[%s1 + $0x6f8] sm:$0xff]
    %v260 = vld [vmem:[%s1 + $0x700] sm:$0xff]
    %v261 = vld [vmem:[%s1 + $0x708] sm:$0xff]
    %v262 = vld [vmem:[%s1 + $0x710] sm:$0xff]
    %v263 = vld [vmem:[%s1 + $0x718] sm:$0xff]
    %v264 = vld [vmem:[%s1 + $0x720] sm:$0xff]
    %v265 = vld [vmem:[%s1 + $0x728] sm:$0xff]
    %v266 = vld [vmem:[%s1 + $0x730] sm:$0xff]
    %v267 = vld [vmem:[%s1 + $0x738] sm:$0xff]
    %v268 = vld [vmem:[%s1 + $0x740] sm:$0xff]
    %v269 = vld [vmem:[%s1 + $0x748] sm:$0xff]
    %v270 = vld [vmem:[%s1 + $0x750] sm:$0xff]
    %v271 = vld [vmem:[%s1 + $0x758] sm:$0xff]
    %v272 = vld [vmem:[%s1 + $0x760] sm:$0xff]
    %v273 = vld [vmem:[%s1 + $0x768] sm:$0xff]
    %v274 = vld [vmem:[%s1 + $0x770] sm:$0xff]
    %v275 = vld [vmem:[%s1 + $0x778] sm:$0xff]
    %v276 = vld [vmem:[%s1 + $0x780] sm:$0xff]
    %v277 = vld [vmem:[%s1 + $0x788] sm:$0xff]
    %v278 = vld [vmem:[%s1 + $0x790] sm:$0xff]
    %v279 = vld [vmem:[%s1 + $0x798] sm:$0xff]
    %v280 = vld [vmem:[%s1 + $0x7a0] sm:$0xff]
    %v281 = vld [vmem:[%s1 + $0x7a8] sm:$0xff]
    %v282 = vld [vmem:[%s1 + $0x7b0] sm:$0xff]
    %v283 = vld [vmem:[%s1 + $0x7b8] sm:$0xff]
    %v284 = vld [vmem:[%s1 + $0x7c0] sm:$0xff]
    %v285 = vld [vmem:[%s1 + $0x7c8] sm:$0xff]
    %v286 = vld [vmem:[%s1 + $0x7d0] sm:$0xff]
    %v287 = vld [vmem:[%s1 + $0x7d8] sm:$0xff]
    %v288 = vld [vmem:[%s1 + $0x7e0] sm:$0xff]
    %v289 = vld [vmem:[%s1 + $0x7e8] sm:$0xff]
    %v290 = vld [vmem:[%s1 + $0x7f0] sm:$0xff]
    %v291 = vld [vmem:[%s1 + $0x7f8] sm:$0xff]
    %v292 = vld [vmem:[%s1 + $0x800] sm:$0xff]
    %v293 = vld [vmem:[%s1 + $0x808] sm:$0xff]
    %v294 = vld [vmem:[%s1 + $0x810] sm:$0xff]
    %v295 = vld [vmem:[%s1 + $0x818] sm:$0xff]
    %v296 = vld [vmem:[%s1 + $0x820] sm:$0xff]
    %v297 = vld [vmem:[%s1 + $0x828] sm:$0xff]
    %v298 = vld [vmem:[%s1 + $0x830] sm:$0xff]
    %v299 = vld [vmem:[%s1 + $0x838] sm:$0xff]
    %v300 = vld [vmem:[%s1 + $0x840] sm:$0xff]
    %v301 = vld [vmem:[%s1 + $0x848] sm:$0xff]
    %v302 = vld [vmem:[%s1 + $0x850] sm:$0xff]
    %v303 = vld [vmem:[%s1 + $0x858] sm:$0xff]
    %v304 = vld [vmem:[%s1 + $0x860] sm:$0xff]
    %v305 = vld [vmem:[%s1 + $0x868] sm:$0xff]
    %v306 = vld [vmem:[%s1 + $0x870] sm:$0xff]
    %v307 = vld [vmem:[%s1 + $0x878] sm:$0xff]
    %v308 = vld [vmem:[%s1 + $0x880] sm:$0xff]
    %v309 = vld [vmem:[%s1 + $0x888] sm:$0xff]
    %v310 = vld [vmem:[%s1 + $0x890] sm:$0xff]
    %v311 = vld [vmem:[%s1 + $0x898] sm:$0xff]
    %v312 = vld [vmem:[%s1 + $0x8a0] sm:$0xff]
    %v313 = vld [vmem:[%s1 + $0x8a8] sm:$0xff]
    %v314 = vld [vmem:[%s1 + $0x8b0] sm:$0xff]
    %v315 = vld [vmem:[%s1 + $0x8b8] sm:$0xff]
    %v316 = vld [vmem:[%s1 + $0x8c0] sm:$0xff]
    %v317 = vld [vmem:[%s1 + $0x8c8] sm:$0xff]
    %v318 = vld [vmem:[%s1 + $0x8d0] sm:$0xff]
    %v319 = vld [vmem:[%s1 + $0x8d8] sm:$0xff]
    %v320 = vld [vmem:[%s1 + $0x8e0] sm:$0xff]
    %v321 = vld [vmem:[%s1 + $0x8e8] sm:$0xff]
    %v322 = vld [vmem:[%s1 + $0x8f0] sm:$0xff]
    %v323 = vld [vmem:[%s1 + $0x8f8] sm:$0xff]
    %v324 = vld [vmem:[%s1 + $0x900] sm:$0xff]
    %v325 = vld [vmem:[%s1 + $0x908] sm:$0xff]
    %v326 = vld [vmem:[%s1 + $0x910] sm:$0xff]
    %v327 = vld [vmem:[%s1 + $0x918] sm:$0xff]
    %v328 = vld [vmem:[%s1 + $0x920] sm:$0xff]
    %v329 = vld [vmem:[%s1 + $0x928] sm:$0xff]
    %v330 = vld [vmem:[%s1 + $0x930] sm:$0xff]
    %v331 = vld [vmem:[%s1 + $0x938] sm:$0xff]
    %v332 = vld [vmem:[%s1 + $0x940] sm:$0xff]
    %v333 = vld [vmem:[%s1 + $0x948] sm:$0xff]
    %v334 = vld [vmem:[%s1 + $0x950] sm:$0xff]
    %v335 = vld [vmem:[%s1 + $0x958] sm:$0xff]
    %v336 = vld [vmem:[%s1 + $0x960] sm:$0xff]
    %v337 = vld [vmem:[%s1 + $0x968] sm:$0xff]
    %v338 = vld [vmem:[%s1 + $0x970] sm:$0xff]
    %v339 = vld [vmem:[%s1 + $0x978] sm:$0xff]
    %v340 = vld [vmem:[%s1 + $0x980] sm:$0xff]
    %v341 = vld [vmem:[%s1 + $0x988] sm:$0xff]
    %v342 = vld [vmem:[%s1 + $0x990] sm:$0xff]
    %v343 = vld [vmem:[%s1 + $0x998] sm:$0xff]
    %v344 = vld [vmem:[%s1 + $0x9a0] sm:$0xff]
    %v345 = vld [vmem:[%s1 + $0x9a8] sm:$0xff]
    %v346 = vld [vmem:[%s1 + $0x9b0] sm:$0xff]
    %v347 = vld [vmem:[%s1 + $0x9b8] sm:$0xff]
    %v348 = vld [vmem:[%s1 + $0x9c0] sm:$0xff]
    %v349 = vld [vmem:[%s1 + $0x9c8] sm:$0xff]
    %v350 = vld [vmem:[%s1 + $0x9d0] sm:$0xff]
    %v351 = vld [vmem:[%s1 + $0x9d8] sm:$0xff]
    %v352 = vld [vmem:[%s1 + $0x9e0] sm:$0xff]
    %v353 = vld [vmem:[%s1 + $0x9e8] sm:$0xff]
    %v354 = vld [vmem:[%s1 + $0x9f0] sm:$0xff]
    %v355 = vld [vmem:[%s1 + $0x9f8] sm:$0xff]
    %v356 = vld [vmem:[%s1 + $0xa00] sm:$0xff]
    %v357 = vld [vmem:[%s1 + $0xa08] sm:$0xff]
    %v358 = vld [vmem:[%s1 + $0xa10] sm:$0xff]
    %v359 = vld [vmem:[%s1 + $0xa18] sm:$0xff]
    %v360 = vld [vmem:[%s1 + $0xa20] sm:$0xff]
    %v361 = vld [vmem:[%s1 + $0xa28] sm:$0xff]
    %v362 = vld [vmem:[%s1 + $0xa30] sm:$0xff]
    %v363 = vld [vmem:[%s1 + $0xa38] sm:$0xff]
    %v364 = vld [vmem:[%s1 + $0xa40] sm:$0xff]
    %v365 = vld [vmem:[%s1 + $0xa48] sm:$0xff]
    %v366 = vld [vmem:[%s1 + $0xa50] sm:$0xff]
    %v367 = vld [vmem:[%s1 + $0xa58] sm:$0xff]
    %v368 = vld [vmem:[%s1 + $0xa60] sm:$0xff]
    %v369 = vld [vmem:[%s1 + $0xa68] sm:$0xff]
    %v370 = vld [vmem:[%s1 + $0xa70] sm:$0xff]
    %v371 = vld [vmem:[%s1 + $0xa78] sm:$0xff]
    %v372 = vld [vmem:[%s1 + $0xa80] sm:$0xff]
    %v373 = vld [vmem:[%s1 + $0xa88] sm:$0xff]
    %v374 = vld [vmem:[%s1 + $0xa90] sm:$0xff]
    %v375 = vld [vmem:[%s1 + $0xa98] sm:$0xff]
    %v376 = vld [vmem:[%s1 + $0xaa0] sm:$0xff]
    %v377 = vld [vmem:[%s1 + $0xaa8] sm:$0xff]
    %v378 = vld [vmem:[%s1 + $0xab0] sm:$0xff]
    %v379 = vld [vmem:[%s1 + $0xab8] sm:$0xff]
    %v380 = vld [vmem:[%s1 + $0xac0] sm:$0xff]
    %v381 = vld [vmem:[%s1 + $0xac8] sm:$0xff]
    %v382 = vld [vmem:[%s1 + $0xad0] sm:$0xff]
    %v383 = vld [vmem:[%s1 + $0xad8] sm:$0xff]
    %v384 = vld [vmem:[%s1 + $0xae0] sm:$0xff]
    %v385 = vld [vmem:[%s1 + $0xae8] sm:$0xff]
    %v386 = vld [vmem:[%s1 + $0xaf0] sm:$0xff]
    %v387 = vld [vmem:[%s1 + $0xaf8] sm:$0xff]
    %v388 = vld [vmem:[%s1 + $0xb00] sm:$0xff]
    %v389 = vld [vmem:[%s1 + $0xb08] sm:$0xff]
    %v390 = vld [vmem:[%s1 + $0xb10] sm:$0xff]
    %v391 = vld [vmem:[%s1 + $0xb18] sm:$0xff]
    %v392 = vld [vmem:[%s1 + $0xb20] sm:$0xff]
    %v393 = vld [vmem:[%s1 + $0xb28] sm:$0xff]
    %v394 = vld [vmem:[%s1 + $0xb30] sm:$0xff]
    %v395 = vld [vmem:[%s1 + $0xb38] sm:$0xff]
    %v396 = vld [vmem:[%s1 + $0xb40] sm:$0xff]
    %v397 = vld [vmem:[%s1 + $0xb48] sm:$0xff]
    %v398 = vld [vmem:[%s1 + $0xb50] sm:$0xff]
    %v399 = vld [vmem:[%s1 + $0xb58] sm:$0xff]
    %v400 = vld [vmem:[%s1 + $0xb60] sm:$0xff]
    %v401 = vld [vmem:[%s1 + $0xb68] sm:$0xff]
    %v402 = vld [vmem:[%s1 + $0xb70] sm:$0xff]
    %v403 = vld [vmem:[%s1 + $0xb78] sm:$0xff]
    %v404 = vld [vmem:[%s1 + $0xb80] sm:$0xff]
    %v405 = vld [vmem:[%s1 + $0xb88] sm:$0xff]
    %v406 = vld [vmem:[%s1 + $0xb90] sm:$0xff]
    %v407 = vld [vmem:[%s1 + $0xb98] sm:$0xff]
    %v408 = vld [vmem:[%s1 + $0xba0] sm:$0xff]
    %v409 = vld [vmem:[%s1 + $0xba8] sm:$0xff]
    %v410 = vld [vmem:[%s1 + $0xbb0] sm:$0xff]
    %v411 = vld [vmem:[%s1 + $0xbb8] sm:$0xff]
    %v412 = vld [vmem:[%s1 + $0xbc0] sm:$0xff]
    %v413 = vld [vmem:[%s1 + $0xbc8] sm:$0xff]
    %v414 = vld [vmem:[%s1 + $0xbd0] sm:$0xff]
    %v415 = vld [vmem:[%s1 + $0xbd8] sm:$0xff]
    %v416 = vld [vmem:[%s1 + $0xbe0] sm:$0xff]
    %v417 = vld [vmem:[%s1 + $0xbe8] sm:$0xff]
    %v418 = vld [vmem:[%s1 + $0xbf0] sm:$0xff]
    %v419 = vld [vmem:[%s1 + $0xbf8] sm:$0xff]
    %v420 = vld [vmem:[%s1 + $0xc00] sm:$0xff]
    %v421 = vld [vmem:[%s1 + $0xc08] sm:$0xff]
    %v422 = vld [vmem:[%s1 + $0xc10] sm:$0xff]
    %v423 = vld [vmem:[%s1 + $0xc18] sm:$0xff]
    %v424 = vld [vmem:[%s1 + $0xc20] sm:$0xff]
    %v425 = vld [vmem:[%s1 + $0xc28] sm:$0xff]
    %v426 = vld [vmem:[%s1 + $0xc30] sm:$0xff]
    %v427 = vld [vmem:[%s1 + $0xc38] sm:$0xff]
    %v428 = vld [vmem:[%s1 + $0xc40] sm:$0xff]
    %v429 = vld [vmem:[%s1 + $0xc48] sm:$0xff]
    %v430 = vld [vmem:[%s1 + $0xc50] sm:$0xff]
    %v431 = vld [vmem:[%s1 + $0xc58] sm:$0xff]
    %v432 = vld [vmem:[%s1 + $0xc60] sm:$0xff]
    %v433 = vld [vmem:[%s1 + $0xc68] sm:$0xff]
    %v434 = vld [vmem:[%s1 + $0xc70] sm:$0xff]
    %v435 = vld [vmem:[%s1 + $0xc78] sm:$0xff]
    %v436 = vld [vmem:[%s1 + $0xc80] sm:$0xff]
    %v437 = vld [vmem:[%s1 + $0xc88] sm:$0xff]
    %v438 = vld [vmem:[%s1 + $0xc90] sm:$0xff]
    %v439 = vld [vmem:[%s1 + $0xc98] sm:$0xff]
    %v440 = vld [vmem:[%s1 + $0xca0] sm:$0xff]
    %v441 = vld [vmem:[%s1 + $0xca8] sm:$0xff]
    %v442 = vld [vmem:[%s1 + $0xcb0] sm:$0xff]
    %v443 = vld [vmem:[%s1 + $0xcb8] sm:$0xff]
    %v444 = vld [vmem:[%s1 + $0xcc0] sm:$0xff]
    %v445 = vld [vmem:[%s1 + $0xcc8] sm:$0xff]
    %v446 = vld [vmem:[%s1 + $0xcd0] sm:$0xff]
    %v447 = vld [vmem:[%s1 + $0xcd8] sm:$0xff]
    %v448 = vld [vmem:[%s1 + $0xce0] sm:$0xff]
    %v449 = vld [vmem:[%s1 + $0xce8] sm:$0xff]
    %v450 = vld [vmem:[%s1 + $0xcf0] sm:$0xff]
    %v451 = vld [vmem:[%s1 + $0xcf8] sm:$0xff]
    %v452 = vld [vmem:[%s1 + $0xd00] sm:$0xff]
    %v453 = vld [vmem:[%s1 + $0xd08] sm:$0xff]
    %v454 = vld [vmem:[%s1 + $0xd10] sm:$0xff]
    %v455 = vld [vmem:[%s1 + $0xd18] sm:$0xff]
    %v456 = vld [vmem:[%s1 + $0xd20] sm:$0xff]
    %v457 = vld [vmem:[%s1 + $0xd28] sm:$0xff]
    %v458 = vld [vmem:[%s1 + $0xd30] sm:$0xff]
    %v459 = vld [vmem:[%s1 + $0xd38] sm:$0xff]
    %v460 = vld [vmem:[%s1 + $0xd40] sm:$0xff]
    %v461 = vld [vmem:[%s1 + $0xd48] sm:$0xff]
    %v462 = vld [vmem:[%s1 + $0xd50] sm:$0xff]
    %v463 = vld [vmem:[%s1 + $0xd58] sm:$0xff]
    %v464 = vld [vmem:[%s1 + $0xd60] sm:$0xff]
    %v465 = vld [vmem:[%s1 + $0xd68] sm:$0xff]
    %v466 = vld [vmem:[%s1 + $0xd70] sm:$0xff]
    %v467 = vld [vmem:[%s1 + $0xd78] sm:$0xff]
    %v468 = vld [vmem:[%s1 + $0xd80] sm:$0xff]
    %v469 = vld [vmem:[%s1 + $0xd88] sm:$0xff]
    %v470 = vld [vmem:[%s1 + $0xd90] sm:$0xff]
    %v471 = vld [vmem:[%s1 + $0xd98] sm:$0xff]
    %v472 = vld [vmem:[%s1 + $0xda0] sm:$0xff]
    %v473 = vld [vmem:[%s1 + $0xda8] sm:$0xff]
    %v474 = vld [vmem:[%s1 + $0xdb0] sm:$0xff]
    %v475 = vld [vmem:[%s1 + $0xdb8] sm:$0xff]
    %v476 = vld [vmem:[%s1 + $0xdc0] sm:$0xff]
    %v477 = vld [vmem:[%s1 + $0xdc8] sm:$0xff]
    %v478 = vld [vmem:[%s1 + $0xdd0] sm:$0xff]
    %v479 = vld [vmem:[%s1 + $0xdd8] sm:$0xff]
    %v480 = vld [vmem:[%s1 + $0xde0] sm:$0xff]
    %v481 = vld [vmem:[%s1 + $0xde8] sm:$0xff]
    %v482 = vld [vmem:[%s1 + $0xdf0] sm:$0xff]
    %v483 = vld [vmem:[%s1 + $0xdf8] sm:$0xff]
    %v484 = vld [vmem:[%s1 + $0xe00] sm:$0xff]
    %v485 = vld [vmem:[%s1 + $0xe08] sm:$0xff]
    %v486 = vld [vmem:[%s1 + $0xe10] sm:$0xff]
    %v487 = vld [vmem:[%s1 + $0xe18] sm:$0xff]
    %v488 = vld [vmem:[%s1 + $0xe20] sm:$0xff]
    %v489 = vld [vmem:[%s1 + $0xe28] sm:$0xff]
    %v490 = vld [vmem:[%s1 + $0xe30] sm:$0xff]
    %v491 = vld [vmem:[%s1 + $0xe38] sm:$0xff]
    %v492 = vld [vmem:[%s1 + $0xe40] sm:$0xff]
    %v493 = vld [vmem:[%s1 + $0xe48] sm:$0xff]
    %v494 = vld [vmem:[%s1 + $0xe50] sm:$0xff]
    %v495 = vld [vmem:[%s1 + $0xe58] sm:$0xff]
    %v496 = vld [vmem:[%s1 + $0xe60] sm:$0xff]
    %v497 = vld [vmem:[%s1 + $0xe68] sm:$0xff]
    %v498 = vld [vmem:[%s1 + $0xe70] sm:$0xff]
    %v499 = vld [vmem:[%s1 + $0xe78] sm:$0xff]
    %v500 = vld [vmem:[%s1 + $0xe80] sm:$0xff]
    %v501 = vld [vmem:[%s1 + $0xe88] sm:$0xff]
    %v502 = vld [vmem:[%s1 + $0xe90] sm:$0xff]
    %v503 = vld [vmem:[%s1 + $0xe98] sm:$0xff]
    %v504 = vld [vmem:[%s1 + $0xea0] sm:$0xff]
    %v505 = vld [vmem:[%s1 + $0xea8] sm:$0xff]
    %v506 = vld [vmem:[%s1 + $0xeb0] sm:$0xff]
    %v507 = vld [vmem:[%s1 + $0xeb8] sm:$0xff]
    %v508 = vld [vmem:[%s1 + $0xec0] sm:$0xff]
    %v509 = vld [vmem:[%s1 + $0xec8] sm:$0xff]
    %v510 = vld [vmem:[%s1 + $0xed0] sm:$0xff]
    %v511 = vld [vmem:[%s1 + $0xed8] sm:$0xff]
    %v512 = vld [vmem:[%s1 + $0xee0] sm:$0xff]
    %v513 = vld [vmem:[%s1 + $0xee8] sm:$0xff]
    %v514 = vld [vmem:[%s1 + $0xef0] sm:$0xff]
    %v515 = vld [vmem:[%s1 + $0xef8] sm:$0xff]
    %v516 = vld [vmem:[%s1 + $0xf00] sm:$0xff]
    %v517 = vld [vmem:[%s1 + $0xf08] sm:$0xff]
    %v518 = vld [vmem:[%s1 + $0xf10] sm:$0xff]
    %v519 = vld [vmem:[%s1 + $0xf18] sm:$0xff]
    %v520 = vld [vmem:[%s1 + $0xf20] sm:$0xff]
    %v521 = vld [vmem:[%s1 + $0xf28] sm:$0xff]
    %v522 = vld [vmem:[%s1 + $0xf30] sm:$0xff]
    %v523 = vld [vmem:[%s1 + $0xf38] sm:$0xff]
    %v524 = vld [vmem:[%s1 + $0xf40] sm:$0xff]
    %v525 = vld [vmem:[%s1 + $0xf48] sm:$0xff]
    %v526 = vld [vmem:[%s1 + $0xf50] sm:$0xff]
    %v527 = vld [vmem:[%s1 + $0xf58] sm:$0xff]
    %v528 = vld [vmem:[%s1 + $0xf60] sm:$0xff]
    %v529 = vld [vmem:[%s1 + $0xf68] sm:$0xff]
    %v530 = vld [vmem:[%s1 + $0xf70] sm:$0xff]
    %v531 = vld [vmem:[%s1 + $0xf78] sm:$0xff]
    %v532 = vld [vmem:[%s1 + $0xf80] sm:$0xff]
    %v533 = vld [vmem:[%s1 + $0xf88] sm:$0xff]
    %v534 = vld [vmem:[%s1 + $0xf90] sm:$0xff]
    %v535 = vld [vmem:[%s1 + $0xf98] sm:$0xff]
    %v536 = vld [vmem:[%s1 + $0xfa0] sm:$0xff]
    %v537 = vld [vmem:[%s1 + $0xfa8] sm:$0xff]
    %v538 = vld [vmem:[%s1 + $0xfb0] sm:$0xff]
    %v539 = vld [vmem:[%s1 + $0xfb8] sm:$0xff]
    %v540 = vld [vmem:[%s1 + $0xfc0] sm:$0xff]
    %v541 = vld [vmem:[%s1 + $0xfc8] sm:$0xff]
    %v542 = vld [vmem:[%s1 + $0xfd0] sm:$0xff]
    %v543 = vld [vmem:[%s1 + $0xfd8] sm:$0xff]
    %v544 = vld [vmem:[%s1 + $0xfe0] sm:$0xff]
    %v545 = vld [vmem:[%s1 + $0xfe8] sm:$0xff]
    %v546 = vld [vmem:[%s1 + $0xff0] sm:$0xff]
    %v547 = vld [vmem:[%s1 + $0xff8] sm:$0xff]
    %v548 = vld [vmem:[%s1 + $0x1000] sm:$0xff]
    %v549 = vld [vmem:[%s1 + $0x1008] sm:$0xff]
    %v550 = vld [vmem:[%s1 + $0x1010] sm:$0xff]
    %v551 = vld [vmem:[%s1 + $0x1018] sm:$0xff]
    %v552 = vld [vmem:[%s1 + $0x1020] sm:$0xff]
    %v553 = vld [vmem:[%s1 + $0x1028] sm:$0xff]
    %v554 = vld [vmem:[%s1 + $0x1030] sm:$0xff]
    %v555 = vld [vmem:[%s1 + $0x1038] sm:$0xff]
    %v556 = vld [vmem:[%s1 + $0x1040] sm:$0xff]
    %v557 = vld [vmem:[%s1 + $0x1048] sm:$0xff]
    %v558 = vld [vmem:[%s1 + $0x1050] sm:$0xff]
    %v559 = vld [vmem:[%s1 + $0x1058] sm:$0xff]
    %v560 = vld [vmem:[%s1 + $0x1060] sm:$0xff]
    %v561 = vld [vmem:[%s1 + $0x1068] sm:$0xff]
    %v562 = vld [vmem:[%s1 + $0x1070] sm:$0xff]
    %v563 = vld [vmem:[%s1 + $0x1078] sm:$0xff]
    %v564 = vld [vmem:[%s1 + $0x1080] sm:$0xff]
    %v565 = vld [vmem:[%s1 + $0x1088] sm:$0xff]
    %v566 = vld [vmem:[%s1 + $0x1090] sm:$0xff]
    %v567 = vld [vmem:[%s1 + $0x1098] sm:$0xff]
    %v568 = vld [vmem:[%s1 + $0x10a0] sm:$0xff]
    %v569 = vld [vmem:[%s1 + $0x10a8] sm:$0xff]
    %v570 = vld [vmem:[%s1 + $0x10b0] sm:$0xff]
    %v571 = vld [vmem:[%s1 + $0x10b8] sm:$0xff]
    %v572 = vld [vmem:[%s1 + $0x10c0] sm:$0xff]
    %v573 = vld [vmem:[%s1 + $0x10c8] sm:$0xff]
    %v574 = vld [vmem:[%s1 + $0x10d0] sm:$0xff]
    %v575 = vld [vmem:[%s1 + $0x10d8] sm:$0xff]
    %v576 = vld [vmem:[%s1 + $0x10e0] sm:$0xff]
    %v577 = vld [vmem:[%s1 + $0x10e8] sm:$0xff]
    %v578 = vld [vmem:[%s1 + $0x10f0] sm:$0xff]
    %v579 = vld [vmem:[%s1 + $0x10f8] sm:$0xff]
    %v580 = vld [vmem:[%s1 + $0x1100] sm:$0xff]
    %v581 = vld [vmem:[%s1 + $0x1108] sm:$0xff]
    %v582 = vld [vmem:[%s1 + $0x1110] sm:$0xff]
    %v583 = vld [vmem:[%s1 + $0x1118] sm:$0xff]
    %v584 = vld [vmem:[%s1 + $0x1120] sm:$0xff]
    %v585 = vld [vmem:[%s1 + $0x1128] sm:$0xff]
    %v586 = vld [vmem:[%s1 + $0x1130] sm:$0xff]
    %v587 = vld [vmem:[%s1 + $0x1138] sm:$0xff]
    %v588 = vld [vmem:[%s1 + $0x1140] sm:$0xff]
    %v589 = vld [vmem:[%s1 + $0x1148] sm:$0xff]
    %v590 = vld [vmem:[%s1 + $0x1150] sm:$0xff]
    %v591 = vld [vmem:[%s1 + $0x1158] sm:$0xff]
    %v592 = vld [vmem:[%s1 + $0x1160] sm:$0xff]
    %v593 = vld [vmem:[%s1 + $0x1168] sm:$0xff]
    %v594 = vld [vmem:[%s1 + $0x1170] sm:$0xff]
    %v595 = vld [vmem:[%s1 + $0x1178] sm:$0xff]
    %v596 = vld [vmem:[%s1 + $0x1180] sm:$0xff]
    %v597 = vld [vmem:[%s1 + $0x1188] sm:$0xff]
    %v598 = vld [vmem:[%s1 + $0x1190] sm:$0xff]
    %v599 = vld [vmem:[%s1 + $0x1198] sm:$0xff]
    %v600 = vld [vmem:[%s1 + $0x11a0] sm:$0xff]
    %v601 = vld [vmem:[%s1 + $0x11a8] sm:$0xff]
    %v602 = vld [vmem:[%s1 + $0x11b0] sm:$0xff]
    %v603 = vld [vmem:[%s1 + $0x11b8] sm:$0xff]
    %v604 = vld [vmem:[%s1 + $0x11c0] sm:$0xff]
    %v605 = vld [vmem:[%s1 + $0x11c8] sm:$0xff]
    %v606 = vld [vmem:[%s1 + $0x11d0] sm:$0xff]
    %v607 = vld [vmem:[%s1 + $0x11d8] sm:$0xff]
    %v608 = vld [vmem:[%s1 + $0x11e0] sm:$0xff]
    %v609 = vld [vmem:[%s1 + $0x11e8] sm:$0xff]
    %v610 = vld [vmem:[%s1 + $0x11f0] sm:$0xff]
    %v611 = vld [vmem:[%s1 + $0x11f8] sm:$0xff]
    %v612 = vld [vmem:[%s1 + $0x1200] sm:$0xff]
    %v613 = vld [vmem:[%s1 + $0x1208] sm:$0xff]
    %v614 = vld [vmem:[%s1 + $0x1210] sm:$0xff]
    %v615 = vld [vmem:[%s1 + $0x1218] sm:$0xff]
    %v616 = vld [vmem:[%s1 + $0x1220] sm:$0xff]
    %v617 = vld [vmem:[%s1 + $0x1228] sm:$0xff]
    %v618 = vld [vmem:[%s1 + $0x1230] sm:$0xff]
    %v619 = vld [vmem:[%s1 + $0x1238] sm:$0xff]
    %v620 = vld [vmem:[%s1 + $0x1240] sm:$0xff]
    %v621 = vld [vmem:[%s1 + $0x1248] sm:$0xff]
    %v622 = vld [vmem:[%s1 + $0x1250] sm:$0xff]
    %v623 = vld [vmem:[%s1 + $0x1258] sm:$0xff]
    %v624 = vld [vmem:[%s1 + $0x1260] sm:$0xff]
    %v625 = vld [vmem:[%s1 + $0x1268] sm:$0xff]
    %v626 = vld [vmem:[%s1 + $0x1270] sm:$0xff]
    %v627 = vld [vmem:[%s1 + $0x1278] sm:$0xff]
    %v628 = vld [vmem:[%s1 + $0x1280] sm:$0xff]
    %v629 = vld [vmem:[%s1 + $0x1288] sm:$0xff]
    %v630 = vld [vmem:[%s1 + $0x1290] sm:$0xff]
    %v631 = vld [vmem:[%s1 + $0x1298] sm:$0xff]
    %v632 = vld [vmem:[%s1 + $0x12a0] sm:$0xff]
    %v633 = vld [vmem:[%s1 + $0x12a8] sm:$0xff]
    %v634 = vld [vmem:[%s1 + $0x12b0] sm:$0xff]
    %v635 = vld [vmem:[%s1 + $0x12b8] sm:$0xff]
    %v636 = vld [vmem:[%s1 + $0x12c0] sm:$0xff]
    %v637 = vld [vmem:[%s1 + $0x12c8] sm:$0xff]
    %v638 = vld [vmem:[%s1 + $0x12d0] sm:$0xff]
    %v639 = vld [vmem:[%s1 + $0x12d8] sm:$0xff]
    %v640 = vld [vmem:[%s1 + $0x12e0] sm:$0xff]
    %v641 = vld [vmem:[%s1 + $0x12e8] sm:$0xff]
    %v642 = vld [vmem:[%s1 + $0x12f0] sm:$0xff]
    %v643 = vld [vmem:[%s1 + $0x12f8] sm:$0xff]
    %v644 = vld [vmem:[%s1 + $0x1300] sm:$0xff]
    %v645 = vld [vmem:[%s1 + $0x1308] sm:$0xff]
    %v646 = vld [vmem:[%s1 + $0x1310] sm:$0xff]
    %v647 = vld [vmem:[%s1 + $0x1318] sm:$0xff]
    %v648 = vld [vmem:[%s1 + $0x1320] sm:$0xff]
    %v649 = vld [vmem:[%s1 + $0x1328] sm:$0xff]
    %v650 = vld [vmem:[%s1 + $0x1330] sm:$0xff]
    %v651 = vld [vmem:[%s1 + $0x1338] sm:$0xff]
    %v652 = vld [vmem:[%s1 + $0x1340] sm:$0xff]
    %v653 = vld [vmem:[%s1 + $0x1348] sm:$0xff]
    %v654 = vld [vmem:[%s1 + $0x1350] sm:$0xff]
    %v655 = vld [vmem:[%s1 + $0x1358] sm:$0xff]
    %v656 = vld [vmem:[%s1 + $0x1360] sm:$0xff]
    %v657 = vld [vmem:[%s1 + $0x1368] sm:$0xff]
    %v658 = vld [vmem:[%s1 + $0x1370] sm:$0xff]
    %v659 = vld [vmem:[%s1 + $0x1378] sm:$0xff]
    %v660 = vld [vmem:[%s1 + $0x1380] sm:$0xff]
    %v661 = vld [vmem:[%s1 + $0x1388] sm:$0xff]
    %v662 = vld [vmem:[%s1 + $0x1390] sm:$0xff]
    %v663 = vld [vmem:[%s1 + $0x1398] sm:$0xff]
    %v664 = vld [vmem:[%s1 + $0x13a0] sm:$0xff]
    %v665 = vld [vmem:[%s1 + $0x13a8] sm:$0xff]
    %v666 = vld [vmem:[%s1 + $0x13b0] sm:$0xff]
    %v667 = vld [vmem:[%s1 + $0x13b8] sm:$0xff]
    %v668 = vld [vmem:[%s1 + $0x13c0] sm:$0xff]
    %v669 = vld [vmem:[%s1 + $0x13c8] sm:$0xff]
    %v670 = vld [vmem:[%s1 + $0x13d0] sm:$0xff]
    %v671 = vld [vmem:[%s1 + $0x13d8] sm:$0xff]
    %v672 = vld [vmem:[%s1 + $0x13e0] sm:$0xff]
    %v673 = vld [vmem:[%s1 + $0x13e8] sm:$0xff]
    %v674 = vld [vmem:[%s1 + $0x13f0] sm:$0xff]
    %v675 = vld [vmem:[%s1 + $0x13f8] sm:$0xff]
    %v676 = vld [vmem:[%s1 + $0x1400] sm:$0xff]
    %v677 = vld [vmem:[%s1 + $0x1408] sm:$0xff]
    %v678 = vld [vmem:[%s1 + $0x1410] sm:$0xff]
    %v679 = vld [vmem:[%s1 + $0x1418] sm:$0xff]
    %v680 = vld [vmem:[%s1 + $0x1420] sm:$0xff]
    %v681 = vld [vmem:[%s1 + $0x1428] sm:$0xff]
    %v682 = vld [vmem:[%s1 + $0x1430] sm:$0xff]
    %v683 = vld [vmem:[%s1 + $0x1438] sm:$0xff]
    %v684 = vld [vmem:[%s1 + $0x1440] sm:$0xff]
    %v685 = vld [vmem:[%s1 + $0x1448] sm:$0xff]
    %v686 = vld [vmem:[%s1 + $0x1450] sm:$0xff]
    %v687 = vld [vmem:[%s1 + $0x1458] sm:$0xff]
    %v688 = vld [vmem:[%s1 + $0x1460] sm:$0xff]
    %v689 = vld [vmem:[%s1 + $0x1468] sm:$0xff]
    %v690 = vld [vmem:[%s1 + $0x1470] sm:$0xff]
    %v691 = vld [vmem:[%s1 + $0x1478] sm:$0xff]
    %v692 = vld [vmem:[%s1 + $0x1480] sm:$0xff]
    %v693 = vld [vmem:[%s1 + $0x1488] sm:$0xff]
    %v694 = vld [vmem:[%s1 + $0x1490] sm:$0xff]
    %v695 = vld [vmem:[%s1 + $0x1498] sm:$0xff]
    %v696 = vld [vmem:[%s1 + $0x14a0] sm:$0xff]
    %v697 = vld [vmem:[%s1 + $0x14a8] sm:$0xff]
    %v698 = vld [vmem:[%s1 + $0x14b0] sm:$0xff]
    %v699 = vld [vmem:[%s1 + $0x14b8] sm:$0xff]
    %v700 = vld [vmem:[%s1 + $0x14c0] sm:$0xff]
    %v701 = vld [vmem:[%s1 + $0x14c8] sm:$0xff]
    %v702 = vld [vmem:[%s1 + $0x14d0] sm:$0xff]
    %v703 = vld [vmem:[%s1 + $0x14d8] sm:$0xff]
    %v704 = vld [vmem:[%s1 + $0x14e0] sm:$0xff]
    %v705 = vld [vmem:[%s1 + $0x14e8] sm:$0xff]
    %v706 = vld [vmem:[%s1 + $0x14f0] sm:$0xff]
    %v707 = vld [vmem:[%s1 + $0x14f8] sm:$0xff]
    %v708 = vld [vmem:[%s1 + $0x1500] sm:$0xff]
    %v709 = vld [vmem:[%s1 + $0x1508] sm:$0xff]
    %v710 = vld [vmem:[%s1 + $0x1510] sm:$0xff]
    %v711 = vld [vmem:[%s1 + $0x1518] sm:$0xff]
    %v712 = vld [vmem:[%s1 + $0x1520] sm:$0xff]
    %v713 = vld [vmem:[%s1 + $0x1528] sm:$0xff]
    %v714 = vld [vmem:[%s1 + $0x1530] sm:$0xff]
    %v715 = vld [vmem:[%s1 + $0x1538] sm:$0xff]
    %v716 = vld [vmem:[%s1 + $0x1540] sm:$0xff]
    %v717 = vld [vmem:[%s1 + $0x1548] sm:$0xff]
    %v718 = vld [vmem:[%s1 + $0x1550] sm:$0xff]
    %v719 = vld [vmem:[%s1 + $0x1558] sm:$0xff]
    %v720 = vld [vmem:[%s1 + $0x1560] sm:$0xff]
    %v721 = vld [vmem:[%s1 + $0x1568] sm:$0xff]
    %v722 = vld [vmem:[%s1 + $0x1570] sm:$0xff]
    %v723 = vld [vmem:[%s1 + $0x1578] sm:$0xff]
    %v724 = vld [vmem:[%s1 + $0x1580] sm:$0xff]
    %v725 = vld [vmem:[%s1 + $0x1588] sm:$0xff]
    %v726 = vld [vmem:[%s1 + $0x1590] sm:$0xff]
    %v727 = vld [vmem:[%s1 + $0x1598] sm:$0xff]
    %v728 = vld [vmem:[%s1 + $0x15a0] sm:$0xff]
    %v729 = vld [vmem:[%s1 + $0x15a8] sm:$0xff]
    %v730 = vld [vmem:[%s1 + $0x15b0] sm:$0xff]
    %v731 = vld [vmem:[%s1 + $0x15b8] sm:$0xff]
    %v732 = vld [vmem:[%s1 + $0x15c0] sm:$0xff]
    %v733 = vld [vmem:[%s1 + $0x15c8] sm:$0xff]
    %v734 = vld [vmem:[%s1 + $0x15d0] sm:$0xff]
    %v735 = vld [vmem:[%s1 + $0x15d8] sm:$0xff]
    %v736 = vld [vmem:[%s1 + $0x15e0] sm:$0xff]
    %v737 = vld [vmem:[%s1 + $0x15e8] sm:$0xff]
    %v738 = vld [vmem:[%s1 + $0x15f0] sm:$0xff]
    %v739 = vld [vmem:[%s1 + $0x15f8] sm:$0xff]
    %v740 = vld [vmem:[%s1 + $0x1600] sm:$0xff]
    %v741 = vld [vmem:[%s1 + $0x1608] sm:$0xff]
    %v742 = vld [vmem:[%s1 + $0x1610] sm:$0xff]
    %v743 = vld [vmem:[%s1 + $0x1618] sm:$0xff]
    %v744 = vld [vmem:[%s1 + $0x1620] sm:$0xff]
    %v745 = vld [vmem:[%s1 + $0x1628] sm:$0xff]
    %v746 = vld [vmem:[%s1 + $0x1630] sm:$0xff]
    %v747 = vld [vmem:[%s1 + $0x1638] sm:$0xff]
    %v748 = vld [vmem:[%s1 + $0x1640] sm:$0xff]
    %v749 = vld [vmem:[%s1 + $0x1648] sm:$0xff]
    %v750 = vld [vmem:[%s1 + $0x1650] sm:$0xff]
    %v751 = vld [vmem:[%s1 + $0x1658] sm:$0xff]
    %v752 = vld [vmem:[%s1 + $0x1660] sm:$0xff]
    %v753 = vld [vmem:[%s1 + $0x1668] sm:$0xff]
    %v754 = vld [vmem:[%s1 + $0x1670] sm:$0xff]
    %v755 = vld [vmem:[%s1 + $0x1678] sm:$0xff]
    %v756 = vld [vmem:[%s1 + $0x1680] sm:$0xff]
    %v757 = vld [vmem:[%s1 + $0x1688] sm:$0xff]
    %v758 = vld [vmem:[%s1 + $0x1690] sm:$0xff]
    %v759 = vld [vmem:[%s1 + $0x1698] sm:$0xff]
    %v760 = vld [vmem:[%s1 + $0x16a0] sm:$0xff]
    %v761 = vld [vmem:[%s1 + $0x16a8] sm:$0xff]
    %v762 = vld [vmem:[%s1 + $0x16b0] sm:$0xff]
    %v763 = vld [vmem:[%s1 + $0x16b8] sm:$0xff]
    %v764 = vld [vmem:[%s1 + $0x16c0] sm:$0xff]
    %v765 = vld [vmem:[%s1 + $0x16c8] sm:$0xff]
    %v766 = vld [vmem:[%s1 + $0x16d0] sm:$0xff]
    %v767 = vld [vmem:[%s1 + $0x16d8] sm:$0xff]
    %v768 = vld [vmem:[%s1 + $0x16e0] sm:$0xff]
    %v769 = vld [vmem:[%s1 + $0x16e8] sm:$0xff]
    %v770 = vld [vmem:[%s1 + $0x16f0] sm:$0xff]
    %v771 = vld [vmem:[%s1 + $0x16f8] sm:$0xff]
    %v772 = vld [vmem:[%s1 + $0x1700] sm:$0xff]
    %v773 = vld [vmem:[%s1 + $0x1708] sm:$0xff]
    %v774 = vld [vmem:[%s1 + $0x1710] sm:$0xff]
    %v775 = vld [vmem:[%s1 + $0x1718] sm:$0xff]
    %v776 = vld [vmem:[%s1 + $0x1720] sm:$0xff]
    %v777 = vld [vmem:[%s1 + $0x1728] sm:$0xff]
    %v778 = vld [vmem:[%s1 + $0x1730] sm:$0xff]
    %v779 = vld [vmem:[%s1 + $0x1738] sm:$0xff]
    %v780 = vld [vmem:[%s1 + $0x1740] sm:$0xff]
    %v781 = vld [vmem:[%s1 + $0x1748] sm:$0xff]
    %v782 = vld [vmem:[%s1 + $0x1750] sm:$0xff]
    %v783 = vld [vmem:[%s1 + $0x1758] sm:$0xff]
    %v784 = vld [vmem:[%s1 + $0x1760] sm:$0xff]
    %v785 = vld [vmem:[%s1 + $0x1768] sm:$0xff]
    %v786 = vld [vmem:[%s1 + $0x1770] sm:$0xff]
    %v787 = vld [vmem:[%s1 + $0x1778] sm:$0xff]
    %v788 = vld [vmem:[%s1 + $0x1780] sm:$0xff]
    %v789 = vld [vmem:[%s1 + $0x1788] sm:$0xff]
    %v790 = vld [vmem:[%s1 + $0x1790] sm:$0xff]
    %v791 = vld [vmem:[%s1 + $0x1798] sm:$0xff]
    %v792 = vld [vmem:[%s1 + $0x17a0] sm:$0xff]
    %v793 = vld [vmem:[%s1 + $0x17a8] sm:$0xff]
    %v794 = vld [vmem:[%s1 + $0x17b0] sm:$0xff]
    %v795 = vld [vmem:[%s1 + $0x17b8] sm:$0xff]
    %v796 = vld [vmem:[%s1 + $0x17c0] sm:$0xff]
    %v797 = vld [vmem:[%s1 + $0x17c8] sm:$0xff]
    %v798 = vld [vmem:[%s1 + $0x17d0] sm:$0xff]
    %v799 = vld [vmem:[%s1 + $0x17d8] sm:$0xff]
    %v800 = vld [vmem:[%s1 + $0x17e0] sm:$0xff]
    %v801 = vld [vmem:[%s1 + $0x17e8] sm:$0xff]
    %v802 = vld [vmem:[%s1 + $0x17f0] sm:$0xff]
    %v803 = vld [vmem:[%s1 + $0x17f8] sm:$0xff]
    %v804 = vld [vmem:[%s1 + $0x1800] sm:$0xff]
    %v805 = vld [vmem:[%s1 + $0x1808] sm:$0xff]
    %v806 = vld [vmem:[%s1 + $0x1810] sm:$0xff]
    %v807 = vld [vmem:[%s1 + $0x1818] sm:$0xff]
    %v808 = vld [vmem:[%s1 + $0x1820] sm:$0xff]
    %v809 = vld [vmem:[%s1 + $0x1828] sm:$0xff]
    %v810 = vld [vmem:[%s1 + $0x1830] sm:$0xff]
    %v811 = vld [vmem:[%s1 + $0x1838] sm:$0xff]
    %v812 = vld [vmem:[%s1 + $0x1840] sm:$0xff]
    %v813 = vld [vmem:[%s1 + $0x1848] sm:$0xff]
    %v814 = vld [vmem:[%s1 + $0x1850] sm:$0xff]
    %v815 = vld [vmem:[%s1 + $0x1858] sm:$0xff]
    %v816 = vld [vmem:[%s1 + $0x1860] sm:$0xff]
    %v817 = vld [vmem:[%s1 + $0x1868] sm:$0xff]
    %v818 = vld [vmem:[%s1 + $0x1870] sm:$0xff]
    %v819 = vld [vmem:[%s1 + $0x1878] sm:$0xff]
    %v820 = vld [vmem:[%s1 + $0x1880] sm:$0xff]
    %v821 = vld [vmem:[%s1 + $0x1888] sm:$0xff]
    %v822 = vld [vmem:[%s1 + $0x1890] sm:$0xff]
    %v823 = vld [vmem:[%s1 + $0x1898] sm:$0xff]
    %v824 = vld [vmem:[%s1 + $0x18a0] sm:$0xff]
    %v825 = vld [vmem:[%s1 + $0x18a8] sm:$0xff]
    %v826 = vld [vmem:[%s1 + $0x18b0] sm:$0xff]
    %v827 = vld [vmem:[%s1 + $0x18b8] sm:$0xff]
    %v828 = vld [vmem:[%s1 + $0x18c0] sm:$0xff]
    %v829 = vld [vmem:[%s1 + $0x18c8] sm:$0xff]
    %v830 = vld [vmem:[%s1 + $0x18d0] sm:$0xff]
    %v831 = vld [vmem:[%s1 + $0x18d8] sm:$0xff]
    %v832 = vld [vmem:[%s1 + $0x18e0] sm:$0xff]
    %v833 = vld [vmem:[%s1 + $0x18e8] sm:$0xff]
    %v834 = vld [vmem:[%s1 + $0x18f0] sm:$0xff]
    %v835 = vld [vmem:[%s1 + $0x18f8] sm:$0xff]
    %v836 = vld [vmem:[%s1 + $0x1900] sm:$0xff]
    %v837 = vld [vmem:[%s1 + $0x1908] sm:$0xff]
    %v838 = vld [vmem:[%s1 + $0x1910] sm:$0xff]
    %v839 = vld [vmem:[%s1 + $0x1918] sm:$0xff]
    %v840 = vld [vmem:[%s1 + $0x1920] sm:$0xff]
    %v841 = vld [vmem:[%s1 + $0x1928] sm:$0xff]
    %v842 = vld [vmem:[%s1 + $0x1930] sm:$0xff]
    %v843 = vld [vmem:[%s1 + $0x1938] sm:$0xff]
    %v844 = vld [vmem:[%s1 + $0x1940] sm:$0xff]
    %v845 = vld [vmem:[%s1 + $0x1948] sm:$0xff]
    %v846 = vld [vmem:[%s1 + $0x1950] sm:$0xff]
    %v847 = vld [vmem:[%s1 + $0x1958] sm:$0xff]
    %v848 = vld [vmem:[%s1 + $0x1960] sm:$0xff]
    %v849 = vld [vmem:[%s1 + $0x1968] sm:$0xff]
    %v850 = vld [vmem:[%s1 + $0x1970] sm:$0xff]
    %v851 = vld [vmem:[%s1 + $0x1978] sm:$0xff]
    %v852 = vld [vmem:[%s1 + $0x1980] sm:$0xff]
    %v853 = vld [vmem:[%s1 + $0x1988] sm:$0xff]
    %v854 = vld [vmem:[%s1 + $0x1990] sm:$0xff]
    %v855 = vld [vmem:[%s1 + $0x1998] sm:$0xff]
    %v856 = vld [vmem:[%s1 + $0x19a0] sm:$0xff]
    %v857 = vld [vmem:[%s1 + $0x19a8] sm:$0xff]
    %v858 = vld [vmem:[%s1 + $0x19b0] sm:$0xff]
    %v859 = vld [vmem:[%s1 + $0x19b8] sm:$0xff]
    %v860 = vld [vmem:[%s1 + $0x19c0] sm:$0xff]
    %v861 = vld [vmem:[%s1 + $0x19c8] sm:$0xff]
    %v862 = vld [vmem:[%s1 + $0x19d0] sm:$0xff]
    %v863 = vld [vmem:[%s1 + $0x19d8] sm:$0xff]
    %v864 = vld [vmem:[%s1 + $0x19e0] sm:$0xff]
    %v865 = vld [vmem:[%s1 + $0x19e8] sm:$0xff]
    %v866 = vld [vmem:[%s1 + $0x19f0] sm:$0xff]
    %v867 = vld [vmem:[%s1 + $0x19f8] sm:$0xff]
    %v868 = vld [vmem:[%s1 + $0x1a00] sm:$0xff]
    %v869 = vld [vmem:[%s1 + $0x1a08] sm:$0xff]
    %v870 = vld [vmem:[%s1 + $0x1a10] sm:$0xff]
    %v871 = vld [vmem:[%s1 + $0x1a18] sm:$0xff]
    %v872 = vld [vmem:[%s1 + $0x1a20] sm:$0xff]
    %v873 = vld [vmem:[%s1 + $0x1a28] sm:$0xff]
    %v874 = vld [vmem:[%s1 + $0x1a30] sm:$0xff]
    %v875 = vld [vmem:[%s1 + $0x1a38] sm:$0xff]
    %v876 = vld [vmem:[%s1 + $0x1a40] sm:$0xff]
    %v877 = vld [vmem:[%s1 + $0x1a48] sm:$0xff]
    %v878 = vld [vmem:[%s1 + $0x1a50] sm:$0xff]
    %v879 = vld [vmem:[%s1 + $0x1a58] sm:$0xff]
    %v880 = vld [vmem:[%s1 + $0x1a60] sm:$0xff]
    %v881 = vld [vmem:[%s1 + $0x1a68] sm:$0xff]
    %v882 = vld [vmem:[%s1 + $0x1a70] sm:$0xff]
    %v883 = vld [vmem:[%s1 + $0x1a78] sm:$0xff]
    %v884 = vld [vmem:[%s1 + $0x1a80] sm:$0xff]
    %v885 = vld [vmem:[%s1 + $0x1a88] sm:$0xff]
    %v886 = vld [vmem:[%s1 + $0x1a90] sm:$0xff]
    %v887 = vld [vmem:[%s1 + $0x1a98] sm:$0xff]
    %v888 = vld [vmem:[%s1 + $0x1aa0] sm:$0xff]
    %v889 = vld [vmem:[%s1 + $0x1aa8] sm:$0xff]
    %v890 = vld [vmem:[%s1 + $0x1ab0] sm:$0xff]
    %v891 = vld [vmem:[%s1 + $0x1ab8] sm:$0xff]
    %v892 = vld [vmem:[%s1 + $0x1ac0] sm:$0xff]
    %v893 = vld [vmem:[%s1 + $0x1ac8] sm:$0xff]
    %v894 = vld [vmem:[%s1 + $0x1ad0] sm:$0xff]
    %v895 = vld [vmem:[%s1 + $0x1ad8] sm:$0xff]
    %v896 = vld [vmem:[%s1 + $0x1ae0] sm:$0xff]
    %v897 = vld [vmem:[%s1 + $0x1ae8] sm:$0xff]
    %v898 = vld [vmem:[%s1 + $0x1af0] sm:$0xff]
    %v899 = vld [vmem:[%s1 + $0x1af8] sm:$0xff]
    %v900 = vld [vmem:[%s1 + $0x1b00] sm:$0xff]
    %v901 = vld [vmem:[%s1 + $0x1b08] sm:$0xff]
    %v902 = vld [vmem:[%s1 + $0x1b10] sm:$0xff]
    %v903 = vld [vmem:[%s1 + $0x1b18] sm:$0xff]
    %v904 = vld [vmem:[%s1 + $0x1b20] sm:$0xff]
    %v905 = vld [vmem:[%s1 + $0x1b28] sm:$0xff]
    %v906 = vld [vmem:[%s1 + $0x1b30] sm:$0xff]
    %v907 = vld [vmem:[%s1 + $0x1b38] sm:$0xff]
    %v908 = vld [vmem:[%s1 + $0x1b40] sm:$0xff]
    %v909 = vld [vmem:[%s1 + $0x1b48] sm:$0xff]
    %v910 = vld [vmem:[%s1 + $0x1b50] sm:$0xff]
    %v911 = vld [vmem:[%s1 + $0x1b58] sm:$0xff]
    %v912 = vld [vmem:[%s1 + $0x1b60] sm:$0xff]
    %v913 = vld [vmem:[%s1 + $0x1b68] sm:$0xff]
    %v914 = vld [vmem:[%s1 + $0x1b70] sm:$0xff]
    %v915 = vld [vmem:[%s1 + $0x1b78] sm:$0xff]
    %v916 = vld [vmem:[%s1 + $0x1b80] sm:$0xff]
    %v917 = vld [vmem:[%s1 + $0x1b88] sm:$0xff]
    %v918 = vld [vmem:[%s1 + $0x1b90] sm:$0xff]
    %v919 = vld [vmem:[%s1 + $0x1b98] sm:$0xff]
    %v920 = vld [vmem:[%s1 + $0x1ba0] sm:$0xff]
    %v921 = vld [vmem:[%s1 + $0x1ba8] sm:$0xff]
    %v922 = vld [vmem:[%s1 + $0x1bb0] sm:$0xff]
    %v923 = vld [vmem:[%s1 + $0x1bb8] sm:$0xff]
    %v924 = vld [vmem:[%s1 + $0x1bc0] sm:$0xff]
    %v925 = vld [vmem:[%s1 + $0x1bc8] sm:$0xff]
    %v926 = vld [vmem:[%s1 + $0x1bd0] sm:$0xff]
    %v927 = vld [vmem:[%s1 + $0x1bd8] sm:$0xff]
    %v928 = vld [vmem:[%s1 + $0x1be0] sm:$0xff]
    %v929 = vld [vmem:[%s1 + $0x1be8] sm:$0xff]
    %v930 = vld [vmem:[%s1 + $0x1bf0] sm:$0xff]
    %v931 = vld [vmem:[%s1 + $0x1bf8] sm:$0xff]
    %v932 = vld [vmem:[%s1 + $0x1c00] sm:$0xff]
    %v933 = vld [vmem:[%s1 + $0x1c08] sm:$0xff]
    %v934 = vld [vmem:[%s1 + $0x1c10] sm:$0xff]
    %v935 = vld [vmem:[%s1 + $0x1c18] sm:$0xff]
    %v936 = vld [vmem:[%s1 + $0x1c20] sm:$0xff]
    %v937 = vld [vmem:[%s1 + $0x1c28] sm:$0xff]
    %v938 = vld [vmem:[%s1 + $0x1c30] sm:$0xff]
    %v939 = vld [vmem:[%s1 + $0x1c38] sm:$0xff]
    %v940 = vld [vmem:[%s1 + $0x1c40] sm:$0xff]
    %v941 = vld [vmem:[%s1 + $0x1c48] sm:$0xff]
    %v942 = vld [vmem:[%s1 + $0x1c50] sm:$0xff]
    %v943 = vld [vmem:[%s1 + $0x1c58] sm:$0xff]
    %v944 = vld [vmem:[%s1 + $0x1c60] sm:$0xff]
    %v945 = vld [vmem:[%s1 + $0x1c68] sm:$0xff]
    %v946 = vld [vmem:[%s1 + $0x1c70] sm:$0xff]
    %v947 = vld [vmem:[%s1 + $0x1c78] sm:$0xff]
    %v948 = vld [vmem:[%s1 + $0x1c80] sm:$0xff]
    %v949 = vld [vmem:[%s1 + $0x1c88] sm:$0xff]
    %v950 = vld [vmem:[%s1 + $0x1c90] sm:$0xff]
    %v951 = vld [vmem:[%s1 + $0x1c98] sm:$0xff]
    %v952 = vld [vmem:[%s1 + $0x1ca0] sm:$0xff]
    %v953 = vld [vmem:[%s1 + $0x1ca8] sm:$0xff]
    %v954 = vld [vmem:[%s1 + $0x1cb0] sm:$0xff]
    %v955 = vld [vmem:[%s1 + $0x1cb8] sm:$0xff]
    %v956 = vld [vmem:[%s1 + $0x1cc0] sm:$0xff]
    %v957 = vld [vmem:[%s1 + $0x1cc8] sm:$0xff]
    %v958 = vld [vmem:[%s1 + $0x1cd0] sm:$0xff]
    %v959 = vld [vmem:[%s1 + $0x1cd8] sm:$0xff]
    %v960 = vld [vmem:[%s1 + $0x1ce0] sm:$0xff]
    %v961 = vld [vmem:[%s1 + $0x1ce8] sm:$0xff]
    %v962 = vld [vmem:[%s1 + $0x1cf0] sm:$0xff]
    %v963 = vld [vmem:[%s1 + $0x1cf8] sm:$0xff]
    %v964 = vld [vmem:[%s1 + $0x1d00] sm:$0xff]
    %v965 = vld [vmem:[%s1 + $0x1d08] sm:$0xff]
    %v966 = vld [vmem:[%s1 + $0x1d10] sm:$0xff]
    %v967 = vld [vmem:[%s1 + $0x1d18] sm:$0xff]
    %v968 = vld [vmem:[%s1 + $0x1d20] sm:$0xff]
    %v969 = vld [vmem:[%s1 + $0x1d28] sm:$0xff]
    %v970 = vld [vmem:[%s1 + $0x1d30] sm:$0xff]
    %v971 = vld [vmem:[%s1 + $0x1d38] sm:$0xff]
    %v972 = vld [vmem:[%s1 + $0x1d40] sm:$0xff]
    %v973 = vld [vmem:[%s1 + $0x1d48] sm:$0xff]
    %v974 = vld [vmem:[%s1 + $0x1d50] sm:$0xff]
    %v975 = vld [vmem:[%s1 + $0x1d58] sm:$0xff]
    %v976 = vld [vmem:[%s1 + $0x1d60] sm:$0xff]
    %v977 = vld [vmem:[%s1 + $0x1d68] sm:$0xff]
    %v978 = vld [vmem:[%s1 + $0x1d70] sm:$0xff]
    %v979 = vld [vmem:[%s1 + $0x1d78] sm:$0xff]
    %v980 = vld [vmem:[%s1 + $0x1d80] sm:$0xff]
    %v981 = vld [vmem:[%s1 + $0x1d88] sm:$0xff]
    %v982 = vld [vmem:[%s1 + $0x1d90] sm:$0xff]
    %v983 = vld [vmem:[%s1 + $0x1d98] sm:$0xff]
    %v984 = vld [vmem:[%s1 + $0x1da0] sm:$0xff]
    %v985 = vld [vmem:[%s1 + $0x1da8] sm:$0xff]
    %v986 = vld [vmem:[%s1 + $0x1db0] sm:$0xff]
    %v987 = vld [vmem:[%s1 + $0x1db8] sm:$0xff]
    %v988 = vld [vmem:[%s1 + $0x1dc0] sm:$0xff]
    %v989 = vld [vmem:[%s1 + $0x1dc8] sm:$0xff]
    %v990 = vld [vmem:[%s1 + $0x1dd0] sm:$0xff]
    %v991 = vld [vmem:[%s1 + $0x1dd8] sm:$0xff]
    %v992 = vld [vmem:[%s1 + $0x1de0] sm:$0xff]
    %v993 = vld [vmem:[%s1 + $0x1de8] sm:$0xff]
    %v994 = vld [vmem:[%s1 + $0x1df0] sm:$0xff]
    %v995 = vld [vmem:[%s1 + $0x1df8] sm:$0xff]
    %v996 = vld [vmem:[%s1 + $0x1e00] sm:$0xff]
    %v997 = vld [vmem:[%s1 + $0x1e08] sm:$0xff]
    %v998 = vld [vmem:[%s1 + $0x1e10] sm:$0xff]
    %v999 = vld [vmem:[%s1 + $0x1e18] sm:$0xff]
    %v1000 = vld [vmem:[%s1 + $0x1e20] sm:$0xff]
    %v1001 = vld [vmem:[%s1 + $0x1e28] sm:$0xff]
    %v1002 = vld [vmem:[%s1 + $0x1e30] sm:$0xff]
    %v1003 = vld [vmem:[%s1 + $0x1e38] sm:$0xff]
    %v1004 = vld [vmem:[%s1 + $0x1e40] sm:$0xff]
    %v1005 = vld [vmem:[%s1 + $0x1e48] sm:$0xff]
    %v1006 = vld [vmem:[%s1 + $0x1e50] sm:$0xff]
    %v1007 = vld [vmem:[%s1 + $0x1e58] sm:$0xff]
    %v1008 = vld [vmem:[%s1 + $0x1e60] sm:$0xff]
    %v1009 = vld [vmem:[%s1 + $0x1e68] sm:$0xff]
    %v1010 = vld [vmem:[%s1 + $0x1e70] sm:$0xff]
    %v1011 = vld [vmem:[%s1 + $0x1e78] sm:$0xff]
    %v1012 = vld [vmem:[%s1 + $0x1e80] sm:$0xff]
    %v1013 = vld [vmem:[%s1 + $0x1e88] sm:$0xff]
    %v1014 = vld [vmem:[%s1 + $0x1e90] sm:$0xff]
    %v1015 = vld [vmem:[%s1 + $0x1e98] sm:$0xff]
    %v1016 = vld [vmem:[%s1 + $0x1ea0] sm:$0xff]
    %v1017 = vld [vmem:[%s1 + $0x1ea8] sm:$0xff]
    %v1018 = vld [vmem:[%s1 + $0x1eb0] sm:$0xff]
    %v1019 = vld [vmem:[%s1 + $0x1eb8] sm:$0xff]
    %v1020 = vld [vmem:[%s1 + $0x1ec0] sm:$0xff]
    %v1021 = vld [vmem:[%s1 + $0x1ec8] sm:$0xff]
    %v1022 = vld [vmem:[%s1 + $0x1ed0] sm:$0xff]
    %v1023 = vld [vmem:[%s1 + $0x1ed8] sm:$0xff]
    %v1024 = vld [vmem:[%s1 + $0x1ee0] sm:$0xff]
    %v1025 = vld [vmem:[%s1 + $0x1ee8] sm:$0xff]
    %v1026 = vld [vmem:[%s1 + $0x1ef0] sm:$0xff]
    %v1027 = vld [vmem:[%s1 + $0x1ef8] sm:$0xff]
    %v1028 = vld [vmem:[%s1 + $0x1f00] sm:$0xff]
    %v1029 = vld [vmem:[%s1 + $0x1f08] sm:$0xff]
    %v1030 = vld [vmem:[%s1 + $0x1f10] sm:$0xff]
    %v1031 = vld [vmem:[%s1 + $0x1f18] sm:$0xff]
    %v1032 = vld [vmem:[%s1 + $0x1f20] sm:$0xff]
    %v1033 = vld [vmem:[%s1 + $0x1f28] sm:$0xff]
    %v1034 = vld [vmem:[%s1 + $0x1f30] sm:$0xff]
    %v1035 = vld [vmem:[%s1 + $0x1f38] sm:$0xff]
    %v1036 = vld [vmem:[%s1 + $0x1f40] sm:$0xff]
    %v1037 = vld [vmem:[%s1 + $0x1f48] sm:$0xff]
    %v1038 = vld [vmem:[%s1 + $0x1f50] sm:$0xff]
    %v1039 = vld [vmem:[%s1 + $0x1f58] sm:$0xff]
    %v1040 = vld [vmem:[%s1 + $0x1f60] sm:$0xff]
    %v1041 = vld [vmem:[%s1 + $0x1f68] sm:$0xff]
    %v1042 = vld [vmem:[%s1 + $0x1f70] sm:$0xff]
    %v1043 = vld [vmem:[%s1 + $0x1f78] sm:$0xff]
    %v1044 = vld [vmem:[%s1 + $0x1f80] sm:$0xff]
    %v1045 = vld [vmem:[%s1 + $0x1f88] sm:$0xff]
    %v1046 = vld [vmem:[%s1 + $0x1f90] sm:$0xff]
    %v1047 = vld [vmem:[%s1 + $0x1f98] sm:$0xff]
    %v1048 = vld [vmem:[%s1 + $0x1fa0] sm:$0xff]
    %v1049 = vld [vmem:[%s1 + $0x1fa8] sm:$0xff]
    %v1050 = vld [vmem:[%s1 + $0x1fb0] sm:$0xff]
    %v1051 = vld [vmem:[%s1 + $0x1fb8] sm:$0xff]
    %v1052 = vld [vmem:[%s1 + $0x1fc0] sm:$0xff]
    %v1053 = vld [vmem:[%s1 + $0x1fc8] sm:$0xff]
    %v1054 = vld [vmem:[%s1 + $0x1fd0] sm:$0xff]
    %v1055 = vld [vmem:[%s1 + $0x1fd8] sm:$0xff]
    %v1056 = vld [vmem:[%s1 + $0x1fe0] sm:$0xff]
    %v1057 = vld [vmem:[%s1 + $0x1fe8] sm:$0xff]
    %v1058 = vld [vmem:[%s1 + $0x1ff0] sm:$0xff]
    %v1059 = vld [vmem:[%s1 + $0x1ff8] sm:$0xff]
    %v1060 = vld [vmem:[%s1 + $0x2000] sm:$0xff]
    %v1061 = vld [vmem:[%s1 + $0x2008] sm:$0xff]
    %v1062 = vld [vmem:[%s1 + $0x2010] sm:$0xff]
    %v1063 = vld [vmem:[%s1 + $0x2018] sm:$0xff]
    %v1064 = vld [vmem:[%s1 + $0x2020] sm:$0xff]
    %v1065 = vld [vmem:[%s1 + $0x2028] sm:$0xff]
    %v1066 = vld [vmem:[%s1 + $0x2030] sm:$0xff]
    %v1067 = vld [vmem:[%s1 + $0x2038] sm:$0xff]
    %v1068 = vld [vmem:[%s1 + $0x2040] sm:$0xff]
    %v1069 = vld [vmem:[%s1 + $0x2048] sm:$0xff]
    %v1070 = vld [vmem:[%s1 + $0x2050] sm:$0xff]
    %v1071 = vld [vmem:[%s1 + $0x2058] sm:$0xff]
    %v1072 = vld [vmem:[%s1 + $0x2060] sm:$0xff]
    %v1073 = vld [vmem:[%s1 + $0x2068] sm:$0xff]
    %v1074 = vld [vmem:[%s1 + $0x2070] sm:$0xff]
    %v1075 = vld [vmem:[%s1 + $0x2078] sm:$0xff]
    %v1076 = vld [vmem:[%s1 + $0x2080] sm:$0xff]
    %v1077 = vld [vmem:[%s1 + $0x2088] sm:$0xff]
    %v1078 = vld [vmem:[%s1 + $0x2090] sm:$0xff]
    %v1079 = vld [vmem:[%s1 + $0x2098] sm:$0xff]
    %v1080 = vld [vmem:[%s1 + $0x20a0] sm:$0xff]
    %v1081 = vld [vmem:[%s1 + $0x20a8] sm:$0xff]
    %v1082 = vld [vmem:[%s1 + $0x20b0] sm:$0xff]
    %v1083 = vld [vmem:[%s1 + $0x20b8] sm:$0xff]
    %v1084 = vld [vmem:[%s1 + $0x20c0] sm:$0xff]
    %v1085 = vld [vmem:[%s1 + $0x20c8] sm:$0xff]
    %v1086 = vld [vmem:[%s1 + $0x20d0] sm:$0xff]
    %v1087 = vld [vmem:[%s1 + $0x20d8] sm:$0xff]
    %v1088 = vld [vmem:[%s1 + $0x20e0] sm:$0xff]
    %v1089 = vld [vmem:[%s1 + $0x20e8] sm:$0xff]
    %v1090 = vld [vmem:[%s1 + $0x20f0] sm:$0xff]
    %v1091 = vld [vmem:[%s1 + $0x20f8] sm:$0xff]
    %v1092 = vld [vmem:[%s1 + $0x2100] sm:$0xff]
    %v1093 = vld [vmem:[%s1 + $0x2108] sm:$0xff]
    %v1094 = vld [vmem:[%s1 + $0x2110] sm:$0xff]
    %v1095 = vld [vmem:[%s1 + $0x2118] sm:$0xff]
    %v1096 = vld [vmem:[%s1 + $0x2120] sm:$0xff]
    %v1097 = vld [vmem:[%s1 + $0x2128] sm:$0xff]
    %v1098 = vld [vmem:[%s1 + $0x2130] sm:$0xff]
    %v1099 = vld [vmem:[%s1 + $0x2138] sm:$0xff]
    %v1100 = vld [vmem:[%s1 + $0x2140] sm:$0xff]
    %v1101 = vld [vmem:[%s1 + $0x2148] sm:$0xff]
    %v1102 = vld [vmem:[%s1 + $0x2150] sm:$0xff]
    %v1103 = vld [vmem:[%s1 + $0x2158] sm:$0xff]
    %v1104 = vld [vmem:[%s1 + $0x2160] sm:$0xff]
    %v1105 = vld [vmem:[%s1 + $0x2168] sm:$0xff]
    %v1106 = vld [vmem:[%s1 + $0x2170] sm:$0xff]
    %v1107 = vld [vmem:[%s1 + $0x2178] sm:$0xff]
    %v1108 = vld [vmem:[%s1 + $0x2180] sm:$0xff]
    %v1109 = vld [vmem:[%s1 + $0x2188] sm:$0xff]
    %v1110 = vld [vmem:[%s1 + $0x2190] sm:$0xff]
    %v1111 = vld [vmem:[%s1 + $0x2198] sm:$0xff]
    %v1112 = vld [vmem:[%s1 + $0x21a0] sm:$0xff]
    %v1113 = vld [vmem:[%s1 + $0x21a8] sm:$0xff]
    %v1114 = vld [vmem:[%s1 + $0x21b0] sm:$0xff]
    %v1115 = vld [vmem:[%s1 + $0x21b8] sm:$0xff]
    %v1116 = vld [vmem:[%s1 + $0x21c0] sm:$0xff]
    %v1117 = vld [vmem:[%s1 + $0x21c8] sm:$0xff]
    %v1118 = vld [vmem:[%s1 + $0x21d0] sm:$0xff]
    %v1119 = vld [vmem:[%s1 + $0x21d8] sm:$0xff]
    %v1120 = vld [vmem:[%s1 + $0x21e0] sm:$0xff]
    %v1121 = vld [vmem:[%s1 + $0x21e8] sm:$0xff]
    %v1122 = vld [vmem:[%s1 + $0x21f0] sm:$0xff]
    %v1123 = vld [vmem:[%s1 + $0x21f8] sm:$0xff]
    %v1124 = vld [vmem:[%s1 + $0x2200] sm:$0xff]
    %v1125 = vld [vmem:[%s1 + $0x2208] sm:$0xff]
    %v1126 = vld [vmem:[%s1 + $0x2210] sm:$0xff]
    %v1127 = vld [vmem:[%s1 + $0x2218] sm:$0xff]
    %v1128 = vld [vmem:[%s1 + $0x2220] sm:$0xff]
    %v1129 = vld [vmem:[%s1 + $0x2228] sm:$0xff]
    %v1130 = vld [vmem:[%s1 + $0x2230] sm:$0xff]
    %v1131 = vld [vmem:[%s1 + $0x2238] sm:$0xff]
    %v1132 = vld [vmem:[%s1 + $0x2240] sm:$0xff]
    %v1133 = vld [vmem:[%s1 + $0x2248] sm:$0xff]
    %v1134 = vld [vmem:[%s1 + $0x2250] sm:$0xff]
    %v1135 = vld [vmem:[%s1 + $0x2258] sm:$0xff]
    %v1136 = vld [vmem:[%s1 + $0x2260] sm:$0xff]
    %v1137 = vld [vmem:[%s1 + $0x2268] sm:$0xff]
    %v1138 = vld [vmem:[%s1 + $0x2270] sm:$0xff]
    %v1139 = vld [vmem:[%s1 + $0x2278] sm:$0xff]
    %v1140 = vld [vmem:[%s1 + $0x2280] sm:$0xff]
    %v1141 = vld [vmem:[%s1 + $0x2288] sm:$0xff]
    %v1142 = vld [vmem:[%s1 + $0x2290] sm:$0xff]
    %v1143 = vld [vmem:[%s1 + $0x2298] sm:$0xff]
    %v1144 = vld [vmem:[%s1 + $0x22a0] sm:$0xff]
    %v1145 = vld [vmem:[%s1 + $0x22a8] sm:$0xff]
    %v1146 = vld [vmem:[%s1 + $0x22b0] sm:$0xff]
    %v1147 = vld [vmem:[%s1 + $0x22b8] sm:$0xff]
    %v1148 = vld [vmem:[%s1 + $0x22c0] sm:$0xff]
    %v1149 = vld [vmem:[%s1 + $0x22c8] sm:$0xff]
    %v1150 = vld [vmem:[%s1 + $0x22d0] sm:$0xff]
    %v1151 = vld [vmem:[%s1 + $0x22d8] sm:$0xff]
    %v1152 = vld [vmem:[%s1 + $0x22e0] sm:$0xff]
    %v1153 = vld [vmem:[%s1 + $0x22e8] sm:$0xff]
    %v1154 = vld [vmem:[%s1 + $0x22f0] sm:$0xff]
    %v1155 = vld [vmem:[%s1 + $0x22f8] sm:$0xff]
    %v1156 = vld [vmem:[%s1 + $0x2300] sm:$0xff]
    %v1157 = vld [vmem:[%s1 + $0x2308] sm:$0xff]
    %v1158 = vld [vmem:[%s1 + $0x2310] sm:$0xff]
    %v1159 = vld [vmem:[%s1 + $0x2318] sm:$0xff]
    %v1160 = vld [vmem:[%s1 + $0x2320] sm:$0xff]
    %v1161 = vld [vmem:[%s1 + $0x2328] sm:$0xff]
    %v1162 = vld [vmem:[%s1 + $0x2330] sm:$0xff]
    %v1163 = vld [vmem:[%s1 + $0x2338] sm:$0xff]
    %v1164 = vld [vmem:[%s1 + $0x2340] sm:$0xff]
    %v1165 = vld [vmem:[%s1 + $0x2348] sm:$0xff]
    %v1166 = vld [vmem:[%s1 + $0x2350] sm:$0xff]
    %v1167 = vld [vmem:[%s1 + $0x2358] sm:$0xff]
    %v1168 = vld [vmem:[%s1 + $0x2360] sm:$0xff]
    %v1169 = vld [vmem:[%s1 + $0x2368] sm:$0xff]
    %v1170 = vld [vmem:[%s1 + $0x2370] sm:$0xff]
    %v1171 = vld [vmem:[%s1 + $0x2378] sm:$0xff]
    %v1172 = vld [vmem:[%s1 + $0x2380] sm:$0xff]
    %v1173 = vld [vmem:[%s1 + $0x2388] sm:$0xff]
    %v1174 = vld [vmem:[%s1 + $0x2390] sm:$0xff]
    %v1175 = vld [vmem:[%s1 + $0x2398] sm:$0xff]
    %v1176 = vld [vmem:[%s1 + $0x23a0] sm:$0xff]
    %v1177 = vld [vmem:[%s1 + $0x23a8] sm:$0xff]
    %v1178 = vld [vmem:[%s1 + $0x23b0] sm:$0xff]
    %v1179 = vld [vmem:[%s1 + $0x23b8] sm:$0xff]
    %v1180 = vld [vmem:[%s1 + $0x23c0] sm:$0xff]
    %v1181 = vld [vmem:[%s1 + $0x23c8] sm:$0xff]
    %v1182 = vld [vmem:[%s1 + $0x23d0] sm:$0xff]
    %v1183 = vld [vmem:[%s1 + $0x23d8] sm:$0xff]
    %v1184 = vld [vmem:[%s1 + $0x23e0] sm:$0xff]
    %v1185 = vld [vmem:[%s1 + $0x23e8] sm:$0xff]
    %v1186 = vld [vmem:[%s1 + $0x23f0] sm:$0xff]
    %v1187 = vld [vmem:[%s1 + $0x23f8] sm:$0xff]
    %v1188 = vld [vmem:[%s1 + $0x2400] sm:$0xff]
    %v1189 = vld [vmem:[%s1 + $0x2408] sm:$0xff]
    %v1190 = vld [vmem:[%s1 + $0x2410] sm:$0xff]
    %v1191 = vld [vmem:[%s1 + $0x2418] sm:$0xff]
    %v1192 = vld [vmem:[%s1 + $0x2420] sm:$0xff]
    %v1193 = vld [vmem:[%s1 + $0x2428] sm:$0xff]
    %v1194 = vld [vmem:[%s1 + $0x2430] sm:$0xff]
    %v1195 = vld [vmem:[%s1 + $0x2438] sm:$0xff]
    %v1196 = vld [vmem:[%s1 + $0x2440] sm:$0xff]
    %v1197 = vld [vmem:[%s1 + $0x2448] sm:$0xff]
    %v1198 = vld [vmem:[%s1 + $0x2450] sm:$0xff]
    %v1199 = vld [vmem:[%s1 + $0x2458] sm:$0xff]
    %v1200 = vld [vmem:[%s1 + $0x2460] sm:$0xff]
    %v1201 = vld [vmem:[%s1 + $0x2468] sm:$0xff]
    %v1202 = vld [vmem:[%s1 + $0x2470] sm:$0xff]
    %v1203 = vld [vmem:[%s1 + $0x2478] sm:$0xff]
    %v1204 = vld [vmem:[%s1 + $0x2480] sm:$0xff]
    %v1205 = vld [vmem:[%s1 + $0x2488] sm:$0xff]
    %v1206 = vld [vmem:[%s1 + $0x2490] sm:$0xff]
    %v1207 = vld [vmem:[%s1 + $0x2498] sm:$0xff]
    %v1208 = vld [vmem:[%s1 + $0x24a0] sm:$0xff]
    %v1209 = vld [vmem:[%s1 + $0x24a8] sm:$0xff]
    %v1210 = vld [vmem:[%s1 + $0x24b0] sm:$0xff]
    %v1211 = vld [vmem:[%s1 + $0x24b8] sm:$0xff]
    %v1212 = vld [vmem:[%s1 + $0x24c0] sm:$0xff]
    %v1213 = vld [vmem:[%s1 + $0x24c8] sm:$0xff]
    %v1214 = vld [vmem:[%s1 + $0x24d0] sm:$0xff]
    %v1215 = vld [vmem:[%s1 + $0x24d8] sm:$0xff]
    %v1216 = vld [vmem:[%s1 + $0x24e0] sm:$0xff]
    %v1217 = vld [vmem:[%s1 + $0x24e8] sm:$0xff]
    %v1218 = vld [vmem:[%s1 + $0x24f0] sm:$0xff]
    %v1219 = vld [vmem:[%s1 + $0x24f8] sm:$0xff]
    %v1220 = vld [vmem:[%s1 + $0x2500] sm:$0xff]
    %v1221 = vld [vmem:[%s1 + $0x2508] sm:$0xff]
    %v1222 = vld [vmem:[%s1 + $0x2510] sm:$0xff]
    %v1223 = vld [vmem:[%s1 + $0x2518] sm:$0xff]
    %v1224 = vld [vmem:[%s1 + $0x2520] sm:$0xff]
    %v1225 = vld [vmem:[%s1 + $0x2528] sm:$0xff]
    %v1226 = vld [vmem:[%s1 + $0x2530] sm:$0xff]
    %v1227 = vld [vmem:[%s1 + $0x2538] sm:$0xff]
    %v1228 = vld [vmem:[%s1 + $0x2540] sm:$0xff]
    %v1229 = vld [vmem:[%s1 + $0x2548] sm:$0xff]
    %v1230 = vld [vmem:[%s1 + $0x2550] sm:$0xff]
    %v1231 = vld [vmem:[%s1 + $0x2558] sm:$0xff]
    %v1232 = vld [vmem:[%s1 + $0x2560] sm:$0xff]
    %v1233 = vld [vmem:[%s1 + $0x2568] sm:$0xff]
    %v1234 = vld [vmem:[%s1 + $0x2570] sm:$0xff]
    %v1235 = vld [vmem:[%s1 + $0x2578] sm:$0xff]
    %v1236 = vld [vmem:[%s1 + $0x2580] sm:$0xff]
    %v1237 = vld [vmem:[%s1 + $0x2588] sm:$0xff]
    %v1238 = vld [vmem:[%s1 + $0x2590] sm:$0xff]
    %v1239 = vld [vmem:[%s1 + $0x2598] sm:$0xff]
    %v1240 = vld [vmem:[%s1 + $0x25a0] sm:$0xff]
    %v1241 = vld [vmem:[%s1 + $0x25a8] sm:$0xff]
    %v1242 = vld [vmem:[%s1 + $0x25b0] sm:$0xff]
    %v1243 = vld [vmem:[%s1 + $0x25b8] sm:$0xff]
    %v1244 = vld [vmem:[%s1 + $0x25c0] sm:$0xff]
    %v1245 = vld [vmem:[%s1 + $0x25c8] sm:$0xff]
    %v1246 = vld [vmem:[%s1 + $0x25d0] sm:$0xff]
    %v1247 = vld [vmem:[%s1 + $0x25d8] sm:$0xff]
    %v1248 = vld [vmem:[%s1 + $0x25e0] sm:$0xff]
    %v1249 = vld [vmem:[%s1 + $0x25e8] sm:$0xff]
    %v1250 = vld [vmem:[%s1 + $0x25f0] sm:$0xff]
    %v1251 = vld [vmem:[%s1 + $0x25f8] sm:$0xff]
    %v1252 = vld [vmem:[%s1 + $0x2600] sm:$0xff]
    %v1253 = vld [vmem:[%s1 + $0x2608] sm:$0xff]
    %v1254 = vld [vmem:[%s1 + $0x2610] sm:$0xff]
    %v1255 = vld [vmem:[%s1 + $0x2618] sm:$0xff]
    %v1256 = vld [vmem:[%s1 + $0x2620] sm:$0xff]
    %v1257 = vld [vmem:[%s1 + $0x2628] sm:$0xff]
    %v1258 = vld [vmem:[%s1 + $0x2630] sm:$0xff]
    %v1259 = vld [vmem:[%s1 + $0x2638] sm:$0xff]
    %v1260 = vld [vmem:[%s1 + $0x2640] sm:$0xff]
    %v1261 = vld [vmem:[%s1 + $0x2648] sm:$0xff]
    %v1262 = vld [vmem:[%s1 + $0x2650] sm:$0xff]
    %v1263 = vld [vmem:[%s1 + $0x2658] sm:$0xff]
    %v1264 = vld [vmem:[%s1 + $0x2660] sm:$0xff]
    %v1265 = vld [vmem:[%s1 + $0x2668] sm:$0xff]
    %v1266 = vld [vmem:[%s1 + $0x2670] sm:$0xff]
    %v1267 = vld [vmem:[%s1 + $0x2678] sm:$0xff]
    %v1268 = vld [vmem:[%s1 + $0x2680] sm:$0xff]
    %v1269 = vld [vmem:[%s1 + $0x2688] sm:$0xff]
    %v1270 = vld [vmem:[%s1 + $0x2690] sm:$0xff]
    %v1271 = vld [vmem:[%s1 + $0x2698] sm:$0xff]
    %v1272 = vld [vmem:[%s1 + $0x26a0] sm:$0xff]
    %v1273 = vld [vmem:[%s1 + $0x26a8] sm:$0xff]
    %v1274 = vld [vmem:[%s1 + $0x26b0] sm:$0xff]
    %v1275 = vld [vmem:[%s1 + $0x26b8] sm:$0xff]
    %v1276 = vld [vmem:[%s1 + $0x26c0] sm:$0xff]
    %v1277 = vld [vmem:[%s1 + $0x26c8] sm:$0xff]
    %v1278 = vld [vmem:[%s1 + $0x26d0] sm:$0xff]
    %v1279 = vld [vmem:[%s1 + $0x26d8] sm:$0xff]
    %v1280 = vld [vmem:[%s1 + $0x26e0] sm:$0xff]
    %v1281 = vld [vmem:[%s1 + $0x26e8] sm:$0xff]
    %v1282 = vld [vmem:[%s1 + $0x26f0] sm:$0xff]
    %v1283 = vld [vmem:[%s1 + $0x26f8] sm:$0xff]
    %v1284 = vld [vmem:[%s1 + $0x2700] sm:$0xff]
    %v1285 = vld [vmem:[%s1 + $0x2708] sm:$0xff]
    %v1286 = vld [vmem:[%s1 + $0x2710] sm:$0xff]
    %v1287 = vld [vmem:[%s1 + $0x2718] sm:$0xff]
    %v1288 = vld [vmem:[%s1 + $0x2720] sm:$0xff]
    %v1289 = vld [vmem:[%s1 + $0x2728] sm:$0xff]
    %v1290 = vld [vmem:[%s1 + $0x2730] sm:$0xff]
    %v1291 = vld [vmem:[%s1 + $0x2738] sm:$0xff]
    %v1292 = vld [vmem:[%s1 + $0x2740] sm:$0xff]
    %v1293 = vld [vmem:[%s1 + $0x2748] sm:$0xff]
    %v1294 = vld [vmem:[%s1 + $0x2750] sm:$0xff]
    %v1295 = vld [vmem:[%s1 + $0x2758] sm:$0xff]
    %v1296 = vld [vmem:[%s1 + $0x2760] sm:$0xff]
    %v1297 = vld [vmem:[%s1 + $0x2768] sm:$0xff]
    %v1298 = vld [vmem:[%s1 + $0x2770] sm:$0xff]
    %v1299 = vld [vmem:[%s1 + $0x2778] sm:$0xff]
    %v1300 = vld [vmem:[%s1 + $0x2780] sm:$0xff]
    %v1301 = vld [vmem:[%s1 + $0x2788] sm:$0xff]
    %v1302 = vld [vmem:[%s1 + $0x2790] sm:$0xff]
    %v1303 = vld [vmem:[%s1 + $0x2798] sm:$0xff]
    %v1304 = vld [vmem:[%s1 + $0x27a0] sm:$0xff]
    %v1305 = vld [vmem:[%s1 + $0x27a8] sm:$0xff]
    %v1306 = vld [vmem:[%s1 + $0x27b0] sm:$0xff]
    %v1307 = vld [vmem:[%s1 + $0x27b8] sm:$0xff]
    %v1308 = vld [vmem:[%s1 + $0x27c0] sm:$0xff]
    %v1309 = vld [vmem:[%s1 + $0x27c8] sm:$0xff]
    %v1310 = vld [vmem:[%s1 + $0x27d0] sm:$0xff]
    %v1311 = vld [vmem:[%s1 + $0x27d8] sm:$0xff]
    %v1312 = vld [vmem:[%s1 + $0x27e0] sm:$0xff]
    %v1313 = vld [vmem:[%s1 + $0x27e8] sm:$0xff]
    %v1314 = vld [vmem:[%s1 + $0x27f0] sm:$0xff]
    %v1315 = vld [vmem:[%s1 + $0x27f8] sm:$0xff]
    %v1316 = vld [vmem:[%s1 + $0x2800] sm:$0xff]
    %v1317 = vld [vmem:[%s1 + $0x2808] sm:$0xff]
    %v1318 = vld [vmem:[%s1 + $0x2810] sm:$0xff]
    %v1319 = vld [vmem:[%s1 + $0x2818] sm:$0xff]
    %v1320 = vld [vmem:[%s1 + $0x2820] sm:$0xff]
    %v1321 = vld [vmem:[%s1 + $0x2828] sm:$0xff]
    %v1322 = vld [vmem:[%s1 + $0x2830] sm:$0xff]
    %v1323 = vld [vmem:[%s1 + $0x2838] sm:$0xff]
    %v1324 = vld [vmem:[%s1 + $0x2840] sm:$0xff]
    %v1325 = vld [vmem:[%s1 + $0x2848] sm:$0xff]
    %v1326 = vld [vmem:[%s1 + $0x2850] sm:$0xff]
    %v1327 = vld [vmem:[%s1 + $0x2858] sm:$0xff]
    %v1328 = vld [vmem:[%s1 + $0x2860] sm:$0xff]
    %v1329 = vld [vmem:[%s1 + $0x2868] sm:$0xff]
    %v1330 = vld [vmem:[%s1 + $0x2870] sm:$0xff]
    %v1331 = vld [vmem:[%s1 + $0x2878] sm:$0xff]
    %v1332 = vld [vmem:[%s1 + $0x2880] sm:$0xff]
    %v1333 = vld [vmem:[%s1 + $0x2888] sm:$0xff]
    %v1334 = vld [vmem:[%s1 + $0x2890] sm:$0xff]
    %v1335 = vld [vmem:[%s1 + $0x2898] sm:$0xff]
    %v1336 = vld [vmem:[%s1 + $0x28a0] sm:$0xff]
    %v1337 = vld [vmem:[%s1 + $0x28a8] sm:$0xff]
    %v1338 = vld [vmem:[%s1 + $0x28b0] sm:$0xff]
    %v1339 = vld [vmem:[%s1 + $0x28b8] sm:$0xff]
    %v1340 = vld [vmem:[%s1 + $0x28c0] sm:$0xff]
    %v1341 = vld [vmem:[%s1 + $0x28c8] sm:$0xff]
    %v1342 = vld [vmem:[%s1 + $0x28d0] sm:$0xff]
    %v1343 = vld [vmem:[%s1 + $0x28d8] sm:$0xff]
    %v1344 = vld [vmem:[%s1 + $0x28e0] sm:$0xff]
    %v1345 = vld [vmem:[%s1 + $0x28e8] sm:$0xff]
    %v1346 = vld [vmem:[%s1 + $0x28f0] sm:$0xff]
    %v1347 = vld [vmem:[%s1 + $0x28f8] sm:$0xff]
    %v1348 = vld [vmem:[%s1 + $0x2900] sm:$0xff]
    %v1349 = vld [vmem:[%s1 + $0x2908] sm:$0xff]
    %v1350 = vld [vmem:[%s1 + $0x2910] sm:$0xff]
    %v1351 = vld [vmem:[%s1 + $0x2918] sm:$0xff]
    %v1352 = vld [vmem:[%s1 + $0x2920] sm:$0xff]
    %v1353 = vld [vmem:[%s1 + $0x2928] sm:$0xff]
    %v1354 = vld [vmem:[%s1 + $0x2930] sm:$0xff]
    %v1355 = vld [vmem:[%s1 + $0x2938] sm:$0xff]
    %v1356 = vld [vmem:[%s1 + $0x2940] sm:$0xff]
    %v1357 = vld [vmem:[%s1 + $0x2948] sm:$0xff]
    %v1358 = vld [vmem:[%s1 + $0x2950] sm:$0xff]
    %v1359 = vld [vmem:[%s1 + $0x2958] sm:$0xff]
    %v1360 = vld [vmem:[%s1 + $0x2960] sm:$0xff]
    %v1361 = vld [vmem:[%s1 + $0x2968] sm:$0xff]
    %v1362 = vld [vmem:[%s1 + $0x2970] sm:$0xff]
    %v1363 = vld [vmem:[%s1 + $0x2978] sm:$0xff]
    %v1364 = vld [vmem:[%s1 + $0x2980] sm:$0xff]
    %v1365 = vld [vmem:[%s1 + $0x2988] sm:$0xff]
    %v1366 = vld [vmem:[%s1 + $0x2990] sm:$0xff]
    %v1367 = vld [vmem:[%s1 + $0x2998] sm:$0xff]
    %v1368 = vld [vmem:[%s1 + $0x29a0] sm:$0xff]
    %v1369 = vld [vmem:[%s1 + $0x29a8] sm:$0xff]
    %v1370 = vld [vmem:[%s1 + $0x29b0] sm:$0xff]
    %v1371 = vld [vmem:[%s1 + $0x29b8] sm:$0xff]
    %v1372 = vld [vmem:[%s1 + $0x29c0] sm:$0xff]
    %v1373 = vld [vmem:[%s1 + $0x29c8] sm:$0xff]
    %v1374 = vld [vmem:[%s1 + $0x29d0] sm:$0xff]
    %v1375 = vld [vmem:[%s1 + $0x29d8] sm:$0xff]
    %v1376 = vld [vmem:[%s1 + $0x29e0] sm:$0xff]
    %v1377 = vld [vmem:[%s1 + $0x29e8] sm:$0xff]
    %v1378 = vld [vmem:[%s1 + $0x29f0] sm:$0xff]
    %v1379 = vld [vmem:[%s1 + $0x29f8] sm:$0xff]
    %v1380 = vld [vmem:[%s1 + $0x2a00] sm:$0xff]
    %v1381 = vld [vmem:[%s1 + $0x2a08] sm:$0xff]
    %v1382 = vld [vmem:[%s1 + $0x2a10] sm:$0xff]
    %v1383 = vld [vmem:[%s1 + $0x2a18] sm:$0xff]
    %v1384 = vld [vmem:[%s1 + $0x2a20] sm:$0xff]
    %v1385 = vld [vmem:[%s1 + $0x2a28] sm:$0xff]
    %v1386 = vld [vmem:[%s1 + $0x2a30] sm:$0xff]
    %v1387 = vld [vmem:[%s1 + $0x2a38] sm:$0xff]
    %v1388 = vld [vmem:[%s1 + $0x2a40] sm:$0xff]
    %v1389 = vld [vmem:[%s1 + $0x2a48] sm:$0xff]
    %v1390 = vld [vmem:[%s1 + $0x2a50] sm:$0xff]
    %v1391 = vld [vmem:[%s1 + $0x2a58] sm:$0xff]
    %v1392 = vld [vmem:[%s1 + $0x2a60] sm:$0xff]
    %v1393 = vld [vmem:[%s1 + $0x2a68] sm:$0xff]
    %v1394 = vld [vmem:[%s1 + $0x2a70] sm:$0xff]
    %v1395 = vld [vmem:[%s1 + $0x2a78] sm:$0xff]
    %v1396 = vld [vmem:[%s1 + $0x2a80] sm:$0xff]
    %v1397 = vld [vmem:[%s1 + $0x2a88] sm:$0xff]
    %v1398 = vld [vmem:[%s1 + $0x2a90] sm:$0xff]
    %v1399 = vld [vmem:[%s1 + $0x2a98] sm:$0xff]
    %v1400 = vld [vmem:[%s1 + $0x2aa0] sm:$0xff]
    %v1401 = vld [vmem:[%s1 + $0x2aa8] sm:$0xff]
    %v1402 = vld [vmem:[%s1 + $0x2ab0] sm:$0xff]
    %v1403 = vld [vmem:[%s1 + $0x2ab8] sm:$0xff]
    %v1404 = vld [vmem:[%s1 + $0x2ac0] sm:$0xff]
    %v1405 = vld [vmem:[%s1 + $0x2ac8] sm:$0xff]
    %v1406 = vld [vmem:[%s1 + $0x2ad0] sm:$0xff]
    %v1407 = vld [vmem:[%s1 + $0x2ad8] sm:$0xff]
    %v1408 = vld [vmem:[%s1 + $0x2ae0] sm:$0xff]
    %v1409 = vld [vmem:[%s1 + $0x2ae8] sm:$0xff]
    %v1410 = vld [vmem:[%s1 + $0x2af0] sm:$0xff]
    %v1411 = vld [vmem:[%s1 + $0x2af8] sm:$0xff]
    %v1412 = vld [vmem:[%s1 + $0x2b00] sm:$0xff]
    %v1413 = vld [vmem:[%s1 + $0x2b08] sm:$0xff]
    %v1414 = vld [vmem:[%s1 + $0x2b10] sm:$0xff]
    %v1415 = vld [vmem:[%s1 + $0x2b18] sm:$0xff]
    %v1416 = vld [vmem:[%s1 + $0x2b20] sm:$0xff]
    %v1417 = vld [vmem:[%s1 + $0x2b28] sm:$0xff]
    %v1418 = vld [vmem:[%s1 + $0x2b30] sm:$0xff]
    %v1419 = vld [vmem:[%s1 + $0x2b38] sm:$0xff]
    %v1420 = vld [vmem:[%s1 + $0x2b40] sm:$0xff]
    %v1421 = vld [vmem:[%s1 + $0x2b48] sm:$0xff]
    %v1422 = vld [vmem:[%s1 + $0x2b50] sm:$0xff]
    %v1423 = vld [vmem:[%s1 + $0x2b58] sm:$0xff]
    %v1424 = vld [vmem:[%s1 + $0x2b60] sm:$0xff]
    %v1425 = vld [vmem:[%s1 + $0x2b68] sm:$0xff]
    %v1426 = vld [vmem:[%s1 + $0x2b70] sm:$0xff]
    %v1427 = vld [vmem:[%s1 + $0x2b78] sm:$0xff]
    %v1428 = vld [vmem:[%s1 + $0x2b80] sm:$0xff]
    %v1429 = vld [vmem:[%s1 + $0x2b88] sm:$0xff]
    %v1430 = vld [vmem:[%s1 + $0x2b90] sm:$0xff]
    %v1431 = vld [vmem:[%s1 + $0x2b98] sm:$0xff]
    %v1432 = vld [vmem:[%s1 + $0x2ba0] sm:$0xff]
    %v1433 = vld [vmem:[%s1 + $0x2ba8] sm:$0xff]
    %v1434 = vld [vmem:[%s1 + $0x2bb0] sm:$0xff]
    %v1435 = vld [vmem:[%s1 + $0x2bb8] sm:$0xff]
    %v1436 = vld [vmem:[%s1 + $0x2bc0] sm:$0xff]
    %v1437 = vld [vmem:[%s1 + $0x2bc8] sm:$0xff]
    %v1438 = vld [vmem:[%s1 + $0x2bd0] sm:$0xff]
    %v1439 = vld [vmem:[%s1 + $0x2bd8] sm:$0xff]
    %v1440 = vld [vmem:[%s1 + $0x2be0] sm:$0xff]
    %v1441 = vld [vmem:[%s1 + $0x2be8] sm:$0xff]
    %v1442 = vld [vmem:[%s1 + $0x2bf0] sm:$0xff]
    %v1443 = vld [vmem:[%s1 + $0x2bf8] sm:$0xff]
    %v1444 = vld [vmem:[%s1 + $0x2c00] sm:$0xff]
    %v1445 = vld [vmem:[%s1 + $0x2c08] sm:$0xff]
    %v1446 = vld [vmem:[%s1 + $0x2c10] sm:$0xff]
    %v1447 = vld [vmem:[%s1 + $0x2c18] sm:$0xff]
    %v1448 = vld [vmem:[%s1 + $0x2c20] sm:$0xff]
    %v1449 = vld [vmem:[%s1 + $0x2c28] sm:$0xff]
    %v1450 = vld [vmem:[%s1 + $0x2c30] sm:$0xff]
    %v1451 = vld [vmem:[%s1 + $0x2c38] sm:$0xff]
    %v1452 = vld [vmem:[%s1 + $0x2c40] sm:$0xff]
    %v1453 = vld [vmem:[%s1 + $0x2c48] sm:$0xff]
    %v1454 = vld [vmem:[%s1 + $0x2c50] sm:$0xff]
    %v1455 = vld [vmem:[%s1 + $0x2c58] sm:$0xff]
    %v1456 = vld [vmem:[%s1 + $0x2c60] sm:$0xff]
    %v1457 = vld [vmem:[%s1 + $0x2c68] sm:$0xff]
    %v1458 = vld [vmem:[%s1 + $0x2c70] sm:$0xff]
    %v1459 = vld [vmem:[%s1 + $0x2c78] sm:$0xff]
    %v1460 = vld [vmem:[%s1 + $0x2c80] sm:$0xff]
    %v1461 = vld [vmem:[%s1 + $0x2c88] sm:$0xff]
    %v1462 = vld [vmem:[%s1 + $0x2c90] sm:$0xff]
    %v1463 = vld [vmem:[%s1 + $0x2c98] sm:$0xff]
    %v1464 = vld [vmem:[%s1 + $0x2ca0] sm:$0xff]
    %v1465 = vld [vmem:[%s1 + $0x2ca8] sm:$0xff]
    %v1466 = vld [vmem:[%s1 + $0x2cb0] sm:$0xff]
    %v1467 = vld [vmem:[%s1 + $0x2cb8] sm:$0xff]
    %v1468 = vld [vmem:[%s1 + $0x2cc0] sm:$0xff]
    %v1469 = vld [vmem:[%s1 + $0x2cc8] sm:$0xff]
    %v1470 = vld [vmem:[%s1 + $0x2cd0] sm:$0xff]
    %v1471 = vld [vmem:[%s1 + $0x2cd8] sm:$0xff]
    %v1472 = vld [vmem:[%s1 + $0x2ce0] sm:$0xff]
    %v1473 = vld [vmem:[%s1 + $0x2ce8] sm:$0xff]
    %v1474 = vld [vmem:[%s1 + $0x2cf0] sm:$0xff]
    %v1475 = vld [vmem:[%s1 + $0x2cf8] sm:$0xff]
    %v1476 = vld [vmem:[%s1 + $0x2d00] sm:$0xff]
    %v1477 = vld [vmem:[%s1 + $0x2d08] sm:$0xff]
    %v1478 = vld [vmem:[%s1 + $0x2d10] sm:$0xff]
    %v1479 = vld [vmem:[%s1 + $0x2d18] sm:$0xff]
    %v1480 = vld [vmem:[%s1 + $0x2d20] sm:$0xff]
    %v1481 = vld [vmem:[%s1 + $0x2d28] sm:$0xff]
    %v1482 = vld [vmem:[%s1 + $0x2d30] sm:$0xff]
    %v1483 = vld [vmem:[%s1 + $0x2d38] sm:$0xff]
    %v1484 = vld [vmem:[%s1 + $0x2d40] sm:$0xff]
    %v1485 = vld [vmem:[%s1 + $0x2d48] sm:$0xff]
    %v1486 = vld [vmem:[%s1 + $0x2d50] sm:$0xff]
    %v1487 = vld [vmem:[%s1 + $0x2d58] sm:$0xff]
    %v1488 = vld [vmem:[%s1 + $0x2d60] sm:$0xff]
    %v1489 = vld [vmem:[%s1 + $0x2d68] sm:$0xff]
    %v1490 = vld [vmem:[%s1 + $0x2d70] sm:$0xff]
    %v1491 = vld [vmem:[%s1 + $0x2d78] sm:$0xff]
    %v1492 = vld [vmem:[%s1 + $0x2d80] sm:$0xff]
    %v1493 = vld [vmem:[%s1 + $0x2d88] sm:$0xff]
    %v1494 = vld [vmem:[%s1 + $0x2d90] sm:$0xff]
    %v1495 = vld [vmem:[%s1 + $0x2d98] sm:$0xff]
    %v1496 = vld [vmem:[%s1 + $0x2da0] sm:$0xff]
    %v1497 = vld [vmem:[%s1 + $0x2da8] sm:$0xff]
    %v1498 = vld [vmem:[%s1 + $0x2db0] sm:$0xff]
    %v1499 = vld [vmem:[%s1 + $0x2db8] sm:$0xff]
    %v1500 = vld [vmem:[%s1 + $0x2dc0] sm:$0xff]
    %v1501 = vld [vmem:[%s1 + $0x2dc8] sm:$0xff]
    %v1502 = vld [vmem:[%s1 + $0x2dd0] sm:$0xff]
    %v1503 = vld [vmem:[%s1 + $0x2dd8] sm:$0xff]
    %v1504 = vld [vmem:[%s1 + $0x2de0] sm:$0xff]
    %v1505 = vld [vmem:[%s1 + $0x2de8] sm:$0xff]
    %v1506 = vld [vmem:[%s1 + $0x2df0] sm:$0xff]
    %v1507 = vld [vmem:[%s1 + $0x2df8] sm:$0xff]
    %v1508 = vld [vmem:[%s1 + $0x2e00] sm:$0xff]
    %v1509 = vld [vmem:[%s1 + $0x2e08] sm:$0xff]
    %v1510 = vld [vmem:[%s1 + $0x2e10] sm:$0xff]
    %v1511 = vld [vmem:[%s1 + $0x2e18] sm:$0xff]
    %v1512 = vld [vmem:[%s1 + $0x2e20] sm:$0xff]
    %v1513 = vld [vmem:[%s1 + $0x2e28] sm:$0xff]
    %v1514 = vld [vmem:[%s1 + $0x2e30] sm:$0xff]
    %v1515 = vld [vmem:[%s1 + $0x2e38] sm:$0xff]
    %v1516 = vld [vmem:[%s1 + $0x2e40] sm:$0xff]
    %v1517 = vld [vmem:[%s1 + $0x2e48] sm:$0xff]
    %v1518 = vld [vmem:[%s1 + $0x2e50] sm:$0xff]
    %v1519 = vld [vmem:[%s1 + $0x2e58] sm:$0xff]
    %v1520 = vld [vmem:[%s1 + $0x2e60] sm:$0xff]
    %v1521 = vld [vmem:[%s1 + $0x2e68] sm:$0xff]
    %v1522 = vld [vmem:[%s1 + $0x2e70] sm:$0xff]
    %v1523 = vld [vmem:[%s1 + $0x2e78] sm:$0xff]
    %v1524 = vld [vmem:[%s1 + $0x2e80] sm:$0xff]
    %v1525 = vld [vmem:[%s1 + $0x2e88] sm:$0xff]
    %v1526 = vld [vmem:[%s1 + $0x2e90] sm:$0xff]
    %v1527 = vld [vmem:[%s1 + $0x2e98] sm:$0xff]
    %v1528 = vld [vmem:[%s1 + $0x2ea0] sm:$0xff]
    %v1529 = vld [vmem:[%s1 + $0x2ea8] sm:$0xff]
    %v1530 = vld [vmem:[%s1 + $0x2eb0] sm:$0xff]
    %v1531 = vld [vmem:[%s1 + $0x2eb8] sm:$0xff]
    %v1532 = vld [vmem:[%s1 + $0x2ec0] sm:$0xff]
    %v1533 = vld [vmem:[%s1 + $0x2ec8] sm:$0xff]
    %v1534 = vld [vmem:[%s1 + $0x2ed0] sm:$0xff]
    %v1535 = vld [vmem:[%s1 + $0x2ed8] sm:$0xff]
    %v1536 = vld [vmem:[%s1 + $0x2ee0] sm:$0xff]
    %v1537 = vld [vmem:[%s1 + $0x2ee8] sm:$0xff]
    %v1538 = vld [vmem:[%s1 + $0x2ef0] sm:$0xff]
    %v1539 = vld [vmem:[%s1 + $0x2ef8] sm:$0xff]
    %v1540 = vld [vmem:[%s1 + $0x2f00] sm:$0xff]
    %v1541 = vld [vmem:[%s1 + $0x2f08] sm:$0xff]
    %v1542 = vld [vmem:[%s1 + $0x2f10] sm:$0xff]
    %v1543 = vld [vmem:[%s1 + $0x2f18] sm:$0xff]
    %v1544 = vld [vmem:[%s1 + $0x2f20] sm:$0xff]
    %v1545 = vld [vmem:[%s1 + $0x2f28] sm:$0xff]
    %v1546 = vld [vmem:[%s1 + $0x2f30] sm:$0xff]
    %v1547 = vld [vmem:[%s1 + $0x2f38] sm:$0xff]
    %v1548 = vld [vmem:[%s1 + $0x2f40] sm:$0xff]
    %v1549 = vld [vmem:[%s1 + $0x2f48] sm:$0xff]
    %v1550 = vld [vmem:[%s1 + $0x2f50] sm:$0xff]
    %v1551 = vld [vmem:[%s1 + $0x2f58] sm:$0xff]
    %v1552 = vld [vmem:[%s1 + $0x2f60] sm:$0xff]
    %v1553 = vld [vmem:[%s1 + $0x2f68] sm:$0xff]
    %v1554 = vld [vmem:[%s1 + $0x2f70] sm:$0xff]
    %v1555 = vld [vmem:[%s1 + $0x2f78] sm:$0xff]
    %v1556 = vld [vmem:[%s1 + $0x2f80] sm:$0xff]
    %v1557 = vld [vmem:[%s1 + $0x2f88] sm:$0xff]
    %v1558 = vld [vmem:[%s1 + $0x2f90] sm:$0xff]
    %v1559 = vld [vmem:[%s1 + $0x2f98] sm:$0xff]
    %v1560 = vld [vmem:[%s1 + $0x2fa0] sm:$0xff]
    %v1561 = vld [vmem:[%s1 + $0x2fa8] sm:$0xff]
    %v1562 = vld [vmem:[%s1 + $0x2fb0] sm:$0xff]
    %v1563 = vld [vmem:[%s1 + $0x2fb8] sm:$0xff]
    %v1564 = vld [vmem:[%s1 + $0x2fc0] sm:$0xff]
    %v1565 = vld [vmem:[%s1 + $0x2fc8] sm:$0xff]
    %v1566 = vld [vmem:[%s1 + $0x2fd0] sm:$0xff]
    %v1567 = vld [vmem:[%s1 + $0x2fd8] sm:$0xff]
    %v1568 = vld [vmem:[%s1 + $0x2fe0] sm:$0xff]
    %v1569 = vld [vmem:[%s1 + $0x2fe8] sm:$0xff]
    %v1570 = vld [vmem:[%s1 + $0x2ff0] sm:$0xff]
    %v1571 = vld [vmem:[%s1 + $0x2ff8] sm:$0xff]
    %v1572 = vld [vmem:[%s1 + $0x3000] sm:$0xff]
    %v1573 = vld [vmem:[%s1 + $0x3008] sm:$0xff]
    %v1574 = vld [vmem:[%s1 + $0x3010] sm:$0xff]
    %v1575 = vld [vmem:[%s1 + $0x3018] sm:$0xff]
    %v1576 = vld [vmem:[%s1 + $0x3020] sm:$0xff]
    %v1577 = vld [vmem:[%s1 + $0x3028] sm:$0xff]
    %v1578 = vld [vmem:[%s1 + $0x3030] sm:$0xff]
    %v1579 = vld [vmem:[%s1 + $0x3038] sm:$0xff]
    %v1580 = vld [vmem:[%s1 + $0x3040] sm:$0xff]
    %v1581 = vld [vmem:[%s1 + $0x3048] sm:$0xff]
    %v1582 = vld [vmem:[%s1 + $0x3050] sm:$0xff]
    %v1583 = vld [vmem:[%s1 + $0x3058] sm:$0xff]
    %v1584 = vld [vmem:[%s1 + $0x3060] sm:$0xff]
    %v1585 = vld [vmem:[%s1 + $0x3068] sm:$0xff]
    %v1586 = vld [vmem:[%s1 + $0x3070] sm:$0xff]
    %v1587 = vld [vmem:[%s1 + $0x3078] sm:$0xff]
    %v1588 = vld [vmem:[%s1 + $0x3080] sm:$0xff]
    %v1589 = vld [vmem:[%s1 + $0x3088] sm:$0xff]
    %v1590 = vld [vmem:[%s1 + $0x3090] sm:$0xff]
    %v1591 = vld [vmem:[%s1 + $0x3098] sm:$0xff]
    %v1592 = vld [vmem:[%s1 + $0x30a0] sm:$0xff]
    %v1593 = vld [vmem:[%s1 + $0x30a8] sm:$0xff]
    %v1594 = vld [vmem:[%s1 + $0x30b0] sm:$0xff]
    %v1595 = vld [vmem:[%s1 + $0x30b8] sm:$0xff]
    %v1596 = vld [vmem:[%s1 + $0x30c0] sm:$0xff]
    %v1597 = vld [vmem:[%s1 + $0x30c8] sm:$0xff]
    %v1598 = vld [vmem:[%s1 + $0x30d0] sm:$0xff]
    %v1599 = vld [vmem:[%s1 + $0x30d8] sm:$0xff]
    %v1600 = vld [vmem:[%s1 + $0x30e0] sm:$0xff]
    %v1601 = vld [vmem:[%s1 + $0x30e8] sm:$0xff]
    %v1602 = vld [vmem:[%s1 + $0x30f0] sm:$0xff]
    %v1603 = vld [vmem:[%s1 + $0x30f8] sm:$0xff]
    %v1604 = vld [vmem:[%s1 + $0x3100] sm:$0xff]
    %v1605 = vld [vmem:[%s1 + $0x3108] sm:$0xff]
    %v1606 = vld [vmem:[%s1 + $0x3110] sm:$0xff]
    %v1607 = vld [vmem:[%s1 + $0x3118] sm:$0xff]
    %v1608 = vld [vmem:[%s1 + $0x3120] sm:$0xff]
    %v1609 = vld [vmem:[%s1 + $0x3128] sm:$0xff]
    %v1610 = vld [vmem:[%s1 + $0x3130] sm:$0xff]
    %v1611 = vld [vmem:[%s1 + $0x3138] sm:$0xff]
    %v1612 = vld [vmem:[%s1 + $0x3140] sm:$0xff]
    %v1613 = vld [vmem:[%s1 + $0x3148] sm:$0xff]
    %v1614 = vld [vmem:[%s1 + $0x3150] sm:$0xff]
    %v1615 = vld [vmem:[%s1 + $0x3158] sm:$0xff]
    %v1616 = vld [vmem:[%s1 + $0x3160] sm:$0xff]
    %v1617 = vld [vmem:[%s1 + $0x3168] sm:$0xff]
    %v1618 = vld [vmem:[%s1 + $0x3170] sm:$0xff]
    %v1619 = vld [vmem:[%s1 + $0x3178] sm:$0xff]
    %v1620 = vld [vmem:[%s1 + $0x3180] sm:$0xff]
    %v1621 = vld [vmem:[%s1 + $0x3188] sm:$0xff]
    %v1622 = vld [vmem:[%s1 + $0x3190] sm:$0xff]
    %v1623 = vld [vmem:[%s1 + $0x3198] sm:$0xff]
    %v1624 = vld [vmem:[%s1 + $0x31a0] sm:$0xff]
    %v1625 = vld [vmem:[%s1 + $0x31a8] sm:$0xff]
    %v1626 = vld [vmem:[%s1 + $0x31b0] sm:$0xff]
    %v1627 = vld [vmem:[%s1 + $0x31b8] sm:$0xff]
    %v1628 = vld [vmem:[%s1 + $0x31c0] sm:$0xff]
    %v1629 = vld [vmem:[%s1 + $0x31c8] sm:$0xff]
    %v1630 = vld [vmem:[%s1 + $0x31d0] sm:$0xff]
    %v1631 = vld [vmem:[%s1 + $0x31d8] sm:$0xff]
    %v1632 = vld [vmem:[%s1 + $0x31e0] sm:$0xff]
    %v1633 = vld [vmem:[%s1 + $0x31e8] sm:$0xff]
    %v1634 = vld [vmem:[%s1 + $0x31f0] sm:$0xff]
    %v1635 = vld [vmem:[%s1 + $0x31f8] sm:$0xff]
    %v1636 = vld [vmem:[%s1 + $0x3200] sm:$0xff]
    %v1637 = vld [vmem:[%s1 + $0x3208] sm:$0xff]
    %v1638 = vld [vmem:[%s1 + $0x3210] sm:$0xff]
    %v1639 = vld [vmem:[%s1 + $0x3218] sm:$0xff]
    %v1640 = vld [vmem:[%s1 + $0x3220] sm:$0xff]
    %v1641 = vld [vmem:[%s1 + $0x3228] sm:$0xff]
    %v1642 = vld [vmem:[%s1 + $0x3230] sm:$0xff]
    %v1643 = vld [vmem:[%s1 + $0x3238] sm:$0xff]
    %v1644 = vld [vmem:[%s1 + $0x3240] sm:$0xff]
    %v1645 = vld [vmem:[%s1 + $0x3248] sm:$0xff]
    %v1646 = vld [vmem:[%s1 + $0x3250] sm:$0xff]
    %v1647 = vld [vmem:[%s1 + $0x3258] sm:$0xff]
    %v1648 = vld [vmem:[%s1 + $0x3260] sm:$0xff]
    %v1649 = vld [vmem:[%s1 + $0x3268] sm:$0xff]
    %v1650 = vld [vmem:[%s1 + $0x3270] sm:$0xff]
    %v1651 = vld [vmem:[%s1 + $0x3278] sm:$0xff]
    %v1652 = vld [vmem:[%s1 + $0x3280] sm:$0xff]
    %v1653 = vld [vmem:[%s1 + $0x3288] sm:$0xff]
    %v1654 = vld [vmem:[%s1 + $0x3290] sm:$0xff]
    %v1655 = vld [vmem:[%s1 + $0x3298] sm:$0xff]
    %v1656 = vld [vmem:[%s1 + $0x32a0] sm:$0xff]
    %v1657 = vld [vmem:[%s1 + $0x32a8] sm:$0xff]
    %v1658 = vld [vmem:[%s1 + $0x32b0] sm:$0xff]
    %v1659 = vld [vmem:[%s1 + $0x32b8] sm:$0xff]
    %v1660 = vld [vmem:[%s1 + $0x32c0] sm:$0xff]
    %v1661 = vld [vmem:[%s1 + $0x32c8] sm:$0xff]
    %v1662 = vld [vmem:[%s1 + $0x32d0] sm:$0xff]
    %v1663 = vld [vmem:[%s1 + $0x32d8] sm:$0xff]
    %v1664 = vld [vmem:[%s1 + $0x32e0] sm:$0xff]
    %v1665 = vld [vmem:[%s1 + $0x32e8] sm:$0xff]
    %v1666 = vld [vmem:[%s1 + $0x32f0] sm:$0xff]
    %v1667 = vld [vmem:[%s1 + $0x32f8] sm:$0xff]
    %v1668 = vld [vmem:[%s1 + $0x3300] sm:$0xff]
    %v1669 = vld [vmem:[%s1 + $0x3308] sm:$0xff]
    %v1670 = vld [vmem:[%s1 + $0x3310] sm:$0xff]
    %v1671 = vld [vmem:[%s1 + $0x3318] sm:$0xff]
    %v1672 = vld [vmem:[%s1 + $0x3320] sm:$0xff]
    %v1673 = vld [vmem:[%s1 + $0x3328] sm:$0xff]
    %v1674 = vld [vmem:[%s1 + $0x3330] sm:$0xff]
    %v1675 = vld [vmem:[%s1 + $0x3338] sm:$0xff]
    %v1676 = vld [vmem:[%s1 + $0x3340] sm:$0xff]
    %v1677 = vld [vmem:[%s1 + $0x3348] sm:$0xff]
    %v1678 = vld [vmem:[%s1 + $0x3350] sm:$0xff]
    %v1679 = vld [vmem:[%s1 + $0x3358] sm:$0xff]
    %v1680 = vld [vmem:[%s1 + $0x3360] sm:$0xff]
    %v1681 = vld [vmem:[%s1 + $0x3368] sm:$0xff]
    %v1682 = vld [vmem:[%s1 + $0x3370] sm:$0xff]
    %v1683 = vld [vmem:[%s1 + $0x3378] sm:$0xff]
    %v1684 = vld [vmem:[%s1 + $0x3380] sm:$0xff]
    %v1685 = vld [vmem:[%s1 + $0x3388] sm:$0xff]
    %v1686 = vld [vmem:[%s1 + $0x3390] sm:$0xff]
    %v1687 = vld [vmem:[%s1 + $0x3398] sm:$0xff]
    %v1688 = vld [vmem:[%s1 + $0x33a0] sm:$0xff]
    %v1689 = vld [vmem:[%s1 + $0x33a8] sm:$0xff]
    %v1690 = vld [vmem:[%s1 + $0x33b0] sm:$0xff]
    %v1691 = vld [vmem:[%s1 + $0x33b8] sm:$0xff]
    %v1692 = vld [vmem:[%s1 + $0x33c0] sm:$0xff]
    %v1693 = vld [vmem:[%s1 + $0x33c8] sm:$0xff]
    %v1694 = vld [vmem:[%s1 + $0x33d0] sm:$0xff]
    %v1695 = vld [vmem:[%s1 + $0x33d8] sm:$0xff]
    %v1696 = vld [vmem:[%s1 + $0x33e0] sm:$0xff]
    %v1697 = vld [vmem:[%s1 + $0x33e8] sm:$0xff]
    %v1698 = vld [vmem:[%s1 + $0x33f0] sm:$0xff]
    %v1699 = vld [vmem:[%s1 + $0x33f8] sm:$0xff]
    %v1700 = vld [vmem:[%s1 + $0x3400] sm:$0xff]
    %v1701 = vld [vmem:[%s1 + $0x3408] sm:$0xff]
    %v1702 = vld [vmem:[%s1 + $0x3410] sm:$0xff]
    %v1703 = vld [vmem:[%s1 + $0x3418] sm:$0xff]
    %v1704 = vld [vmem:[%s1 + $0x3420] sm:$0xff]
    %v1705 = vld [vmem:[%s1 + $0x3428] sm:$0xff]
    %v1706 = vld [vmem:[%s1 + $0x3430] sm:$0xff]
    %v1707 = vld [vmem:[%s1 + $0x3438] sm:$0xff]
    %v1708 = vld [vmem:[%s1 + $0x3440] sm:$0xff]
    %v1709 = vld [vmem:[%s1 + $0x3448] sm:$0xff]
    %v1710 = vld [vmem:[%s1 + $0x3450] sm:$0xff]
    %v1711 = vld [vmem:[%s1 + $0x3458] sm:$0xff]
    %v1712 = vld [vmem:[%s1 + $0x3460] sm:$0xff]
    %v1713 = vld [vmem:[%s1 + $0x3468] sm:$0xff]
    %v1714 = vld [vmem:[%s1 + $0x3470] sm:$0xff]
    %v1715 = vld [vmem:[%s1 + $0x3478] sm:$0xff]
    %v1716 = vld [vmem:[%s1 + $0x3480] sm:$0xff]
    %v1717 = vld [vmem:[%s1 + $0x3488] sm:$0xff]
    %v1718 = vld [vmem:[%s1 + $0x3490] sm:$0xff]
    %v1719 = vld [vmem:[%s1 + $0x3498] sm:$0xff]
    %v1720 = vld [vmem:[%s1 + $0x34a0] sm:$0xff]
    %v1721 = vld [vmem:[%s1 + $0x34a8] sm:$0xff]
    %v1722 = vld [vmem:[%s1 + $0x34b0] sm:$0xff]
    %v1723 = vld [vmem:[%s1 + $0x34b8] sm:$0xff]
    %v1724 = vld [vmem:[%s1 + $0x34c0] sm:$0xff]
    %v1725 = vld [vmem:[%s1 + $0x34c8] sm:$0xff]
    %v1726 = vld [vmem:[%s1 + $0x34d0] sm:$0xff]
    %v1727 = vld [vmem:[%s1 + $0x34d8] sm:$0xff]
    %v1728 = vld [vmem:[%s1 + $0x34e0] sm:$0xff]
    %v1729 = vld [vmem:[%s1 + $0x34e8] sm:$0xff]
    %v1730 = vld [vmem:[%s1 + $0x34f0] sm:$0xff]
    %v1731 = vld [vmem:[%s1 + $0x34f8] sm:$0xff]
    %v1732 = vld [vmem:[%s1 + $0x3500] sm:$0xff]
    %v1733 = vld [vmem:[%s1 + $0x3508] sm:$0xff]
    %v1734 = vld [vmem:[%s1 + $0x3510] sm:$0xff]
    %v1735 = vld [vmem:[%s1 + $0x3518] sm:$0xff]
    %v1736 = vld [vmem:[%s1 + $0x3520] sm:$0xff]
    %v1737 = vld [vmem:[%s1 + $0x3528] sm:$0xff]
    %v1738 = vld [vmem:[%s1 + $0x3530] sm:$0xff]
    %v1739 = vld [vmem:[%s1 + $0x3538] sm:$0xff]
    %v1740 = vld [vmem:[%s1 + $0x3540] sm:$0xff]
    %v1741 = vld [vmem:[%s1 + $0x3548] sm:$0xff]
    %v1742 = vld [vmem:[%s1 + $0x3550] sm:$0xff]
    %v1743 = vld [vmem:[%s1 + $0x3558] sm:$0xff]
    %v1744 = vld [vmem:[%s1 + $0x3560] sm:$0xff]
    %v1745 = vld [vmem:[%s1 + $0x3568] sm:$0xff]
    %v1746 = vld [vmem:[%s1 + $0x3570] sm:$0xff]
    %v1747 = vld [vmem:[%s1 + $0x3578] sm:$0xff]
    %v1748 = vld [vmem:[%s1 + $0x3580] sm:$0xff]
    %v1749 = vld [vmem:[%s1 + $0x3588] sm:$0xff]
    %v1750 = vld [vmem:[%s1 + $0x3590] sm:$0xff]
    %v1751 = vld [vmem:[%s1 + $0x3598] sm:$0xff]
    %v1752 = vld [vmem:[%s1 + $0x35a0] sm:$0xff]
    %v1753 = vld [vmem:[%s1 + $0x35a8] sm:$0xff]
    %v1754 = vld [vmem:[%s1 + $0x35b0] sm:$0xff]
    %v1755 = vld [vmem:[%s1 + $0x35b8] sm:$0xff]
    %v1756 = vld [vmem:[%s1 + $0x35c0] sm:$0xff]
    %v1757 = vld [vmem:[%s1 + $0x35c8] sm:$0xff]
    %v1758 = vld [vmem:[%s1 + $0x35d0] sm:$0xff]
    %v1759 = vld [vmem:[%s1 + $0x35d8] sm:$0xff]
    %v1760 = vld [vmem:[%s1 + $0x35e0] sm:$0xff]
    %v1761 = vld [vmem:[%s1 + $0x35e8] sm:$0xff]
    %v1762 = vld [vmem:[%s1 + $0x35f0] sm:$0xff]
    %v1763 = vld [vmem:[%s1 + $0x35f8] sm:$0xff]
    %v1764 = vld [vmem:[%s1 + $0x3600] sm:$0xff]
    %v1765 = vld [vmem:[%s1 + $0x3608] sm:$0xff]
    %v1766 = vld [vmem:[%s1 + $0x3610] sm:$0xff]
    %v1767 = vld [vmem:[%s1 + $0x3618] sm:$0xff]
    %v1768 = vld [vmem:[%s1 + $0x3620] sm:$0xff]
    %v1769 = vld [vmem:[%s1 + $0x3628] sm:$0xff]
    %v1770 = vld [vmem:[%s1 + $0x3630] sm:$0xff]
    %v1771 = vld [vmem:[%s1 + $0x3638] sm:$0xff]
    %v1772 = vld [vmem:[%s1 + $0x3640] sm:$0xff]
    %v1773 = vld [vmem:[%s1 + $0x3648] sm:$0xff]
    %v1774 = vld [vmem:[%s1 + $0x3650] sm:$0xff]
    %v1775 = vld [vmem:[%s1 + $0x3658] sm:$0xff]
    %v1776 = vld [vmem:[%s1 + $0x3660] sm:$0xff]
    %v1777 = vld [vmem:[%s1 + $0x3668] sm:$0xff]
    %v1778 = vld [vmem:[%s1 + $0x3670] sm:$0xff]
    %v1779 = vld [vmem:[%s1 + $0x3678] sm:$0xff]
    %v1780 = vld [vmem:[%s1 + $0x3680] sm:$0xff]
    %v1781 = vld [vmem:[%s1 + $0x3688] sm:$0xff]
    %v1782 = vld [vmem:[%s1 + $0x3690] sm:$0xff]
    %v1783 = vld [vmem:[%s1 + $0x3698] sm:$0xff]
    %v1784 = vld [vmem:[%s1 + $0x36a0] sm:$0xff]
    %v1785 = vld [vmem:[%s1 + $0x36a8] sm:$0xff]
    %v1786 = vld [vmem:[%s1 + $0x36b0] sm:$0xff]
    %v1787 = vld [vmem:[%s1 + $0x36b8] sm:$0xff]
    %v1788 = vld [vmem:[%s1 + $0x36c0] sm:$0xff]
    %v1789 = vld [vmem:[%s1 + $0x36c8] sm:$0xff]
    %v1790 = vld [vmem:[%s1 + $0x36d0] sm:$0xff]
    %v1791 = vld [vmem:[%s1 + $0x36d8] sm:$0xff]
    %v1792 = vld [vmem:[%s1 + $0x36e0] sm:$0xff]
    %v1793 = vld [vmem:[%s1 + $0x36e8] sm:$0xff]
    %v1794 = vld [vmem:[%s1 + $0x36f0] sm:$0xff]
    %v1795 = vld [vmem:[%s1 + $0x36f8] sm:$0xff]
    %v1796 = vld [vmem:[%s1 + $0x3700] sm:$0xff]
    %v1797 = vld [vmem:[%s1 + $0x3708] sm:$0xff]
    %v1798 = vld [vmem:[%s1 + $0x3710] sm:$0xff]
    %v1799 = vld [vmem:[%s1 + $0x3718] sm:$0xff]
    %v1800 = vld [vmem:[%s1 + $0x3720] sm:$0xff]
    %v1801 = vld [vmem:[%s1 + $0x3728] sm:$0xff]
    %v1802 = vld [vmem:[%s1 + $0x3730] sm:$0xff]
    %v1803 = vld [vmem:[%s1 + $0x3738] sm:$0xff]
    %v1804 = vld [vmem:[%s1 + $0x3740] sm:$0xff]
    %v1805 = vld [vmem:[%s1 + $0x3748] sm:$0xff]
    %v1806 = vld [vmem:[%s1 + $0x3750] sm:$0xff]
    %v1807 = vld [vmem:[%s1 + $0x3758] sm:$0xff]
    %v1808 = vld [vmem:[%s1 + $0x3760] sm:$0xff]
    %v1809 = vld [vmem:[%s1 + $0x3768] sm:$0xff]
    %v1810 = vld [vmem:[%s1 + $0x3770] sm:$0xff]
    %v1811 = vld [vmem:[%s1 + $0x3778] sm:$0xff]
    %v1812 = vld [vmem:[%s1 + $0x3780] sm:$0xff]
    %v1813 = vld [vmem:[%s1 + $0x3788] sm:$0xff]
    %v1814 = vld [vmem:[%s1 + $0x3790] sm:$0xff]
    %v1815 = vld [vmem:[%s1 + $0x3798] sm:$0xff]
    %v1816 = vld [vmem:[%s1 + $0x37a0] sm:$0xff]
    %v1817 = vld [vmem:[%s1 + $0x37a8] sm:$0xff]
    %v1818 = vld [vmem:[%s1 + $0x37b0] sm:$0xff]
    %v1819 = vld [vmem:[%s1 + $0x37b8] sm:$0xff]
    %v1820 = vld [vmem:[%s1 + $0x37c0] sm:$0xff]
    %v1821 = vld [vmem:[%s1 + $0x37c8] sm:$0xff]
    %v1822 = vld [vmem:[%s1 + $0x37d0] sm:$0xff]
    %v1823 = vld [vmem:[%s1 + $0x37d8] sm:$0xff]
    %v1824 = vld [vmem:[%s1 + $0x37e0] sm:$0xff]
    %v1825 = vld [vmem:[%s1 + $0x37e8] sm:$0xff]
    %v1826 = vld [vmem:[%s1 + $0x37f0] sm:$0xff]
    %v1827 = vld [vmem:[%s1 + $0x37f8] sm:$0xff]
    %v1828 = vld [vmem:[%s1 + $0x3800] sm:$0xff]
    %v1829 = vld [vmem:[%s1 + $0x3808] sm:$0xff]
    %v1830 = vld [vmem:[%s1 + $0x3810] sm:$0xff]
    %v1831 = vld [vmem:[%s1 + $0x3818] sm:$0xff]
    %v1832 = vld [vmem:[%s1 + $0x3820] sm:$0xff]
    %v1833 = vld [vmem:[%s1 + $0x3828] sm:$0xff]
    %v1834 = vld [vmem:[%s1 + $0x3830] sm:$0xff]
    %v1835 = vld [vmem:[%s1 + $0x3838] sm:$0xff]
    %v1836 = vld [vmem:[%s2] sm:$0x3]
    %v1838 = vlaneseq
    %v1839 = vshrl.u32 %v1838, 7
    %v1840 = vsub.s32 0, %v1839
    %v1841 = vrot.slane %v1836, %v1840
    %v1842 = vlaneseq
    %v1843 = vshrl.u32 %v1842, 7
    %v1844 = vsub.s32 1, %v1843
    %v1845 = vrot.slane %v1836, %v1844
    %v1863 = vcombine.high %v21, %v21
    %v1865 = vunpack.c.l.s4 1983009808
    %v1866 = vunpack.c.0.s8 %v1865
    %v1867 = vlaneseq
    %v1868 = vshrl.u32 %v1867, 7
    %v1869 = vsub.s32 %v1866, %v1868
    %v1870 = vrot.slane %v21, %v1869
    %v1872 = vunpack.c.l.s4 1983009808
    %v1873 = vunpack.c.0.s8 %v1872
    %v1874 = vlaneseq
    %v1875 = vshrl.u32 %v1874, 7
    %v1876 = vsub.s32 %v1873, %v1875
    %v1877 = vrot.slane %v1863, %v1876
    %v1878 = vcombine.high %v1870, %v1870
    %v1879 = vcombine.high %v1877, %v1877
    %v1880 = vcombine.high %v22, %v22
    %v1882 = vunpack.c.l.s4 1983009808
    %v1883 = vunpack.c.0.s8 %v1882
    %v1884 = vlaneseq
    %v1885 = vshrl.u32 %v1884, 7
    %v1886 = vsub.s32 %v1883, %v1885
    %v1887 = vrot.slane %v22, %v1886
    %v1889 = vunpack.c.l.s4 1983009808
    %v1890 = vunpack.c.0.s8 %v1889
    %v1891 = vlaneseq
    %v1892 = vshrl.u32 %v1891, 7
    %v1893 = vsub.s32 %v1890, %v1892
    %v1894 = vrot.slane %v1880, %v1893
    %v1895 = vcombine.high %v1887, %v1887
    %v1896 = vcombine.high %v1894, %v1894
    %v1897 = vcombine.high %v23, %v23
    %v1899 = vunpack.c.l.s4 1983009808
    %v1900 = vunpack.c.0.s8 %v1899
    %v1901 = vlaneseq
    %v1902 = vshrl.u32 %v1901, 7
    %v1903 = vsub.s32 %v1900, %v1902
    %v1904 = vrot.slane %v23, %v1903
    %v1906 = vunpack.c.l.s4 1983009808
    %v1907 = vunpack.c.0.s8 %v1906
    %v1908 = vlaneseq
    %v1909 = vshrl.u32 %v1908, 7
    %v1910 = vsub.s32 %v1907, %v1909
    %v1911 = vrot.slane %v1897, %v1910
    %v1912 = vcombine.high %v1904, %v1904
    %v1913 = vcombine.high %v1911, %v1911
    %v1914 = vcombine.high %v24, %v24
    %v1916 = vunpack.c.l.s4 1983009808
    %v1917 = vunpack.c.0.s8 %v1916
    %v1918 = vlaneseq
    %v1919 = vshrl.u32 %v1918, 7
    %v1920 = vsub.s32 %v1917, %v1919
    %v1921 = vrot.slane %v24, %v1920
    %v1923 = vunpack.c.l.s4 1983009808
    %v1924 = vunpack.c.0.s8 %v1923
    %v1925 = vlaneseq
    %v1926 = vshrl.u32 %v1925, 7
    %v1927 = vsub.s32 %v1924, %v1926
    %v1928 = vrot.slane %v1914, %v1927
    %v1929 = vcombine.high %v1921, %v1921
    %v1930 = vcombine.high %v1928, %v1928
    %v1931 = vcombine.high %v25, %v25
    %v1933 = vunpack.c.l.s4 1983009808
    %v1934 = vunpack.c.0.s8 %v1933
    %v1935 = vlaneseq
    %v1936 = vshrl.u32 %v1935, 7
    %v1937 = vsub.s32 %v1934, %v1936
    %v1938 = vrot.slane %v25, %v1937
    %v1940 = vunpack.c.l.s4 1983009808
    %v1941 = vunpack.c.0.s8 %v1940
    %v1942 = vlaneseq
    %v1943 = vshrl.u32 %v1942, 7
    %v1944 = vsub.s32 %v1941, %v1943
    %v1945 = vrot.slane %v1931, %v1944
    %v1946 = vcombine.high %v1938, %v1938
    %v1947 = vcombine.high %v1945, %v1945
    %v1948 = vcombine.high %v26, %v26
    %v1950 = vunpack.c.l.s4 1983009808
    %v1951 = vunpack.c.0.s8 %v1950
    %v1952 = vlaneseq
    %v1953 = vshrl.u32 %v1952, 7
    %v1954 = vsub.s32 %v1951, %v1953
    %v1955 = vrot.slane %v26, %v1954
    %v1957 = vunpack.c.l.s4 1983009808
    %v1958 = vunpack.c.0.s8 %v1957
    %v1959 = vlaneseq
    %v1960 = vshrl.u32 %v1959, 7
    %v1961 = vsub.s32 %v1958, %v1960
    %v1962 = vrot.slane %v1948, %v1961
    %v1963 = vcombine.high %v1955, %v1955
    %v1964 = vcombine.high %v1962, %v1962
    %v1965 = vcombine.high %v27, %v27
    %v1967 = vunpack.c.l.s4 1983009808
    %v1968 = vunpack.c.0.s8 %v1967
    %v1969 = vlaneseq
    %v1970 = vshrl.u32 %v1969, 7
    %v1971 = vsub.s32 %v1968, %v1970
    %v1972 = vrot.slane %v27, %v1971
    %v1974 = vunpack.c.l.s4 1983009808
    %v1975 = vunpack.c.0.s8 %v1974
    %v1976 = vlaneseq
    %v1977 = vshrl.u32 %v1976, 7
    %v1978 = vsub.s32 %v1975, %v1977
    %v1979 = vrot.slane %v1965, %v1978
    %v1980 = vcombine.high %v1972, %v1972
    %v1981 = vcombine.high %v1979, %v1979
    %v1982 = vcombine.high %v28, %v28
    %v1984 = vunpack.c.l.s4 1983009808
    %v1985 = vunpack.c.0.s8 %v1984
    %v1986 = vlaneseq
    %v1987 = vshrl.u32 %v1986, 7
    %v1988 = vsub.s32 %v1985, %v1987
    %v1989 = vrot.slane %v28, %v1988
    %v1991 = vunpack.c.l.s4 1983009808
    %v1992 = vunpack.c.0.s8 %v1991
    %v1993 = vlaneseq
    %v1994 = vshrl.u32 %v1993, 7
    %v1995 = vsub.s32 %v1992, %v1994
    %v1996 = vrot.slane %v1982, %v1995
    %v1997 = vcombine.high %v1989, %v1989
    %v1998 = vcombine.high %v1996, %v1996
    %v1999 = vcombine.high %v29, %v29
    %v2001 = vunpack.c.l.s4 1983009808
    %v2002 = vunpack.c.0.s8 %v2001
    %v2003 = vlaneseq
    %v2004 = vshrl.u32 %v2003, 7
    %v2005 = vsub.s32 %v2002, %v2004
    %v2006 = vrot.slane %v29, %v2005
    %v2008 = vunpack.c.l.s4 1983009808
    %v2009 = vunpack.c.0.s8 %v2008
    %v2010 = vlaneseq
    %v2011 = vshrl.u32 %v2010, 7
    %v2012 = vsub.s32 %v2009, %v2011
    %v2013 = vrot.slane %v1999, %v2012
    %v2014 = vcombine.high %v2006, %v2006
    %v2015 = vcombine.high %v2013, %v2013
    %v2016 = vcombine.high %v30, %v30
    %v2018 = vunpack.c.l.s4 1983009808
    %v2019 = vunpack.c.0.s8 %v2018
    %v2020 = vlaneseq
    %v2021 = vshrl.u32 %v2020, 7
    %v2022 = vsub.s32 %v2019, %v2021
    %v2023 = vrot.slane %v30, %v2022
    %v2025 = vunpack.c.l.s4 1983009808
    %v2026 = vunpack.c.0.s8 %v2025
    %v2027 = vlaneseq
    %v2028 = vshrl.u32 %v2027, 7
    %v2029 = vsub.s32 %v2026, %v2028
    %v2030 = vrot.slane %v2016, %v2029
    %v2031 = vcombine.high %v2023, %v2023
    %v2032 = vcombine.high %v2030, %v2030
    %v2033 = vcombine.high %v31, %v31
    %v2035 = vunpack.c.l.s4 1983009808
    %v2036 = vunpack.c.0.s8 %v2035
    %v2037 = vlaneseq
    %v2038 = vshrl.u32 %v2037, 7
    %v2039 = vsub.s32 %v2036, %v2038
    %v2040 = vrot.slane %v31, %v2039
    %v2042 = vunpack.c.l.s4 1983009808
    %v2043 = vunpack.c.0.s8 %v2042
    %v2044 = vlaneseq
    %v2045 = vshrl.u32 %v2044, 7
    %v2046 = vsub.s32 %v2043, %v2045
    %v2047 = vrot.slane %v2033, %v2046
    %v2048 = vcombine.high %v2040, %v2040
    %v2049 = vcombine.high %v2047, %v2047
    %v2050 = vcombine.high %v32, %v32
    %v2052 = vunpack.c.l.s4 1983009808
    %v2053 = vunpack.c.0.s8 %v2052
    %v2054 = vlaneseq
    %v2055 = vshrl.u32 %v2054, 7
    %v2056 = vsub.s32 %v2053, %v2055
    %v2057 = vrot.slane %v32, %v2056
    %v2059 = vunpack.c.l.s4 1983009808
    %v2060 = vunpack.c.0.s8 %v2059
    %v2061 = vlaneseq
    %v2062 = vshrl.u32 %v2061, 7
    %v2063 = vsub.s32 %v2060, %v2062
    %v2064 = vrot.slane %v2050, %v2063
    %v2065 = vcombine.high %v2057, %v2057
    %v2066 = vcombine.high %v2064, %v2064
    %v2067 = vcombine.high %v33, %v33
    %v2069 = vunpack.c.l.s4 1983009808
    %v2070 = vunpack.c.0.s8 %v2069
    %v2071 = vlaneseq
    %v2072 = vshrl.u32 %v2071, 7
    %v2073 = vsub.s32 %v2070, %v2072
    %v2074 = vrot.slane %v33, %v2073
    %v2076 = vunpack.c.l.s4 1983009808
    %v2077 = vunpack.c.0.s8 %v2076
    %v2078 = vlaneseq
    %v2079 = vshrl.u32 %v2078, 7
    %v2080 = vsub.s32 %v2077, %v2079
    %v2081 = vrot.slane %v2067, %v2080
    %v2082 = vcombine.high %v2074, %v2074
    %v2083 = vcombine.high %v2081, %v2081
    %v2084 = vcombine.high %v34, %v34
    %v2086 = vunpack.c.l.s4 1983009808
    %v2087 = vunpack.c.0.s8 %v2086
    %v2088 = vlaneseq
    %v2089 = vshrl.u32 %v2088, 7
    %v2090 = vsub.s32 %v2087, %v2089
    %v2091 = vrot.slane %v34, %v2090
    %v2093 = vunpack.c.l.s4 1983009808
    %v2094 = vunpack.c.0.s8 %v2093
    %v2095 = vlaneseq
    %v2096 = vshrl.u32 %v2095, 7
    %v2097 = vsub.s32 %v2094, %v2096
    %v2098 = vrot.slane %v2084, %v2097
    %v2099 = vcombine.high %v2091, %v2091
    %v2100 = vcombine.high %v2098, %v2098
    %v2102 = vunpack.c.l.s4 1983009808
    %v2103 = vunpack.c.0.s8 %v2102
    %v2104 = vlaneseq
    %v2105 = vshrl.u32 %v2104, 7
    %v2106 = vsub.s32 %v2103, %v2105
    %v2107 = vrot.slane %v35, %v2106
    %vm2164 = vcmask 261120
    %v2165 = vsel %vm2164, %v2107, 0
    %2167 = vmatprep.subr.mxu0 %v37
    %2168 = vmatpush1.msra.mxu0 %v36
    %2169 = vmatprep.subr.mxu0 %v39
    %2170 = vmatpush1.msra.mxu0 %v38
    %2171 = vmatprep.subr.mxu0 %v41
    %2172 = vmatpush1.msra.mxu0 %v40
    %2173 = vmatprep.subr.mxu0 %v43
    %2174 = vmatpush1.msra.mxu0 %v42
    %2175 = vmatprep.subr.mxu0 %v45
    %2176 = vmatpush1.msra.mxu0 %v44
    %2177 = vmatprep.subr.mxu0 %v47
    %2178 = vmatpush1.msra.mxu0 %v46
    %2179 = vmatprep.subr.mxu0 %v49
    %2180 = vmatpush1.msra.mxu0 %v48
    %2181 = vmatprep.subr.mxu0 %v51
    %2182 = vmatpush1.msra.mxu0 %v50
    %2183 = vmatprep.subr.mxu0 %v53
    %2184 = vmatpush1.msra.mxu0 %v52
    %2185 = vmatprep.subr.mxu0 %v55
    %2186 = vmatpush1.msra.mxu0 %v54
    %2187 = vmatprep.subr.mxu0 %v57
    %2188 = vmatpush1.msra.mxu0 %v56
    %2189 = vmatprep.subr.mxu0 %v59
    %2190 = vmatpush1.msra.mxu0 %v58
    %2191 = vmatprep.subr.mxu0 %v61
    %2192 = vmatpush1.msra.mxu0 %v60
    %2193 = vmatprep.subr.mxu0 %v63
    %2194 = vmatpush1.msra.mxu0 %v62
    %2195 = vmatprep.subr.mxu0 %v65
    %2196 = vmatpush1.msra.mxu0 %v64
    %2197 = vmatprep.subr.mxu0 %v67
    %2198 = vmatpush1.msra.mxu0 %v66
    %2199 = vmatprep.subr.mxu0 %v69
    %2200 = vmatpush1.msra.mxu0 %v68
    %2201 = vmatprep.subr.mxu0 %v71
    %2202 = vmatpush1.msra.mxu0 %v70
    %2203 = vmatprep.subr.mxu0 %v73
    %2204 = vmatpush1.msra.mxu0 %v72
    %2205 = vmatprep.subr.mxu0 %v75
    %2206 = vmatpush1.msra.mxu0 %v74
    %2207 = vmatprep.subr.mxu0 %v77
    %2208 = vmatpush1.msra.mxu0 %v76
    %2209 = vmatprep.subr.mxu0 %v79
    %2210 = vmatpush1.msra.mxu0 %v78
    %2211 = vmatprep.subr.mxu0 %v81
    %2212 = vmatpush1.msra.mxu0 %v80
    %2213 = vmatprep.subr.mxu0 %v83
    %2214 = vmatpush1.msra.mxu0 %v82
    %2215 = vmatprep.subr.mxu0 %v85
    %2216 = vmatpush1.msra.mxu0 %v84
    %2217 = vmatprep.subr.mxu0 %v87
    %2218 = vmatpush1.msra.mxu0 %v86
    %2219 = vmatprep.subr.mxu0 %v89
    %2220 = vmatpush1.msra.mxu0 %v88
    %2221 = vmatprep.subr.mxu0 %v91
    %2222 = vmatpush1.msra.mxu0 %v90
    %2223 = vmatprep.subr.mxu0 %v93
    %2224 = vmatpush1.msra.mxu0 %v92
    %2225 = vmatprep.subr.mxu0 %v95
    %2226 = vmatpush1.msra.mxu0 %v94
    %2227 = vmatprep.subr.mxu0 %v97
    %2228 = vmatpush1.msra.mxu0 %v96
    %2229 = vmatprep.subr.mxu0 %v99
    %2230 = vmatpush1.msra.mxu0 %v98
    %2231 = vmatprep.mubr.f32.mxu0 %v1878
    %2232 = vmatmul.mubr.f32.gmra.mrb[0].mxu0 %v1870
    %v2233 = vpop.f32.mrb[0].mxu0
    %v2234 = vadd.f32 %v1841, %v2233
    %v2235 = vpop.f32.mrb[0].mxu0
    %v2236 = vadd.f32 %v1845, %v2235
    %2237 = vdwg.mxu0
    %2238 = vmatprep.subr.mxu0 %v101
    %2239 = vmatpush1.msra.mxu0 %v100
    %2240 = vmatprep.subr.mxu0 %v103
    %2241 = vmatpush1.msra.mxu0 %v102
    %2242 = vmatprep.subr.mxu0 %v105
    %2243 = vmatpush1.msra.mxu0 %v104
    %2244 = vmatprep.subr.mxu0 %v107
    %2245 = vmatpush1.msra.mxu0 %v106
    %2246 = vmatprep.subr.mxu0 %v109
    %2247 = vmatpush1.msra.mxu0 %v108
    %2248 = vmatprep.subr.mxu0 %v111
    %2249 = vmatpush1.msra.mxu0 %v110
    %2250 = vmatprep.subr.mxu0 %v113
    %2251 = vmatpush1.msra.mxu0 %v112
    %2252 = vmatprep.subr.mxu0 %v115
    %2253 = vmatpush1.msra.mxu0 %v114
    %2254 = vmatprep.subr.mxu0 %v117
    %2255 = vmatpush1.msra.mxu0 %v116
    %2256 = vmatprep.subr.mxu0 %v119
    %2257 = vmatpush1.msra.mxu0 %v118
    %2258 = vmatprep.subr.mxu0 %v121
    %2259 = vmatpush1.msra.mxu0 %v120
    %2260 = vmatprep.subr.mxu0 %v123
    %2261 = vmatpush1.msra.mxu0 %v122
    %2262 = vmatprep.subr.mxu0 %v125
    %2263 = vmatpush1.msra.mxu0 %v124
    %2264 = vmatprep.subr.mxu0 %v127
    %2265 = vmatpush1.msra.mxu0 %v126
    %2266 = vmatprep.subr.mxu0 %v129
    %2267 = vmatpush1.msra.mxu0 %v128
    %2268 = vmatprep.subr.mxu0 %v131
    %2269 = vmatpush1.msra.mxu0 %v130
    %2270 = vmatprep.subr.mxu0 %v133
    %2271 = vmatpush1.msra.mxu0 %v132
    %2272 = vmatprep.subr.mxu0 %v135
    %2273 = vmatpush1.msra.mxu0 %v134
    %2274 = vmatprep.subr.mxu0 %v137
    %2275 = vmatpush1.msra.mxu0 %v136
    %2276 = vmatprep.subr.mxu0 %v139
    %2277 = vmatpush1.msra.mxu0 %v138
    %2278 = vmatprep.subr.mxu0 %v141
    %2279 = vmatpush1.msra.mxu0 %v140
    %2280 = vmatprep.subr.mxu0 %v143
    %2281 = vmatpush1.msra.mxu0 %v142
    %2282 = vmatprep.subr.mxu0 %v145
    %2283 = vmatpush1.msra.mxu0 %v144
    %2284 = vmatprep.subr.mxu0 %v147
    %2285 = vmatpush1.msra.mxu0 %v146
    %2286 = vmatprep.subr.mxu0 %v149
    %2287 = vmatpush1.msra.mxu0 %v148
    %2288 = vmatprep.subr.mxu0 %v151
    %2289 = vmatpush1.msra.mxu0 %v150
    %2290 = vmatprep.subr.mxu0 %v153
    %2291 = vmatpush1.msra.mxu0 %v152
    %2292 = vmatprep.subr.mxu0 %v155
    %2293 = vmatpush1.msra.mxu0 %v154
    %2294 = vmatprep.subr.mxu0 %v157
    %2295 = vmatpush1.msra.mxu0 %v156
    %2296 = vmatprep.subr.mxu0 %v159
    %2297 = vmatpush1.msra.mxu0 %v158
    %2298 = vmatprep.subr.mxu0 %v161
    %2299 = vmatpush1.msra.mxu0 %v160
    %2300 = vmatprep.subr.mxu0 %v163
    %2301 = vmatpush1.msra.mxu0 %v162
    %2302 = vmatprep.mubr.f32.mxu0 %v1879
    %2303 = vmatmul.mubr.f32.gmra.mrb[0].mxu0 %v1877
    %v2304 = vpop.f32.mrb[0].mxu0
    %v2305 = vadd.f32 %v2234, %v2304
    %v2306 = vpop.f32.mrb[0].mxu0
    %v2307 = vadd.f32 %v2236, %v2306
    %2308 = vdwg.mxu0
    %2309 = vmatprep.subr.mxu0 %v165
    %2310 = vmatpush1.msra.mxu0 %v164
    %2311 = vmatprep.subr.mxu0 %v167
    %2312 = vmatpush1.msra.mxu0 %v166
    %2313 = vmatprep.subr.mxu0 %v169
    %2314 = vmatpush1.msra.mxu0 %v168
    %2315 = vmatprep.subr.mxu0 %v171
    %2316 = vmatpush1.msra.mxu0 %v170
    %2317 = vmatprep.subr.mxu0 %v173
    %2318 = vmatpush1.msra.mxu0 %v172
    %2319 = vmatprep.subr.mxu0 %v175
    %2320 = vmatpush1.msra.mxu0 %v174
    %2321 = vmatprep.subr.mxu0 %v177
    %2322 = vmatpush1.msra.mxu0 %v176
    %2323 = vmatprep.subr.mxu0 %v179
    %2324 = vmatpush1.msra.mxu0 %v178
    %2325 = vmatprep.subr.mxu0 %v181
    %2326 = vmatpush1.msra.mxu0 %v180
    %2327 = vmatprep.subr.mxu0 %v183
    %2328 = vmatpush1.msra.mxu0 %v182
    %2329 = vmatprep.subr.mxu0 %v185
    %2330 = vmatpush1.msra.mxu0 %v184
    %2331 = vmatprep.subr.mxu0 %v187
    %2332 = vmatpush1.msra.mxu0 %v186
    %2333 = vmatprep.subr.mxu0 %v189
    %2334 = vmatpush1.msra.mxu0 %v188
    %2335 = vmatprep.subr.mxu0 %v191
    %2336 = vmatpush1.msra.mxu0 %v190
    %2337 = vmatprep.subr.mxu0 %v193
    %2338 = vmatpush1.msra.mxu0 %v192
    %2339 = vmatprep.subr.mxu0 %v195
    %2340 = vmatpush1.msra.mxu0 %v194
    %2341 = vmatprep.subr.mxu0 %v197
    %2342 = vmatpush1.msra.mxu0 %v196
    %2343 = vmatprep.subr.mxu0 %v199
    %2344 = vmatpush1.msra.mxu0 %v198
    %2345 = vmatprep.subr.mxu0 %v201
    %2346 = vmatpush1.msra.mxu0 %v200
    %2347 = vmatprep.subr.mxu0 %v203
    %2348 = vmatpush1.msra.mxu0 %v202
    %2349 = vmatprep.subr.mxu0 %v205
    %2350 = vmatpush1.msra.mxu0 %v204
    %2351 = vmatprep.subr.mxu0 %v207
    %2352 = vmatpush1.msra.mxu0 %v206
    %2353 = vmatprep.subr.mxu0 %v209
    %2354 = vmatpush1.msra.mxu0 %v208
    %2355 = vmatprep.subr.mxu0 %v211
    %2356 = vmatpush1.msra.mxu0 %v210
    %2357 = vmatprep.subr.mxu0 %v213
    %2358 = vmatpush1.msra.mxu0 %v212
    %2359 = vmatprep.subr.mxu0 %v215
    %2360 = vmatpush1.msra.mxu0 %v214
    %2361 = vmatprep.subr.mxu0 %v217
    %2362 = vmatpush1.msra.mxu0 %v216
    %2363 = vmatprep.subr.mxu0 %v219
    %2364 = vmatpush1.msra.mxu0 %v218
    %2365 = vmatprep.subr.mxu0 %v221
    %2366 = vmatpush1.msra.mxu0 %v220
    %2367 = vmatprep.subr.mxu0 %v223
    %2368 = vmatpush1.msra.mxu0 %v222
    %2369 = vmatprep.subr.mxu0 %v225
    %2370 = vmatpush1.msra.mxu0 %v224
    %2371 = vmatprep.subr.mxu0 %v227
    %2372 = vmatpush1.msra.mxu0 %v226
    %2373 = vmatprep.mubr.f32.mxu0 %v1895
    %2374 = vmatmul.mubr.f32.gmra.mrb[0].mxu0 %v1887
    %v2375 = vpop.f32.mrb[0].mxu0
    %v2376 = vadd.f32 %v2305, %v2375
    %v2377 = vpop.f32.mrb[0].mxu0
    %v2378 = vadd.f32 %v2307, %v2377
    %2379 = vdwg.mxu0
    %2380 = vmatprep.subr.mxu0 %v229
    %2381 = vmatpush1.msra.mxu0 %v228
    %2382 = vmatprep.subr.mxu0 %v231
    %2383 = vmatpush1.msra.mxu0 %v230
    %2384 = vmatprep.subr.mxu0 %v233
    %2385 = vmatpush1.msra.mxu0 %v232
    %2386 = vmatprep.subr.mxu0 %v235
    %2387 = vmatpush1.msra.mxu0 %v234
    %2388 = vmatprep.subr.mxu0 %v237
    %2389 = vmatpush1.msra.mxu0 %v236
    %2390 = vmatprep.subr.mxu0 %v239
    %2391 = vmatpush1.msra.mxu0 %v238
    %2392 = vmatprep.subr.mxu0 %v241
    %2393 = vmatpush1.msra.mxu0 %v240
    %2394 = vmatprep.subr.mxu0 %v243
    %2395 = vmatpush1.msra.mxu0 %v242
    %2396 = vmatprep.subr.mxu0 %v245
    %2397 = vmatpush1.msra.mxu0 %v244
    %2398 = vmatprep.subr.mxu0 %v247
    %2399 = vmatpush1.msra.mxu0 %v246
    %2400 = vmatprep.subr.mxu0 %v249
    %2401 = vmatpush1.msra.mxu0 %v248
    %2402 = vmatprep.subr.mxu0 %v251
    %2403 = vmatpush1.msra.mxu0 %v250
    %2404 = vmatprep.subr.mxu0 %v253
    %2405 = vmatpush1.msra.mxu0 %v252
    %2406 = vmatprep.subr.mxu0 %v255
    %2407 = vmatpush1.msra.mxu0 %v254
    %2408 = vmatprep.subr.mxu0 %v257
    %2409 = vmatpush1.msra.mxu0 %v256
    %2410 = vmatprep.subr.mxu0 %v259
    %2411 = vmatpush1.msra.mxu0 %v258
    %2412 = vmatprep.subr.mxu0 %v261
    %2413 = vmatpush1.msra.mxu0 %v260
    %2414 = vmatprep.subr.mxu0 %v263
    %2415 = vmatpush1.msra.mxu0 %v262
    %2416 = vmatprep.subr.mxu0 %v265
    %2417 = vmatpush1.msra.mxu0 %v264
    %2418 = vmatprep.subr.mxu0 %v267
    %2419 = vmatpush1.msra.mxu0 %v266
    %2420 = vmatprep.subr.mxu0 %v269
    %2421 = vmatpush1.msra.mxu0 %v268
    %2422 = vmatprep.subr.mxu0 %v271
    %2423 = vmatpush1.msra.mxu0 %v270
    %2424 = vmatprep.subr.mxu0 %v273
    %2425 = vmatpush1.msra.mxu0 %v272
    %2426 = vmatprep.subr.mxu0 %v275
    %2427 = vmatpush1.msra.mxu0 %v274
    %2428 = vmatprep.subr.mxu0 %v277
    %2429 = vmatpush1.msra.mxu0 %v276
    %2430 = vmatprep.subr.mxu0 %v279
    %2431 = vmatpush1.msra.mxu0 %v278
    %2432 = vmatprep.subr.mxu0 %v281
    %2433 = vmatpush1.msra.mxu0 %v280
    %2434 = vmatprep.subr.mxu0 %v283
    %2435 = vmatpush1.msra.mxu0 %v282
    %2436 = vmatprep.subr.mxu0 %v285
    %2437 = vmatpush1.msra.mxu0 %v284
    %2438 = vmatprep.subr.mxu0 %v287
    %2439 = vmatpush1.msra.mxu0 %v286
    %2440 = vmatprep.subr.mxu0 %v289
    %2441 = vmatpush1.msra.mxu0 %v288
    %2442 = vmatprep.subr.mxu0 %v291
    %2443 = vmatpush1.msra.mxu0 %v290
    %2444 = vmatprep.mubr.f32.mxu0 %v1896
    %2445 = vmatmul.mubr.f32.gmra.mrb[0].mxu0 %v1894
    %v2446 = vpop.f32.mrb[0].mxu0
    %v2447 = vadd.f32 %v2376, %v2446
    %v2448 = vpop.f32.mrb[0].mxu0
    %v2449 = vadd.f32 %v2378, %v2448
    %2450 = vdwg.mxu0
    %2451 = vmatprep.subr.mxu0 %v293
    %2452 = vmatpush1.msra.mxu0 %v292
    %2453 = vmatprep.subr.mxu0 %v295
    %2454 = vmatpush1.msra.mxu0 %v294
    %2455 = vmatprep.subr.mxu0 %v297
    %2456 = vmatpush1.msra.mxu0 %v296
    %2457 = vmatprep.subr.mxu0 %v299
    %2458 = vmatpush1.msra.mxu0 %v298
    %2459 = vmatprep.subr.mxu0 %v301
    %2460 = vmatpush1.msra.mxu0 %v300
    %2461 = vmatprep.subr.mxu0 %v303
    %2462 = vmatpush1.msra.mxu0 %v302
    %2463 = vmatprep.subr.mxu0 %v305
    %2464 = vmatpush1.msra.mxu0 %v304
    %2465 = vmatprep.subr.mxu0 %v307
    %2466 = vmatpush1.msra.mxu0 %v306
    %2467 = vmatprep.subr.mxu0 %v309
    %2468 = vmatpush1.msra.mxu0 %v308
    %2469 = vmatprep.subr.mxu0 %v311
    %2470 = vmatpush1.msra.mxu0 %v310
    %2471 = vmatprep.subr.mxu0 %v313
    %2472 = vmatpush1.msra.mxu0 %v312
    %2473 = vmatprep.subr.mxu0 %v315
    %2474 = vmatpush1.msra.mxu0 %v314
    %2475 = vmatprep.subr.mxu0 %v317
    %2476 = vmatpush1.msra.mxu0 %v316
    %2477 = vmatprep.subr.mxu0 %v319
    %2478 = vmatpush1.msra.mxu0 %v318
    %2479 = vmatprep.subr.mxu0 %v321
    %2480 = vmatpush1.msra.mxu0 %v320
    %2481 = vmatprep.subr.mxu0 %v323
    %2482 = vmatpush1.msra.mxu0 %v322
    %2483 = vmatprep.subr.mxu0 %v325
    %2484 = vmatpush1.msra.mxu0 %v324
    %2485 = vmatprep.subr.mxu0 %v327
    %2486 = vmatpush1.msra.mxu0 %v326
    %2487 = vmatprep.subr.mxu0 %v329
    %2488 = vmatpush1.msra.mxu0 %v328
    %2489 = vmatprep.subr.mxu0 %v331
    %2490 = vmatpush1.msra.mxu0 %v330
    %2491 = vmatprep.subr.mxu0 %v333
    %2492 = vmatpush1.msra.mxu0 %v332
    %2493 = vmatprep.subr.mxu0 %v335
    %2494 = vmatpush1.msra.mxu0 %v334
    %2495 = vmatprep.subr.mxu0 %v337
    %2496 = vmatpush1.msra.mxu0 %v336
    %2497 = vmatprep.subr.mxu0 %v339
    %2498 = vmatpush1.msra.mxu0 %v338
    %2499 = vmatprep.subr.mxu0 %v341
    %2500 = vmatpush1.msra.mxu0 %v340
    %2501 = vmatprep.subr.mxu0 %v343
    %2502 = vmatpush1.msra.mxu0 %v342
    %2503 = vmatprep.subr.mxu0 %v345
    %2504 = vmatpush1.msra.mxu0 %v344
    %2505 = vmatprep.subr.mxu0 %v347
    %2506 = vmatpush1.msra.mxu0 %v346
    %2507 = vmatprep.subr.mxu0 %v349
    %2508 = vmatpush1.msra.mxu0 %v348
    %2509 = vmatprep.subr.mxu0 %v351
    %2510 = vmatpush1.msra.mxu0 %v350
    %2511 = vmatprep.subr.mxu0 %v353
    %2512 = vmatpush1.msra.mxu0 %v352
    %2513 = vmatprep.subr.mxu0 %v355
    %2514 = vmatpush1.msra.mxu0 %v354
    %2515 = vmatprep.mubr.f32.mxu0 %v1912
    %2516 = vmatmul.mubr.f32.gmra.mrb[0].mxu0 %v1904
    %v2517 = vpop.f32.mrb[0].mxu0
    %v2518 = vadd.f32 %v2447, %v2517
    %v2519 = vpop.f32.mrb[0].mxu0
    %v2520 = vadd.f32 %v2449, %v2519
    %2521 = vdwg.mxu0
    %2522 = vmatprep.subr.mxu0 %v357
    %2523 = vmatpush1.msra.mxu0 %v356
    %2524 = vmatprep.subr.mxu0 %v359
    %2525 = vmatpush1.msra.mxu0 %v358
    %2526 = vmatprep.subr.mxu0 %v361
    %2527 = vmatpush1.msra.mxu0 %v360
    %2528 = vmatprep.subr.mxu0 %v363
    %2529 = vmatpush1.msra.mxu0 %v362
    %2530 = vmatprep.subr.mxu0 %v365
    %2531 = vmatpush1.msra.mxu0 %v364
    %2532 = vmatprep.subr.mxu0 %v367
    %2533 = vmatpush1.msra.mxu0 %v366
    %2534 = vmatprep.subr.mxu0 %v369
    %2535 = vmatpush1.msra.mxu0 %v368
    %2536 = vmatprep.subr.mxu0 %v371
    %2537 = vmatpush1.msra.mxu0 %v370
    %2538 = vmatprep.subr.mxu0 %v373
    %2539 = vmatpush1.msra.mxu0 %v372
    %2540 = vmatprep.subr.mxu0 %v375
    %2541 = vmatpush1.msra.mxu0 %v374
    %2542 = vmatprep.subr.mxu0 %v377
    %2543 = vmatpush1.msra.mxu0 %v376
    %2544 = vmatprep.subr.mxu0 %v379
    %2545 = vmatpush1.msra.mxu0 %v378
    %2546 = vmatprep.subr.mxu0 %v381
    %2547 = vmatpush1.msra.mxu0 %v380
    %2548 = vmatprep.subr.mxu0 %v383
    %2549 = vmatpush1.msra.mxu0 %v382
    %2550 = vmatprep.subr.mxu0 %v385
    %2551 = vmatpush1.msra.mxu0 %v384
    %2552 = vmatprep.subr.mxu0 %v387
    %2553 = vmatpush1.msra.mxu0 %v386
    %2554 = vmatprep.subr.mxu0 %v389
    %2555 = vmatpush1.msra.mxu0 %v388
    %2556 = vmatprep.subr.mxu0 %v391
    %2557 = vmatpush1.msra.mxu0 %v390
    %2558 = vmatprep.subr.mxu0 %v393
    %2559 = vmatpush1.msra.mxu0 %v392
    %2560 = vmatprep.subr.mxu0 %v395
    %2561 = vmatpush1.msra.mxu0 %v394
    %2562 = vmatprep.subr.mxu0 %v397
    %2563 = vmatpush1.msra.mxu0 %v396
    %2564 = vmatprep.subr.mxu0 %v399
    %2565 = vmatpush1.msra.mxu0 %v398
    %2566 = vmatprep.subr.mxu0 %v401
    %2567 = vmatpush1.msra.mxu0 %v400
    %2568 = vmatprep.subr.mxu0 %v403
    %2569 = vmatpush1.msra.mxu0 %v402
    %2570 = vmatprep.subr.mxu0 %v405
    %2571 = vmatpush1.msra.mxu0 %v404
    %2572 = vmatprep.subr.mxu0 %v407
    %2573 = vmatpush1.msra.mxu0 %v406
    %2574 = vmatprep.subr.mxu0 %v409
    %2575 = vmatpush1.msra.mxu0 %v408
    %2576 = vmatprep.subr.mxu0 %v411
    %2577 = vmatpush1.msra.mxu0 %v410
    %2578 = vmatprep.subr.mxu0 %v413
    %2579 = vmatpush1.msra.mxu0 %v412
    %2580 = vmatprep.subr.mxu0 %v415
    %2581 = vmatpush1.msra.mxu0 %v414
    %2582 = vmatprep.subr.mxu0 %v417
    %2583 = vmatpush1.msra.mxu0 %v416
    %2584 = vmatprep.subr.mxu0 %v419
    %2585 = vmatpush1.msra.mxu0 %v418
    %2586 = vmatprep.mubr.f32.mxu0 %v1913
    %2587 = vmatmul.mubr.f32.gmra.mrb[0].mxu0 %v1911
    %v2588 = vpop.f32.mrb[0].mxu0
    %v2589 = vadd.f32 %v2518, %v2588
    %v2590 = vpop.f32.mrb[0].mxu0
    %v2591 = vadd.f32 %v2520, %v2590
    %2592 = vdwg.mxu0
    %2593 = vmatprep.subr.mxu0 %v421
    %2594 = vmatpush1.msra.mxu0 %v420
    %2595 = vmatprep.subr.mxu0 %v423
    %2596 = vmatpush1.msra.mxu0 %v422
    %2597 = vmatprep.subr.mxu0 %v425
    %2598 = vmatpush1.msra.mxu0 %v424
    %2599 = vmatprep.subr.mxu0 %v427
    %2600 = vmatpush1.msra.mxu0 %v426
    %2601 = vmatprep.subr.mxu0 %v429
    %2602 = vmatpush1.msra.mxu0 %v428
    %2603 = vmatprep.subr.mxu0 %v431
    %2604 = vmatpush1.msra.mxu0 %v430
    %2605 = vmatprep.subr.mxu0 %v433
    %2606 = vmatpush1.msra.mxu0 %v432
    %2607 = vmatprep.subr.mxu0 %v435
    %2608 = vmatpush1.msra.mxu0 %v434
    %2609 = vmatprep.subr.mxu0 %v437
    %2610 = vmatpush1.msra.mxu0 %v436
    %2611 = vmatprep.subr.mxu0 %v439
    %2612 = vmatpush1.msra.mxu0 %v438
    %2613 = vmatprep.subr.mxu0 %v441
    %2614 = vmatpush1.msra.mxu0 %v440
    %2615 = vmatprep.subr.mxu0 %v443
    %2616 = vmatpush1.msra.mxu0 %v442
    %2617 = vmatprep.subr.mxu0 %v445
    %2618 = vmatpush1.msra.mxu0 %v444
    %2619 = vmatprep.subr.mxu0 %v447
    %2620 = vmatpush1.msra.mxu0 %v446
    %2621 = vmatprep.subr.mxu0 %v449
    %2622 = vmatpush1.msra.mxu0 %v448
    %2623 = vmatprep.subr.mxu0 %v451
    %2624 = vmatpush1.msra.mxu0 %v450
    %2625 = vmatprep.subr.mxu0 %v453
    %2626 = vmatpush1.msra.mxu0 %v452
    %2627 = vmatprep.subr.mxu0 %v455
    %2628 = vmatpush1.msra.mxu0 %v454
    %2629 = vmatprep.subr.mxu0 %v457
    %2630 = vmatpush1.msra.mxu0 %v456
    %2631 = vmatprep.subr.mxu0 %v459
    %2632 = vmatpush1.msra.mxu0 %v458
    %2633 = vmatprep.subr.mxu0 %v461
    %2634 = vmatpush1.msra.mxu0 %v460
    %2635 = vmatprep.subr.mxu0 %v463
    %2636 = vmatpush1.msra.mxu0 %v462
    %2637 = vmatprep.subr.mxu0 %v465
    %2638 = vmatpush1.msra.mxu0 %v464
    %2639 = vmatprep.subr.mxu0 %v467
    %2640 = vmatpush1.msra.mxu0 %v466
    %2641 = vmatprep.subr.mxu0 %v469
    %2642 = vmatpush1.msra.mxu0 %v468
    %2643 = vmatprep.subr.mxu0 %v471
    %2644 = vmatpush1.msra.mxu0 %v470
    %2645 = vmatprep.subr.mxu0 %v473
    %2646 = vmatpush1.msra.mxu0 %v472
    %2647 = vmatprep.subr.mxu0 %v475
    %2648 = vmatpush1.msra.mxu0 %v474
    %2649 = vmatprep.subr.mxu0 %v477
    %2650 = vmatpush1.msra.mxu0 %v476
    %2651 = vmatprep.subr.mxu0 %v479
    %2652 = vmatpush1.msra.mxu0 %v478
    %2653 = vmatprep.subr.mxu0 %v481
    %2654 = vmatpush1.msra.mxu0 %v480
    %2655 = vmatprep.subr.mxu0 %v483
    %2656 = vmatpush1.msra.mxu0 %v482
    %2657 = vmatprep.mubr.f32.mxu0 %v1929
    %2658 = vmatmul.mubr.f32.gmra.mrb[0].mxu0 %v1921
    %v2659 = vpop.f32.mrb[0].mxu0
    %v2660 = vadd.f32 %v2589, %v2659
    %v2661 = vpop.f32.mrb[0].mxu0
    %v2662 = vadd.f32 %v2591, %v2661
    %2663 = vdwg.mxu0
    %2664 = vmatprep.subr.mxu0 %v485
    %2665 = vmatpush1.msra.mxu0 %v484
    %2666 = vmatprep.subr.mxu0 %v487
    %2667 = vmatpush1.msra.mxu0 %v486
    %2668 = vmatprep.subr.mxu0 %v489
    %2669 = vmatpush1.msra.mxu0 %v488
    %2670 = vmatprep.subr.mxu0 %v491
    %2671 = vmatpush1.msra.mxu0 %v490
    %2672 = vmatprep.subr.mxu0 %v493
    %2673 = vmatpush1.msra.mxu0 %v492
    %2674 = vmatprep.subr.mxu0 %v495
    %2675 = vmatpush1.msra.mxu0 %v494
    %2676 = vmatprep.subr.mxu0 %v497
    %2677 = vmatpush1.msra.mxu0 %v496
    %2678 = vmatprep.subr.mxu0 %v499
    %2679 = vmatpush1.msra.mxu0 %v498
    %2680 = vmatprep.subr.mxu0 %v501
    %2681 = vmatpush1.msra.mxu0 %v500
    %2682 = vmatprep.subr.mxu0 %v503
    %2683 = vmatpush1.msra.mxu0 %v502
    %2684 = vmatprep.subr.mxu0 %v505
    %2685 = vmatpush1.msra.mxu0 %v504
    %2686 = vmatprep.subr.mxu0 %v507
    %2687 = vmatpush1.msra.mxu0 %v506
    %2688 = vmatprep.subr.mxu0 %v509
    %2689 = vmatpush1.msra.mxu0 %v508
    %2690 = vmatprep.subr.mxu0 %v511
    %2691 = vmatpush1.msra.mxu0 %v510
    %2692 = vmatprep.subr.mxu0 %v513
    %2693 = vmatpush1.msra.mxu0 %v512
    %2694 = vmatprep.subr.mxu0 %v515
    %2695 = vmatpush1.msra.mxu0 %v514
    %2696 = vmatprep.subr.mxu0 %v517
    %2697 = vmatpush1.msra.mxu0 %v516
    %2698 = vmatprep.subr.mxu0 %v519
    %2699 = vmatpush1.msra.mxu0 %v518
    %2700 = vmatprep.subr.mxu0 %v521
    %2701 = vmatpush1.msra.mxu0 %v520
    %2702 = vmatprep.subr.mxu0 %v523
    %2703 = vmatpush1.msra.mxu0 %v522
    %2704 = vmatprep.subr.mxu0 %v525
    %2705 = vmatpush1.msra.mxu0 %v524
    %2706 = vmatprep.subr.mxu0 %v527
    %2707 = vmatpush1.msra.mxu0 %v526
    %2708 = vmatprep.subr.mxu0 %v529
    %2709 = vmatpush1.msra.mxu0 %v528
    %2710 = vmatprep.subr.mxu0 %v531
    %2711 = vmatpush1.msra.mxu0 %v530
    %2712 = vmatprep.subr.mxu0 %v533
    %2713 = vmatpush1.msra.mxu0 %v532
    %2714 = vmatprep.subr.mxu0 %v535
    %2715 = vmatpush1.msra.mxu0 %v534
    %2716 = vmatprep.subr.mxu0 %v537
    %2717 = vmatpush1.msra.mxu0 %v536
    %2718 = vmatprep.subr.mxu0 %v539
    %2719 = vmatpush1.msra.mxu0 %v538
    %2720 = vmatprep.subr.mxu0 %v541
    %2721 = vmatpush1.msra.mxu0 %v540
    %2722 = vmatprep.subr.mxu0 %v543
    %2723 = vmatpush1.msra.mxu0 %v542
    %2724 = vmatprep.subr.mxu0 %v545
    %2725 = vmatpush1.msra.mxu0 %v544
    %2726 = vmatprep.subr.mxu0 %v547
    %2727 = vmatpush1.msra.mxu0 %v546
    %2728 = vmatprep.mubr.f32.mxu0 %v1930
    %2729 = vmatmul.mubr.f32.gmra.mrb[0].mxu0 %v1928
    %v2730 = vpop.f32.mrb[0].mxu0
    %v2731 = vadd.f32 %v2660, %v2730
    %v2732 = vpop.f32.mrb[0].mxu0
    %v2733 = vadd.f32 %v2662, %v2732
    %2734 = vdwg.mxu0
    %2735 = vmatprep.subr.mxu0 %v549
    %2736 = vmatpush1.msra.mxu0 %v548
    %2737 = vmatprep.subr.mxu0 %v551
    %2738 = vmatpush1.msra.mxu0 %v550
    %2739 = vmatprep.subr.mxu0 %v553
    %2740 = vmatpush1.msra.mxu0 %v552
    %2741 = vmatprep.subr.mxu0 %v555
    %2742 = vmatpush1.msra.mxu0 %v554
    %2743 = vmatprep.subr.mxu0 %v557
    %2744 = vmatpush1.msra.mxu0 %v556
    %2745 = vmatprep.subr.mxu0 %v559
    %2746 = vmatpush1.msra.mxu0 %v558
    %2747 = vmatprep.subr.mxu0 %v561
    %2748 = vmatpush1.msra.mxu0 %v560
    %2749 = vmatprep.subr.mxu0 %v563
    %2750 = vmatpush1.msra.mxu0 %v562
    %2751 = vmatprep.subr.mxu0 %v565
    %2752 = vmatpush1.msra.mxu0 %v564
    %2753 = vmatprep.subr.mxu0 %v567
    %2754 = vmatpush1.msra.mxu0 %v566
    %2755 = vmatprep.subr.mxu0 %v569
    %2756 = vmatpush1.msra.mxu0 %v568
    %2757 = vmatprep.subr.mxu0 %v571
    %2758 = vmatpush1.msra.mxu0 %v570
    %2759 = vmatprep.subr.mxu0 %v573
    %2760 = vmatpush1.msra.mxu0 %v572
    %2761 = vmatprep.subr.mxu0 %v575
    %2762 = vmatpush1.msra.mxu0 %v574
    %2763 = vmatprep.subr.mxu0 %v577
    %2764 = vmatpush1.msra.mxu0 %v576
    %2765 = vmatprep.subr.mxu0 %v579
    %2766 = vmatpush1.msra.mxu0 %v578
    %2767 = vmatprep.subr.mxu0 %v581
    %2768 = vmatpush1.msra.mxu0 %v580
    %2769 = vmatprep.subr.mxu0 %v583
    %2770 = vmatpush1.msra.mxu0 %v582
    %2771 = vmatprep.subr.mxu0 %v585
    %2772 = vmatpush1.msra.mxu0 %v584
    %2773 = vmatprep.subr.mxu0 %v587
    %2774 = vmatpush1.msra.mxu0 %v586
    %2775 = vmatprep.subr.mxu0 %v589
    %2776 = vmatpush1.msra.mxu0 %v588
    %2777 = vmatprep.subr.mxu0 %v591
    %2778 = vmatpush1.msra.mxu0 %v590
    %2779 = vmatprep.subr.mxu0 %v593
    %2780 = vmatpush1.msra.mxu0 %v592
    %2781 = vmatprep.subr.mxu0 %v595
    %2782 = vmatpush1.msra.mxu0 %v594
    %2783 = vmatprep.subr.mxu0 %v597
    %2784 = vmatpush1.msra.mxu0 %v596
    %2785 = vmatprep.subr.mxu0 %v599
    %2786 = vmatpush1.msra.mxu0 %v598
    %2787 = vmatprep.subr.mxu0 %v601
    %2788 = vmatpush1.msra.mxu0 %v600
    %2789 = vmatprep.subr.mxu0 %v603
    %2790 = vmatpush1.msra.mxu0 %v602
    %2791 = vmatprep.subr.mxu0 %v605
    %2792 = vmatpush1.msra.mxu0 %v604
    %2793 = vmatprep.subr.mxu0 %v607
    %2794 = vmatpush1.msra.mxu0 %v606
    %2795 = vmatprep.subr.mxu0 %v609
    %2796 = vmatpush1.msra.mxu0 %v608
    %2797 = vmatprep.subr.mxu0 %v611
    %2798 = vmatpush1.msra.mxu0 %v610
    %2799 = vmatprep.mubr.f32.mxu0 %v1946
    %2800 = vmatmul.mubr.f32.gmra.mrb[0].mxu0 %v1938
    %v2801 = vpop.f32.mrb[0].mxu0
    %v2802 = vadd.f32 %v2731, %v2801
    %v2803 = vpop.f32.mrb[0].mxu0
    %v2804 = vadd.f32 %v2733, %v2803
    %2805 = vdwg.mxu0
    %2806 = vmatprep.subr.mxu0 %v613
    %2807 = vmatpush1.msra.mxu0 %v612
    %2808 = vmatprep.subr.mxu0 %v615
    %2809 = vmatpush1.msra.mxu0 %v614
    %2810 = vmatprep.subr.mxu0 %v617
    %2811 = vmatpush1.msra.mxu0 %v616
    %2812 = vmatprep.subr.mxu0 %v619
    %2813 = vmatpush1.msra.mxu0 %v618
    %2814 = vmatprep.subr.mxu0 %v621
    %2815 = vmatpush1.msra.mxu0 %v620
    %2816 = vmatprep.subr.mxu0 %v623
    %2817 = vmatpush1.msra.mxu0 %v622
    %2818 = vmatprep.subr.mxu0 %v625
    %2819 = vmatpush1.msra.mxu0 %v624
    %2820 = vmatprep.subr.mxu0 %v627
    %2821 = vmatpush1.msra.mxu0 %v626
    %2822 = vmatprep.subr.mxu0 %v629
    %2823 = vmatpush1.msra.mxu0 %v628
    %2824 = vmatprep.subr.mxu0 %v631
    %2825 = vmatpush1.msra.mxu0 %v630
    %2826 = vmatprep.subr.mxu0 %v633
    %2827 = vmatpush1.msra.mxu0 %v632
    %2828 = vmatprep.subr.mxu0 %v635
    %2829 = vmatpush1.msra.mxu0 %v634
    %2830 = vmatprep.subr.mxu0 %v637
    %2831 = vmatpush1.msra.mxu0 %v636
    %2832 = vmatprep.subr.mxu0 %v639
    %2833 = vmatpush1.msra.mxu0 %v638
    %2834 = vmatprep.subr.mxu0 %v641
    %2835 = vmatpush1.msra.mxu0 %v640
    %2836 = vmatprep.subr.mxu0 %v643
    %2837 = vmatpush1.msra.mxu0 %v642
    %2838 = vmatprep.subr.mxu0 %v645
    %2839 = vmatpush1.msra.mxu0 %v644
    %2840 = vmatprep.subr.mxu0 %v647
    %2841 = vmatpush1.msra.mxu0 %v646
    %2842 = vmatprep.subr.mxu0 %v649
    %2843 = vmatpush1.msra.mxu0 %v648
    %2844 = vmatprep.subr.mxu0 %v651
    %2845 = vmatpush1.msra.mxu0 %v650
    %2846 = vmatprep.subr.mxu0 %v653
    %2847 = vmatpush1.msra.mxu0 %v652
    %2848 = vmatprep.subr.mxu0 %v655
    %2849 = vmatpush1.msra.mxu0 %v654
    %2850 = vmatprep.subr.mxu0 %v657
    %2851 = vmatpush1.msra.mxu0 %v656
    %2852 = vmatprep.subr.mxu0 %v659
    %2853 = vmatpush1.msra.mxu0 %v658
    %2854 = vmatprep.subr.mxu0 %v661
    %2855 = vmatpush1.msra.mxu0 %v660
    %2856 = vmatprep.subr.mxu0 %v663
    %2857 = vmatpush1.msra.mxu0 %v662
    %2858 = vmatprep.subr.mxu0 %v665
    %2859 = vmatpush1.msra.mxu0 %v664
    %2860 = vmatprep.subr.mxu0 %v667
    %2861 = vmatpush1.msra.mxu0 %v666
    %2862 = vmatprep.subr.mxu0 %v669
    %2863 = vmatpush1.msra.mxu0 %v668
    %2864 = vmatprep.subr.mxu0 %v671
    %2865 = vmatpush1.msra.mxu0 %v670
    %2866 = vmatprep.subr.mxu0 %v673
    %2867 = vmatpush1.msra.mxu0 %v672
    %2868 = vmatprep.subr.mxu0 %v675
    %2869 = vmatpush1.msra.mxu0 %v674
    %2870 = vmatprep.mubr.f32.mxu0 %v1947
    %2871 = vmatmul.mubr.f32.gmra.mrb[0].mxu0 %v1945
    %v2872 = vpop.f32.mrb[0].mxu0
    %v2873 = vadd.f32 %v2802, %v2872
    %v2874 = vpop.f32.mrb[0].mxu0
    %v2875 = vadd.f32 %v2804, %v2874
    %2876 = vdwg.mxu0
    %2877 = vmatprep.subr.mxu0 %v677
    %2878 = vmatpush1.msra.mxu0 %v676
    %2879 = vmatprep.subr.mxu0 %v679
    %2880 = vmatpush1.msra.mxu0 %v678
    %2881 = vmatprep.subr.mxu0 %v681
    %2882 = vmatpush1.msra.mxu0 %v680
    %2883 = vmatprep.subr.mxu0 %v683
    %2884 = vmatpush1.msra.mxu0 %v682
    %2885 = vmatprep.subr.mxu0 %v685
    %2886 = vmatpush1.msra.mxu0 %v684
    %2887 = vmatprep.subr.mxu0 %v687
    %2888 = vmatpush1.msra.mxu0 %v686
    %2889 = vmatprep.subr.mxu0 %v689
    %2890 = vmatpush1.msra.mxu0 %v688
    %2891 = vmatprep.subr.mxu0 %v691
    %2892 = vmatpush1.msra.mxu0 %v690
    %2893 = vmatprep.subr.mxu0 %v693
    %2894 = vmatpush1.msra.mxu0 %v692
    %2895 = vmatprep.subr.mxu0 %v695
    %2896 = vmatpush1.msra.mxu0 %v694
    %2897 = vmatprep.subr.mxu0 %v697
    %2898 = vmatpush1.msra.mxu0 %v696
    %2899 = vmatprep.subr.mxu0 %v699
    %2900 = vmatpush1.msra.mxu0 %v698
    %2901 = vmatprep.subr.mxu0 %v701
    %2902 = vmatpush1.msra.mxu0 %v700
    %2903 = vmatprep.subr.mxu0 %v703
    %2904 = vmatpush1.msra.mxu0 %v702
    %2905 = vmatprep.subr.mxu0 %v705
    %2906 = vmatpush1.msra.mxu0 %v704
    %2907 = vmatprep.subr.mxu0 %v707
    %2908 = vmatpush1.msra.mxu0 %v706
    %2909 = vmatprep.subr.mxu0 %v709
    %2910 = vmatpush1.msra.mxu0 %v708
    %2911 = vmatprep.subr.mxu0 %v711
    %2912 = vmatpush1.msra.mxu0 %v710
    %2913 = vmatprep.subr.mxu0 %v713
    %2914 = vmatpush1.msra.mxu0 %v712
    %2915 = vmatprep.subr.mxu0 %v715
    %2916 = vmatpush1.msra.mxu0 %v714
    %2917 = vmatprep.subr.mxu0 %v717
    %2918 = vmatpush1.msra.mxu0 %v716
    %2919 = vmatprep.subr.mxu0 %v719
    %2920 = vmatpush1.msra.mxu0 %v718
    %2921 = vmatprep.subr.mxu0 %v721
    %2922 = vmatpush1.msra.mxu0 %v720
    %2923 = vmatprep.subr.mxu0 %v723
    %2924 = vmatpush1.msra.mxu0 %v722
    %2925 = vmatprep.subr.mxu0 %v725
    %2926 = vmatpush1.msra.mxu0 %v724
    %2927 = vmatprep.subr.mxu0 %v727
    %2928 = vmatpush1.msra.mxu0 %v726
    %2929 = vmatprep.subr.mxu0 %v729
    %2930 = vmatpush1.msra.mxu0 %v728
    %2931 = vmatprep.subr.mxu0 %v731
    %2932 = vmatpush1.msra.mxu0 %v730
    %2933 = vmatprep.subr.mxu0 %v733
    %2934 = vmatpush1.msra.mxu0 %v732
    %2935 = vmatprep.subr.mxu0 %v735
    %2936 = vmatpush1.msra.mxu0 %v734
    %2937 = vmatprep.subr.mxu0 %v737
    %2938 = vmatpush1.msra.mxu0 %v736
    %2939 = vmatprep.subr.mxu0 %v739
    %2940 = vmatpush1.msra.mxu0 %v738
    %2941 = vmatprep.mubr.f32.mxu0 %v1963
    %2942 = vmatmul.mubr.f32.gmra.mrb[0].mxu0 %v1955
    %v2943 = vpop.f32.mrb[0].mxu0
    %v2944 = vadd.f32 %v2873, %v2943
    %v2945 = vpop.f32.mrb[0].mxu0
    %v2946 = vadd.f32 %v2875, %v2945
    %2947 = vdwg.mxu0
    %2948 = vmatprep.subr.mxu0 %v741
    %2949 = vmatpush1.msra.mxu0 %v740
    %2950 = vmatprep.subr.mxu0 %v743
    %2951 = vmatpush1.msra.mxu0 %v742
    %2952 = vmatprep.subr.mxu0 %v745
    %2953 = vmatpush1.msra.mxu0 %v744
    %2954 = vmatprep.subr.mxu0 %v747
    %2955 = vmatpush1.msra.mxu0 %v746
    %2956 = vmatprep.subr.mxu0 %v749
    %2957 = vmatpush1.msra.mxu0 %v748
    %2958 = vmatprep.subr.mxu0 %v751
    %2959 = vmatpush1.msra.mxu0 %v750
    %2960 = vmatprep.subr.mxu0 %v753
    %2961 = vmatpush1.msra.mxu0 %v752
    %2962 = vmatprep.subr.mxu0 %v755
    %2963 = vmatpush1.msra.mxu0 %v754
    %2964 = vmatprep.subr.mxu0 %v757
    %2965 = vmatpush1.msra.mxu0 %v756
    %2966 = vmatprep.subr.mxu0 %v759
    %2967 = vmatpush1.msra.mxu0 %v758
    %2968 = vmatprep.subr.mxu0 %v761
    %2969 = vmatpush1.msra.mxu0 %v760
    %2970 = vmatprep.subr.mxu0 %v763
    %2971 = vmatpush1.msra.mxu0 %v762
    %2972 = vmatprep.subr.mxu0 %v765
    %2973 = vmatpush1.msra.mxu0 %v764
    %2974 = vmatprep.subr.mxu0 %v767
    %2975 = vmatpush1.msra.mxu0 %v766
    %2976 = vmatprep.subr.mxu0 %v769
    %2977 = vmatpush1.msra.mxu0 %v768
    %2978 = vmatprep.subr.mxu0 %v771
    %2979 = vmatpush1.msra.mxu0 %v770
    %2980 = vmatprep.subr.mxu0 %v773
    %2981 = vmatpush1.msra.mxu0 %v772
    %2982 = vmatprep.subr.mxu0 %v775
    %2983 = vmatpush1.msra.mxu0 %v774
    %2984 = vmatprep.subr.mxu0 %v777
    %2985 = vmatpush1.msra.mxu0 %v776
    %2986 = vmatprep.subr.mxu0 %v779
    %2987 = vmatpush1.msra.mxu0 %v778
    %2988 = vmatprep.subr.mxu0 %v781
    %2989 = vmatpush1.msra.mxu0 %v780
    %2990 = vmatprep.subr.mxu0 %v783
    %2991 = vmatpush1.msra.mxu0 %v782
    %2992 = vmatprep.subr.mxu0 %v785
    %2993 = vmatpush1.msra.mxu0 %v784
    %2994 = vmatprep.subr.mxu0 %v787
    %2995 = vmatpush1.msra.mxu0 %v786
    %2996 = vmatprep.subr.mxu0 %v789
    %2997 = vmatpush1.msra.mxu0 %v788
    %2998 = vmatprep.subr.mxu0 %v791
    %2999 = vmatpush1.msra.mxu0 %v790
    %3000 = vmatprep.subr.mxu0 %v793
    %3001 = vmatpush1.msra.mxu0 %v792
    %3002 = vmatprep.subr.mxu0 %v795
    %3003 = vmatpush1.msra.mxu0 %v794
    %3004 = vmatprep.subr.mxu0 %v797
    %3005 = vmatpush1.msra.mxu0 %v796
    %3006 = vmatprep.subr.mxu0 %v799
    %3007 = vmatpush1.msra.mxu0 %v798
    %3008 = vmatprep.subr.mxu0 %v801
    %3009 = vmatpush1.msra.mxu0 %v800
    %3010 = vmatprep.subr.mxu0 %v803
    %3011 = vmatpush1.msra.mxu0 %v802
    %3012 = vmatprep.mubr.f32.mxu0 %v1964
    %3013 = vmatmul.mubr.f32.gmra.mrb[0].mxu0 %v1962
    %v3014 = vpop.f32.mrb[0].mxu0
    %v3015 = vadd.f32 %v2944, %v3014
    %v3016 = vpop.f32.mrb[0].mxu0
    %v3017 = vadd.f32 %v2946, %v3016
    %3018 = vdwg.mxu0
    %3019 = vmatprep.subr.mxu0 %v805
    %3020 = vmatpush1.msra.mxu0 %v804
    %3021 = vmatprep.subr.mxu0 %v807
    %3022 = vmatpush1.msra.mxu0 %v806
    %3023 = vmatprep.subr.mxu0 %v809
    %3024 = vmatpush1.msra.mxu0 %v808
    %3025 = vmatprep.subr.mxu0 %v811
    %3026 = vmatpush1.msra.mxu0 %v810
    %3027 = vmatprep.subr.mxu0 %v813
    %3028 = vmatpush1.msra.mxu0 %v812
    %3029 = vmatprep.subr.mxu0 %v815
    %3030 = vmatpush1.msra.mxu0 %v814
    %3031 = vmatprep.subr.mxu0 %v817
    %3032 = vmatpush1.msra.mxu0 %v816
    %3033 = vmatprep.subr.mxu0 %v819
    %3034 = vmatpush1.msra.mxu0 %v818
    %3035 = vmatprep.subr.mxu0 %v821
    %3036 = vmatpush1.msra.mxu0 %v820
    %3037 = vmatprep.subr.mxu0 %v823
    %3038 = vmatpush1.msra.mxu0 %v822
    %3039 = vmatprep.subr.mxu0 %v825
    %3040 = vmatpush1.msra.mxu0 %v824
    %3041 = vmatprep.subr.mxu0 %v827
    %3042 = vmatpush1.msra.mxu0 %v826
    %3043 = vmatprep.subr.mxu0 %v829
    %3044 = vmatpush1.msra.mxu0 %v828
    %3045 = vmatprep.subr.mxu0 %v831
    %3046 = vmatpush1.msra.mxu0 %v830
    %3047 = vmatprep.subr.mxu0 %v833
    %3048 = vmatpush1.msra.mxu0 %v832
    %3049 = vmatprep.subr.mxu0 %v835
    %3050 = vmatpush1.msra.mxu0 %v834
    %3051 = vmatprep.subr.mxu0 %v837
    %3052 = vmatpush1.msra.mxu0 %v836
    %3053 = vmatprep.subr.mxu0 %v839
    %3054 = vmatpush1.msra.mxu0 %v838
    %3055 = vmatprep.subr.mxu0 %v841
    %3056 = vmatpush1.msra.mxu0 %v840
    %3057 = vmatprep.subr.mxu0 %v843
    %3058 = vmatpush1.msra.mxu0 %v842
    %3059 = vmatprep.subr.mxu0 %v845
    %3060 = vmatpush1.msra.mxu0 %v844
    %3061 = vmatprep.subr.mxu0 %v847
    %3062 = vmatpush1.msra.mxu0 %v846
    %3063 = vmatprep.subr.mxu0 %v849
    %3064 = vmatpush1.msra.mxu0 %v848
    %3065 = vmatprep.subr.mxu0 %v851
    %3066 = vmatpush1.msra.mxu0 %v850
    %3067 = vmatprep.subr.mxu0 %v853
    %3068 = vmatpush1.msra.mxu0 %v852
    %3069 = vmatprep.subr.mxu0 %v855
    %3070 = vmatpush1.msra.mxu0 %v854
    %3071 = vmatprep.subr.mxu0 %v857
    %3072 = vmatpush1.msra.mxu0 %v856
    %3073 = vmatprep.subr.mxu0 %v859
    %3074 = vmatpush1.msra.mxu0 %v858
    %3075 = vmatprep.subr.mxu0 %v861
    %3076 = vmatpush1.msra.mxu0 %v860
    %3077 = vmatprep.subr.mxu0 %v863
    %3078 = vmatpush1.msra.mxu0 %v862
    %3079 = vmatprep.subr.mxu0 %v865
    %3080 = vmatpush1.msra.mxu0 %v864
    %3081 = vmatprep.subr.mxu0 %v867
    %3082 = vmatpush1.msra.mxu0 %v866
    %3083 = vmatprep.mubr.f32.mxu0 %v1980
    %3084 = vmatmul.mubr.f32.gmra.mrb[0].mxu0 %v1972
    %v3085 = vpop.f32.mrb[0].mxu0
    %v3086 = vadd.f32 %v3015, %v3085
    %v3087 = vpop.f32.mrb[0].mxu0
    %v3088 = vadd.f32 %v3017, %v3087
    %3089 = vdwg.mxu0
    %3090 = vmatprep.subr.mxu0 %v869
    %3091 = vmatpush1.msra.mxu0 %v868
    %3092 = vmatprep.subr.mxu0 %v871
    %3093 = vmatpush1.msra.mxu0 %v870
    %3094 = vmatprep.subr.mxu0 %v873
    %3095 = vmatpush1.msra.mxu0 %v872
    %3096 = vmatprep.subr.mxu0 %v875
    %3097 = vmatpush1.msra.mxu0 %v874
    %3098 = vmatprep.subr.mxu0 %v877
    %3099 = vmatpush1.msra.mxu0 %v876
    %3100 = vmatprep.subr.mxu0 %v879
    %3101 = vmatpush1.msra.mxu0 %v878
    %3102 = vmatprep.subr.mxu0 %v881
    %3103 = vmatpush1.msra.mxu0 %v880
    %3104 = vmatprep.subr.mxu0 %v883
    %3105 = vmatpush1.msra.mxu0 %v882
    %3106 = vmatprep.subr.mxu0 %v885
    %3107 = vmatpush1.msra.mxu0 %v884
    %3108 = vmatprep.subr.mxu0 %v887
    %3109 = vmatpush1.msra.mxu0 %v886
    %3110 = vmatprep.subr.mxu0 %v889
    %3111 = vmatpush1.msra.mxu0 %v888
    %3112 = vmatprep.subr.mxu0 %v891
    %3113 = vmatpush1.msra.mxu0 %v890
    %3114 = vmatprep.subr.mxu0 %v893
    %3115 = vmatpush1.msra.mxu0 %v892
    %3116 = vmatprep.subr.mxu0 %v895
    %3117 = vmatpush1.msra.mxu0 %v894
    %3118 = vmatprep.subr.mxu0 %v897
    %3119 = vmatpush1.msra.mxu0 %v896
    %3120 = vmatprep.subr.mxu0 %v899
    %3121 = vmatpush1.msra.mxu0 %v898
    %3122 = vmatprep.subr.mxu0 %v901
    %3123 = vmatpush1.msra.mxu0 %v900
    %3124 = vmatprep.subr.mxu0 %v903
    %3125 = vmatpush1.msra.mxu0 %v902
    %3126 = vmatprep.subr.mxu0 %v905
    %3127 = vmatpush1.msra.mxu0 %v904
    %3128 = vmatprep.subr.mxu0 %v907
    %3129 = vmatpush1.msra.mxu0 %v906
    %3130 = vmatprep.subr.mxu0 %v909
    %3131 = vmatpush1.msra.mxu0 %v908
    %3132 = vmatprep.subr.mxu0 %v911
    %3133 = vmatpush1.msra.mxu0 %v910
    %3134 = vmatprep.subr.mxu0 %v913
    %3135 = vmatpush1.msra.mxu0 %v912
    %3136 = vmatprep.subr.mxu0 %v915
    %3137 = vmatpush1.msra.mxu0 %v914
    %3138 = vmatprep.subr.mxu0 %v917
    %3139 = vmatpush1.msra.mxu0 %v916
    %3140 = vmatprep.subr.mxu0 %v919
    %3141 = vmatpush1.msra.mxu0 %v918
    %3142 = vmatprep.subr.mxu0 %v921
    %3143 = vmatpush1.msra.mxu0 %v920
    %3144 = vmatprep.subr.mxu0 %v923
    %3145 = vmatpush1.msra.mxu0 %v922
    %3146 = vmatprep.subr.mxu0 %v925
    %3147 = vmatpush1.msra.mxu0 %v924
    %3148 = vmatprep.subr.mxu0 %v927
    %3149 = vmatpush1.msra.mxu0 %v926
    %3150 = vmatprep.subr.mxu0 %v929
    %3151 = vmatpush1.msra.mxu0 %v928
    %3152 = vmatprep.subr.mxu0 %v931
    %3153 = vmatpush1.msra.mxu0 %v930
    %3154 = vmatprep.mubr.f32.mxu0 %v1981
    %3155 = vmatmul.mubr.f32.gmra.mrb[0].mxu0 %v1979
    %v3156 = vpop.f32.mrb[0].mxu0
    %v3157 = vadd.f32 %v3086, %v3156
    %v3158 = vpop.f32.mrb[0].mxu0
    %v3159 = vadd.f32 %v3088, %v3158
    %3160 = vdwg.mxu0
    %3161 = vmatprep.subr.mxu0 %v933
    %3162 = vmatpush1.msra.mxu0 %v932
    %3163 = vmatprep.subr.mxu0 %v935
    %3164 = vmatpush1.msra.mxu0 %v934
    %3165 = vmatprep.subr.mxu0 %v937
    %3166 = vmatpush1.msra.mxu0 %v936
    %3167 = vmatprep.subr.mxu0 %v939
    %3168 = vmatpush1.msra.mxu0 %v938
    %3169 = vmatprep.subr.mxu0 %v941
    %3170 = vmatpush1.msra.mxu0 %v940
    %3171 = vmatprep.subr.mxu0 %v943
    %3172 = vmatpush1.msra.mxu0 %v942
    %3173 = vmatprep.subr.mxu0 %v945
    %3174 = vmatpush1.msra.mxu0 %v944
    %3175 = vmatprep.subr.mxu0 %v947
    %3176 = vmatpush1.msra.mxu0 %v946
    %3177 = vmatprep.subr.mxu0 %v949
    %3178 = vmatpush1.msra.mxu0 %v948
    %3179 = vmatprep.subr.mxu0 %v951
    %3180 = vmatpush1.msra.mxu0 %v950
    %3181 = vmatprep.subr.mxu0 %v953
    %3182 = vmatpush1.msra.mxu0 %v952
    %3183 = vmatprep.subr.mxu0 %v955
    %3184 = vmatpush1.msra.mxu0 %v954
    %3185 = vmatprep.subr.mxu0 %v957
    %3186 = vmatpush1.msra.mxu0 %v956
    %3187 = vmatprep.subr.mxu0 %v959
    %3188 = vmatpush1.msra.mxu0 %v958
    %3189 = vmatprep.subr.mxu0 %v961
    %3190 = vmatpush1.msra.mxu0 %v960
    %3191 = vmatprep.subr.mxu0 %v963
    %3192 = vmatpush1.msra.mxu0 %v962
    %3193 = vmatprep.subr.mxu0 %v965
    %3194 = vmatpush1.msra.mxu0 %v964
    %3195 = vmatprep.subr.mxu0 %v967
    %3196 = vmatpush1.msra.mxu0 %v966
    %3197 = vmatprep.subr.mxu0 %v969
    %3198 = vmatpush1.msra.mxu0 %v968
    %3199 = vmatprep.subr.mxu0 %v971
    %3200 = vmatpush1.msra.mxu0 %v970
    %3201 = vmatprep.subr.mxu0 %v973
    %3202 = vmatpush1.msra.mxu0 %v972
    %3203 = vmatprep.subr.mxu0 %v975
    %3204 = vmatpush1.msra.mxu0 %v974
    %3205 = vmatprep.subr.mxu0 %v977
    %3206 = vmatpush1.msra.mxu0 %v976
    %3207 = vmatprep.subr.mxu0 %v979
    %3208 = vmatpush1.msra.mxu0 %v978
    %3209 = vmatprep.subr.mxu0 %v981
    %3210 = vmatpush1.msra.mxu0 %v980
    %3211 = vmatprep.subr.mxu0 %v983
    %3212 = vmatpush1.msra.mxu0 %v982
    %3213 = vmatprep.subr.mxu0 %v985
    %3214 = vmatpush1.msra.mxu0 %v984
    %3215 = vmatprep.subr.mxu0 %v987
    %3216 = vmatpush1.msra.mxu0 %v986
    %3217 = vmatprep.subr.mxu0 %v989
    %3218 = vmatpush1.msra.mxu0 %v988
    %3219 = vmatprep.subr.mxu0 %v991
    %3220 = vmatpush1.msra.mxu0 %v990
    %3221 = vmatprep.subr.mxu0 %v993
    %3222 = vmatpush1.msra.mxu0 %v992
    %3223 = vmatprep.subr.mxu0 %v995
    %3224 = vmatpush1.msra.mxu0 %v994
    %3225 = vmatprep.mubr.f32.mxu0 %v1997
    %3226 = vmatmul.mubr.f32.gmra.mrb[0].mxu0 %v1989
    %v3227 = vpop.f32.mrb[0].mxu0
    %v3228 = vadd.f32 %v3157, %v3227
    %v3229 = vpop.f32.mrb[0].mxu0
    %v3230 = vadd.f32 %v3159, %v3229
    %3231 = vdwg.mxu0
    %3232 = vmatprep.subr.mxu0 %v997
    %3233 = vmatpush1.msra.mxu0 %v996
    %3234 = vmatprep.subr.mxu0 %v999
    %3235 = vmatpush1.msra.mxu0 %v998
    %3236 = vmatprep.subr.mxu0 %v1001
    %3237 = vmatpush1.msra.mxu0 %v1000
    %3238 = vmatprep.subr.mxu0 %v1003
    %3239 = vmatpush1.msra.mxu0 %v1002
    %3240 = vmatprep.subr.mxu0 %v1005
    %3241 = vmatpush1.msra.mxu0 %v1004
    %3242 = vmatprep.subr.mxu0 %v1007
    %3243 = vmatpush1.msra.mxu0 %v1006
    %3244 = vmatprep.subr.mxu0 %v1009
    %3245 = vmatpush1.msra.mxu0 %v1008
    %3246 = vmatprep.subr.mxu0 %v1011
    %3247 = vmatpush1.msra.mxu0 %v1010
    %3248 = vmatprep.subr.mxu0 %v1013
    %3249 = vmatpush1.msra.mxu0 %v1012
    %3250 = vmatprep.subr.mxu0 %v1015
    %3251 = vmatpush1.msra.mxu0 %v1014
    %3252 = vmatprep.subr.mxu0 %v1017
    %3253 = vmatpush1.msra.mxu0 %v1016
    %3254 = vmatprep.subr.mxu0 %v1019
    %3255 = vmatpush1.msra.mxu0 %v1018
    %3256 = vmatprep.subr.mxu0 %v1021
    %3257 = vmatpush1.msra.mxu0 %v1020
    %3258 = vmatprep.subr.mxu0 %v1023
    %3259 = vmatpush1.msra.mxu0 %v1022
    %3260 = vmatprep.subr.mxu0 %v1025
    %3261 = vmatpush1.msra.mxu0 %v1024
    %3262 = vmatprep.subr.mxu0 %v1027
    %3263 = vmatpush1.msra.mxu0 %v1026
    %3264 = vmatprep.subr.mxu0 %v1029
    %3265 = vmatpush1.msra.mxu0 %v1028
    %3266 = vmatprep.subr.mxu0 %v1031
    %3267 = vmatpush1.msra.mxu0 %v1030
    %3268 = vmatprep.subr.mxu0 %v1033
    %3269 = vmatpush1.msra.mxu0 %v1032
    %3270 = vmatprep.subr.mxu0 %v1035
    %3271 = vmatpush1.msra.mxu0 %v1034
    %3272 = vmatprep.subr.mxu0 %v1037
    %3273 = vmatpush1.msra.mxu0 %v1036
    %3274 = vmatprep.subr.mxu0 %v1039
    %3275 = vmatpush1.msra.mxu0 %v1038
    %3276 = vmatprep.subr.mxu0 %v1041
    %3277 = vmatpush1.msra.mxu0 %v1040
    %3278 = vmatprep.subr.mxu0 %v1043
    %3279 = vmatpush1.msra.mxu0 %v1042
    %3280 = vmatprep.subr.mxu0 %v1045
    %3281 = vmatpush1.msra.mxu0 %v1044
    %3282 = vmatprep.subr.mxu0 %v1047
    %3283 = vmatpush1.msra.mxu0 %v1046
    %3284 = vmatprep.subr.mxu0 %v1049
    %3285 = vmatpush1.msra.mxu0 %v1048
    %3286 = vmatprep.subr.mxu0 %v1051
    %3287 = vmatpush1.msra.mxu0 %v1050
    %3288 = vmatprep.subr.mxu0 %v1053
    %3289 = vmatpush1.msra.mxu0 %v1052
    %3290 = vmatprep.subr.mxu0 %v1055
    %3291 = vmatpush1.msra.mxu0 %v1054
    %3292 = vmatprep.subr.mxu0 %v1057
    %3293 = vmatpush1.msra.mxu0 %v1056
    %3294 = vmatprep.subr.mxu0 %v1059
    %3295 = vmatpush1.msra.mxu0 %v1058
    %3296 = vmatprep.mubr.f32.mxu0 %v1998
    %3297 = vmatmul.mubr.f32.gmra.mrb[0].mxu0 %v1996
    %v3298 = vpop.f32.mrb[0].mxu0
    %v3299 = vadd.f32 %v3228, %v3298
    %v3300 = vpop.f32.mrb[0].mxu0
    %v3301 = vadd.f32 %v3230, %v3300
    %3302 = vdwg.mxu0
    %3303 = vmatprep.subr.mxu0 %v1061
    %3304 = vmatpush1.msra.mxu0 %v1060
    %3305 = vmatprep.subr.mxu0 %v1063
    %3306 = vmatpush1.msra.mxu0 %v1062
    %3307 = vmatprep.subr.mxu0 %v1065
    %3308 = vmatpush1.msra.mxu0 %v1064
    %3309 = vmatprep.subr.mxu0 %v1067
    %3310 = vmatpush1.msra.mxu0 %v1066
    %3311 = vmatprep.subr.mxu0 %v1069
    %3312 = vmatpush1.msra.mxu0 %v1068
    %3313 = vmatprep.subr.mxu0 %v1071
    %3314 = vmatpush1.msra.mxu0 %v1070
    %3315 = vmatprep.subr.mxu0 %v1073
    %3316 = vmatpush1.msra.mxu0 %v1072
    %3317 = vmatprep.subr.mxu0 %v1075
    %3318 = vmatpush1.msra.mxu0 %v1074
    %3319 = vmatprep.subr.mxu0 %v1077
    %3320 = vmatpush1.msra.mxu0 %v1076
    %3321 = vmatprep.subr.mxu0 %v1079
    %3322 = vmatpush1.msra.mxu0 %v1078
    %3323 = vmatprep.subr.mxu0 %v1081
    %3324 = vmatpush1.msra.mxu0 %v1080
    %3325 = vmatprep.subr.mxu0 %v1083
    %3326 = vmatpush1.msra.mxu0 %v1082
    %3327 = vmatprep.subr.mxu0 %v1085
    %3328 = vmatpush1.msra.mxu0 %v1084
    %3329 = vmatprep.subr.mxu0 %v1087
    %3330 = vmatpush1.msra.mxu0 %v1086
    %3331 = vmatprep.subr.mxu0 %v1089
    %3332 = vmatpush1.msra.mxu0 %v1088
    %3333 = vmatprep.subr.mxu0 %v1091
    %3334 = vmatpush1.msra.mxu0 %v1090
    %3335 = vmatprep.subr.mxu0 %v1093
    %3336 = vmatpush1.msra.mxu0 %v1092
    %3337 = vmatprep.subr.mxu0 %v1095
    %3338 = vmatpush1.msra.mxu0 %v1094
    %3339 = vmatprep.subr.mxu0 %v1097
    %3340 = vmatpush1.msra.mxu0 %v1096
    %3341 = vmatprep.subr.mxu0 %v1099
    %3342 = vmatpush1.msra.mxu0 %v1098
    %3343 = vmatprep.subr.mxu0 %v1101
    %3344 = vmatpush1.msra.mxu0 %v1100
    %3345 = vmatprep.subr.mxu0 %v1103
    %3346 = vmatpush1.msra.mxu0 %v1102
    %3347 = vmatprep.subr.mxu0 %v1105
    %3348 = vmatpush1.msra.mxu0 %v1104
    %3349 = vmatprep.subr.mxu0 %v1107
    %3350 = vmatpush1.msra.mxu0 %v1106
    %3351 = vmatprep.subr.mxu0 %v1109
    %3352 = vmatpush1.msra.mxu0 %v1108
    %3353 = vmatprep.subr.mxu0 %v1111
    %3354 = vmatpush1.msra.mxu0 %v1110
    %3355 = vmatprep.subr.mxu0 %v1113
    %3356 = vmatpush1.msra.mxu0 %v1112
    %3357 = vmatprep.subr.mxu0 %v1115
    %3358 = vmatpush1.msra.mxu0 %v1114
    %3359 = vmatprep.subr.mxu0 %v1117
    %3360 = vmatpush1.msra.mxu0 %v1116
    %3361 = vmatprep.subr.mxu0 %v1119
    %3362 = vmatpush1.msra.mxu0 %v1118
    %3363 = vmatprep.subr.mxu0 %v1121
    %3364 = vmatpush1.msra.mxu0 %v1120
    %3365 = vmatprep.subr.mxu0 %v1123
    %3366 = vmatpush1.msra.mxu0 %v1122
    %3367 = vmatprep.mubr.f32.mxu0 %v2014
    %3368 = vmatmul.mubr.f32.gmra.mrb[0].mxu0 %v2006
    %v3369 = vpop.f32.mrb[0].mxu0
    %v3370 = vadd.f32 %v3299, %v3369
    %v3371 = vpop.f32.mrb[0].mxu0
    %v3372 = vadd.f32 %v3301, %v3371
    %3373 = vdwg.mxu0
    %3374 = vmatprep.subr.mxu0 %v1125
    %3375 = vmatpush1.msra.mxu0 %v1124
    %3376 = vmatprep.subr.mxu0 %v1127
    %3377 = vmatpush1.msra.mxu0 %v1126
    %3378 = vmatprep.subr.mxu0 %v1129
    %3379 = vmatpush1.msra.mxu0 %v1128
    %3380 = vmatprep.subr.mxu0 %v1131
    %3381 = vmatpush1.msra.mxu0 %v1130
    %3382 = vmatprep.subr.mxu0 %v1133
    %3383 = vmatpush1.msra.mxu0 %v1132
    %3384 = vmatprep.subr.mxu0 %v1135
    %3385 = vmatpush1.msra.mxu0 %v1134
    %3386 = vmatprep.subr.mxu0 %v1137
    %3387 = vmatpush1.msra.mxu0 %v1136
    %3388 = vmatprep.subr.mxu0 %v1139
    %3389 = vmatpush1.msra.mxu0 %v1138
    %3390 = vmatprep.subr.mxu0 %v1141
    %3391 = vmatpush1.msra.mxu0 %v1140
    %3392 = vmatprep.subr.mxu0 %v1143
    %3393 = vmatpush1.msra.mxu0 %v1142
    %3394 = vmatprep.subr.mxu0 %v1145
    %3395 = vmatpush1.msra.mxu0 %v1144
    %3396 = vmatprep.subr.mxu0 %v1147
    %3397 = vmatpush1.msra.mxu0 %v1146
    %3398 = vmatprep.subr.mxu0 %v1149
    %3399 = vmatpush1.msra.mxu0 %v1148
    %3400 = vmatprep.subr.mxu0 %v1151
    %3401 = vmatpush1.msra.mxu0 %v1150
    %3402 = vmatprep.subr.mxu0 %v1153
    %3403 = vmatpush1.msra.mxu0 %v1152
    %3404 = vmatprep.subr.mxu0 %v1155
    %3405 = vmatpush1.msra.mxu0 %v1154
    %3406 = vmatprep.subr.mxu0 %v1157
    %3407 = vmatpush1.msra.mxu0 %v1156
    %3408 = vmatprep.subr.mxu0 %v1159
    %3409 = vmatpush1.msra.mxu0 %v1158
    %3410 = vmatprep.subr.mxu0 %v1161
    %3411 = vmatpush1.msra.mxu0 %v1160
    %3412 = vmatprep.subr.mxu0 %v1163
    %3413 = vmatpush1.msra.mxu0 %v1162
    %3414 = vmatprep.subr.mxu0 %v1165
    %3415 = vmatpush1.msra.mxu0 %v1164
    %3416 = vmatprep.subr.mxu0 %v1167
    %3417 = vmatpush1.msra.mxu0 %v1166
    %3418 = vmatprep.subr.mxu0 %v1169
    %3419 = vmatpush1.msra.mxu0 %v1168
    %3420 = vmatprep.subr.mxu0 %v1171
    %3421 = vmatpush1.msra.mxu0 %v1170
    %3422 = vmatprep.subr.mxu0 %v1173
    %3423 = vmatpush1.msra.mxu0 %v1172
    %3424 = vmatprep.subr.mxu0 %v1175
    %3425 = vmatpush1.msra.mxu0 %v1174
    %3426 = vmatprep.subr.mxu0 %v1177
    %3427 = vmatpush1.msra.mxu0 %v1176
    %3428 = vmatprep.subr.mxu0 %v1179
    %3429 = vmatpush1.msra.mxu0 %v1178
    %3430 = vmatprep.subr.mxu0 %v1181
    %3431 = vmatpush1.msra.mxu0 %v1180
    %3432 = vmatprep.subr.mxu0 %v1183
    %3433 = vmatpush1.msra.mxu0 %v1182
    %3434 = vmatprep.subr.mxu0 %v1185
    %3435 = vmatpush1.msra.mxu0 %v1184
    %3436 = vmatprep.subr.mxu0 %v1187
    %3437 = vmatpush1.msra.mxu0 %v1186
    %3438 = vmatprep.mubr.f32.mxu0 %v2015
    %3439 = vmatmul.mubr.f32.gmra.mrb[0].mxu0 %v2013
    %v3440 = vpop.f32.mrb[0].mxu0
    %v3441 = vadd.f32 %v3370, %v3440
    %v3442 = vpop.f32.mrb[0].mxu0
    %v3443 = vadd.f32 %v3372, %v3442
    %3444 = vdwg.mxu0
    %3445 = vmatprep.subr.mxu0 %v1189
    %3446 = vmatpush1.msra.mxu0 %v1188
    %3447 = vmatprep.subr.mxu0 %v1191
    %3448 = vmatpush1.msra.mxu0 %v1190
    %3449 = vmatprep.subr.mxu0 %v1193
    %3450 = vmatpush1.msra.mxu0 %v1192
    %3451 = vmatprep.subr.mxu0 %v1195
    %3452 = vmatpush1.msra.mxu0 %v1194
    %3453 = vmatprep.subr.mxu0 %v1197
    %3454 = vmatpush1.msra.mxu0 %v1196
    %3455 = vmatprep.subr.mxu0 %v1199
    %3456 = vmatpush1.msra.mxu0 %v1198
    %3457 = vmatprep.subr.mxu0 %v1201
    %3458 = vmatpush1.msra.mxu0 %v1200
    %3459 = vmatprep.subr.mxu0 %v1203
    %3460 = vmatpush1.msra.mxu0 %v1202
    %3461 = vmatprep.subr.mxu0 %v1205
    %3462 = vmatpush1.msra.mxu0 %v1204
    %3463 = vmatprep.subr.mxu0 %v1207
    %3464 = vmatpush1.msra.mxu0 %v1206
    %3465 = vmatprep.subr.mxu0 %v1209
    %3466 = vmatpush1.msra.mxu0 %v1208
    %3467 = vmatprep.subr.mxu0 %v1211
    %3468 = vmatpush1.msra.mxu0 %v1210
    %3469 = vmatprep.subr.mxu0 %v1213
    %3470 = vmatpush1.msra.mxu0 %v1212
    %3471 = vmatprep.subr.mxu0 %v1215
    %3472 = vmatpush1.msra.mxu0 %v1214
    %3473 = vmatprep.subr.mxu0 %v1217
    %3474 = vmatpush1.msra.mxu0 %v1216
    %3475 = vmatprep.subr.mxu0 %v1219
    %3476 = vmatpush1.msra.mxu0 %v1218
    %3477 = vmatprep.subr.mxu0 %v1221
    %3478 = vmatpush1.msra.mxu0 %v1220
    %3479 = vmatprep.subr.mxu0 %v1223
    %3480 = vmatpush1.msra.mxu0 %v1222
    %3481 = vmatprep.subr.mxu0 %v1225
    %3482 = vmatpush1.msra.mxu0 %v1224
    %3483 = vmatprep.subr.mxu0 %v1227
    %3484 = vmatpush1.msra.mxu0 %v1226
    %3485 = vmatprep.subr.mxu0 %v1229
    %3486 = vmatpush1.msra.mxu0 %v1228
    %3487 = vmatprep.subr.mxu0 %v1231
    %3488 = vmatpush1.msra.mxu0 %v1230
    %3489 = vmatprep.subr.mxu0 %v1233
    %3490 = vmatpush1.msra.mxu0 %v1232
    %3491 = vmatprep.subr.mxu0 %v1235
    %3492 = vmatpush1.msra.mxu0 %v1234
    %3493 = vmatprep.subr.mxu0 %v1237
    %3494 = vmatpush1.msra.mxu0 %v1236
    %3495 = vmatprep.subr.mxu0 %v1239
    %3496 = vmatpush1.msra.mxu0 %v1238
    %3497 = vmatprep.subr.mxu0 %v1241
    %3498 = vmatpush1.msra.mxu0 %v1240
    %3499 = vmatprep.subr.mxu0 %v1243
    %3500 = vmatpush1.msra.mxu0 %v1242
    %3501 = vmatprep.subr.mxu0 %v1245
    %3502 = vmatpush1.msra.mxu0 %v1244
    %3503 = vmatprep.subr.mxu0 %v1247
    %3504 = vmatpush1.msra.mxu0 %v1246
    %3505 = vmatprep.subr.mxu0 %v1249
    %3506 = vmatpush1.msra.mxu0 %v1248
    %3507 = vmatprep.subr.mxu0 %v1251
    %3508 = vmatpush1.msra.mxu0 %v1250
    %3509 = vmatprep.mubr.f32.mxu0 %v2031
    %3510 = vmatmul.mubr.f32.gmra.mrb[0].mxu0 %v2023
    %v3511 = vpop.f32.mrb[0].mxu0
    %v3512 = vadd.f32 %v3441, %v3511
    %v3513 = vpop.f32.mrb[0].mxu0
    %v3514 = vadd.f32 %v3443, %v3513
    %3515 = vdwg.mxu0
    %3516 = vmatprep.subr.mxu0 %v1253
    %3517 = vmatpush1.msra.mxu0 %v1252
    %3518 = vmatprep.subr.mxu0 %v1255
    %3519 = vmatpush1.msra.mxu0 %v1254
    %3520 = vmatprep.subr.mxu0 %v1257
    %3521 = vmatpush1.msra.mxu0 %v1256
    %3522 = vmatprep.subr.mxu0 %v1259
    %3523 = vmatpush1.msra.mxu0 %v1258
    %3524 = vmatprep.subr.mxu0 %v1261
    %3525 = vmatpush1.msra.mxu0 %v1260
    %3526 = vmatprep.subr.mxu0 %v1263
    %3527 = vmatpush1.msra.mxu0 %v1262
    %3528 = vmatprep.subr.mxu0 %v1265
    %3529 = vmatpush1.msra.mxu0 %v1264
    %3530 = vmatprep.subr.mxu0 %v1267
    %3531 = vmatpush1.msra.mxu0 %v1266
    %3532 = vmatprep.subr.mxu0 %v1269
    %3533 = vmatpush1.msra.mxu0 %v1268
    %3534 = vmatprep.subr.mxu0 %v1271
    %3535 = vmatpush1.msra.mxu0 %v1270
    %3536 = vmatprep.subr.mxu0 %v1273
    %3537 = vmatpush1.msra.mxu0 %v1272
    %3538 = vmatprep.subr.mxu0 %v1275
    %3539 = vmatpush1.msra.mxu0 %v1274
    %3540 = vmatprep.subr.mxu0 %v1277
    %3541 = vmatpush1.msra.mxu0 %v1276
    %3542 = vmatprep.subr.mxu0 %v1279
    %3543 = vmatpush1.msra.mxu0 %v1278
    %3544 = vmatprep.subr.mxu0 %v1281
    %3545 = vmatpush1.msra.mxu0 %v1280
    %3546 = vmatprep.subr.mxu0 %v1283
    %3547 = vmatpush1.msra.mxu0 %v1282
    %3548 = vmatprep.subr.mxu0 %v1285
    %3549 = vmatpush1.msra.mxu0 %v1284
    %3550 = vmatprep.subr.mxu0 %v1287
    %3551 = vmatpush1.msra.mxu0 %v1286
    %3552 = vmatprep.subr.mxu0 %v1289
    %3553 = vmatpush1.msra.mxu0 %v1288
    %3554 = vmatprep.subr.mxu0 %v1291
    %3555 = vmatpush1.msra.mxu0 %v1290
    %3556 = vmatprep.subr.mxu0 %v1293
    %3557 = vmatpush1.msra.mxu0 %v1292
    %3558 = vmatprep.subr.mxu0 %v1295
    %3559 = vmatpush1.msra.mxu0 %v1294
    %3560 = vmatprep.subr.mxu0 %v1297
    %3561 = vmatpush1.msra.mxu0 %v1296
    %3562 = vmatprep.subr.mxu0 %v1299
    %3563 = vmatpush1.msra.mxu0 %v1298
    %3564 = vmatprep.subr.mxu0 %v1301
    %3565 = vmatpush1.msra.mxu0 %v1300
    %3566 = vmatprep.subr.mxu0 %v1303
    %3567 = vmatpush1.msra.mxu0 %v1302
    %3568 = vmatprep.subr.mxu0 %v1305
    %3569 = vmatpush1.msra.mxu0 %v1304
    %3570 = vmatprep.subr.mxu0 %v1307
    %3571 = vmatpush1.msra.mxu0 %v1306
    %3572 = vmatprep.subr.mxu0 %v1309
    %3573 = vmatpush1.msra.mxu0 %v1308
    %3574 = vmatprep.subr.mxu0 %v1311
    %3575 = vmatpush1.msra.mxu0 %v1310
    %3576 = vmatprep.subr.mxu0 %v1313
    %3577 = vmatpush1.msra.mxu0 %v1312
    %3578 = vmatprep.subr.mxu0 %v1315
    %3579 = vmatpush1.msra.mxu0 %v1314
    %3580 = vmatprep.mubr.f32.mxu0 %v2032
    %3581 = vmatmul.mubr.f32.gmra.mrb[0].mxu0 %v2030
    %v3582 = vpop.f32.mrb[0].mxu0
    %v3583 = vadd.f32 %v3512, %v3582
    %v3584 = vpop.f32.mrb[0].mxu0
    %v3585 = vadd.f32 %v3514, %v3584
    %3586 = vdwg.mxu0
    %3587 = vmatprep.subr.mxu0 %v1317
    %3588 = vmatpush1.msra.mxu0 %v1316
    %3589 = vmatprep.subr.mxu0 %v1319
    %3590 = vmatpush1.msra.mxu0 %v1318
    %3591 = vmatprep.subr.mxu0 %v1321
    %3592 = vmatpush1.msra.mxu0 %v1320
    %3593 = vmatprep.subr.mxu0 %v1323
    %3594 = vmatpush1.msra.mxu0 %v1322
    %3595 = vmatprep.subr.mxu0 %v1325
    %3596 = vmatpush1.msra.mxu0 %v1324
    %3597 = vmatprep.subr.mxu0 %v1327
    %3598 = vmatpush1.msra.mxu0 %v1326
    %3599 = vmatprep.subr.mxu0 %v1329
    %3600 = vmatpush1.msra.mxu0 %v1328
    %3601 = vmatprep.subr.mxu0 %v1331
    %3602 = vmatpush1.msra.mxu0 %v1330
    %3603 = vmatprep.subr.mxu0 %v1333
    %3604 = vmatpush1.msra.mxu0 %v1332
    %3605 = vmatprep.subr.mxu0 %v1335
    %3606 = vmatpush1.msra.mxu0 %v1334
    %3607 = vmatprep.subr.mxu0 %v1337
    %3608 = vmatpush1.msra.mxu0 %v1336
    %3609 = vmatprep.subr.mxu0 %v1339
    %3610 = vmatpush1.msra.mxu0 %v1338
    %3611 = vmatprep.subr.mxu0 %v1341
    %3612 = vmatpush1.msra.mxu0 %v1340
    %3613 = vmatprep.subr.mxu0 %v1343
    %3614 = vmatpush1.msra.mxu0 %v1342
    %3615 = vmatprep.subr.mxu0 %v1345
    %3616 = vmatpush1.msra.mxu0 %v1344
    %3617 = vmatprep.subr.mxu0 %v1347
    %3618 = vmatpush1.msra.mxu0 %v1346
    %3619 = vmatprep.subr.mxu0 %v1349
    %3620 = vmatpush1.msra.mxu0 %v1348
    %3621 = vmatprep.subr.mxu0 %v1351
    %3622 = vmatpush1.msra.mxu0 %v1350
    %3623 = vmatprep.subr.mxu0 %v1353
    %3624 = vmatpush1.msra.mxu0 %v1352
    %3625 = vmatprep.subr.mxu0 %v1355
    %3626 = vmatpush1.msra.mxu0 %v1354
    %3627 = vmatprep.subr.mxu0 %v1357
    %3628 = vmatpush1.msra.mxu0 %v1356
    %3629 = vmatprep.subr.mxu0 %v1359
    %3630 = vmatpush1.msra.mxu0 %v1358
    %3631 = vmatprep.subr.mxu0 %v1361
    %3632 = vmatpush1.msra.mxu0 %v1360
    %3633 = vmatprep.subr.mxu0 %v1363
    %3634 = vmatpush1.msra.mxu0 %v1362
    %3635 = vmatprep.subr.mxu0 %v1365
    %3636 = vmatpush1.msra.mxu0 %v1364
    %3637 = vmatprep.subr.mxu0 %v1367
    %3638 = vmatpush1.msra.mxu0 %v1366
    %3639 = vmatprep.subr.mxu0 %v1369
    %3640 = vmatpush1.msra.mxu0 %v1368
    %3641 = vmatprep.subr.mxu0 %v1371
    %3642 = vmatpush1.msra.mxu0 %v1370
    %3643 = vmatprep.subr.mxu0 %v1373
    %3644 = vmatpush1.msra.mxu0 %v1372
    %3645 = vmatprep.subr.mxu0 %v1375
    %3646 = vmatpush1.msra.mxu0 %v1374
    %3647 = vmatprep.subr.mxu0 %v1377
    %3648 = vmatpush1.msra.mxu0 %v1376
    %3649 = vmatprep.subr.mxu0 %v1379
    %3650 = vmatpush1.msra.mxu0 %v1378
    %3651 = vmatprep.mubr.f32.mxu0 %v2048
    %3652 = vmatmul.mubr.f32.gmra.mrb[0].mxu0 %v2040
    %v3653 = vpop.f32.mrb[0].mxu0
    %v3654 = vadd.f32 %v3583, %v3653
    %v3655 = vpop.f32.mrb[0].mxu0
    %v3656 = vadd.f32 %v3585, %v3655
    %3657 = vdwg.mxu0
    %3658 = vmatprep.subr.mxu0 %v1381
    %3659 = vmatpush1.msra.mxu0 %v1380
    %3660 = vmatprep.subr.mxu0 %v1383
    %3661 = vmatpush1.msra.mxu0 %v1382
    %3662 = vmatprep.subr.mxu0 %v1385
    %3663 = vmatpush1.msra.mxu0 %v1384
    %3664 = vmatprep.subr.mxu0 %v1387
    %3665 = vmatpush1.msra.mxu0 %v1386
    %3666 = vmatprep.subr.mxu0 %v1389
    %3667 = vmatpush1.msra.mxu0 %v1388
    %3668 = vmatprep.subr.mxu0 %v1391
    %3669 = vmatpush1.msra.mxu0 %v1390
    %3670 = vmatprep.subr.mxu0 %v1393
    %3671 = vmatpush1.msra.mxu0 %v1392
    %3672 = vmatprep.subr.mxu0 %v1395
    %3673 = vmatpush1.msra.mxu0 %v1394
    %3674 = vmatprep.subr.mxu0 %v1397
    %3675 = vmatpush1.msra.mxu0 %v1396
    %3676 = vmatprep.subr.mxu0 %v1399
    %3677 = vmatpush1.msra.mxu0 %v1398
    %3678 = vmatprep.subr.mxu0 %v1401
    %3679 = vmatpush1.msra.mxu0 %v1400
    %3680 = vmatprep.subr.mxu0 %v1403
    %3681 = vmatpush1.msra.mxu0 %v1402
    %3682 = vmatprep.subr.mxu0 %v1405
    %3683 = vmatpush1.msra.mxu0 %v1404
    %3684 = vmatprep.subr.mxu0 %v1407
    %3685 = vmatpush1.msra.mxu0 %v1406
    %3686 = vmatprep.subr.mxu0 %v1409
    %3687 = vmatpush1.msra.mxu0 %v1408
    %3688 = vmatprep.subr.mxu0 %v1411
    %3689 = vmatpush1.msra.mxu0 %v1410
    %3690 = vmatprep.subr.mxu0 %v1413
    %3691 = vmatpush1.msra.mxu0 %v1412
    %3692 = vmatprep.subr.mxu0 %v1415
    %3693 = vmatpush1.msra.mxu0 %v1414
    %3694 = vmatprep.subr.mxu0 %v1417
    %3695 = vmatpush1.msra.mxu0 %v1416
    %3696 = vmatprep.subr.mxu0 %v1419
    %3697 = vmatpush1.msra.mxu0 %v1418
    %3698 = vmatprep.subr.mxu0 %v1421
    %3699 = vmatpush1.msra.mxu0 %v1420
    %3700 = vmatprep.subr.mxu0 %v1423
    %3701 = vmatpush1.msra.mxu0 %v1422
    %3702 = vmatprep.subr.mxu0 %v1425
    %3703 = vmatpush1.msra.mxu0 %v1424
    %3704 = vmatprep.subr.mxu0 %v1427
    %3705 = vmatpush1.msra.mxu0 %v1426
    %3706 = vmatprep.subr.mxu0 %v1429
    %3707 = vmatpush1.msra.mxu0 %v1428
    %3708 = vmatprep.subr.mxu0 %v1431
    %3709 = vmatpush1.msra.mxu0 %v1430
    %3710 = vmatprep.subr.mxu0 %v1433
    %3711 = vmatpush1.msra.mxu0 %v1432
    %3712 = vmatprep.subr.mxu0 %v1435
    %3713 = vmatpush1.msra.mxu0 %v1434
    %3714 = vmatprep.subr.mxu0 %v1437
    %3715 = vmatpush1.msra.mxu0 %v1436
    %3716 = vmatprep.subr.mxu0 %v1439
    %3717 = vmatpush1.msra.mxu0 %v1438
    %3718 = vmatprep.subr.mxu0 %v1441
    %3719 = vmatpush1.msra.mxu0 %v1440
    %3720 = vmatprep.subr.mxu0 %v1443
    %3721 = vmatpush1.msra.mxu0 %v1442
    %3722 = vmatprep.mubr.f32.mxu0 %v2049
    %3723 = vmatmul.mubr.f32.gmra.mrb[0].mxu0 %v2047
    %v3724 = vpop.f32.mrb[0].mxu0
    %v3725 = vadd.f32 %v3654, %v3724
    %v3726 = vpop.f32.mrb[0].mxu0
    %v3727 = vadd.f32 %v3656, %v3726
    %3728 = vdwg.mxu0
    %3729 = vmatprep.subr.mxu0 %v1445
    %3730 = vmatpush1.msra.mxu0 %v1444
    %3731 = vmatprep.subr.mxu0 %v1447
    %3732 = vmatpush1.msra.mxu0 %v1446
    %3733 = vmatprep.subr.mxu0 %v1449
    %3734 = vmatpush1.msra.mxu0 %v1448
    %3735 = vmatprep.subr.mxu0 %v1451
    %3736 = vmatpush1.msra.mxu0 %v1450
    %3737 = vmatprep.subr.mxu0 %v1453
    %3738 = vmatpush1.msra.mxu0 %v1452
    %3739 = vmatprep.subr.mxu0 %v1455
    %3740 = vmatpush1.msra.mxu0 %v1454
    %3741 = vmatprep.subr.mxu0 %v1457
    %3742 = vmatpush1.msra.mxu0 %v1456
    %3743 = vmatprep.subr.mxu0 %v1459
    %3744 = vmatpush1.msra.mxu0 %v1458
    %3745 = vmatprep.subr.mxu0 %v1461
    %3746 = vmatpush1.msra.mxu0 %v1460
    %3747 = vmatprep.subr.mxu0 %v1463
    %3748 = vmatpush1.msra.mxu0 %v1462
    %3749 = vmatprep.subr.mxu0 %v1465
    %3750 = vmatpush1.msra.mxu0 %v1464
    %3751 = vmatprep.subr.mxu0 %v1467
    %3752 = vmatpush1.msra.mxu0 %v1466
    %3753 = vmatprep.subr.mxu0 %v1469
    %3754 = vmatpush1.msra.mxu0 %v1468
    %3755 = vmatprep.subr.mxu0 %v1471
    %3756 = vmatpush1.msra.mxu0 %v1470
    %3757 = vmatprep.subr.mxu0 %v1473
    %3758 = vmatpush1.msra.mxu0 %v1472
    %3759 = vmatprep.subr.mxu0 %v1475
    %3760 = vmatpush1.msra.mxu0 %v1474
    %3761 = vmatprep.subr.mxu0 %v1477
    %3762 = vmatpush1.msra.mxu0 %v1476
    %3763 = vmatprep.subr.mxu0 %v1479
    %3764 = vmatpush1.msra.mxu0 %v1478
    %3765 = vmatprep.subr.mxu0 %v1481
    %3766 = vmatpush1.msra.mxu0 %v1480
    %3767 = vmatprep.subr.mxu0 %v1483
    %3768 = vmatpush1.msra.mxu0 %v1482
    %3769 = vmatprep.subr.mxu0 %v1485
    %3770 = vmatpush1.msra.mxu0 %v1484
    %3771 = vmatprep.subr.mxu0 %v1487
    %3772 = vmatpush1.msra.mxu0 %v1486
    %3773 = vmatprep.subr.mxu0 %v1489
    %3774 = vmatpush1.msra.mxu0 %v1488
    %3775 = vmatprep.subr.mxu0 %v1491
    %3776 = vmatpush1.msra.mxu0 %v1490
    %3777 = vmatprep.subr.mxu0 %v1493
    %3778 = vmatpush1.msra.mxu0 %v1492
    %3779 = vmatprep.subr.mxu0 %v1495
    %3780 = vmatpush1.msra.mxu0 %v1494
    %3781 = vmatprep.subr.mxu0 %v1497
    %3782 = vmatpush1.msra.mxu0 %v1496
    %3783 = vmatprep.subr.mxu0 %v1499
    %3784 = vmatpush1.msra.mxu0 %v1498
    %3785 = vmatprep.subr.mxu0 %v1501
    %3786 = vmatpush1.msra.mxu0 %v1500
    %3787 = vmatprep.subr.mxu0 %v1503
    %3788 = vmatpush1.msra.mxu0 %v1502
    %3789 = vmatprep.subr.mxu0 %v1505
    %3790 = vmatpush1.msra.mxu0 %v1504
    %3791 = vmatprep.subr.mxu0 %v1507
    %3792 = vmatpush1.msra.mxu0 %v1506
    %3793 = vmatprep.mubr.f32.mxu0 %v2065
    %3794 = vmatmul.mubr.f32.gmra.mrb[0].mxu0 %v2057
    %v3795 = vpop.f32.mrb[0].mxu0
    %v3796 = vadd.f32 %v3725, %v3795
    %v3797 = vpop.f32.mrb[0].mxu0
    %v3798 = vadd.f32 %v3727, %v3797
    %3799 = vdwg.mxu0
    %3800 = vmatprep.subr.mxu0 %v1509
    %3801 = vmatpush1.msra.mxu0 %v1508
    %3802 = vmatprep.subr.mxu0 %v1511
    %3803 = vmatpush1.msra.mxu0 %v1510
    %3804 = vmatprep.subr.mxu0 %v1513
    %3805 = vmatpush1.msra.mxu0 %v1512
    %3806 = vmatprep.subr.mxu0 %v1515
    %3807 = vmatpush1.msra.mxu0 %v1514
    %3808 = vmatprep.subr.mxu0 %v1517
    %3809 = vmatpush1.msra.mxu0 %v1516
    %3810 = vmatprep.subr.mxu0 %v1519
    %3811 = vmatpush1.msra.mxu0 %v1518
    %3812 = vmatprep.subr.mxu0 %v1521
    %3813 = vmatpush1.msra.mxu0 %v1520
    %3814 = vmatprep.subr.mxu0 %v1523
    %3815 = vmatpush1.msra.mxu0 %v1522
    %3816 = vmatprep.subr.mxu0 %v1525
    %3817 = vmatpush1.msra.mxu0 %v1524
    %3818 = vmatprep.subr.mxu0 %v1527
    %3819 = vmatpush1.msra.mxu0 %v1526
    %3820 = vmatprep.subr.mxu0 %v1529
    %3821 = vmatpush1.msra.mxu0 %v1528
    %3822 = vmatprep.subr.mxu0 %v1531
    %3823 = vmatpush1.msra.mxu0 %v1530
    %3824 = vmatprep.subr.mxu0 %v1533
    %3825 = vmatpush1.msra.mxu0 %v1532
    %3826 = vmatprep.subr.mxu0 %v1535
    %3827 = vmatpush1.msra.mxu0 %v1534
    %3828 = vmatprep.subr.mxu0 %v1537
    %3829 = vmatpush1.msra.mxu0 %v1536
    %3830 = vmatprep.subr.mxu0 %v1539
    %3831 = vmatpush1.msra.mxu0 %v1538
    %3832 = vmatprep.subr.mxu0 %v1541
    %3833 = vmatpush1.msra.mxu0 %v1540
    %3834 = vmatprep.subr.mxu0 %v1543
    %3835 = vmatpush1.msra.mxu0 %v1542
    %3836 = vmatprep.subr.mxu0 %v1545
    %3837 = vmatpush1.msra.mxu0 %v1544
    %3838 = vmatprep.subr.mxu0 %v1547
    %3839 = vmatpush1.msra.mxu0 %v1546
    %3840 = vmatprep.subr.mxu0 %v1549
    %3841 = vmatpush1.msra.mxu0 %v1548
    %3842 = vmatprep.subr.mxu0 %v1551
    %3843 = vmatpush1.msra.mxu0 %v1550
    %3844 = vmatprep.subr.mxu0 %v1553
    %3845 = vmatpush1.msra.mxu0 %v1552
    %3846 = vmatprep.subr.mxu0 %v1555
    %3847 = vmatpush1.msra.mxu0 %v1554
    %3848 = vmatprep.subr.mxu0 %v1557
    %3849 = vmatpush1.msra.mxu0 %v1556
    %3850 = vmatprep.subr.mxu0 %v1559
    %3851 = vmatpush1.msra.mxu0 %v1558
    %3852 = vmatprep.subr.mxu0 %v1561
    %3853 = vmatpush1.msra.mxu0 %v1560
    %3854 = vmatprep.subr.mxu0 %v1563
    %3855 = vmatpush1.msra.mxu0 %v1562
    %3856 = vmatprep.subr.mxu0 %v1565
    %3857 = vmatpush1.msra.mxu0 %v1564
    %3858 = vmatprep.subr.mxu0 %v1567
    %3859 = vmatpush1.msra.mxu0 %v1566
    %3860 = vmatprep.subr.mxu0 %v1569
    %3861 = vmatpush1.msra.mxu0 %v1568
    %3862 = vmatprep.subr.mxu0 %v1571
    %3863 = vmatpush1.msra.mxu0 %v1570
    %3864 = vmatprep.mubr.f32.mxu0 %v2066
    %3865 = vmatmul.mubr.f32.gmra.mrb[0].mxu0 %v2064
    %v3866 = vpop.f32.mrb[0].mxu0
    %v3867 = vadd.f32 %v3796, %v3866
    %v3868 = vpop.f32.mrb[0].mxu0
    %v3869 = vadd.f32 %v3798, %v3868
    %3870 = vdwg.mxu0
    %3871 = vmatprep.subr.mxu0 %v1573
    %3872 = vmatpush1.msra.mxu0 %v1572
    %3873 = vmatprep.subr.mxu0 %v1575
    %3874 = vmatpush1.msra.mxu0 %v1574
    %3875 = vmatprep.subr.mxu0 %v1577
    %3876 = vmatpush1.msra.mxu0 %v1576
    %3877 = vmatprep.subr.mxu0 %v1579
    %3878 = vmatpush1.msra.mxu0 %v1578
    %3879 = vmatprep.subr.mxu0 %v1581
    %3880 = vmatpush1.msra.mxu0 %v1580
    %3881 = vmatprep.subr.mxu0 %v1583
    %3882 = vmatpush1.msra.mxu0 %v1582
    %3883 = vmatprep.subr.mxu0 %v1585
    %3884 = vmatpush1.msra.mxu0 %v1584
    %3885 = vmatprep.subr.mxu0 %v1587
    %3886 = vmatpush1.msra.mxu0 %v1586
    %3887 = vmatprep.subr.mxu0 %v1589
    %3888 = vmatpush1.msra.mxu0 %v1588
    %3889 = vmatprep.subr.mxu0 %v1591
    %3890 = vmatpush1.msra.mxu0 %v1590
    %3891 = vmatprep.subr.mxu0 %v1593
    %3892 = vmatpush1.msra.mxu0 %v1592
    %3893 = vmatprep.subr.mxu0 %v1595
    %3894 = vmatpush1.msra.mxu0 %v1594
    %3895 = vmatprep.subr.mxu0 %v1597
    %3896 = vmatpush1.msra.mxu0 %v1596
    %3897 = vmatprep.subr.mxu0 %v1599
    %3898 = vmatpush1.msra.mxu0 %v1598
    %3899 = vmatprep.subr.mxu0 %v1601
    %3900 = vmatpush1.msra.mxu0 %v1600
    %3901 = vmatprep.subr.mxu0 %v1603
    %3902 = vmatpush1.msra.mxu0 %v1602
    %3903 = vmatprep.subr.mxu0 %v1605
    %3904 = vmatpush1.msra.mxu0 %v1604
    %3905 = vmatprep.subr.mxu0 %v1607
    %3906 = vmatpush1.msra.mxu0 %v1606
    %3907 = vmatprep.subr.mxu0 %v1609
    %3908 = vmatpush1.msra.mxu0 %v1608
    %3909 = vmatprep.subr.mxu0 %v1611
    %3910 = vmatpush1.msra.mxu0 %v1610
    %3911 = vmatprep.subr.mxu0 %v1613
    %3912 = vmatpush1.msra.mxu0 %v1612
    %3913 = vmatprep.subr.mxu0 %v1615
    %3914 = vmatpush1.msra.mxu0 %v1614
    %3915 = vmatprep.subr.mxu0 %v1617
    %3916 = vmatpush1.msra.mxu0 %v1616
    %3917 = vmatprep.subr.mxu0 %v1619
    %3918 = vmatpush1.msra.mxu0 %v1618
    %3919 = vmatprep.subr.mxu0 %v1621
    %3920 = vmatpush1.msra.mxu0 %v1620
    %3921 = vmatprep.subr.mxu0 %v1623
    %3922 = vmatpush1.msra.mxu0 %v1622
    %3923 = vmatprep.subr.mxu0 %v1625
    %3924 = vmatpush1.msra.mxu0 %v1624
    %3925 = vmatprep.subr.mxu0 %v1627
    %3926 = vmatpush1.msra.mxu0 %v1626
    %3927 = vmatprep.subr.mxu0 %v1629
    %3928 = vmatpush1.msra.mxu0 %v1628
    %3929 = vmatprep.subr.mxu0 %v1631
    %3930 = vmatpush1.msra.mxu0 %v1630
    %3931 = vmatprep.subr.mxu0 %v1633
    %3932 = vmatpush1.msra.mxu0 %v1632
    %3933 = vmatprep.subr.mxu0 %v1635
    %3934 = vmatpush1.msra.mxu0 %v1634
    %3935 = vmatprep.mubr.f32.mxu0 %v2082
    %3936 = vmatmul.mubr.f32.gmra.mrb[0].mxu0 %v2074
    %v3937 = vpop.f32.mrb[0].mxu0
    %v3938 = vadd.f32 %v3867, %v3937
    %v3939 = vpop.f32.mrb[0].mxu0
    %v3940 = vadd.f32 %v3869, %v3939
    %3941 = vdwg.mxu0
    %3942 = vmatprep.subr.mxu0 %v1637
    %3943 = vmatpush1.msra.mxu0 %v1636
    %3944 = vmatprep.subr.mxu0 %v1639
    %3945 = vmatpush1.msra.mxu0 %v1638
    %3946 = vmatprep.subr.mxu0 %v1641
    %3947 = vmatpush1.msra.mxu0 %v1640
    %3948 = vmatprep.subr.mxu0 %v1643
    %3949 = vmatpush1.msra.mxu0 %v1642
    %3950 = vmatprep.subr.mxu0 %v1645
    %3951 = vmatpush1.msra.mxu0 %v1644
    %3952 = vmatprep.subr.mxu0 %v1647
    %3953 = vmatpush1.msra.mxu0 %v1646
    %3954 = vmatprep.subr.mxu0 %v1649
    %3955 = vmatpush1.msra.mxu0 %v1648
    %3956 = vmatprep.subr.mxu0 %v1651
    %3957 = vmatpush1.msra.mxu0 %v1650
    %3958 = vmatprep.subr.mxu0 %v1653
    %3959 = vmatpush1.msra.mxu0 %v1652
    %3960 = vmatprep.subr.mxu0 %v1655
    %3961 = vmatpush1.msra.mxu0 %v1654
    %3962 = vmatprep.subr.mxu0 %v1657
    %3963 = vmatpush1.msra.mxu0 %v1656
    %3964 = vmatprep.subr.mxu0 %v1659
    %3965 = vmatpush1.msra.mxu0 %v1658
    %3966 = vmatprep.subr.mxu0 %v1661
    %3967 = vmatpush1.msra.mxu0 %v1660
    %3968 = vmatprep.subr.mxu0 %v1663
    %3969 = vmatpush1.msra.mxu0 %v1662
    %3970 = vmatprep.subr.mxu0 %v1665
    %3971 = vmatpush1.msra.mxu0 %v1664
    %3972 = vmatprep.subr.mxu0 %v1667
    %3973 = vmatpush1.msra.mxu0 %v1666
    %3974 = vmatprep.subr.mxu0 %v1669
    %3975 = vmatpush1.msra.mxu0 %v1668
    %3976 = vmatprep.subr.mxu0 %v1671
    %3977 = vmatpush1.msra.mxu0 %v1670
    %3978 = vmatprep.subr.mxu0 %v1673
    %3979 = vmatpush1.msra.mxu0 %v1672
    %3980 = vmatprep.subr.mxu0 %v1675
    %3981 = vmatpush1.msra.mxu0 %v1674
    %3982 = vmatprep.subr.mxu0 %v1677
    %3983 = vmatpush1.msra.mxu0 %v1676
    %3984 = vmatprep.subr.mxu0 %v1679
    %3985 = vmatpush1.msra.mxu0 %v1678
    %3986 = vmatprep.subr.mxu0 %v1681
    %3987 = vmatpush1.msra.mxu0 %v1680
    %3988 = vmatprep.subr.mxu0 %v1683
    %3989 = vmatpush1.msra.mxu0 %v1682
    %3990 = vmatprep.subr.mxu0 %v1685
    %3991 = vmatpush1.msra.mxu0 %v1684
    %3992 = vmatprep.subr.mxu0 %v1687
    %3993 = vmatpush1.msra.mxu0 %v1686
    %3994 = vmatprep.subr.mxu0 %v1689
    %3995 = vmatpush1.msra.mxu0 %v1688
    %3996 = vmatprep.subr.mxu0 %v1691
    %3997 = vmatpush1.msra.mxu0 %v1690
    %3998 = vmatprep.subr.mxu0 %v1693
    %3999 = vmatpush1.msra.mxu0 %v1692
    %4000 = vmatprep.subr.mxu0 %v1695
    %4001 = vmatpush1.msra.mxu0 %v1694
    %4002 = vmatprep.subr.mxu0 %v1697
    %4003 = vmatpush1.msra.mxu0 %v1696
    %4004 = vmatprep.subr.mxu0 %v1699
    %4005 = vmatpush1.msra.mxu0 %v1698
    %4006 = vmatprep.mubr.f32.mxu0 %v2083
    %4007 = vmatmul.mubr.f32.gmra.mrb[0].mxu0 %v2081
    %v4008 = vpop.f32.mrb[0].mxu0
    %v4009 = vadd.f32 %v3938, %v4008
    %v4010 = vpop.f32.mrb[0].mxu0
    %v4011 = vadd.f32 %v3940, %v4010
    %4012 = vdwg.mxu0
    %4013 = vmatprep.subr.mxu0 %v1701
    %4014 = vmatpush1.msra.mxu0 %v1700
    %4015 = vmatprep.subr.mxu0 %v1703
    %4016 = vmatpush1.msra.mxu0 %v1702
    %4017 = vmatprep.subr.mxu0 %v1705
    %4018 = vmatpush1.msra.mxu0 %v1704
    %4019 = vmatprep.subr.mxu0 %v1707
    %4020 = vmatpush1.msra.mxu0 %v1706
    %4021 = vmatprep.subr.mxu0 %v1709
    %4022 = vmatpush1.msra.mxu0 %v1708
    %4023 = vmatprep.subr.mxu0 %v1711
    %4024 = vmatpush1.msra.mxu0 %v1710
    %4025 = vmatprep.subr.mxu0 %v1713
    %4026 = vmatpush1.msra.mxu0 %v1712
    %4027 = vmatprep.subr.mxu0 %v1715
    %4028 = vmatpush1.msra.mxu0 %v1714
    %4029 = vmatprep.subr.mxu0 %v1717
    %4030 = vmatpush1.msra.mxu0 %v1716
    %4031 = vmatprep.subr.mxu0 %v1719
    %4032 = vmatpush1.msra.mxu0 %v1718
    %4033 = vmatprep.subr.mxu0 %v1721
    %4034 = vmatpush1.msra.mxu0 %v1720
    %4035 = vmatprep.subr.mxu0 %v1723
    %4036 = vmatpush1.msra.mxu0 %v1722
    %4037 = vmatprep.subr.mxu0 %v1725
    %4038 = vmatpush1.msra.mxu0 %v1724
    %4039 = vmatprep.subr.mxu0 %v1727
    %4040 = vmatpush1.msra.mxu0 %v1726
    %4041 = vmatprep.subr.mxu0 %v1729
    %4042 = vmatpush1.msra.mxu0 %v1728
    %4043 = vmatprep.subr.mxu0 %v1731
    %4044 = vmatpush1.msra.mxu0 %v1730
    %4045 = vmatprep.subr.mxu0 %v1733
    %4046 = vmatpush1.msra.mxu0 %v1732
    %4047 = vmatprep.subr.mxu0 %v1735
    %4048 = vmatpush1.msra.mxu0 %v1734
    %4049 = vmatprep.subr.mxu0 %v1737
    %4050 = vmatpush1.msra.mxu0 %v1736
    %4051 = vmatprep.subr.mxu0 %v1739
    %4052 = vmatpush1.msra.mxu0 %v1738
    %4053 = vmatprep.subr.mxu0 %v1741
    %4054 = vmatpush1.msra.mxu0 %v1740
    %4055 = vmatprep.subr.mxu0 %v1743
    %4056 = vmatpush1.msra.mxu0 %v1742
    %4057 = vmatprep.subr.mxu0 %v1745
    %4058 = vmatpush1.msra.mxu0 %v1744
    %4059 = vmatprep.subr.mxu0 %v1747
    %4060 = vmatpush1.msra.mxu0 %v1746
    %4061 = vmatprep.subr.mxu0 %v1749
    %4062 = vmatpush1.msra.mxu0 %v1748
    %4063 = vmatprep.subr.mxu0 %v1751
    %4064 = vmatpush1.msra.mxu0 %v1750
    %4065 = vmatprep.subr.mxu0 %v1753
    %4066 = vmatpush1.msra.mxu0 %v1752
    %4067 = vmatprep.subr.mxu0 %v1755
    %4068 = vmatpush1.msra.mxu0 %v1754
    %4069 = vmatprep.subr.mxu0 %v1757
    %4070 = vmatpush1.msra.mxu0 %v1756
    %4071 = vmatprep.subr.mxu0 %v1759
    %4072 = vmatpush1.msra.mxu0 %v1758
    %4073 = vmatprep.subr.mxu0 %v1761
    %4074 = vmatpush1.msra.mxu0 %v1760
    %4075 = vmatprep.subr.mxu0 %v1763
    %4076 = vmatpush1.msra.mxu0 %v1762
    %4077 = vmatprep.mubr.f32.mxu0 %v2099
    %4078 = vmatmul.mubr.f32.gmra.mrb[0].mxu0 %v2091
    %v4079 = vpop.f32.mrb[0].mxu0
    %v4080 = vadd.f32 %v4009, %v4079
    %v4081 = vpop.f32.mrb[0].mxu0
    %v4082 = vadd.f32 %v4011, %v4081
    %4083 = vdwg.mxu0
    %4084 = vmatprep.subr.mxu0 %v1765
    %4085 = vmatpush1.msra.mxu0 %v1764
    %4086 = vmatprep.subr.mxu0 %v1767
    %4087 = vmatpush1.msra.mxu0 %v1766
    %4088 = vmatprep.subr.mxu0 %v1769
    %4089 = vmatpush1.msra.mxu0 %v1768
    %4090 = vmatprep.subr.mxu0 %v1771
    %4091 = vmatpush1.msra.mxu0 %v1770
    %4092 = vmatprep.subr.mxu0 %v1773
    %4093 = vmatpush1.msra.mxu0 %v1772
    %4094 = vmatprep.subr.mxu0 %v1775
    %4095 = vmatpush1.msra.mxu0 %v1774
    %4096 = vmatprep.subr.mxu0 %v1777
    %4097 = vmatpush1.msra.mxu0 %v1776
    %4098 = vmatprep.subr.mxu0 %v1779
    %4099 = vmatpush1.msra.mxu0 %v1778
    %4100 = vmatprep.subr.mxu0 %v1781
    %4101 = vmatpush1.msra.mxu0 %v1780
    %4102 = vmatprep.subr.mxu0 %v1783
    %4103 = vmatpush1.msra.mxu0 %v1782
    %4104 = vmatprep.subr.mxu0 %v1785
    %4105 = vmatpush1.msra.mxu0 %v1784
    %4106 = vmatprep.subr.mxu0 %v1787
    %4107 = vmatpush1.msra.mxu0 %v1786
    %4108 = vmatprep.subr.mxu0 %v1789
    %4109 = vmatpush1.msra.mxu0 %v1788
    %4110 = vmatprep.subr.mxu0 %v1791
    %4111 = vmatpush1.msra.mxu0 %v1790
    %4112 = vmatprep.subr.mxu0 %v1793
    %4113 = vmatpush1.msra.mxu0 %v1792
    %4114 = vmatprep.subr.mxu0 %v1795
    %4115 = vmatpush1.msra.mxu0 %v1794
    %4116 = vmatprep.subr.mxu0 %v1797
    %4117 = vmatpush1.msra.mxu0 %v1796
    %4118 = vmatprep.subr.mxu0 %v1799
    %4119 = vmatpush1.msra.mxu0 %v1798
    %4120 = vmatprep.subr.mxu0 %v1801
    %4121 = vmatpush1.msra.mxu0 %v1800
    %4122 = vmatprep.subr.mxu0 %v1803
    %4123 = vmatpush1.msra.mxu0 %v1802
    %4124 = vmatprep.subr.mxu0 %v1805
    %4125 = vmatpush1.msra.mxu0 %v1804
    %4126 = vmatprep.subr.mxu0 %v1807
    %4127 = vmatpush1.msra.mxu0 %v1806
    %4128 = vmatprep.subr.mxu0 %v1809
    %4129 = vmatpush1.msra.mxu0 %v1808
    %4130 = vmatprep.subr.mxu0 %v1811
    %4131 = vmatpush1.msra.mxu0 %v1810
    %4132 = vmatprep.subr.mxu0 %v1813
    %4133 = vmatpush1.msra.mxu0 %v1812
    %4134 = vmatprep.subr.mxu0 %v1815
    %4135 = vmatpush1.msra.mxu0 %v1814
    %4136 = vmatprep.subr.mxu0 %v1817
    %4137 = vmatpush1.msra.mxu0 %v1816
    %4138 = vmatprep.subr.mxu0 %v1819
    %4139 = vmatpush1.msra.mxu0 %v1818
    %4140 = vmatprep.subr.mxu0 %v1821
    %4141 = vmatpush1.msra.mxu0 %v1820
    %4142 = vmatprep.subr.mxu0 %v1823
    %4143 = vmatpush1.msra.mxu0 %v1822
    %4144 = vmatprep.subr.mxu0 %v1825
    %4145 = vmatpush1.msra.mxu0 %v1824
    %4146 = vmatprep.subr.mxu0 %v1827
    %4147 = vmatpush1.msra.mxu0 %v1826
    %4148 = vmatprep.mubr.f32.mxu0 %v2100
    %4149 = vmatmul.mubr.f32.gmra.mrb[0].mxu0 %v2098
    %v4150 = vpop.f32.mrb[0].mxu0
    %v4151 = vadd.f32 %v4080, %v4150
    %v4152 = vpop.f32.mrb[0].mxu0
    %v4153 = vadd.f32 %v4082, %v4152
    %4154 = vdwg.mxu0
    %4155 = vmatprep.subr.mxu0 %v1829
    %4156 = vmatpush1.msra.mxu0 %v1828
    %4157 = vmatprep.subr.mxu0 %v1831
    %4158 = vmatpush1.msra.mxu0 %v1830
    %4159 = vmatprep.subr.mxu0 %v1833
    %4160 = vmatpush1.msra.mxu0 %v1832
    %4161 = vmatprep.subr.mxu0 %v1835
    %4162 = vmatpush1.msra.mxu0 %v1834
    %4163 = vmatprep.subr.mxu0 0.0
    %4164 = vmatpush1.msra.mxu0 0.0
    %4165 = vmatprep.subr.mxu0 0.0
    %4166 = vmatpush1.msra.mxu0 0.0
    %4167 = vmatprep.subr.mxu0 0.0
    %4168 = vmatpush1.msra.mxu0 0.0
    %4169 = vmatprep.subr.mxu0 0.0
    %4170 = vmatpush1.msra.mxu0 0.0
    %4171 = vmatprep.subr.mxu0 0.0
    %4172 = vmatpush1.msra.mxu0 0.0
    %4173 = vmatprep.subr.mxu0 0.0
    %4174 = vmatpush1.msra.mxu0 0.0
    %4175 = vmatprep.subr.mxu0 0.0
    %4176 = vmatpush1.msra.mxu0 0.0
    %4177 = vmatprep.subr.mxu0 0.0
    %4178 = vmatpush1.msra.mxu0 0.0
    %4179 = vmatprep.subr.mxu0 0.0
    %4180 = vmatpush1.msra.mxu0 0.0
    %4181 = vmatprep.subr.mxu0 0.0
    %4182 = vmatpush1.msra.mxu0 0.0
    %4183 = vmatprep.subr.mxu0 0.0
    %4184 = vmatpush1.msra.mxu0 0.0
    %4185 = vmatprep.subr.mxu0 0.0
    %4186 = vmatpush1.msra.mxu0 0.0
    %4187 = vmatprep.subr.mxu0 0.0
    %4188 = vmatpush1.msra.mxu0 0.0
    %4189 = vmatprep.subr.mxu0 0.0
    %4190 = vmatpush1.msra.mxu0 0.0
    %4191 = vmatprep.subr.mxu0 0.0
    %4192 = vmatpush1.msra.mxu0 0.0
    %4193 = vmatprep.subr.mxu0 0.0
    %4194 = vmatpush1.msra.mxu0 0.0
    %4195 = vmatprep.subr.mxu0 0.0
    %4196 = vmatpush1.msra.mxu0 0.0
    %4197 = vmatprep.subr.mxu0 0.0
    %4198 = vmatpush1.msra.mxu0 0.0
    %4199 = vmatprep.subr.mxu0 0.0
    %4200 = vmatpush1.msra.mxu0 0.0
    %4201 = vmatprep.subr.mxu0 0.0
    %4202 = vmatpush1.msra.mxu0 0.0
    %4203 = vmatprep.subr.mxu0 0.0
    %4204 = vmatpush1.msra.mxu0 0.0
    %4205 = vmatprep.subr.mxu0 0.0
    %4206 = vmatpush1.msra.mxu0 0.0
    %4207 = vmatprep.subr.mxu0 0.0
    %4208 = vmatpush1.msra.mxu0 0.0
    %4209 = vmatprep.subr.mxu0 0.0
    %4210 = vmatpush1.msra.mxu0 0.0
    %4211 = vmatprep.subr.mxu0 0.0
    %4212 = vmatpush1.msra.mxu0 0.0
    %4213 = vmatprep.subr.mxu0 0.0
    %4214 = vmatpush1.msra.mxu0 0.0
    %4215 = vmatprep.subr.mxu0 0.0
    %4216 = vmatpush1.msra.mxu0 0.0
    %4217 = vmatprep.subr.mxu0 0.0
    %4218 = vmatpush1.msra.mxu0 0.0
    %4219 = vmatprep.mubr.f32.mxu0 0.0
    %4220 = vmatmul.mubr.f32.gmra.mrb[0].mxu0 %v2165
    %v4221 = vpop.f32.mrb[0].mxu0
    %v4222 = vadd.f32 %v4151, %v4221
    %v4223 = vpop.f32.mrb[0].mxu0
    %v4224 = vadd.f32 %v4153, %v4223
    %4225 = vdwg.mxu0
    %v4226 = vmax.f32 %v4222, 0.0
    %v4227 = vmax.f32 %v4224, 0.0
    %v4228 = vld [vmem:[%s3] sm:$0xff]
    %v4229 = vld [vmem:[%s3 + $0x8] sm:$0xff]
    %v4230 = vld [vmem:[%s3 + $0x10] sm:$0xff]
    %v4231 = vld [vmem:[%s3 + $0x18] sm:$0xff]
    %v4232 = vld [vmem:[%s3 + $0x20] sm:$0xff]
    %v4233 = vld [vmem:[%s3 + $0x28] sm:$0xff]
    %v4234 = vld [vmem:[%s3 + $0x30] sm:$0xff]
    %v4235 = vld [vmem:[%s3 + $0x38] sm:$0xff]
    %v4236 = vld [vmem:[%s3 + $0x40] sm:$0xff]
    %v4237 = vld [vmem:[%s3 + $0x48] sm:$0xff]
    %v4238 = vld [vmem:[%s3 + $0x50] sm:$0xff]
    %v4239 = vld [vmem:[%s3 + $0x58] sm:$0xff]
    %v4240 = vld [vmem:[%s3 + $0x60] sm:$0xff]
    %v4241 = vld [vmem:[%s3 + $0x68] sm:$0xff]
    %v4242 = vld [vmem:[%s3 + $0x70] sm:$0xff]
    %v4243 = vld [vmem:[%s3 + $0x78] sm:$0xff]
    %v4244 = vld [vmem:[%s3 + $0x80] sm:$0xff]
    %v4245 = vld [vmem:[%s3 + $0x88] sm:$0xff]
    %v4246 = vld [vmem:[%s3 + $0x90] sm:$0xff]
    %v4247 = vld [vmem:[%s3 + $0x98] sm:$0xff]
    %v4248 = vld [vmem:[%s3 + $0xa0] sm:$0xff]
    %v4249 = vld [vmem:[%s3 + $0xa8] sm:$0xff]
    %v4250 = vld [vmem:[%s3 + $0xb0] sm:$0xff]
    %v4251 = vld [vmem:[%s3 + $0xb8] sm:$0xff]
    %v4252 = vld [vmem:[%s3 + $0xc0] sm:$0xff]
    %v4253 = vld [vmem:[%s3 + $0xc8] sm:$0xff]
    %v4254 = vld [vmem:[%s3 + $0xd0] sm:$0xff]
    %v4255 = vld [vmem:[%s3 + $0xd8] sm:$0xff]
    %v4256 = vld [vmem:[%s3 + $0xe0] sm:$0xff]
    %v4257 = vld [vmem:[%s3 + $0xe8] sm:$0xff]
    %v4258 = vld [vmem:[%s3 + $0xf0] sm:$0xff]
    %v4259 = vld [vmem:[%s3 + $0xf8] sm:$0xff]
    %v4260 = vld [vmem:[%s4] sm:$0x1]
    %v4262 = vlaneseq
    %v4263 = vshrl.u32 %v4262, 7
    %v4264 = vsub.s32 0, %v4263
    %v4265 = vrot.slane %v4260, %v4264
    %4267 = vmatprep.subr.mxu0 0.0
    %4268 = vmatpush1.msra.mxu0 %v4228
    %4269 = vmatprep.subr.mxu0 0.0
    %4270 = vmatpush1.msra.mxu0 %v4229
    %4271 = vmatprep.subr.mxu0 0.0
    %4272 = vmatpush1.msra.mxu0 %v4230
    %4273 = vmatprep.subr.mxu0 0.0
    %4274 = vmatpush1.msra.mxu0 %v4231
    %4275 = vmatprep.subr.mxu0 0.0
    %4276 = vmatpush1.msra.mxu0 %v4232
    %4277 = vmatprep.subr.mxu0 0.0
    %4278 = vmatpush1.msra.mxu0 %v4233
    %4279 = vmatprep.subr.mxu0 0.0
    %4280 = vmatpush1.msra.mxu0 %v4234
    %4281 = vmatprep.subr.mxu0 0.0
    %4282 = vmatpush1.msra.mxu0 %v4235
    %4283 = vmatprep.subr.mxu0 0.0
    %4284 = vmatpush1.msra.mxu0 %v4236
    %4285 = vmatprep.subr.mxu0 0.0
    %4286 = vmatpush1.msra.mxu0 %v4237
    %4287 = vmatprep.subr.mxu0 0.0
    %4288 = vmatpush1.msra.mxu0 %v4238
    %4289 = vmatprep.subr.mxu0 0.0
    %4290 = vmatpush1.msra.mxu0 %v4239
    %4291 = vmatprep.subr.mxu0 0.0
    %4292 = vmatpush1.msra.mxu0 %v4240
    %4293 = vmatprep.subr.mxu0 0.0
    %4294 = vmatpush1.msra.mxu0 %v4241
    %4295 = vmatprep.subr.mxu0 0.0
    %4296 = vmatpush1.msra.mxu0 %v4242
    %4297 = vmatprep.subr.mxu0 0.0
    %4298 = vmatpush1.msra.mxu0 %v4243
    %4299 = vmatprep.subr.mxu0 0.0
    %4300 = vmatpush1.msra.mxu0 %v4244
    %4301 = vmatprep.subr.mxu0 0.0
    %4302 = vmatpush1.msra.mxu0 %v4245
    %4303 = vmatprep.subr.mxu0 0.0
    %4304 = vmatpush1.msra.mxu0 %v4246
    %4305 = vmatprep.subr.mxu0 0.0
    %4306 = vmatpush1.msra.mxu0 %v4247
    %4307 = vmatprep.subr.mxu0 0.0
    %4308 = vmatpush1.msra.mxu0 %v4248
    %4309 = vmatprep.subr.mxu0 0.0
    %4310 = vmatpush1.msra.mxu0 %v4249
    %4311 = vmatprep.subr.mxu0 0.0
    %4312 = vmatpush1.msra.mxu0 %v4250
    %4313 = vmatprep.subr.mxu0 0.0
    %4314 = vmatpush1.msra.mxu0 %v4251
    %4315 = vmatprep.subr.mxu0 0.0
    %4316 = vmatpush1.msra.mxu0 %v4252
    %4317 = vmatprep.subr.mxu0 0.0
    %4318 = vmatpush1.msra.mxu0 %v4253
    %4319 = vmatprep.subr.mxu0 0.0
    %4320 = vmatpush1.msra.mxu0 %v4254
    %4321 = vmatprep.subr.mxu0 0.0
    %4322 = vmatpush1.msra.mxu0 %v4255
    %4323 = vmatprep.subr.mxu0 0.0
    %4324 = vmatpush1.msra.mxu0 %v4256
    %4325 = vmatprep.subr.mxu0 0.0
    %4326 = vmatpush1.msra.mxu0 %v4257
    %4327 = vmatprep.subr.mxu0 0.0
    %4328 = vmatpush1.msra.mxu0 %v4258
    %4329 = vmatprep.subr.mxu0 0.0
    %4330 = vmatpush1.msra.mxu0 %v4259
    %4331 = vmatprep.mubr.f32.mxu0 %v4227
    %4332 = vmatmul.mubr.f32.gmra.mrb[0].mxu0 %v4226
    %v4333 = vpop.f32.mrb[0].mxu0
    %v4334 = vadd.f32 %v4265, %v4333
    %v4335 = vpop.f32.mrb[0].mxu0
    %4336 = vdwg.mxu0
    %vm4337 = vcmask 41984
    %4338 = vst.msk [vmem:[#allocation2] sm:$0x3] %vm4337, %v4334
    // Predicated region
    $region22: #{dqn_cnn_forward.3} parent=1 // pred_check
      _
    $region23: #{dqn_cnn_forward.3} parent=1 // pred_check_branch
      %4340 = sbr.rel (0) target = $region25
    $region24: #{dqn_cnn_forward.3} parent=1 // pred_region
      %s4342 = ssub.s32 32, 32
      %4343 = vsyncadd [#allocation3], %s4342
      %s4345 = sshll.u32 [#allocation2], 4
      %s4346 = int_to_ptr.vmem [resolvable:$true] %s4345
      %4348 = dma.vmem_to_hbm [thread:$0]  %s4346, 32, %s5, [#allocation3]
    $region25: #{dqn_cnn_forward.3} parent=1 // pred_fallthru
      _
    // Predicated region
    $region26: #{dqn_cnn_forward.3} parent=1 // pred_check
      _
    $region27: #{dqn_cnn_forward.3} parent=1 // pred_check_branch
      %4350 = sbr.rel (0) target = $region29
    $region28: #{dqn_cnn_forward.3} parent=1 // pred_region
      %4351 = dma.done [#allocation3], 32
    $region29: #{dqn_cnn_forward.3} parent=1 // pred_fallthru
      _
    %4352 = vsyncpa [#allocation3], 1

</llo_original>
